<compile_context>
chip_gen: v7x
topology: tpu7x:2x2x1
jax: 0.10.0
libtpu: 0.0.40
codegen_flags: <defaults>
</compile_context>

<pallas_src>
import functools
import math

import jax
import jax.numpy as jnp
import numpy as np
from jax.experimental import pallas as pl
from jax.experimental.pallas import tpu as pltpu


# ----------------------------------------------------------------------------
# helpers
# ----------------------------------------------------------------------------
def _pick_tile(m):
    """Largest row tile that still gives >=2 grid steps (megacore friendly)."""
    for t in (1024, 512, 256, 128, 64, 32, 16, 8):
        if t <= m // 2 and m % t == 0:
            return t
    return m


def _interp_matrix(n):
    """1-D bilinear x2 (align_corners=True) interpolation matrix, (2n, n)."""
    n_out = 2 * n
    c = np.zeros((n_out, n), np.float32)
    if n == 1:
        c[:, 0] = 1.0
        return c
    i = np.arange(n_out, dtype=np.float64)
    src = i * (n - 1) / (n_out - 1)
    lo = np.clip(np.floor(src).astype(np.int64), 0, n - 2)
    frac = (src - lo).astype(np.float32)
    c[np.arange(n_out), lo] = 1.0 - frac
    c[np.arange(n_out), lo + 1] += frac
    return c


# ----------------------------------------------------------------------------
# Pallas kernels
# ----------------------------------------------------------------------------
def _patch_embed_kernel(x_ref, w_ref, b_ref, lnw_ref, lnb_ref, pos_ref, o_ref,
                        *, eps):
    y = jnp.dot(x_ref[...].astype(jnp.bfloat16), w_ref[...],
                preferred_element_type=jnp.float32) + b_ref[...]
    mu = jnp.mean(y, axis=-1, keepdims=True)
    var = jnp.mean(y * y, axis=-1, keepdims=True) - mu * mu
    y = (y - mu) * jax.lax.rsqrt(var + eps) * lnw_ref[...] + lnb_ref[...]
    o_ref[...] = (y + pos_ref[...]).astype(o_ref.dtype)


def _encoder_stack_kernel(tok_ref,
                          ln1w_ref, ln1b_ref, lnaw_ref, lnab_ref,
                          wqkv_ref, bqkv_ref, wo_ref, bo_ref,
                          ln2w_ref, ln2b_ref,
                          w1_ref, b1_ref, w2_ref, b2_ref,
                          out_ref, *, num_heads, eps):
    """One transformer encoder layer per grid step; grid=(B, L), L arbitrary.

    The (S, E) token block is resident in VMEM across the L axis (accumulator
    output); it is initialised from the input tokens when l == 0.
    """
    f32, bf16 = jnp.float32, jnp.bfloat16
    l = pl.program_id(1)

    @pl.when(l == 0)
    def _init():
        out_ref[...] = tok_ref[...]

    x = out_ref[...].astype(f32)                        # (S, E)
    S, E = x.shape
    head_dim = E // num_heads
    scale = 1.0 / math.sqrt(head_dim)

    def layer_norm(z, w_r, b_r):
        mu = jnp.mean(z, axis=-1, keepdims=True)
        var = jnp.mean(z * z, axis=-1, keepdims=True) - mu * mu
        return (z - mu) * jax.lax.rsqrt(var + eps) * w_r[...] + b_r[...]

    # encoder LN1 followed by the attention block's own LN (per the module).
    h = layer_norm(layer_norm(x, ln1w_ref, ln1b_ref), lnaw_ref, lnab_ref)

    # fused QKV projection: (S, E) @ (E, 3E)
    qkv = jnp.dot(h.astype(bf16), wqkv_ref[...],
                  preferred_element_type=f32) + bqkv_ref[...]
    q = qkv[:, :E] * scale
    k = qkv[:, E:2 * E]
    v = qkv[:, 2 * E:]

    heads = []
    for hd in range(num_heads):
        sl = slice(hd * head_dim, (hd + 1) * head_dim)
        s = jax.lax.dot_general(q[:, sl].astype(bf16), k[:, sl].astype(bf16),
                                (((1,), (1,)), ((), ())),
                                preferred_element_type=f32)      # (S, S)
        s = s - jnp.max(s, axis=-1, keepdims=True)
        p = jnp.exp(s)
        p = p / jnp.sum(p, axis=-1, keepdims=True)
        heads.append(jnp.dot(p.astype(bf16), v[:, sl].astype(bf16),
                             preferred_element_type=f32))        # (S, Dh)
    attn = jnp.concatenate(heads, axis=-1)                       # (S, E)
    attn = jnp.dot(attn.astype(bf16), wo_ref[...],
                   preferred_element_type=f32) + bo_ref[...]
    x = x + attn                                                 # residual 1

    # MLP on LN2(x); Dropout = identity at inference.
    g = jnp.dot(layer_norm(x, ln2w_ref, ln2b_ref).astype(bf16), w1_ref[...],
                preferred_element_type=f32) + b1_ref[...]
    # TODO(synk): PyTorch nn.GELU default is exact erf-GELU; tanh approximation used here.
    c0 = jnp.float32(0.7978845608028654)                         # sqrt(2/pi)
    g = 0.5 * g * (1.0 + jnp.tanh(c0 * (g + 0.044715 * g * g * g)))
    g = jnp.dot(g.astype(bf16), w2_ref[...],
                preferred_element_type=f32) + b2_ref[...]

    out_ref[...] = (x + g).astype(out_ref.dtype)                 # residual 2


def _upsample_block_kernel(x_ref, w_ref, scale_ref, shift_ref, cw_ref, ch_ref,
                           o_ref, *, H, W):
    """3x3 conv (pad=1) + folded BN + ReLU + separable bilinear x2, one batch.

    x_ref: (H+2, W+2, Cin) spatially padded NHWC block.
    """
    f32, bf16 = jnp.float32, jnp.bfloat16
    cin9, cout = w_ref.shape

    # in-VMEM im2col: 9 shifted (H, W, Cin) windows concatenated on lanes.
    taps = [x_ref[dy:dy + H, dx:dx + W, :].astype(bf16)
            for dy in range(3) for dx in range(3)]
    xcat = jnp.concatenate(taps, axis=-1)                        # (H, W, 9*Cin)

    # conv3x3 as one batched-over-rows matmul with K = 9*Cin.
    wb = jnp.broadcast_to(w_ref[...], (H, cin9, cout))
    y = jax.lax.dot_general(xcat, wb, (((2,), (1,)), ((0,), (0,))),
                            preferred_element_type=f32)          # (H, W, Cout)
    # folded BatchNorm (eval running stats) + ReLU
    y = jnp.maximum(y * scale_ref[...] + shift_ref[...], 0.0)

    # separable bilinear x2 (align_corners=True): width interp, then height.
    cwb = jnp.broadcast_to(cw_ref[...], (H, 2 * W, W))
    z = jax.lax.dot_general(cwb, y.astype(bf16), (((2,), (1,)), ((0,), (0,))),
                            preferred_element_type=f32)          # (H, 2W, Cout)
    zt = jnp.transpose(z, (1, 0, 2)).astype(bf16)                # (2W, H, Cout)
    chb = jnp.broadcast_to(ch_ref[...], (2 * W, 2 * H, H))
    o = jax.lax.dot_general(chb, zt, (((2,), (1,)), ((0,), (0,))),
                            preferred_element_type=f32)          # (2W, 2H, Cout)
    o_ref[...] = jnp.transpose(o, (1, 0, 2)).astype(o_ref.dtype)  # (2H, 2W, Cout)


def _matmul_bias_kernel(x_ref, w_ref, b_ref, o_ref):
    o_ref[...] = (jnp.dot(x_ref[...].astype(jnp.bfloat16), w_ref[...],
                          preferred_element_type=jnp.float32)
                  + b_ref[...]).astype(o_ref.dtype)


# ----------------------------------------------------------------------------
# pallas_call wrappers
# ----------------------------------------------------------------------------
def patch_embed(xp, params, eps=1e-5):
    B, S, CPP = xp.shape
    E = params["patch_w"].shape[1]
    return pl.pallas_call(
        functools.partial(_patch_embed_kernel, eps=eps),
        out_shape=jax.ShapeDtypeStruct((B, S, E), jnp.float32),
        grid_spec=pltpu.PrefetchScalarGridSpec(
            num_scalar_prefetch=0,
            grid=(B,),
            in_specs=[
                pl.BlockSpec((None, S, CPP), lambda b: (b, 0, 0)),
                pl.BlockSpec((CPP, E), lambda b: (0, 0)),
                pl.BlockSpec((1, E), lambda b: (0, 0)),
                pl.BlockSpec((1, E), lambda b: (0, 0)),
                pl.BlockSpec((1, E), lambda b: (0, 0)),
                pl.BlockSpec((S, E), lambda b: (0, 0)),
            ],
            out_specs=pl.BlockSpec((None, S, E), lambda b: (b, 0, 0)),
        ),
        compiler_params=pltpu.CompilerParams(dimension_semantics=("parallel",)),
    )(xp, params["patch_w"], params["patch_b"],
      params["patch_ln_w"], params["patch_ln_b"], params["pos_embed"])


def encoder_stack(tok, enc, num_heads, eps=1e-5):
    B, S, E = tok.shape
    L = enc["wqkv"].shape[0]
    M = enc["w1"].shape[-1]

    tok_map = lambda b, l: (b, 0, 0)
    w_map = lambda b, l: (l, 0, 0)

    return pl.pallas_call(
        functools.partial(_encoder_stack_kernel, num_heads=num_heads, eps=eps),
        out_shape=jax.ShapeDtypeStruct((B, S, E), jnp.float32),
        grid_spec=pltpu.PrefetchScalarGridSpec(
            num_scalar_prefetch=0,
            grid=(B, L),
            in_specs=[
                pl.BlockSpec((None, S, E), tok_map),
                pl.BlockSpec((None, 1, E), w_map),        # ln1_w
                pl.BlockSpec((None, 1, E), w_map),        # ln1_b
                pl.BlockSpec((None, 1, E), w_map),        # lna_w
                pl.BlockSpec((None, 1, E), w_map),        # lna_b
                pl.BlockSpec((None, E, 3 * E), w_map),    # wqkv
                pl.BlockSpec((None, 1, 3 * E), w_map),    # bqkv
                pl.BlockSpec((None, E, E), w_map),        # wo
                pl.BlockSpec((None, 1, E), w_map),        # bo
                pl.BlockSpec((None, 1, E), w_map),        # ln2_w
                pl.BlockSpec((None, 1, E), w_map),        # ln2_b
                pl.BlockSpec((None, E, M), w_map),        # w1
                pl.BlockSpec((None, 1, M), w_map),        # b1
                pl.BlockSpec((None, M, E), w_map),        # w2
                pl.BlockSpec((None, 1, E), w_map),        # b2
            ],
            out_specs=pl.BlockSpec((None, S, E), tok_map),
        ),
        compiler_params=pltpu.CompilerParams(
            dimension_semantics=("parallel", "arbitrary"),
            vmem_limit_bytes=64 * 1024 * 1024),
    )(tok,
      enc["ln1_w"], enc["ln1_b"], enc["lna_w"], enc["lna_b"],
      enc["wqkv"], enc["bqkv"], enc["wo"], enc["bo"],
      enc["ln2_w"], enc["ln2_b"],
      enc["w1"], enc["b1"], enc["w2"], enc["b2"])


def upsample_block(x_nhwc, p):
    """Whole UpsampleBlock (conv3x3 + BN + ReLU + bilinear x2) per batch elem."""
    B, H, W, Cin = x_nhwc.shape
    Cout = p["w"].shape[-1]
    xpad = jnp.pad(x_nhwc, ((0, 0), (1, 1), (1, 1), (0, 0)))     # single pad
    cw = jnp.asarray(_interp_matrix(W)).astype(jnp.bfloat16)     # (2W, W)
    ch = jnp.asarray(_interp_matrix(H)).astype(jnp.bfloat16)     # (2H, H)

    return pl.pallas_call(
        functools.partial(_upsample_block_kernel, H=H, W=W),
        out_shape=jax.ShapeDtypeStruct((B, 2 * H, 2 * W, Cout), jnp.float32),
        grid_spec=pltpu.PrefetchScalarGridSpec(
            num_scalar_prefetch=0,
            grid=(B,),
            in_specs=[
                pl.BlockSpec((None, H + 2, W + 2, Cin), lambda b: (b, 0, 0, 0)),
                pl.BlockSpec((9 * Cin, Cout), lambda b: (0, 0)),
                pl.BlockSpec((1, Cout), lambda b: (0, 0)),
                pl.BlockSpec((1, Cout), lambda b: (0, 0)),
                pl.BlockSpec((2 * W, W), lambda b: (0, 0)),
                pl.BlockSpec((2 * H, H), lambda b: (0, 0)),
            ],
            out_specs=pl.BlockSpec((None, 2 * H, 2 * W, Cout),
                                   lambda b: (b, 0, 0, 0)),
        ),
        compiler_params=pltpu.CompilerParams(
            dimension_semantics=("parallel",),
            vmem_limit_bytes=64 * 1024 * 1024),
    )(xpad, p["w"], p["scale"], p["shift"], cw, ch)


def matmul_bias(x, w, b):
    M, K = x.shape
    N = w.shape[1]
    tm = _pick_tile(M)
    return pl.pallas_call(
        _matmul_bias_kernel,
        out_shape=jax.ShapeDtypeStruct((M, N), jnp.float32),
        grid_spec=pltpu.PrefetchScalarGridSpec(
            num_scalar_prefetch=0,
            grid=(M // tm,),
            in_specs=[pl.BlockSpec((tm, K), lambda i: (i, 0)),
                      pl.BlockSpec((K, N), lambda i: (0, 0)),
                      pl.BlockSpec((1, N), lambda i: (0, 0))],
            out_specs=pl.BlockSpec((tm, N), lambda i: (i, 0)),
        ),
        compiler_params=pltpu.CompilerParams(dimension_semantics=("parallel",)),
    )(x, w, b)


# ----------------------------------------------------------------------------
# forward pass
# ----------------------------------------------------------------------------
def vit_seg_forward(params, x, cfg):
    # x is NCHW (B, C, H, W), matching the PyTorch module.
    B, C, H, W = x.shape
    P, E = cfg["patch_size"], cfg["embed_dim"]
    nH, NC = cfg["num_heads"], cfg["num_classes"]
    Hp, Wp = H // P, W // P
    S = Hp * Wp

    # --- PatchEmbedding: stride-P conv == non-overlapping patchify matmul,
    #     fused with LayerNorm and the positional-encoding add.
    xp = (x.reshape(B, C, Hp, P, Wp, P)
           .transpose(0, 2, 4, 1, 3, 5)
           .reshape(B, S, C * P * P))
    tok = patch_embed(xp, params)                                # (B, S, E)

    # --- Transformer encoder: one fused pallas_call over all layers ---
    tok = encoder_stack(tok, params["enc"], nH)

    # --- tokens -> NHWC feature map (pure reshape) ---
    feat = tok.reshape(B, Hp, Wp, E)

    # --- UpsampleBlocks ---
    for up in params["ups"]:
        feat = upsample_block(feat, up)

    # --- SegmentationHead: 1x1 conv == per-pixel matmul (N padded to 128) ---
    Bc, Hc, Wc, Cc = feat.shape
    out = matmul_bias(feat.reshape(Bc * Hc * Wc, Cc),
                      params["head_w"], params["head_b"])
    out = out[:, :NC]
    return out.reshape(Bc, Hc, Wc, NC).transpose(0, 3, 1, 2)     # back to NCHW


# ----------------------------------------------------------------------------
# deterministic parameter init (shapes follow the PyTorch __init__)
# ----------------------------------------------------------------------------
def init_params(key, cfg):
    C, P, E = cfg["in_channels"], cfg["patch_size"], cfg["embed_dim"]
    M, L = cfg["mlp_dim"], cfg["num_layers"]
    NC, IMG = cfg["num_classes"], cfg["image_size"]
    n_patches = (IMG // P) ** 2
    keys = iter(jax.random.split(key, 4096))
    bf = jnp.bfloat16

    def nrm(shape, s=0.02, dtype=jnp.float32):
        return (s * jax.random.normal(next(keys), shape)).astype(dtype)

    params = {
        "patch_w": nrm((C * P * P, E), dtype=bf),
        "patch_b": nrm((1, E)),
        "patch_ln_w": jnp.ones((1, E), jnp.float32),
        "patch_ln_b": jnp.zeros((1, E), jnp.float32),
        # lazily-created torch.randn(1, N, E) pos-embed, materialized here
        "pos_embed": jax.random.normal(next(keys), (n_patches, E), jnp.float32),
        "ups": [],
    }

    # transformer weights stacked on a leading layer axis
    params["enc"] = {
        "ln1_w": jnp.ones((L, 1, E), jnp.float32),
        "ln1_b": jnp.zeros((L, 1, E), jnp.float32),
        "lna_w": jnp.ones((L, 1, E), jnp.float32),
        "lna_b": jnp.zeros((L, 1, E), jnp.float32),
        "ln2_w": jnp.ones((L, 1, E), jnp.float32),
        "ln2_b": jnp.zeros((L, 1, E), jnp.float32),
        "wqkv": nrm((L, E, 3 * E), dtype=bf),   # in_proj_weight^T, fused q|k|v
        "bqkv": nrm((L, 1, 3 * E)),
        "wo": nrm((L, E, E), dtype=bf),         # out_proj.weight^T
        "bo": nrm((L, 1, E)),
        "w1": nrm((L, E, M), dtype=bf),
        "b1": nrm((L, 1, M)),
        "w2": nrm((L, M, E), dtype=bf),
        "b2": nrm((L, 1, E)),
    }

    n_up = int(math.log2(IMG // P))
    cin = E
    for _ in range(n_up):
        cout = cin // 2 if cin > E // 4 else E // 4
        w = nrm((cout, cin, 3, 3))                                   # torch layout
        wflat = jnp.transpose(w, (2, 3, 1, 0)).reshape(9 * cin, cout)
        b_conv = nrm((cout,))
        bn_gamma = jnp.ones((cout,), jnp.float32)
        bn_beta = jnp.zeros((cout,), jnp.float32)
        bn_mean = jnp.zeros((cout,), jnp.float32)                    # eval stats
        bn_var = jnp.ones((cout,), jnp.float32)
        s = bn_gamma / jnp.sqrt(bn_var + 1e-5)
        t = bn_beta - bn_mean * s + s * b_conv                       # bias folded
        params["ups"].append({"w": wflat.astype(bf),
                              "scale": s.reshape(1, cout),
                              "shift": t.reshape(1, cout)})
        cin = cout

    # segmentation head: N padded to 128 lanes (sliced back in the wrapper)
    n_pad = 128
    hw = jnp.zeros((E // 4, n_pad), jnp.float32).at[:, :NC].set(nrm((E // 4, NC)))
    hb = jnp.zeros((1, n_pad), jnp.float32).at[:, :NC].set(nrm((1, NC)))
    params["head_w"] = hw.astype(bf)
    params["head_b"] = hb
    return params


# ----------------------------------------------------------------------------
if __name__ == "__main__":
    cfg = dict(in_channels=4, patch_size=4, embed_dim=32, num_heads=4,
               mlp_dim=64, num_layers=2, num_classes=3, image_size=16)
    key = jax.random.PRNGKey(0)
    kx, kp = jax.random.split(key)
    x = jax.random.normal(
        kx, (2, cfg["in_channels"], cfg["image_size"], cfg["image_size"]),
        jnp.float32)
    params = init_params(kp, cfg)

    fwd = jax.jit(functools.partial(vit_seg_forward, cfg=cfg))
    out = jax.block_until_ready(fwd(params, x))

    assert out.shape == (2, cfg["num_classes"], cfg["image_size"],
                         cfg["image_size"]), out.shape
    assert out.dtype == jnp.float32
    assert bool(jnp.all(jnp.isfinite(out)))
    print("KERNEL_OK")
</pallas_src>

<mosaic_0001>
module attributes {stable_mosaic.version = 11 : i64} {
  func.func @_patch_embed_kernel(%arg0: i32, %arg1: memref<1x16x64xf32, #tpu.memory_space<vmem>>, %arg2: memref<64x32xbf16, #tpu.memory_space<vmem>>, %arg3: memref<1x32xf32, #tpu.memory_space<vmem>>, %arg4: memref<1x32xf32, #tpu.memory_space<vmem>>, %arg5: memref<1x32xf32, #tpu.memory_space<vmem>>, %arg6: memref<16x32xf32, #tpu.memory_space<vmem>>, %arg7: memref<1x16x32xf32, #tpu.memory_space<vmem>>) attributes {dimension_semantics = [#tpu.dimension_semantics<parallel>], iteration_bounds = array<i64: 2>, scalar_prefetch = 0 : i64, scratch_operands = 0 : i64, tpu.core_type = #tpu.core_type<tc>, window_params = [{transform_indices = @transform_0, window_bounds = array<i64: 1, 16, 64>}, {pipeline_mode = #tpu.pipeline_mode<synchronous>, transform_indices = @transform_1, window_bounds = array<i64: 64, 32>}, {pipeline_mode = #tpu.pipeline_mode<synchronous>, transform_indices = @transform_2, window_bounds = array<i64: 1, 32>}, {pipeline_mode = #tpu.pipeline_mode<synchronous>, transform_indices = @transform_3, window_bounds = array<i64: 1, 32>}, {pipeline_mode = #tpu.pipeline_mode<synchronous>, transform_indices = @transform_4, window_bounds = array<i64: 1, 32>}, {pipeline_mode = #tpu.pipeline_mode<synchronous>, transform_indices = @transform_5, window_bounds = array<i64: 16, 32>}, {transform_indices = @transform_6, window_bounds = array<i64: 1, 16, 32>}]} {
    %c0 = arith.constant 0 : index
    %c0_0 = arith.constant 0 : index
    %c0_1 = arith.constant 0 : index
    %0 = vector.load %arg1[%c0, %c0_0, %c0_1] : memref<1x16x64xf32, #tpu.memory_space<vmem>>, vector<1x16x64xf32>
    %1 = vector.shape_cast %0 : vector<1x16x64xf32> to vector<16x64xf32>
    %2 = arith.truncf %1 : vector<16x64xf32> to vector<16x64xbf16>
    %c0_2 = arith.constant 0 : index
    %c0_3 = arith.constant 0 : index
    %3 = vector.load %arg2[%c0_2, %c0_3] : memref<64x32xbf16, #tpu.memory_space<vmem>>, vector<64x32xbf16>
    %cst = arith.constant dense<0.000000e+00> : vector<16x32xf32>
    %4 = tpu.matmul %2, %3, %cst {dimension_numbers = #tpu.dot_dimension_numbers<[1], [0], [0], [1], [0, 0, 1, 1], [], []>} : vector<16x64xbf16>, vector<64x32xbf16>, vector<16x32xf32> -> vector<16x32xf32>
    %c0_4 = arith.constant 0 : index
    %c0_5 = arith.constant 0 : index
    %5 = vector.load %arg3[%c0_4, %c0_5] : memref<1x32xf32, #tpu.memory_space<vmem>>, vector<1x32xf32>
    %6 = vector.broadcast %5 : vector<1x32xf32> to vector<16x32xf32>
    %7 = arith.addf %4, %6 : vector<16x32xf32>
    %cst_6 = arith.constant dense<0.000000e+00> : vector<16xf32>
    %8 = vector.multi_reduction <add>, %7, %cst_6 [1] : vector<16x32xf32> to vector<16xf32>
    %9 = vector.shape_cast %8 : vector<16xf32> to vector<16x1xf32>
    %cst_7 = arith.constant 3.200000e+01 : f32
    %10 = vector.broadcast %cst_7 : f32 to vector<16x1xf32>
    %11 = arith.divf %9, %10 : vector<16x1xf32>
    %12 = arith.mulf %7, %7 : vector<16x32xf32>
    %cst_8 = arith.constant dense<0.000000e+00> : vector<16xf32>
    %13 = vector.multi_reduction <add>, %12, %cst_8 [1] : vector<16x32xf32> to vector<16xf32>
    %14 = vector.shape_cast %13 : vector<16xf32> to vector<16x1xf32>
    %cst_9 = arith.constant 3.200000e+01 : f32
    %15 = vector.broadcast %cst_9 : f32 to vector<16x1xf32>
    %16 = arith.divf %14, %15 : vector<16x1xf32>
    %17 = arith.mulf %11, %11 : vector<16x1xf32>
    %18 = arith.subf %16, %17 : vector<16x1xf32>
    %19 = vector.broadcast %11 : vector<16x1xf32> to vector<16x32xf32>
    %20 = arith.subf %7, %19 : vector<16x32xf32>
    %cst_10 = arith.constant 9.99999974E-6 : f32
    %21 = vector.broadcast %cst_10 : f32 to vector<16x1xf32>
    %22 = arith.addf %18, %21 : vector<16x1xf32>
    %23 = math.rsqrt %22 : vector<16x1xf32>
    %24 = vector.broadcast %23 : vector<16x1xf32> to vector<16x32xf32>
    %25 = arith.mulf %20, %24 : vector<16x32xf32>
    %c0_11 = arith.constant 0 : index
    %c0_12 = arith.constant 0 : index
    %26 = vector.load %arg4[%c0_11, %c0_12] : memref<1x32xf32, #tpu.memory_space<vmem>>, vector<1x32xf32>
    %27 = vector.broadcast %26 : vector<1x32xf32> to vector<16x32xf32>
    %28 = arith.mulf %25, %27 : vector<16x32xf32>
    %c0_13 = arith.constant 0 : index
    %c0_14 = arith.constant 0 : index
    %29 = vector.load %arg5[%c0_13, %c0_14] : memref<1x32xf32, #tpu.memory_space<vmem>>, vector<1x32xf32>
    %30 = vector.broadcast %29 : vector<1x32xf32> to vector<16x32xf32>
    %31 = arith.addf %28, %30 : vector<16x32xf32>
    %c0_15 = arith.constant 0 : index
    %c0_16 = arith.constant 0 : index
    %32 = vector.load %arg6[%c0_15, %c0_16] : memref<16x32xf32, #tpu.memory_space<vmem>>, vector<16x32xf32>
    %33 = arith.addf %31, %32 : vector<16x32xf32>
    %c0_17 = arith.constant 0 : index
    %c0_18 = arith.constant 0 : index
    %c0_19 = arith.constant 0 : index
    %34 = vector.load %arg7[%c0_17, %c0_18, %c0_19] : memref<1x16x32xf32, #tpu.memory_space<vmem>>, vector<1x16x32xf32>
    %35 = vector.shape_cast %34 : vector<1x16x32xf32> to vector<16x32xf32>
    %36 = vector.shape_cast %33 : vector<16x32xf32> to vector<1x16x32xf32>
    tpu.vector_store %arg7[%c0_17, %c0_18, %c0_19], %36 {strides = array<i32>} : memref<1x16x32xf32, #tpu.memory_space<vmem>>, vector<1x16x32xf32>,
    return
  }
  func.func @transform_0(%arg0: i32) -> (i32, i32, i32) {
    %c0_i32 = arith.constant 0 : i32
    %c0_i32_0 = arith.constant 0 : i32
    %c0_i32_1 = arith.constant 0 : i32
    return %arg0, %c0_i32, %c0_i32_0 : i32, i32, i32
  }
  func.func @transform_1(%arg0: i32) -> (i32, i32) {
    %c0_i32 = arith.constant 0 : i32
    %c0_i32_0 = arith.constant 0 : i32
    %c0_i32_1 = arith.constant 0 : i32
    return %c0_i32, %c0_i32_0 : i32, i32
  }
  func.func @transform_2(%arg0: i32) -> (i32, i32) {
    %c0_i32 = arith.constant 0 : i32
    %c0_i32_0 = arith.constant 0 : i32
    %c0_i32_1 = arith.constant 0 : i32
    return %c0_i32, %c0_i32_0 : i32, i32
  }
  func.func @transform_3(%arg0: i32) -> (i32, i32) {
    %c0_i32 = arith.constant 0 : i32
    %c0_i32_0 = arith.constant 0 : i32
    %c0_i32_1 = arith.constant 0 : i32
    return %c0_i32, %c0_i32_0 : i32, i32
  }
  func.func @transform_4(%arg0: i32) -> (i32, i32) {
    %c0_i32 = arith.constant 0 : i32
    %c0_i32_0 = arith.constant 0 : i32
    %c0_i32_1 = arith.constant 0 : i32
    return %c0_i32, %c0_i32_0 : i32, i32
  }
  func.func @transform_5(%arg0: i32) -> (i32, i32) {
    %c0_i32 = arith.constant 0 : i32
    %c0_i32_0 = arith.constant 0 : i32
    %c0_i32_1 = arith.constant 0 : i32
    return %c0_i32, %c0_i32_0 : i32, i32
  }
  func.func @transform_6(%arg0: i32) -> (i32, i32, i32) {
    %c0_i32 = arith.constant 0 : i32
    %c0_i32_0 = arith.constant 0 : i32
    %c0_i32_1 = arith.constant 0 : i32
    return %arg0, %c0_i32, %c0_i32_0 : i32, i32, i32
  }
}

module attributes {stable_mosaic.version = 11 : i64} {
  func.func @_encoder_stack_kernel(%arg0: i32, %arg1: i32, %arg2: memref<1x16x32xf32, #tpu.memory_space<vmem>>, %arg3: memref<1x1x32xf32, #tpu.memory_space<vmem>>, %arg4: memref<1x1x32xf32, #tpu.memory_space<vmem>>, %arg5: memref<1x1x32xf32, #tpu.memory_space<vmem>>, %arg6: memref<1x1x32xf32, #tpu.memory_space<vmem>>, %arg7: memref<1x32x96xbf16, #tpu.memory_space<vmem>>, %arg8: memref<1x1x96xf32, #tpu.memory_space<vmem>>, %arg9: memref<1x32x32xbf16, #tpu.memory_space<vmem>>, %arg10: memref<1x1x32xf32, #tpu.memory_space<vmem>>, %arg11: memref<1x1x32xf32, #tpu.memory_space<vmem>>, %arg12: memref<1x1x32xf32, #tpu.memory_space<vmem>>, %arg13: memref<1x32x64xbf16, #tpu.memory_space<vmem>>, %arg14: memref<1x1x64xf32, #tpu.memory_space<vmem>>, %arg15: memref<1x64x32xbf16, #tpu.memory_space<vmem>>, %arg16: memref<1x1x32xf32, #tpu.memory_space<vmem>>, %arg17: memref<1x16x32xf32, #tpu.memory_space<vmem>>) attributes {dimension_semantics = [#tpu.dimension_semantics<parallel>, #tpu.dimension_semantics<arbitrary>], iteration_bounds = array<i64: 2, 2>, scalar_prefetch = 0 : i64, scratch_operands = 0 : i64, tpu.core_type = #tpu.core_type<tc>, window_params = [{transform_indices = @transform_0, window_bounds = array<i64: 1, 16, 32>}, {transform_indices = @transform_1, window_bounds = array<i64: 1, 1, 32>}, {transform_indices = @transform_2, window_bounds = array<i64: 1, 1, 32>}, {transform_indices = @transform_3, window_bounds = array<i64: 1, 1, 32>}, {transform_indices = @transform_4, window_bounds = array<i64: 1, 1, 32>}, {transform_indices = @transform_5, window_bounds = array<i64: 1, 32, 96>}, {transform_indices = @transform_6, window_bounds = array<i64: 1, 1, 96>}, {transform_indices = @transform_7, window_bounds = array<i64: 1, 32, 32>}, {transform_indices = @transform_8, window_bounds = array<i64: 1, 1, 32>}, {transform_indices = @transform_9, window_bounds = array<i64: 1, 1, 32>}, {transform_indices = @transform_10, window_bounds = array<i64: 1, 1, 32>}, {transform_indices = @transform_11, window_bounds = array<i64: 1, 32, 64>}, {transform_indices = @transform_12, window_bounds = array<i64: 1, 1, 64>}, {transform_indices = @transform_13, window_bounds = array<i64: 1, 64, 32>}, {transform_indices = @transform_14, window_bounds = array<i64: 1, 1, 32>}, {transform_indices = @transform_15, window_bounds = array<i64: 1, 16, 32>}]} {
    %c0_i32 = arith.constant 0 : i32
    %0 = arith.cmpi eq, %arg1, %c0_i32 : i32
    %1 = arith.extui %0 : i1 to i32
    %c0_i32_0 = arith.constant 0 : i32
    %2 = arith.cmpi ne, %1, %c0_i32_0 : i32
    scf.if %2 {
      %c0_87 = arith.constant 0 : index
      %c0_88 = arith.constant 0 : index
      %c0_89 = arith.constant 0 : index
      %211 = vector.load %arg2[%c0_87, %c0_88, %c0_89] : memref<1x16x32xf32, #tpu.memory_space<vmem>>, vector<1x16x32xf32>
      %212 = vector.shape_cast %211 : vector<1x16x32xf32> to vector<16x32xf32>
      %c0_90 = arith.constant 0 : index
      %c0_91 = arith.constant 0 : index
      %c0_92 = arith.constant 0 : index
      %213 = vector.load %arg17[%c0_90, %c0_91, %c0_92] : memref<1x16x32xf32, #tpu.memory_space<vmem>>, vector<1x16x32xf32>
      %214 = vector.shape_cast %213 : vector<1x16x32xf32> to vector<16x32xf32>
      %215 = vector.shape_cast %212 : vector<16x32xf32> to vector<1x16x32xf32>
      tpu.vector_store %arg17[%c0_90, %c0_91, %c0_92], %215 {strides = array<i32>} : memref<1x16x32xf32, #tpu.memory_space<vmem>>, vector<1x16x32xf32>,
    } else {
    }
    %c0 = arith.constant 0 : index
    %c0_1 = arith.constant 0 : index
    %c0_2 = arith.constant 0 : index
    %3 = vector.load %arg17[%c0, %c0_1, %c0_2] : memref<1x16x32xf32, #tpu.memory_space<vmem>>, vector<1x16x32xf32>
    %4 = vector.shape_cast %3 : vector<1x16x32xf32> to vector<16x32xf32>
    %cst = arith.constant dense<0.000000e+00> : vector<16xf32>
    %5 = vector.multi_reduction <add>, %4, %cst [1] : vector<16x32xf32> to vector<16xf32>
    %6 = vector.shape_cast %5 : vector<16xf32> to vector<16x1xf32>
    %cst_3 = arith.constant 3.200000e+01 : f32
    %7 = vector.broadcast %cst_3 : f32 to vector<16x1xf32>
    %8 = arith.divf %6, %7 : vector<16x1xf32>
    %9 = arith.mulf %4, %4 : vector<16x32xf32>
    %cst_4 = arith.constant dense<0.000000e+00> : vector<16xf32>
    %10 = vector.multi_reduction <add>, %9, %cst_4 [1] : vector<16x32xf32> to vector<16xf32>
    %11 = vector.shape_cast %10 : vector<16xf32> to vector<16x1xf32>
    %cst_5 = arith.constant 3.200000e+01 : f32
    %12 = vector.broadcast %cst_5 : f32 to vector<16x1xf32>
    %13 = arith.divf %11, %12 : vector<16x1xf32>
    %14 = arith.mulf %8, %8 : vector<16x1xf32>
    %15 = arith.subf %13, %14 : vector<16x1xf32>
    %16 = vector.broadcast %8 : vector<16x1xf32> to vector<16x32xf32>
    %17 = arith.subf %4, %16 : vector<16x32xf32>
    %cst_6 = arith.constant 9.99999974E-6 : f32
    %18 = vector.broadcast %cst_6 : f32 to vector<16x1xf32>
    %19 = arith.addf %15, %18 : vector<16x1xf32>
    %20 = math.rsqrt %19 : vector<16x1xf32>
    %21 = vector.broadcast %20 : vector<16x1xf32> to vector<16x32xf32>
    %22 = arith.mulf %17, %21 : vector<16x32xf32>
    %c0_7 = arith.constant 0 : index
    %c0_8 = arith.constant 0 : index
    %c0_9 = arith.constant 0 : index
    %23 = vector.load %arg3[%c0_7, %c0_8, %c0_9] : memref<1x1x32xf32, #tpu.memory_space<vmem>>, vector<1x1x32xf32>
    %24 = vector.shape_cast %23 : vector<1x1x32xf32> to vector<1x32xf32>
    %25 = vector.broadcast %24 : vector<1x32xf32> to vector<16x32xf32>
    %26 = arith.mulf %22, %25 : vector<16x32xf32>
    %c0_10 = arith.constant 0 : index
    %c0_11 = arith.constant 0 : index
    %c0_12 = arith.constant 0 : index
    %27 = vector.load %arg4[%c0_10, %c0_11, %c0_12] : memref<1x1x32xf32, #tpu.memory_space<vmem>>, vector<1x1x32xf32>
    %28 = vector.shape_cast %27 : vector<1x1x32xf32> to vector<1x32xf32>
    %29 = vector.broadcast %28 : vector<1x32xf32> to vector<16x32xf32>
    %30 = arith.addf %26, %29 : vector<16x32xf32>
    %cst_13 = arith.constant dense<0.000000e+00> : vector<16xf32>
    %31 = vector.multi_reduction <add>, %30, %cst_13 [1] : vector<16x32xf32> to vector<16xf32>
    %32 = vector.shape_cast %31 : vector<16xf32> to vector<16x1xf32>
    %cst_14 = arith.constant 3.200000e+01 : f32
    %33 = vector.broadcast %cst_14 : f32 to vector<16x1xf32>
    %34 = arith.divf %32, %33 : vector<16x1xf32>
    %35 = arith.mulf %30, %30 : vector<16x32xf32>
    %cst_15 = arith.constant dense<0.000000e+00> : vector<16xf32>
    %36 = vector.multi_reduction <add>, %35, %cst_15 [1] : vector<16x32xf32> to vector<16xf32>
    %37 = vector.shape_cast %36 : vector<16xf32> to vector<16x1xf32>
    %cst_16 = arith.constant 3.200000e+01 : f32
    %38 = vector.broadcast %cst_16 : f32 to vector<16x1xf32>
    %39 = arith.divf %37, %38 : vector<16x1xf32>
    %40 = arith.mulf %34, %34 : vector<16x1xf32>
    %41 = arith.subf %39, %40 : vector<16x1xf32>
    %42 = vector.broadcast %34 : vector<16x1xf32> to vector<16x32xf32>
    %43 = arith.subf %30, %42 : vector<16x32xf32>
    %cst_17 = arith.constant 9.99999974E-6 : f32
    %44 = vector.broadcast %cst_17 : f32 to vector<16x1xf32>
    %45 = arith.addf %41, %44 : vector<16x1xf32>
    %46 = math.rsqrt %45 : vector<16x1xf32>
    %47 = vector.broadcast %46 : vector<16x1xf32> to vector<16x32xf32>
    %48 = arith.mulf %43, %47 : vector<16x32xf32>
    %c0_18 = arith.constant 0 : index
    %c0_19 = arith.constant 0 : index
    %c0_20 = arith.constant 0 : index
    %49 = vector.load %arg5[%c0_18, %c0_19, %c0_20] : memref<1x1x32xf32, #tpu.memory_space<vmem>>, vector<1x1x32xf32>
    %50 = vector.shape_cast %49 : vector<1x1x32xf32> to vector<1x32xf32>
    %51 = vector.broadcast %50 : vector<1x32xf32> to vector<16x32xf32>
    %52 = arith.mulf %48, %51 : vector<16x32xf32>
    %c0_21 = arith.constant 0 : index
    %c0_22 = arith.constant 0 : index
    %c0_23 = arith.constant 0 : index
    %53 = vector.load %arg6[%c0_21, %c0_22, %c0_23] : memref<1x1x32xf32, #tpu.memory_space<vmem>>, vector<1x1x32xf32>
    %54 = vector.shape_cast %53 : vector<1x1x32xf32> to vector<1x32xf32>
    %55 = vector.broadcast %54 : vector<1x32xf32> to vector<16x32xf32>
    %56 = arith.addf %52, %55 : vector<16x32xf32>
    %57 = arith.truncf %56 : vector<16x32xf32> to vector<16x32xbf16>
    %c0_24 = arith.constant 0 : index
    %c0_25 = arith.constant 0 : index
    %c0_26 = arith.constant 0 : index
    %58 = vector.load %arg7[%c0_24, %c0_25, %c0_26] : memref<1x32x96xbf16, #tpu.memory_space<vmem>>, vector<1x32x96xbf16>
    %59 = vector.shape_cast %58 : vector<1x32x96xbf16> to vector<32x96xbf16>
    %cst_27 = arith.constant dense<0.000000e+00> : vector<16x96xf32>
    %60 = tpu.matmul %57, %59, %cst_27 {dimension_numbers = #tpu.dot_dimension_numbers<[1], [0], [0], [1], [0, 0, 1, 1], [], []>} : vector<16x32xbf16>, vector<32x96xbf16>, vector<16x96xf32> -> vector<16x96xf32>
    %c0_28 = arith.constant 0 : index
    %c0_29 = arith.constant 0 : index
    %c0_30 = arith.constant 0 : index
    %61 = vector.load %arg8[%c0_28, %c0_29, %c0_30] : memref<1x1x96xf32, #tpu.memory_space<vmem>>, vector<1x1x96xf32>
    %62 = vector.shape_cast %61 : vector<1x1x96xf32> to vector<1x96xf32>
    %63 = vector.broadcast %62 : vector<1x96xf32> to vector<16x96xf32>
    %64 = arith.addf %60, %63 : vector<16x96xf32>
    %65 = vector.extract_strided_slice %64 {offsets = [0, 0], sizes = [16, 32], strides = [1, 1]} : vector<16x96xf32> to vector<16x32xf32>
    %cst_31 = arith.constant 0.353553385 : f32
    %66 = vector.broadcast %cst_31 : f32 to vector<16x32xf32>
    %67 = arith.mulf %65, %66 : vector<16x32xf32>
    %68 = vector.extract_strided_slice %64 {offsets = [0, 32], sizes = [16, 32], strides = [1, 1]} : vector<16x96xf32> to vector<16x32xf32>
    %69 = vector.extract_strided_slice %64 {offsets = [0, 64], sizes = [16, 32], strides = [1, 1]} : vector<16x96xf32> to vector<16x32xf32>
    %70 = vector.extract_strided_slice %67 {offsets = [0, 0], sizes = [16, 8], strides = [1, 1]} : vector<16x32xf32> to vector<16x8xf32>
    %71 = arith.truncf %70 : vector<16x8xf32> to vector<16x8xbf16>
    %72 = vector.extract_strided_slice %68 {offsets = [0, 0], sizes = [16, 8], strides = [1, 1]} : vector<16x32xf32> to vector<16x8xf32>
    %73 = arith.truncf %72 : vector<16x8xf32> to vector<16x8xbf16>
    %cst_32 = arith.constant dense<0.000000e+00> : vector<16x16xf32>
    %74 = tpu.matmul %71, %73, %cst_32 {dimension_numbers = #tpu.dot_dimension_numbers<[1], [1], [0], [0], [0, 0, 1, 0], [], []>} : vector<16x8xbf16>, vector<16x8xbf16>, vector<16x16xf32> -> vector<16x16xf32>
    %cst_33 = arith.constant dense<0xFF800000> : vector<16xf32>
    %75 = vector.multi_reduction <maximumf>, %74, %cst_33 [1] : vector<16x16xf32> to vector<16xf32>
    %76 = vector.shape_cast %75 : vector<16xf32> to vector<16x1xf32>
    %77 = vector.broadcast %76 : vector<16x1xf32> to vector<16x16xf32>
    %78 = arith.subf %74, %77 : vector<16x16xf32>
    %79 = math.exp %78 : vector<16x16xf32>
    %cst_34 = arith.constant dense<0.000000e+00> : vector<16xf32>
    %80 = vector.multi_reduction <add>, %79, %cst_34 [1] : vector<16x16xf32> to vector<16xf32>
    %81 = vector.shape_cast %80 : vector<16xf32> to vector<16x1xf32>
    %82 = vector.broadcast %81 : vector<16x1xf32> to vector<16x16xf32>
    %83 = arith.divf %79, %82 : vector<16x16xf32>
    %84 = arith.truncf %83 : vector<16x16xf32> to vector<16x16xbf16>
    %85 = vector.extract_strided_slice %69 {offsets = [0, 0], sizes = [16, 8], strides = [1, 1]} : vector<16x32xf32> to vector<16x8xf32>
    %86 = arith.truncf %85 : vector<16x8xf32> to vector<16x8xbf16>
    %cst_35 = arith.constant dense<0.000000e+00> : vector<16x8xf32>
    %87 = tpu.matmul %84, %86, %cst_35 {dimension_numbers = #tpu.dot_dimension_numbers<[1], [0], [0], [1], [0, 0, 1, 1], [], []>} : vector<16x16xbf16>, vector<16x8xbf16>, vector<16x8xf32> -> vector<16x8xf32>
    %88 = vector.extract_strided_slice %67 {offsets = [0, 8], sizes = [16, 8], strides = [1, 1]} : vector<16x32xf32> to vector<16x8xf32>
    %89 = arith.truncf %88 : vector<16x8xf32> to vector<16x8xbf16>
    %90 = vector.extract_strided_slice %68 {offsets = [0, 8], sizes = [16, 8], strides = [1, 1]} : vector<16x32xf32> to vector<16x8xf32>
    %91 = arith.truncf %90 : vector<16x8xf32> to vector<16x8xbf16>
    %cst_36 = arith.constant dense<0.000000e+00> : vector<16x16xf32>
    %92 = tpu.matmul %89, %91, %cst_36 {dimension_numbers = #tpu.dot_dimension_numbers<[1], [1], [0], [0], [0, 0, 1, 0], [], []>} : vector<16x8xbf16>, vector<16x8xbf16>, vector<16x16xf32> -> vector<16x16xf32>
    %cst_37 = arith.constant dense<0xFF800000> : vector<16xf32>
    %93 = vector.multi_reduction <maximumf>, %92, %cst_37 [1] : vector<16x16xf32> to vector<16xf32>
    %94 = vector.shape_cast %93 : vector<16xf32> to vector<16x1xf32>
    %95 = vector.broadcast %94 : vector<16x1xf32> to vector<16x16xf32>
    %96 = arith.subf %92, %95 : vector<16x16xf32>
    %97 = math.exp %96 : vector<16x16xf32>
    %cst_38 = arith.constant dense<0.000000e+00> : vector<16xf32>
    %98 = vector.multi_reduction <add>, %97, %cst_38 [1] : vector<16x16xf32> to vector<16xf32>
    %99 = vector.shape_cast %98 : vector<16xf32> to vector<16x1xf32>
    %100 = vector.broadcast %99 : vector<16x1xf32> to vector<16x16xf32>
    %101 = arith.divf %97, %100 : vector<16x16xf32>
    %102 = arith.truncf %101 : vector<16x16xf32> to vector<16x16xbf16>
    %103 = vector.extract_strided_slice %69 {offsets = [0, 8], sizes = [16, 8], strides = [1, 1]} : vector<16x32xf32> to vector<16x8xf32>
    %104 = arith.truncf %103 : vector<16x8xf32> to vector<16x8xbf16>
    %cst_39 = arith.constant dense<0.000000e+00> : vector<16x8xf32>
    %105 = tpu.matmul %102, %104, %cst_39 {dimension_numbers = #tpu.dot_dimension_numbers<[1], [0], [0], [1], [0, 0, 1, 1], [], []>} : vector<16x16xbf16>, vector<16x8xbf16>, vector<16x8xf32> -> vector<16x8xf32>
    %106 = vector.extract_strided_slice %67 {offsets = [0, 16], sizes = [16, 8], strides = [1, 1]} : vector<16x32xf32> to vector<16x8xf32>
    %107 = arith.truncf %106 : vector<16x8xf32> to vector<16x8xbf16>
    %108 = vector.extract_strided_slice %68 {offsets = [0, 16], sizes = [16, 8], strides = [1, 1]} : vector<16x32xf32> to vector<16x8xf32>
    %109 = arith.truncf %108 : vector<16x8xf32> to vector<16x8xbf16>
    %cst_40 = arith.constant dense<0.000000e+00> : vector<16x16xf32>
    %110 = tpu.matmul %107, %109, %cst_40 {dimension_numbers = #tpu.dot_dimension_numbers<[1], [1], [0], [0], [0, 0, 1, 0], [], []>} : vector<16x8xbf16>, vector<16x8xbf16>, vector<16x16xf32> -> vector<16x16xf32>
    %cst_41 = arith.constant dense<0xFF800000> : vector<16xf32>
    %111 = vector.multi_reduction <maximumf>, %110, %cst_41 [1] : vector<16x16xf32> to vector<16xf32>
    %112 = vector.shape_cast %111 : vector<16xf32> to vector<16x1xf32>
    %113 = vector.broadcast %112 : vector<16x1xf32> to vector<16x16xf32>
    %114 = arith.subf %110, %113 : vector<16x16xf32>
    %115 = math.exp %114 : vector<16x16xf32>
    %cst_42 = arith.constant dense<0.000000e+00> : vector<16xf32>
    %116 = vector.multi_reduction <add>, %115, %cst_42 [1] : vector<16x16xf32> to vector<16xf32>
    %117 = vector.shape_cast %116 : vector<16xf32> to vector<16x1xf32>
    %118 = vector.broadcast %117 : vector<16x1xf32> to vector<16x16xf32>
    %119 = arith.divf %115, %118 : vector<16x16xf32>
    %120 = arith.truncf %119 : vector<16x16xf32> to vector<16x16xbf16>
    %121 = vector.extract_strided_slice %69 {offsets = [0, 16], sizes = [16, 8], strides = [1, 1]} : vector<16x32xf32> to vector<16x8xf32>
    %122 = arith.truncf %121 : vector<16x8xf32> to vector<16x8xbf16>
    %cst_43 = arith.constant dense<0.000000e+00> : vector<16x8xf32>
    %123 = tpu.matmul %120, %122, %cst_43 {dimension_numbers = #tpu.dot_dimension_numbers<[1], [0], [0], [1], [0, 0, 1, 1], [], []>} : vector<16x16xbf16>, vector<16x8xbf16>, vector<16x8xf32> -> vector<16x8xf32>
    %124 = vector.extract_strided_slice %67 {offsets = [0, 24], sizes = [16, 8], strides = [1, 1]} : vector<16x32xf32> to vector<16x8xf32>
    %125 = arith.truncf %124 : vector<16x8xf32> to vector<16x8xbf16>
    %126 = vector.extract_strided_slice %68 {offsets = [0, 24], sizes = [16, 8], strides = [1, 1]} : vector<16x32xf32> to vector<16x8xf32>
    %127 = arith.truncf %126 : vector<16x8xf32> to vector<16x8xbf16>
    %cst_44 = arith.constant dense<0.000000e+00> : vector<16x16xf32>
    %128 = tpu.matmul %125, %127, %cst_44 {dimension_numbers = #tpu.dot_dimension_numbers<[1], [1], [0], [0], [0, 0, 1, 0], [], []>} : vector<16x8xbf16>, vector<16x8xbf16>, vector<16x16xf32> -> vector<16x16xf32>
    %cst_45 = arith.constant dense<0xFF800000> : vector<16xf32>
    %129 = vector.multi_reduction <maximumf>, %128, %cst_45 [1] : vector<16x16xf32> to vector<16xf32>
    %130 = vector.shape_cast %129 : vector<16xf32> to vector<16x1xf32>
    %131 = vector.broadcast %130 : vector<16x1xf32> to vector<16x16xf32>
    %132 = arith.subf %128, %131 : vector<16x16xf32>
    %133 = math.exp %132 : vector<16x16xf32>
    %cst_46 = arith.constant dense<0.000000e+00> : vector<16xf32>
    %134 = vector.multi_reduction <add>, %133, %cst_46 [1] : vector<16x16xf32> to vector<16xf32>
    %135 = vector.shape_cast %134 : vector<16xf32> to vector<16x1xf32>
    %136 = vector.broadcast %135 : vector<16x1xf32> to vector<16x16xf32>
    %137 = arith.divf %133, %136 : vector<16x16xf32>
    %138 = arith.truncf %137 : vector<16x16xf32> to vector<16x16xbf16>
    %139 = vector.extract_strided_slice %69 {offsets = [0, 24], sizes = [16, 8], strides = [1, 1]} : vector<16x32xf32> to vector<16x8xf32>
    %140 = arith.truncf %139 : vector<16x8xf32> to vector<16x8xbf16>
    %cst_47 = arith.constant dense<0.000000e+00> : vector<16x8xf32>
    %141 = tpu.matmul %138, %140, %cst_47 {dimension_numbers = #tpu.dot_dimension_numbers<[1], [0], [0], [1], [0, 0, 1, 1], [], []>} : vector<16x16xbf16>, vector<16x8xbf16>, vector<16x8xf32> -> vector<16x8xf32>
    %142 = tpu.concatenate %87, %105, %123, %141 in 1 : vector<16x8xf32>, vector<16x8xf32>, vector<16x8xf32>, vector<16x8xf32> -> vector<16x32xf32>
    %143 = arith.truncf %142 : vector<16x32xf32> to vector<16x32xbf16>
    %c0_48 = arith.constant 0 : index
    %c0_49 = arith.constant 0 : index
    %c0_50 = arith.constant 0 : index
    %144 = vector.load %arg9[%c0_48, %c0_49, %c0_50] : memref<1x32x32xbf16, #tpu.memory_space<vmem>>, vector<1x32x32xbf16>
    %145 = vector.shape_cast %144 : vector<1x32x32xbf16> to vector<32x32xbf16>
    %cst_51 = arith.constant dense<0.000000e+00> : vector<16x32xf32>
    %146 = tpu.matmul %143, %145, %cst_51 {dimension_numbers = #tpu.dot_dimension_numbers<[1], [0], [0], [1], [0, 0, 1, 1], [], []>} : vector<16x32xbf16>, vector<32x32xbf16>, vector<16x32xf32> -> vector<16x32xf32>
    %c0_52 = arith.constant 0 : index
    %c0_53 = arith.constant 0 : index
    %c0_54 = arith.constant 0 : index
    %147 = vector.load %arg10[%c0_52, %c0_53, %c0_54] : memref<1x1x32xf32, #tpu.memory_space<vmem>>, vector<1x1x32xf32>
    %148 = vector.shape_cast %147 : vector<1x1x32xf32> to vector<1x32xf32>
    %149 = vector.broadcast %148 : vector<1x32xf32> to vector<16x32xf32>
    %150 = arith.addf %146, %149 : vector<16x32xf32>
    %151 = arith.addf %4, %150 : vector<16x32xf32>
    %cst_55 = arith.constant dense<0.000000e+00> : vector<16xf32>
    %152 = vector.multi_reduction <add>, %151, %cst_55 [1] : vector<16x32xf32> to vector<16xf32>
    %153 = vector.shape_cast %152 : vector<16xf32> to vector<16x1xf32>
    %cst_56 = arith.constant 3.200000e+01 : f32
    %154 = vector.broadcast %cst_56 : f32 to vector<16x1xf32>
    %155 = arith.divf %153, %154 : vector<16x1xf32>
    %156 = arith.mulf %151, %151 : vector<16x32xf32>
    %cst_57 = arith.constant dense<0.000000e+00> : vector<16xf32>
    %157 = vector.multi_reduction <add>, %156, %cst_57 [1] : vector<16x32xf32> to vector<16xf32>
    %158 = vector.shape_cast %157 : vector<16xf32> to vector<16x1xf32>
    %cst_58 = arith.constant 3.200000e+01 : f32
    %159 = vector.broadcast %cst_58 : f32 to vector<16x1xf32>
    %160 = arith.divf %158, %159 : vector<16x1xf32>
    %161 = arith.mulf %155, %155 : vector<16x1xf32>
    %162 = arith.subf %160, %161 : vector<16x1xf32>
    %163 = vector.broadcast %155 : vector<16x1xf32> to vector<16x32xf32>
    %164 = arith.subf %151, %163 : vector<16x32xf32>
    %cst_59 = arith.constant 9.99999974E-6 : f32
    %165 = vector.broadcast %cst_59 : f32 to vector<16x1xf32>
    %166 = arith.addf %162, %165 : vector<16x1xf32>
    %167 = math.rsqrt %166 : vector<16x1xf32>
    %168 = vector.broadcast %167 : vector<16x1xf32> to vector<16x32xf32>
    %169 = arith.mulf %164, %168 : vector<16x32xf32>
    %c0_60 = arith.constant 0 : index
    %c0_61 = arith.constant 0 : index
    %c0_62 = arith.constant 0 : index
    %170 = vector.load %arg11[%c0_60, %c0_61, %c0_62] : memref<1x1x32xf32, #tpu.memory_space<vmem>>, vector<1x1x32xf32>
    %171 = vector.shape_cast %170 : vector<1x1x32xf32> to vector<1x32xf32>
    %172 = vector.broadcast %171 : vector<1x32xf32> to vector<16x32xf32>
    %173 = arith.mulf %169, %172 : vector<16x32xf32>
    %c0_63 = arith.constant 0 : index
    %c0_64 = arith.constant 0 : index
    %c0_65 = arith.constant 0 : index
    %174 = vector.load %arg12[%c0_63, %c0_64, %c0_65] : memref<1x1x32xf32, #tpu.memory_space<vmem>>, vector<1x1x32xf32>
    %175 = vector.shape_cast %174 : vector<1x1x32xf32> to vector<1x32xf32>
    %176 = vector.broadcast %175 : vector<1x32xf32> to vector<16x32xf32>
    %177 = arith.addf %173, %176 : vector<16x32xf32>
    %178 = arith.truncf %177 : vector<16x32xf32> to vector<16x32xbf16>
    %c0_66 = arith.constant 0 : index
    %c0_67 = arith.constant 0 : index
    %c0_68 = arith.constant 0 : index
    %179 = vector.load %arg13[%c0_66, %c0_67, %c0_68] : memref<1x32x64xbf16, #tpu.memory_space<vmem>>, vector<1x32x64xbf16>
    %180 = vector.shape_cast %179 : vector<1x32x64xbf16> to vector<32x64xbf16>
    %cst_69 = arith.constant dense<0.000000e+00> : vector<16x64xf32>
    %181 = tpu.matmul %178, %180, %cst_69 {dimension_numbers = #tpu.dot_dimension_numbers<[1], [0], [0], [1], [0, 0, 1, 1], [], []>} : vector<16x32xbf16>, vector<32x64xbf16>, vector<16x64xf32> -> vector<16x64xf32>
    %c0_70 = arith.constant 0 : index
    %c0_71 = arith.constant 0 : index
    %c0_72 = arith.constant 0 : index
    %182 = vector.load %arg14[%c0_70, %c0_71, %c0_72] : memref<1x1x64xf32, #tpu.memory_space<vmem>>, vector<1x1x64xf32>
    %183 = vector.shape_cast %182 : vector<1x1x64xf32> to vector<1x64xf32>
    %184 = vector.broadcast %183 : vector<1x64xf32> to vector<16x64xf32>
    %185 = arith.addf %181, %184 : vector<16x64xf32>
    %cst_73 = arith.constant 5.000000e-01 : f32
    %186 = vector.broadcast %cst_73 : f32 to vector<16x64xf32>
    %187 = arith.mulf %186, %185 : vector<16x64xf32>
    %cst_74 = arith.constant 4.471500e-02 : f32
    %188 = vector.broadcast %cst_74 : f32 to vector<16x64xf32>
    %189 = arith.mulf %188, %185 : vector<16x64xf32>
    %190 = arith.mulf %189, %185 : vector<16x64xf32>
    %191 = arith.mulf %190, %185 : vector<16x64xf32>
    %192 = arith.addf %185, %191 : vector<16x64xf32>
    %cst_75 = arith.constant 0.797884583 : f32
    %193 = vector.broadcast %cst_75 : f32 to vector<16x64xf32>
    %194 = arith.mulf %193, %192 : vector<16x64xf32>
    %195 = math.tanh %194 : vector<16x64xf32>
    %cst_76 = arith.constant 1.000000e+00 : f32
    %196 = vector.broadcast %cst_76 : f32 to vector<16x64xf32>
    %197 = arith.addf %196, %195 : vector<16x64xf32>
    %198 = arith.mulf %187, %197 : vector<16x64xf32>
    %199 = arith.truncf %198 : vector<16x64xf32> to vector<16x64xbf16>
    %c0_77 = arith.constant 0 : index
    %c0_78 = arith.constant 0 : index
    %c0_79 = arith.constant 0 : index
    %200 = vector.load %arg15[%c0_77, %c0_78, %c0_79] : memref<1x64x32xbf16, #tpu.memory_space<vmem>>, vector<1x64x32xbf16>
    %201 = vector.shape_cast %200 : vector<1x64x32xbf16> to vector<64x32xbf16>
    %cst_80 = arith.constant dense<0.000000e+00> : vector<16x32xf32>
    %202 = tpu.matmul %199, %201, %cst_80 {dimension_numbers = #tpu.dot_dimension_numbers<[1], [0], [0], [1], [0, 0, 1, 1], [], []>} : vector<16x64xbf16>, vector<64x32xbf16>, vector<16x32xf32> -> vector<16x32xf32>
    %c0_81 = arith.constant 0 : index
    %c0_82 = arith.constant 0 : index
    %c0_83 = arith.constant 0 : index
    %203 = vector.load %arg16[%c0_81, %c0_82, %c0_83] : memref<1x1x32xf32, #tpu.memory_space<vmem>>, vector<1x1x32xf32>
    %204 = vector.shape_cast %203 : vector<1x1x32xf32> to vector<1x32xf32>
    %205 = vector.broadcast %204 : vector<1x32xf32> to vector<16x32xf32>
    %206 = arith.addf %202, %205 : vector<16x32xf32>
    %207 = arith.addf %151, %206 : vector<16x32xf32>
    %c0_84 = arith.constant 0 : index
    %c0_85 = arith.constant 0 : index
    %c0_86 = arith.constant 0 : index
    %208 = vector.load %arg17[%c0_84, %c0_85, %c0_86] : memref<1x16x32xf32, #tpu.memory_space<vmem>>, vector<1x16x32xf32>
    %209 = vector.shape_cast %208 : vector<1x16x32xf32> to vector<16x32xf32>
    %210 = vector.shape_cast %207 : vector<16x32xf32> to vector<1x16x32xf32>
    tpu.vector_store %arg17[%c0_84, %c0_85, %c0_86], %210 {strides = array<i32>} : memref<1x16x32xf32, #tpu.memory_space<vmem>>, vector<1x16x32xf32>,
    return
  }
  func.func @transform_0(%arg0: i32, %arg1: i32) -> (i32, i32, i32) {
    %c0_i32 = arith.constant 0 : i32
    %c0_i32_0 = arith.constant 0 : i32
    %c0_i32_1 = arith.constant 0 : i32
    return %arg0, %c0_i32, %c0_i32_0 : i32, i32, i32
  }
  func.func @transform_1(%arg0: i32, %arg1: i32) -> (i32, i32, i32) {
    %c0_i32 = arith.constant 0 : i32
    %c0_i32_0 = arith.constant 0 : i32
    %c0_i32_1 = arith.constant 0 : i32
    return %arg1, %c0_i32, %c0_i32_0 : i32, i32, i32
  }
  func.func @transform_2(%arg0: i32, %arg1: i32) -> (i32, i32, i32) {
    %c0_i32 = arith.constant 0 : i32
    %c0_i32_0 = arith.constant 0 : i32
    %c0_i32_1 = arith.constant 0 : i32
    return %arg1, %c0_i32, %c0_i32_0 : i32, i32, i32
  }
  func.func @transform_3(%arg0: i32, %arg1: i32) -> (i32, i32, i32) {
    %c0_i32 = arith.constant 0 : i32
    %c0_i32_0 = arith.constant 0 : i32
    %c0_i32_1 = arith.constant 0 : i32
    return %arg1, %c0_i32, %c0_i32_0 : i32, i32, i32
  }
  func.func @transform_4(%arg0: i32, %arg1: i32) -> (i32, i32, i32) {
    %c0_i32 = arith.constant 0 : i32
    %c0_i32_0 = arith.constant 0 : i32
    %c0_i32_1 = arith.constant 0 : i32
    return %arg1, %c0_i32, %c0_i32_0 : i32, i32, i32
  }
  func.func @transform_5(%arg0: i32, %arg1: i32) -> (i32, i32, i32) {
    %c0_i32 = arith.constant 0 : i32
    %c0_i32_0 = arith.constant 0 : i32
    %c0_i32_1 = arith.constant 0 : i32
    return %arg1, %c0_i32, %c0_i32_0 : i32, i32, i32
  }
  func.func @transform_6(%arg0: i32, %arg1: i32) -> (i32, i32, i32) {
    %c0_i32 = arith.constant 0 : i32
    %c0_i32_0 = arith.constant 0 : i32
    %c0_i32_1 = arith.constant 0 : i32
    return %arg1, %c0_i32, %c0_i32_0 : i32, i32, i32
  }
  func.func @transform_7(%arg0: i32, %arg1: i32) -> (i32, i32, i32) {
    %c0_i32 = arith.constant 0 : i32
    %c0_i32_0 = arith.constant 0 : i32
    %c0_i32_1 = arith.constant 0 : i32
    return %arg1, %c0_i32, %c0_i32_0 : i32, i32, i32
  }
  func.func @transform_8(%arg0: i32, %arg1: i32) -> (i32, i32, i32) {
    %c0_i32 = arith.constant 0 : i32
    %c0_i32_0 = arith.constant 0 : i32
    %c0_i32_1 = arith.constant 0 : i32
    return %arg1, %c0_i32, %c0_i32_0 : i32, i32, i32
  }
  func.func @transform_9(%arg0: i32, %arg1: i32) -> (i32, i32, i32) {
    %c0_i32 = arith.constant 0 : i32
    %c0_i32_0 = arith.constant 0 : i32
    %c0_i32_1 = arith.constant 0 : i32
    return %arg1, %c0_i32, %c0_i32_0 : i32, i32, i32
  }
  func.func @transform_10(%arg0: i32, %arg1: i32) -> (i32, i32, i32) {
    %c0_i32 = arith.constant 0 : i32
    %c0_i32_0 = arith.constant 0 : i32
    %c0_i32_1 = arith.constant 0 : i32
    return %arg1, %c0_i32, %c0_i32_0 : i32, i32, i32
  }
  func.func @transform_11(%arg0: i32, %arg1: i32) -> (i32, i32, i32) {
    %c0_i32 = arith.constant 0 : i32
    %c0_i32_0 = arith.constant 0 : i32
    %c0_i32_1 = arith.constant 0 : i32
    return %arg1, %c0_i32, %c0_i32_0 : i32, i32, i32
  }
  func.func @transform_12(%arg0: i32, %arg1: i32) -> (i32, i32, i32) {
    %c0_i32 = arith.constant 0 : i32
    %c0_i32_0 = arith.constant 0 : i32
    %c0_i32_1 = arith.constant 0 : i32
    return %arg1, %c0_i32, %c0_i32_0 : i32, i32, i32
  }
  func.func @transform_13(%arg0: i32, %arg1: i32) -> (i32, i32, i32) {
    %c0_i32 = arith.constant 0 : i32
    %c0_i32_0 = arith.constant 0 : i32
    %c0_i32_1 = arith.constant 0 : i32
    return %arg1, %c0_i32, %c0_i32_0 : i32, i32, i32
  }
  func.func @transform_14(%arg0: i32, %arg1: i32) -> (i32, i32, i32) {
    %c0_i32 = arith.constant 0 : i32
    %c0_i32_0 = arith.constant 0 : i32
    %c0_i32_1 = arith.constant 0 : i32
    return %arg1, %c0_i32, %c0_i32_0 : i32, i32, i32
  }
  func.func @transform_15(%arg0: i32, %arg1: i32) -> (i32, i32, i32) {
    %c0_i32 = arith.constant 0 : i32
    %c0_i32_0 = arith.constant 0 : i32
    %c0_i32_1 = arith.constant 0 : i32
    return %arg0, %c0_i32, %c0_i32_0 : i32, i32, i32
  }
}

module attributes {stable_mosaic.version = 11 : i64} {
  func.func @_upsample_block_kernel(%arg0: i32, %arg1: memref<1x6x6x32xf32, #tpu.memory_space<vmem>>, %arg2: memref<288x16xbf16, #tpu.memory_space<vmem>>, %arg3: memref<1x16xf32, #tpu.memory_space<vmem>>, %arg4: memref<1x16xf32, #tpu.memory_space<vmem>>, %arg5: memref<8x4xbf16, #tpu.memory_space<vmem>>, %arg6: memref<8x4xbf16, #tpu.memory_space<vmem>>, %arg7: memref<1x8x8x16xf32, #tpu.memory_space<vmem>>) attributes {dimension_semantics = [#tpu.dimension_semantics<parallel>], iteration_bounds = array<i64: 2>, scalar_prefetch = 0 : i64, scratch_operands = 0 : i64, tpu.core_type = #tpu.core_type<tc>, window_params = [{transform_indices = @transform_0, window_bounds = array<i64: 1, 6, 6, 32>}, {pipeline_mode = #tpu.pipeline_mode<synchronous>, transform_indices = @transform_1, window_bounds = array<i64: 288, 16>}, {pipeline_mode = #tpu.pipeline_mode<synchronous>, transform_indices = @transform_2, window_bounds = array<i64: 1, 16>}, {pipeline_mode = #tpu.pipeline_mode<synchronous>, transform_indices = @transform_3, window_bounds = array<i64: 1, 16>}, {pipeline_mode = #tpu.pipeline_mode<synchronous>, transform_indices = @transform_4, window_bounds = array<i64: 8, 4>}, {pipeline_mode = #tpu.pipeline_mode<synchronous>, transform_indices = @transform_5, window_bounds = array<i64: 8, 4>}, {transform_indices = @transform_6, window_bounds = array<i64: 1, 8, 8, 16>}]} {
    %c0 = arith.constant 0 : index
    %c0_0 = arith.constant 0 : index
    %c0_1 = arith.constant 0 : index
    %c0_2 = arith.constant 0 : index
    %0 = vector.load %arg1[%c0, %c0_0, %c0_1, %c0_2] : memref<1x6x6x32xf32, #tpu.memory_space<vmem>>, vector<1x4x4x32xf32>
    %1 = vector.shape_cast %0 : vector<1x4x4x32xf32> to vector<4x4x32xf32>
    %2 = arith.truncf %1 : vector<4x4x32xf32> to vector<4x4x32xbf16>
    %c0_3 = arith.constant 0 : index
    %c0_4 = arith.constant 0 : index
    %c1 = arith.constant 1 : index
    %c0_5 = arith.constant 0 : index
    %3 = vector.load %arg1[%c0_3, %c0_4, %c1, %c0_5] : memref<1x6x6x32xf32, #tpu.memory_space<vmem>>, vector<1x4x4x32xf32>
    %4 = vector.shape_cast %3 : vector<1x4x4x32xf32> to vector<4x4x32xf32>
    %5 = arith.truncf %4 : vector<4x4x32xf32> to vector<4x4x32xbf16>
    %c0_6 = arith.constant 0 : index
    %c0_7 = arith.constant 0 : index
    %c2 = arith.constant 2 : index
    %c0_8 = arith.constant 0 : index
    %6 = vector.load %arg1[%c0_6, %c0_7, %c2, %c0_8] : memref<1x6x6x32xf32, #tpu.memory_space<vmem>>, vector<1x4x4x32xf32>
    %7 = vector.shape_cast %6 : vector<1x4x4x32xf32> to vector<4x4x32xf32>
    %8 = arith.truncf %7 : vector<4x4x32xf32> to vector<4x4x32xbf16>
    %c0_9 = arith.constant 0 : index
    %c1_10 = arith.constant 1 : index
    %c0_11 = arith.constant 0 : index
    %c0_12 = arith.constant 0 : index
    %9 = vector.load %arg1[%c0_9, %c1_10, %c0_11, %c0_12] : memref<1x6x6x32xf32, #tpu.memory_space<vmem>>, vector<1x4x4x32xf32>
    %10 = vector.shape_cast %9 : vector<1x4x4x32xf32> to vector<4x4x32xf32>
    %11 = arith.truncf %10 : vector<4x4x32xf32> to vector<4x4x32xbf16>
    %c0_13 = arith.constant 0 : index
    %c1_14 = arith.constant 1 : index
    %c1_15 = arith.constant 1 : index
    %c0_16 = arith.constant 0 : index
    %12 = vector.load %arg1[%c0_13, %c1_14, %c1_15, %c0_16] : memref<1x6x6x32xf32, #tpu.memory_space<vmem>>, vector<1x4x4x32xf32>
    %13 = vector.shape_cast %12 : vector<1x4x4x32xf32> to vector<4x4x32xf32>
    %14 = arith.truncf %13 : vector<4x4x32xf32> to vector<4x4x32xbf16>
    %c0_17 = arith.constant 0 : index
    %c1_18 = arith.constant 1 : index
    %c2_19 = arith.constant 2 : index
    %c0_20 = arith.constant 0 : index
    %15 = vector.load %arg1[%c0_17, %c1_18, %c2_19, %c0_20] : memref<1x6x6x32xf32, #tpu.memory_space<vmem>>, vector<1x4x4x32xf32>
    %16 = vector.shape_cast %15 : vector<1x4x4x32xf32> to vector<4x4x32xf32>
    %17 = arith.truncf %16 : vector<4x4x32xf32> to vector<4x4x32xbf16>
    %c0_21 = arith.constant 0 : index
    %c2_22 = arith.constant 2 : index
    %c0_23 = arith.constant 0 : index
    %c0_24 = arith.constant 0 : index
    %18 = vector.load %arg1[%c0_21, %c2_22, %c0_23, %c0_24] : memref<1x6x6x32xf32, #tpu.memory_space<vmem>>, vector<1x4x4x32xf32>
    %19 = vector.shape_cast %18 : vector<1x4x4x32xf32> to vector<4x4x32xf32>
    %20 = arith.truncf %19 : vector<4x4x32xf32> to vector<4x4x32xbf16>
    %c0_25 = arith.constant 0 : index
    %c2_26 = arith.constant 2 : index
    %c1_27 = arith.constant 1 : index
    %c0_28 = arith.constant 0 : index
    %21 = vector.load %arg1[%c0_25, %c2_26, %c1_27, %c0_28] : memref<1x6x6x32xf32, #tpu.memory_space<vmem>>, vector<1x4x4x32xf32>
    %22 = vector.shape_cast %21 : vector<1x4x4x32xf32> to vector<4x4x32xf32>
    %23 = arith.truncf %22 : vector<4x4x32xf32> to vector<4x4x32xbf16>
    %c0_29 = arith.constant 0 : index
    %c2_30 = arith.constant 2 : index
    %c2_31 = arith.constant 2 : index
    %c0_32 = arith.constant 0 : index
    %24 = vector.load %arg1[%c0_29, %c2_30, %c2_31, %c0_32] : memref<1x6x6x32xf32, #tpu.memory_space<vmem>>, vector<1x4x4x32xf32>
    %25 = vector.shape_cast %24 : vector<1x4x4x32xf32> to vector<4x4x32xf32>
    %26 = arith.truncf %25 : vector<4x4x32xf32> to vector<4x4x32xbf16>
    %27 = tpu.concatenate %2, %5, %8, %11, %14, %17, %20, %23, %26 in 2 : vector<4x4x32xbf16>, vector<4x4x32xbf16>, vector<4x4x32xbf16>, vector<4x4x32xbf16>, vector<4x4x32xbf16>, vector<4x4x32xbf16>, vector<4x4x32xbf16>, vector<4x4x32xbf16>, vector<4x4x32xbf16> -> vector<4x4x288xbf16>
    %c0_33 = arith.constant 0 : index
    %c0_34 = arith.constant 0 : index
    %28 = vector.load %arg2[%c0_33, %c0_34] : memref<288x16xbf16, #tpu.memory_space<vmem>>, vector<288x16xbf16>
    %29 = vector.shape_cast %28 : vector<288x16xbf16> to vector<1x288x16xbf16>
    %30 = vector.broadcast %29 : vector<1x288x16xbf16> to vector<4x288x16xbf16>
    %cst = arith.constant dense<0.000000e+00> : vector<4x4x16xf32>
    %31 = tpu.matmul %27, %30, %cst {dimension_numbers = #tpu.dot_dimension_numbers<[2], [1], [1], [2], [0, 0, 0, 1, 1, 2], [0], [0]>} : vector<4x4x288xbf16>, vector<4x288x16xbf16>, vector<4x4x16xf32> -> vector<4x4x16xf32>
    %c0_35 = arith.constant 0 : index
    %c0_36 = arith.constant 0 : index
    %32 = vector.load %arg3[%c0_35, %c0_36] : memref<1x16xf32, #tpu.memory_space<vmem>>, vector<1x16xf32>
    %33 = vector.shape_cast %32 : vector<1x16xf32> to vector<1x1x16xf32>
    %34 = vector.broadcast %33 : vector<1x1x16xf32> to vector<4x4x16xf32>
    %35 = arith.mulf %31, %34 : vector<4x4x16xf32>
    %c0_37 = arith.constant 0 : index
    %c0_38 = arith.constant 0 : index
    %36 = vector.load %arg4[%c0_37, %c0_38] : memref<1x16xf32, #tpu.memory_space<vmem>>, vector<1x16xf32>
    %37 = vector.shape_cast %36 : vector<1x16xf32> to vector<1x1x16xf32>
    %38 = vector.broadcast %37 : vector<1x1x16xf32> to vector<4x4x16xf32>
    %39 = arith.addf %35, %38 : vector<4x4x16xf32>
    %cst_39 = arith.constant 0.000000e+00 : f32
    %40 = vector.broadcast %cst_39 : f32 to vector<4x4x16xf32>
    %41 = arith.maximumf %39, %40 : vector<4x4x16xf32>
    %c0_40 = arith.constant 0 : index
    %c0_41 = arith.constant 0 : index
    %42 = vector.load %arg5[%c0_40, %c0_41] : memref<8x4xbf16, #tpu.memory_space<vmem>>, vector<8x4xbf16>
    %43 = vector.shape_cast %42 : vector<8x4xbf16> to vector<1x8x4xbf16>
    %44 = vector.broadcast %43 : vector<1x8x4xbf16> to vector<4x8x4xbf16>
    %45 = arith.truncf %41 : vector<4x4x16xf32> to vector<4x4x16xbf16>
    %cst_42 = arith.constant dense<0.000000e+00> : vector<4x8x16xf32>
    %46 = tpu.matmul %44, %45, %cst_42 {dimension_numbers = #tpu.dot_dimension_numbers<[2], [1], [1], [2], [0, 0, 0, 1, 1, 2], [0], [0]>} : vector<4x8x4xbf16>, vector<4x4x16xbf16>, vector<4x8x16xf32> -> vector<4x8x16xf32>
    %47 = tpu.transpose %46, [1, 0, 2] : vector<4x8x16xf32> -> vector<8x4x16xf32>
    %48 = arith.truncf %47 : vector<8x4x16xf32> to vector<8x4x16xbf16>
    %c0_43 = arith.constant 0 : index
    %c0_44 = arith.constant 0 : index
    %49 = vector.load %arg6[%c0_43, %c0_44] : memref<8x4xbf16, #tpu.memory_space<vmem>>, vector<8x4xbf16>
    %50 = vector.shape_cast %49 : vector<8x4xbf16> to vector<1x8x4xbf16>
    %51 = vector.broadcast %50 : vector<1x8x4xbf16> to vector<8x8x4xbf16>
    %cst_45 = arith.constant dense<0.000000e+00> : vector<8x8x16xf32>
    %52 = tpu.matmul %51, %48, %cst_45 {dimension_numbers = #tpu.dot_dimension_numbers<[2], [1], [1], [2], [0, 0, 0, 1, 1, 2], [0], [0]>} : vector<8x8x4xbf16>, vector<8x4x16xbf16>, vector<8x8x16xf32> -> vector<8x8x16xf32>
    %53 = tpu.transpose %52, [1, 0, 2] : vector<8x8x16xf32> -> vector<8x8x16xf32>
    %c0_46 = arith.constant 0 : index
    %c0_47 = arith.constant 0 : index
    %c0_48 = arith.constant 0 : index
    %c0_49 = arith.constant 0 : index
    %54 = vector.load %arg7[%c0_46, %c0_47, %c0_48, %c0_49] : memref<1x8x8x16xf32, #tpu.memory_space<vmem>>, vector<1x8x8x16xf32>
    %55 = vector.shape_cast %54 : vector<1x8x8x16xf32> to vector<8x8x16xf32>
    %56 = vector.shape_cast %53 : vector<8x8x16xf32> to vector<1x8x8x16xf32>
    tpu.vector_store %arg7[%c0_46, %c0_47, %c0_48, %c0_49], %56 {strides = array<i32>} : memref<1x8x8x16xf32, #tpu.memory_space<vmem>>, vector<1x8x8x16xf32>,
    return
  }
  func.func @transform_0(%arg0: i32) -> (i32, i32, i32, i32) {
    %c0_i32 = arith.constant 0 : i32
    %c0_i32_0 = arith.constant 0 : i32
    %c0_i32_1 = arith.constant 0 : i32
    %c0_i32_2 = arith.constant 0 : i32
    return %arg0, %c0_i32, %c0_i32_0, %c0_i32_1 : i32, i32, i32, i32
  }
  func.func @transform_1(%arg0: i32) -> (i32, i32) {
    %c0_i32 = arith.constant 0 : i32
    %c0_i32_0 = arith.constant 0 : i32
    %c0_i32_1 = arith.constant 0 : i32
    return %c0_i32, %c0_i32_0 : i32, i32
  }
  func.func @transform_2(%arg0: i32) -> (i32, i32) {
    %c0_i32 = arith.constant 0 : i32
    %c0_i32_0 = arith.constant 0 : i32
    %c0_i32_1 = arith.constant 0 : i32
    return %c0_i32, %c0_i32_0 : i32, i32
  }
  func.func @transform_3(%arg0: i32) -> (i32, i32) {
    %c0_i32 = arith.constant 0 : i32
    %c0_i32_0 = arith.constant 0 : i32
    %c0_i32_1 = arith.constant 0 : i32
    return %c0_i32, %c0_i32_0 : i32, i32
  }
  func.func @transform_4(%arg0: i32) -> (i32, i32) {
    %c0_i32 = arith.constant 0 : i32
    %c0_i32_0 = arith.constant 0 : i32
    %c0_i32_1 = arith.constant 0 : i32
    return %c0_i32, %c0_i32_0 : i32, i32
  }
  func.func @transform_5(%arg0: i32) -> (i32, i32) {
    %c0_i32 = arith.constant 0 : i32
    %c0_i32_0 = arith.constant 0 : i32
    %c0_i32_1 = arith.constant 0 : i32
    return %c0_i32, %c0_i32_0 : i32, i32
  }
  func.func @transform_6(%arg0: i32) -> (i32, i32, i32, i32) {
    %c0_i32 = arith.constant 0 : i32
    %c0_i32_0 = arith.constant 0 : i32
    %c0_i32_1 = arith.constant 0 : i32
    %c0_i32_2 = arith.constant 0 : i32
    return %arg0, %c0_i32, %c0_i32_0, %c0_i32_1 : i32, i32, i32, i32
  }
}

module attributes {stable_mosaic.version = 11 : i64} {
  func.func @_matmul_bias_kernel(%arg0: i32, %arg1: memref<256x8xf32, #tpu.memory_space<vmem>>, %arg2: memref<8x128xbf16, #tpu.memory_space<vmem>>, %arg3: memref<1x128xf32, #tpu.memory_space<vmem>>, %arg4: memref<256x128xf32, #tpu.memory_space<vmem>>) attributes {dimension_semantics = [#tpu.dimension_semantics<parallel>], iteration_bounds = array<i64: 2>, scalar_prefetch = 0 : i64, scratch_operands = 0 : i64, tpu.core_type = #tpu.core_type<tc>, window_params = [{transform_indices = @transform_0, window_bounds = array<i64: 256, 8>}, {pipeline_mode = #tpu.pipeline_mode<synchronous>, transform_indices = @transform_1, window_bounds = array<i64: 8, 128>}, {pipeline_mode = #tpu.pipeline_mode<synchronous>, transform_indices = @transform_2, window_bounds = array<i64: 1, 128>}, {transform_indices = @transform_3, window_bounds = array<i64: 256, 128>}]} {
    %c0 = arith.constant 0 : index
    %c0_0 = arith.constant 0 : index
    %0 = vector.load %arg1[%c0, %c0_0] : memref<256x8xf32, #tpu.memory_space<vmem>>, vector<256x8xf32>
    %1 = arith.truncf %0 : vector<256x8xf32> to vector<256x8xbf16>
    %c0_1 = arith.constant 0 : index
    %c0_2 = arith.constant 0 : index
    %2 = vector.load %arg2[%c0_1, %c0_2] : memref<8x128xbf16, #tpu.memory_space<vmem>>, vector<8x128xbf16>
    %cst = arith.constant dense<0.000000e+00> : vector<256x128xf32>
    %3 = tpu.matmul %1, %2, %cst {dimension_numbers = #tpu.dot_dimension_numbers<[1], [0], [0], [1], [0, 0, 1, 1], [], []>} : vector<256x8xbf16>, vector<8x128xbf16>, vector<256x128xf32> -> vector<256x128xf32>
    %c0_3 = arith.constant 0 : index
    %c0_4 = arith.constant 0 : index
    %4 = vector.load %arg3[%c0_3, %c0_4] : memref<1x128xf32, #tpu.memory_space<vmem>>, vector<1x128xf32>
    %5 = vector.broadcast %4 : vector<1x128xf32> to vector<256x128xf32>
    %6 = arith.addf %3, %5 : vector<256x128xf32>
    %c0_5 = arith.constant 0 : index
    %c0_6 = arith.constant 0 : index
    %7 = vector.load %arg4[%c0_5, %c0_6] : memref<256x128xf32, #tpu.memory_space<vmem>>, vector<256x128xf32>
    tpu.vector_store %arg4[%c0_5, %c0_6], %6 {strides = array<i32>} : memref<256x128xf32, #tpu.memory_space<vmem>>, vector<256x128xf32>,
    return
  }
  func.func @transform_0(%arg0: i32) -> (i32, i32) {
    %c0_i32 = arith.constant 0 : i32
    %c0_i32_0 = arith.constant 0 : i32
    return %arg0, %c0_i32 : i32, i32
  }
  func.func @transform_1(%arg0: i32) -> (i32, i32) {
    %c0_i32 = arith.constant 0 : i32
    %c0_i32_0 = arith.constant 0 : i32
    %c0_i32_1 = arith.constant 0 : i32
    return %c0_i32, %c0_i32_0 : i32, i32
  }
  func.func @transform_2(%arg0: i32) -> (i32, i32) {
    %c0_i32 = arith.constant 0 : i32
    %c0_i32_0 = arith.constant 0 : i32
    %c0_i32_1 = arith.constant 0 : i32
    return %c0_i32, %c0_i32_0 : i32, i32
  }
  func.func @transform_3(%arg0: i32) -> (i32, i32) {
    %c0_i32 = arith.constant 0 : i32
    %c0_i32_0 = arith.constant 0 : i32
    return %arg0, %c0_i32 : i32, i32
  }
}

module attributes {stable_mosaic.version = 11 : i64} {
  func.func @_upsample_block_kernel(%arg0: i32, %arg1: memref<1x10x10x16xf32, #tpu.memory_space<vmem>>, %arg2: memref<144x8xbf16, #tpu.memory_space<vmem>>, %arg3: memref<1x8xf32, #tpu.memory_space<vmem>>, %arg4: memref<1x8xf32, #tpu.memory_space<vmem>>, %arg5: memref<16x8xbf16, #tpu.memory_space<vmem>>, %arg6: memref<16x8xbf16, #tpu.memory_space<vmem>>, %arg7: memref<1x16x16x8xf32, #tpu.memory_space<vmem>>) attributes {dimension_semantics = [#tpu.dimension_semantics<parallel>], iteration_bounds = array<i64: 2>, scalar_prefetch = 0 : i64, scratch_operands = 0 : i64, tpu.core_type = #tpu.core_type<tc>, window_params = [{transform_indices = @transform_0, window_bounds = array<i64: 1, 10, 10, 16>}, {pipeline_mode = #tpu.pipeline_mode<synchronous>, transform_indices = @transform_1, window_bounds = array<i64: 144, 8>}, {pipeline_mode = #tpu.pipeline_mode<synchronous>, transform_indices = @transform_2, window_bounds = array<i64: 1, 8>}, {pipeline_mode = #tpu.pipeline_mode<synchronous>, transform_indices = @transform_3, window_bounds = array<i64: 1, 8>}, {pipeline_mode = #tpu.pipeline_mode<synchronous>, transform_indices = @transform_4, window_bounds = array<i64: 16, 8>}, {pipeline_mode = #tpu.pipeline_mode<synchronous>, transform_indices = @transform_5, window_bounds = array<i64: 16, 8>}, {transform_indices = @transform_6, window_bounds = array<i64: 1, 16, 16, 8>}]} {
    %c0 = arith.constant 0 : index
    %c0_0 = arith.constant 0 : index
    %c0_1 = arith.constant 0 : index
    %c0_2 = arith.constant 0 : index
    %0 = vector.load %arg1[%c0, %c0_0, %c0_1, %c0_2] : memref<1x10x10x16xf32, #tpu.memory_space<vmem>>, vector<1x8x8x16xf32>
    %1 = vector.shape_cast %0 : vector<1x8x8x16xf32> to vector<8x8x16xf32>
    %2 = arith.truncf %1 : vector<8x8x16xf32> to vector<8x8x16xbf16>
    %c0_3 = arith.constant 0 : index
    %c0_4 = arith.constant 0 : index
    %c1 = arith.constant 1 : index
    %c0_5 = arith.constant 0 : index
    %3 = vector.load %arg1[%c0_3, %c0_4, %c1, %c0_5] : memref<1x10x10x16xf32, #tpu.memory_space<vmem>>, vector<1x8x8x16xf32>
    %4 = vector.shape_cast %3 : vector<1x8x8x16xf32> to vector<8x8x16xf32>
    %5 = arith.truncf %4 : vector<8x8x16xf32> to vector<8x8x16xbf16>
    %c0_6 = arith.constant 0 : index
    %c0_7 = arith.constant 0 : index
    %c2 = arith.constant 2 : index
    %c0_8 = arith.constant 0 : index
    %6 = vector.load %arg1[%c0_6, %c0_7, %c2, %c0_8] : memref<1x10x10x16xf32, #tpu.memory_space<vmem>>, vector<1x8x8x16xf32>
    %7 = vector.shape_cast %6 : vector<1x8x8x16xf32> to vector<8x8x16xf32>
    %8 = arith.truncf %7 : vector<8x8x16xf32> to vector<8x8x16xbf16>
    %c0_9 = arith.constant 0 : index
    %c1_10 = arith.constant 1 : index
    %c0_11 = arith.constant 0 : index
    %c0_12 = arith.constant 0 : index
    %9 = vector.load %arg1[%c0_9, %c1_10, %c0_11, %c0_12] : memref<1x10x10x16xf32, #tpu.memory_space<vmem>>, vector<1x8x8x16xf32>
    %10 = vector.shape_cast %9 : vector<1x8x8x16xf32> to vector<8x8x16xf32>
    %11 = arith.truncf %10 : vector<8x8x16xf32> to vector<8x8x16xbf16>
    %c0_13 = arith.constant 0 : index
    %c1_14 = arith.constant 1 : index
    %c1_15 = arith.constant 1 : index
    %c0_16 = arith.constant 0 : index
    %12 = vector.load %arg1[%c0_13, %c1_14, %c1_15, %c0_16] : memref<1x10x10x16xf32, #tpu.memory_space<vmem>>, vector<1x8x8x16xf32>
    %13 = vector.shape_cast %12 : vector<1x8x8x16xf32> to vector<8x8x16xf32>
    %14 = arith.truncf %13 : vector<8x8x16xf32> to vector<8x8x16xbf16>
    %c0_17 = arith.constant 0 : index
    %c1_18 = arith.constant 1 : index
    %c2_19 = arith.constant 2 : index
    %c0_20 = arith.constant 0 : index
    %15 = vector.load %arg1[%c0_17, %c1_18, %c2_19, %c0_20] : memref<1x10x10x16xf32, #tpu.memory_space<vmem>>, vector<1x8x8x16xf32>
    %16 = vector.shape_cast %15 : vector<1x8x8x16xf32> to vector<8x8x16xf32>
    %17 = arith.truncf %16 : vector<8x8x16xf32> to vector<8x8x16xbf16>
    %c0_21 = arith.constant 0 : index
    %c2_22 = arith.constant 2 : index
    %c0_23 = arith.constant 0 : index
    %c0_24 = arith.constant 0 : index
    %18 = vector.load %arg1[%c0_21, %c2_22, %c0_23, %c0_24] : memref<1x10x10x16xf32, #tpu.memory_space<vmem>>, vector<1x8x8x16xf32>
    %19 = vector.shape_cast %18 : vector<1x8x8x16xf32> to vector<8x8x16xf32>
    %20 = arith.truncf %19 : vector<8x8x16xf32> to vector<8x8x16xbf16>
    %c0_25 = arith.constant 0 : index
    %c2_26 = arith.constant 2 : index
    %c1_27 = arith.constant 1 : index
    %c0_28 = arith.constant 0 : index
    %21 = vector.load %arg1[%c0_25, %c2_26, %c1_27, %c0_28] : memref<1x10x10x16xf32, #tpu.memory_space<vmem>>, vector<1x8x8x16xf32>
    %22 = vector.shape_cast %21 : vector<1x8x8x16xf32> to vector<8x8x16xf32>
    %23 = arith.truncf %22 : vector<8x8x16xf32> to vector<8x8x16xbf16>
    %c0_29 = arith.constant 0 : index
    %c2_30 = arith.constant 2 : index
    %c2_31 = arith.constant 2 : index
    %c0_32 = arith.constant 0 : index
    %24 = vector.load %arg1[%c0_29, %c2_30, %c2_31, %c0_32] : memref<1x10x10x16xf32, #tpu.memory_space<vmem>>, vector<1x8x8x16xf32>
    %25 = vector.shape_cast %24 : vector<1x8x8x16xf32> to vector<8x8x16xf32>
    %26 = arith.truncf %25 : vector<8x8x16xf32> to vector<8x8x16xbf16>
    %27 = tpu.concatenate %2, %5, %8, %11, %14, %17, %20, %23, %26 in 2 : vector<8x8x16xbf16>, vector<8x8x16xbf16>, vector<8x8x16xbf16>, vector<8x8x16xbf16>, vector<8x8x16xbf16>, vector<8x8x16xbf16>, vector<8x8x16xbf16>, vector<8x8x16xbf16>, vector<8x8x16xbf16> -> vector<8x8x144xbf16>
    %c0_33 = arith.constant 0 : index
    %c0_34 = arith.constant 0 : index
    %28 = vector.load %arg2[%c0_33, %c0_34] : memref<144x8xbf16, #tpu.memory_space<vmem>>, vector<144x8xbf16>
    %29 = vector.shape_cast %28 : vector<144x8xbf16> to vector<1x144x8xbf16>
    %30 = vector.broadcast %29 : vector<1x144x8xbf16> to vector<8x144x8xbf16>
    %cst = arith.constant dense<0.000000e+00> : vector<8x8x8xf32>
    %31 = tpu.matmul %27, %30, %cst {dimension_numbers = #tpu.dot_dimension_numbers<[2], [1], [1], [2], [0, 0, 0, 1, 1, 2], [0], [0]>} : vector<8x8x144xbf16>, vector<8x144x8xbf16>, vector<8x8x8xf32> -> vector<8x8x8xf32>
    %c0_35 = arith.constant 0 : index
    %c0_36 = arith.constant 0 : index
    %32 = vector.load %arg3[%c0_35, %c0_36] : memref<1x8xf32, #tpu.memory_space<vmem>>, vector<1x8xf32>
    %33 = vector.shape_cast %32 : vector<1x8xf32> to vector<1x1x8xf32>
    %34 = vector.broadcast %33 : vector<1x1x8xf32> to vector<8x8x8xf32>
    %35 = arith.mulf %31, %34 : vector<8x8x8xf32>
    %c0_37 = arith.constant 0 : index
    %c0_38 = arith.constant 0 : index
    %36 = vector.load %arg4[%c0_37, %c0_38] : memref<1x8xf32, #tpu.memory_space<vmem>>, vector<1x8xf32>
    %37 = vector.shape_cast %36 : vector<1x8xf32> to vector<1x1x8xf32>
    %38 = vector.broadcast %37 : vector<1x1x8xf32> to vector<8x8x8xf32>
    %39 = arith.addf %35, %38 : vector<8x8x8xf32>
    %cst_39 = arith.constant 0.000000e+00 : f32
    %40 = vector.broadcast %cst_39 : f32 to vector<8x8x8xf32>
    %41 = arith.maximumf %39, %40 : vector<8x8x8xf32>
    %c0_40 = arith.constant 0 : index
    %c0_41 = arith.constant 0 : index
    %42 = vector.load %arg5[%c0_40, %c0_41] : memref<16x8xbf16, #tpu.memory_space<vmem>>, vector<16x8xbf16>
    %43 = vector.shape_cast %42 : vector<16x8xbf16> to vector<1x16x8xbf16>
    %44 = vector.broadcast %43 : vector<1x16x8xbf16> to vector<8x16x8xbf16>
    %45 = arith.truncf %41 : vector<8x8x8xf32> to vector<8x8x8xbf16>
    %cst_42 = arith.constant dense<0.000000e+00> : vector<8x16x8xf32>
    %46 = tpu.matmul %44, %45, %cst_42 {dimension_numbers = #tpu.dot_dimension_numbers<[2], [1], [1], [2], [0, 0, 0, 1, 1, 2], [0], [0]>} : vector<8x16x8xbf16>, vector<8x8x8xbf16>, vector<8x16x8xf32> -> vector<8x16x8xf32>
    %47 = tpu.transpose %46, [1, 0, 2] : vector<8x16x8xf32> -> vector<16x8x8xf32>
    %48 = arith.truncf %47 : vector<16x8x8xf32> to vector<16x8x8xbf16>
    %c0_43 = arith.constant 0 : index
    %c0_44 = arith.constant 0 : index
    %49 = vector.load %arg6[%c0_43, %c0_44] : memref<16x8xbf16, #tpu.memory_space<vmem>>, vector<16x8xbf16>
    %50 = vector.shape_cast %49 : vector<16x8xbf16> to vector<1x16x8xbf16>
    %51 = vector.broadcast %50 : vector<1x16x8xbf16> to vector<16x16x8xbf16>
    %cst_45 = arith.constant dense<0.000000e+00> : vector<16x16x8xf32>
    %52 = tpu.matmul %51, %48, %cst_45 {dimension_numbers = #tpu.dot_dimension_numbers<[2], [1], [1], [2], [0, 0, 0, 1, 1, 2], [0], [0]>} : vector<16x16x8xbf16>, vector<16x8x8xbf16>, vector<16x16x8xf32> -> vector<16x16x8xf32>
    %53 = tpu.transpose %52, [1, 0, 2] : vector<16x16x8xf32> -> vector<16x16x8xf32>
    %c0_46 = arith.constant 0 : index
    %c0_47 = arith.constant 0 : index
    %c0_48 = arith.constant 0 : index
    %c0_49 = arith.constant 0 : index
    %54 = vector.load %arg7[%c0_46, %c0_47, %c0_48, %c0_49] : memref<1x16x16x8xf32, #tpu.memory_space<vmem>>, vector<1x16x16x8xf32>
    %55 = vector.shape_cast %54 : vector<1x16x16x8xf32> to vector<16x16x8xf32>
    %56 = vector.shape_cast %53 : vector<16x16x8xf32> to vector<1x16x16x8xf32>
    tpu.vector_store %arg7[%c0_46, %c0_47, %c0_48, %c0_49], %56 {strides = array<i32>} : memref<1x16x16x8xf32, #tpu.memory_space<vmem>>, vector<1x16x16x8xf32>,
    return
  }
  func.func @transform_0(%arg0: i32) -> (i32, i32, i32, i32) {
    %c0_i32 = arith.constant 0 : i32
    %c0_i32_0 = arith.constant 0 : i32
    %c0_i32_1 = arith.constant 0 : i32
    %c0_i32_2 = arith.constant 0 : i32
    return %arg0, %c0_i32, %c0_i32_0, %c0_i32_1 : i32, i32, i32, i32
  }
  func.func @transform_1(%arg0: i32) -> (i32, i32) {
    %c0_i32 = arith.constant 0 : i32
    %c0_i32_0 = arith.constant 0 : i32
    %c0_i32_1 = arith.constant 0 : i32
    return %c0_i32, %c0_i32_0 : i32, i32
  }
  func.func @transform_2(%arg0: i32) -> (i32, i32) {
    %c0_i32 = arith.constant 0 : i32
    %c0_i32_0 = arith.constant 0 : i32
    %c0_i32_1 = arith.constant 0 : i32
    return %c0_i32, %c0_i32_0 : i32, i32
  }
  func.func @transform_3(%arg0: i32) -> (i32, i32) {
    %c0_i32 = arith.constant 0 : i32
    %c0_i32_0 = arith.constant 0 : i32
    %c0_i32_1 = arith.constant 0 : i32
    return %c0_i32, %c0_i32_0 : i32, i32
  }
  func.func @transform_4(%arg0: i32) -> (i32, i32) {
    %c0_i32 = arith.constant 0 : i32
    %c0_i32_0 = arith.constant 0 : i32
    %c0_i32_1 = arith.constant 0 : i32
    return %c0_i32, %c0_i32_0 : i32, i32
  }
  func.func @transform_5(%arg0: i32) -> (i32, i32) {
    %c0_i32 = arith.constant 0 : i32
    %c0_i32_0 = arith.constant 0 : i32
    %c0_i32_1 = arith.constant 0 : i32
    return %c0_i32, %c0_i32_0 : i32, i32
  }
  func.func @transform_6(%arg0: i32) -> (i32, i32, i32, i32) {
    %c0_i32 = arith.constant 0 : i32
    %c0_i32_0 = arith.constant 0 : i32
    %c0_i32_1 = arith.constant 0 : i32
    %c0_i32_2 = arith.constant 0 : i32
    return %arg0, %c0_i32, %c0_i32_0, %c0_i32_1 : i32, i32, i32, i32
  }
}

</mosaic_0001>

<llo_original>
// kernel: vit_seg_forward.5
$region0: #{vit_seg_forward.5}
  #allocation0 [shape = 'u32[]', space=smem, size = 0x4, offset = 0x4, fixed_abs, tag = 'smem constant byte address 0x4 - core index']
  #allocation1 [shape = 'u32[144,128]{1,0:T(1,128)}', space=vmem, size = 0x12000, scoped, tag = 'internal scratch']
  %s0 = inlined_call_operand.vmem [shape: f32[2,16,64], index: 0, kind: input, shape index: {}]
  %s1 = inlined_call_operand.vmem [shape: bf16[64,32], index: 1, kind: input, shape index: {}]
  %s2 = inlined_call_operand.vmem [shape: f32[1,32], index: 2, kind: input, shape index: {}]
  %s3 = inlined_call_operand.vmem [shape: f32[1,32], index: 3, kind: input, shape index: {}]
  %s4 = inlined_call_operand.vmem [shape: f32[1,32], index: 4, kind: input, shape index: {}]
  %s5 = inlined_call_operand.vmem [shape: f32[16,32], index: 5, kind: input, shape index: {}]
  %s6 = inlined_call_operand.hbm [shape: f32[2,16,32], index: 6, kind: output, shape index: {}]
  %s7 = sld [smem:[#allocation0]]
  $region57: #{vit_seg_forward.5} parent=0
    _
  %s9 = ssub.s32 1, %s7
  %s10 = scalar_select 0, %s9, %s7
  $region1: #{vit_seg_forward.5} parent=0
    #allocation2 [shape = 'u8[16384]{0}', space=vmem, size = 0x4000, scoped, tag = 'output window, operand 0']
    #allocation3 [shape = 's32[2]{0}', space=sflag, size = 0x8, scoped, tag = 'scoped memory for vit_seg_forward.5']
    %11 = vsyncpa [#allocation3], 0
    %s12 = scalar_lea.sflag [#allocation3], 1
    %13 = vsyncpa %s12, 0
    loop: start=0, step=1, limit=4
    $region2: #{vit_seg_forward.5} parent=1 // loop_pre_header
      _
    $region3: #{vit_seg_forward.5} parent=1 // loop_header
      %s15 = sphi 0, %s19
      %p16 = scmp.ge.s32.totalorder %s15, 4
      %s25 = sphi 0, %s27
      %s28 = sphi 0, %s25
      %s29 = sphi 0, %s28
      %s45 = sphi 0, %s29
      %s49 = sphi 0, %s49
      %s51 = sphi 0, %s49
      %s52 = sphi 0, %s51
      %s66 = sphi 0, %s52
      %s70 = sphi 0, %s70
      %s72 = sphi 0, %s70
      %s73 = sphi 0, %s72
      %s87 = sphi 0, %s73
      %s91 = sphi 0, %s91
      %s93 = sphi 0, %s91
      %s94 = sphi 0, %s93
      %s108 = sphi 0, %s94
      %s112 = sphi 0, %s112
      %s114 = sphi 0, %s112
      %s115 = sphi 0, %s114
      %s129 = sphi 0, %s115
      %s133 = sphi 0, %s133
      %s135 = sphi 0, %s133
      %s136 = sphi 0, %s135
      %s150 = sphi 0, %s136
      %s156 = sphi 0, %s158
      %s159 = sphi 0, %s156
      %s160 = sphi 0, %s159
      %s176 = sphi 0, %s160
    $region4: #{vit_seg_forward.5} parent=1 // loop_header_branch
      %18 = sbr.rel (%p16) target = $region8
    $region5: #{vit_seg_forward.5} parent=1 // loop_body
      %s20 = ssub.s32 %s15, 1
      %s21 = ssub.s32 %s15, 2
      %s22 = sadd.s32 %s15, 1
      %s23 = ssub.s32 %s15, %s22
      %p24 = scmp.eq.s32.totalorder %s23, 0
      %s26 = sadd.s32 %s25, 1
      %s27 = scalar_select %p24, %s25, %s26
      %p30 = pneg %p24
      %p31 = scmp.eq.s32.totalorder %s15, 1
      %p32 = por %p30, %p31
      %p33 = scmp.ne.s32.totalorder %s25, %s28
      %p34 = scmp.eq.s32.totalorder %s15, 0
      %p35 = por %p33, %p34
      %p36 = scmp.ne.s32.totalorder %s25, %s28
      %p37 = scmp.eq.s32.totalorder %s20, 1
      %p38 = por %p36, %p37
      %p39 = scmp.ne.s32.totalorder %s28, %s29
      %p40 = scmp.eq.s32.totalorder %s20, 0
      %p41 = por %p39, %p40
      %p42 = scmp.ne.s32.totalorder %s28, %s29
      %p43 = scmp.eq.s32.totalorder %s21, 1
      %p44 = por %p42, %p43
      %p46 = scmp.ne.s32.totalorder %s29, %s45
      %p47 = scmp.eq.s32.totalorder %s21, 0
      %p48 = por %p46, %p47
      %s50 = sadd.s32 %s49, 1
      %p53 = scmp.eq.s32.totalorder %s15, 1
      %p54 = scmp.ne.s32.totalorder %s49, %s51
      %p55 = scmp.eq.s32.totalorder %s15, 0
      %p56 = por %p54, %p55
      %p57 = scmp.ne.s32.totalorder %s49, %s51
      %p58 = scmp.eq.s32.totalorder %s20, 1
      %p59 = por %p57, %p58
      %p60 = scmp.ne.s32.totalorder %s51, %s52
      %p61 = scmp.eq.s32.totalorder %s20, 0
      %p62 = por %p60, %p61
      %p63 = scmp.ne.s32.totalorder %s51, %s52
      %p64 = scmp.eq.s32.totalorder %s21, 1
      %p65 = por %p63, %p64
      %p67 = scmp.ne.s32.totalorder %s52, %s66
      %p68 = scmp.eq.s32.totalorder %s21, 0
      %p69 = por %p67, %p68
      %s71 = sadd.s32 %s70, 1
      %p74 = scmp.eq.s32.totalorder %s15, 1
      %p75 = scmp.ne.s32.totalorder %s70, %s72
      %p76 = scmp.eq.s32.totalorder %s15, 0
      %p77 = por %p75, %p76
      %p78 = scmp.ne.s32.totalorder %s70, %s72
      %p79 = scmp.eq.s32.totalorder %s20, 1
      %p80 = por %p78, %p79
      %p81 = scmp.ne.s32.totalorder %s72, %s73
      %p82 = scmp.eq.s32.totalorder %s20, 0
      %p83 = por %p81, %p82
      %p84 = scmp.ne.s32.totalorder %s72, %s73
      %p85 = scmp.eq.s32.totalorder %s21, 1
      %p86 = por %p84, %p85
      %p88 = scmp.ne.s32.totalorder %s73, %s87
      %p89 = scmp.eq.s32.totalorder %s21, 0
      %p90 = por %p88, %p89
      %s92 = sadd.s32 %s91, 1
      %p95 = scmp.eq.s32.totalorder %s15, 1
      %p96 = scmp.ne.s32.totalorder %s91, %s93
      %p97 = scmp.eq.s32.totalorder %s15, 0
      %p98 = por %p96, %p97
      %p99 = scmp.ne.s32.totalorder %s91, %s93
      %p100 = scmp.eq.s32.totalorder %s20, 1
      %p101 = por %p99, %p100
      %p102 = scmp.ne.s32.totalorder %s93, %s94
      %p103 = scmp.eq.s32.totalorder %s20, 0
      %p104 = por %p102, %p103
      %p105 = scmp.ne.s32.totalorder %s93, %s94
      %p106 = scmp.eq.s32.totalorder %s21, 1
      %p107 = por %p105, %p106
      %p109 = scmp.ne.s32.totalorder %s94, %s108
      %p110 = scmp.eq.s32.totalorder %s21, 0
      %p111 = por %p109, %p110
      %s113 = sadd.s32 %s112, 1
      %p116 = scmp.eq.s32.totalorder %s15, 1
      %p117 = scmp.ne.s32.totalorder %s112, %s114
      %p118 = scmp.eq.s32.totalorder %s15, 0
      %p119 = por %p117, %p118
      %p120 = scmp.ne.s32.totalorder %s112, %s114
      %p121 = scmp.eq.s32.totalorder %s20, 1
      %p122 = por %p120, %p121
      %p123 = scmp.ne.s32.totalorder %s114, %s115
      %p124 = scmp.eq.s32.totalorder %s20, 0
      %p125 = por %p123, %p124
      %p126 = scmp.ne.s32.totalorder %s114, %s115
      %p127 = scmp.eq.s32.totalorder %s21, 1
      %p128 = por %p126, %p127
      %p130 = scmp.ne.s32.totalorder %s115, %s129
      %p131 = scmp.eq.s32.totalorder %s21, 0
      %p132 = por %p130, %p131
      %s134 = sadd.s32 %s133, 1
      %p137 = scmp.eq.s32.totalorder %s15, 1
      %p138 = scmp.ne.s32.totalorder %s133, %s135
      %p139 = scmp.eq.s32.totalorder %s15, 0
      %p140 = por %p138, %p139
      %p141 = scmp.ne.s32.totalorder %s133, %s135
      %p142 = scmp.eq.s32.totalorder %s20, 1
      %p143 = por %p141, %p142
      %p144 = scmp.ne.s32.totalorder %s135, %s136
      %p145 = scmp.eq.s32.totalorder %s20, 0
      %p146 = por %p144, %p145
      %p147 = scmp.ne.s32.totalorder %s135, %s136
      %p148 = scmp.eq.s32.totalorder %s21, 1
      %p149 = por %p147, %p148
      %p151 = scmp.ne.s32.totalorder %s136, %s150
      %p152 = scmp.eq.s32.totalorder %s21, 0
      %p153 = por %p151, %p152
      %s154 = ssub.s32 %s15, %s22
      %p155 = scmp.eq.s32.totalorder %s154, 0
      %s157 = sadd.s32 %s156, 1
      %s158 = scalar_select %p155, %s156, %s157
      %p161 = pneg %p155
      %p162 = scmp.eq.s32.totalorder %s15, 1
      %p163 = por %p161, %p162
      %p164 = scmp.ne.s32.totalorder %s156, %s159
      %p165 = scmp.eq.s32.totalorder %s15, 0
      %p166 = por %p164, %p165
      %p167 = scmp.ne.s32.totalorder %s156, %s159
      %p168 = scmp.eq.s32.totalorder %s20, 1
      %p169 = por %p167, %p168
      %p170 = scmp.ne.s32.totalorder %s159, %s160
      %p171 = scmp.eq.s32.totalorder %s20, 0
      %p172 = por %p170, %p171
      %p173 = scmp.ne.s32.totalorder %s159, %s160
      %p174 = scmp.eq.s32.totalorder %s21, 1
      %p175 = por %p173, %p174
      %p177 = scmp.ne.s32.totalorder %s160, %s176
      %p178 = scmp.eq.s32.totalorder %s21, 0
      %p179 = por %p177, %p178
      %p180 = scmp.le.s32.totalorder 1, %s15
      %p181 = scmp.lt.s32.totalorder %s15, 3
      %p182 = pnand %p180, %p181
      %p183 = pneg %p182
      // Predicated region
      $region9: #{vit_seg_forward.5} parent=5 // pred_check
        _
      $region10: #{vit_seg_forward.5} parent=5 // pred_check_branch
        %185 = sbr.rel (%p182) target = $region12
      $region11: #{vit_seg_forward.5} parent=5 // pred_region
        %s186 = ssub.s32 %s15, 1
        // Predicated region
        $region13: #{vit_seg_forward.5} parent=11 // pred_check
          %p187 = pneg %p62
        $region14: #{vit_seg_forward.5} parent=11 // pred_check_branch
          %189 = sbr.rel (%p187) target = $region16
        $region15: #{vit_seg_forward.5} parent=11 // pred_region
          _
        $region16: #{vit_seg_forward.5} parent=11 // pred_fallthru
          _
        // Predicated region
        $region17: #{vit_seg_forward.5} parent=11 // pred_check
          %p190 = pneg %p83
        $region18: #{vit_seg_forward.5} parent=11 // pred_check_branch
          %192 = sbr.rel (%p190) target = $region20
        $region19: #{vit_seg_forward.5} parent=11 // pred_region
          _
        $region20: #{vit_seg_forward.5} parent=11 // pred_fallthru
          _
        // Predicated region
        $region21: #{vit_seg_forward.5} parent=11 // pred_check
          %p193 = pneg %p104
        $region22: #{vit_seg_forward.5} parent=11 // pred_check_branch
          %195 = sbr.rel (%p193) target = $region24
        $region23: #{vit_seg_forward.5} parent=11 // pred_region
          _
        $region24: #{vit_seg_forward.5} parent=11 // pred_fallthru
          _
        // Predicated region
        $region25: #{vit_seg_forward.5} parent=11 // pred_check
          %p196 = pneg %p125
        $region26: #{vit_seg_forward.5} parent=11 // pred_check_branch
          %198 = sbr.rel (%p196) target = $region28
        $region27: #{vit_seg_forward.5} parent=11 // pred_region
          _
        $region28: #{vit_seg_forward.5} parent=11 // pred_fallthru
          _
        // Predicated region
        $region29: #{vit_seg_forward.5} parent=11 // pred_check
          %p199 = pneg %p146
        $region30: #{vit_seg_forward.5} parent=11 // pred_check_branch
          %201 = sbr.rel (%p199) target = $region32
        $region31: #{vit_seg_forward.5} parent=11 // pred_region
          _
        $region32: #{vit_seg_forward.5} parent=11 // pred_fallthru
          _
      $region12: #{vit_seg_forward.5} parent=5 // pred_fallthru
        _
      %p202 = scmp.lt.s32.totalorder %s15, 2
      // Predicated region
      $region33: #{vit_seg_forward.5} parent=5 // pred_check
        %p203 = pneg %p202
      $region34: #{vit_seg_forward.5} parent=5 // pred_check_branch
        %205 = sbr.rel (%p203) target = $region36
      $region35: #{vit_seg_forward.5} parent=5 // pred_region
        // Predicated region
        $region37: #{vit_seg_forward.5} parent=35 // pred_check
          %p206 = pneg %p35
        $region38: #{vit_seg_forward.5} parent=35 // pred_check_branch
          %208 = sbr.rel (%p206) target = $region40
        $region39: #{vit_seg_forward.5} parent=35 // pred_region
          %p209 = scmp.lt.s32.totalorder %s15, 1
          %s210 = scalar_select %p209, %s15, 1
          %s211 = smul.addr %s210, 2
          %s212 = smul.addr %s211, 8
          %s213 = scalar_lea.vmem %s0, %s212
        $region40: #{vit_seg_forward.5} parent=35 // pred_fallthru
          _
      $region36: #{vit_seg_forward.5} parent=5 // pred_fallthru
        _
      %p214 = scmp.le.s32.totalorder 1, %s15
      %p215 = scmp.lt.s32.totalorder %s15, 3
      %p216 = pnand %p214, %p215
      %p217 = pneg %p216
      // Predicated region
      $region41: #{vit_seg_forward.5} parent=5 // pred_check
        _
      $region42: #{vit_seg_forward.5} parent=5 // pred_check_branch
        %219 = sbr.rel (%p216) target = $region44
      $region43: #{vit_seg_forward.5} parent=5 // pred_region
        %s220 = ssub.s32 %s15, 1
        %p221 = scmp.lt.s32.totalorder %s20, 1
        %s222 = scalar_select %p221, %s20, 1
        %s223 = smul.addr %s222, 2
        %s224 = smul.addr %s223, 8
        %s225 = scalar_lea.vmem %s0, %s224
        %p226 = pneg %p41
        %p227 = pneg %p38
        %p228 = pneg %p62
        %p229 = pneg %p59
        %p230 = pneg %p83
        %p231 = pneg %p80
        %p232 = pneg %p104
        %p233 = pneg %p101
        %p234 = pneg %p125
        %p235 = pneg %p122
        %p236 = pneg %p146
        %p237 = pneg %p143
        %p238 = pneg %p172
        %p239 = pneg %p169
        %s240 = sand.u32 %s159, 1
        %s241 = scalar_lea.sflag [#allocation3], %s240
        %s242 = sand.u32 %s159, 1
        %s243 = smul.addr %s242, 16
        %s244 = scalar_lea.vmem [#allocation2], %s243
        %p245 = scmp.lt.s32.totalorder %s20, 1
        %s246 = scalar_select %p245, %s20, 1
        %s247 = smul.addr %s246, 2
        %s248 = smul.addr %s247, 8
        %s249 = scalar_lea.vmem %s0, %s248
        %v251 = vld [vmem:[%s249] sm:$0xff]
        %v252 = vld [vmem:[%s249 + $0x8] sm:$0xff]
        %v253 = vpack.c.bf16 %v252, %v251
        %v254 = vld [vmem:[%s1] sm:$0xf]
        %v255 = vld [vmem:[%s1 + $0x4] sm:$0xf]
        %v256 = vld [vmem:[%s1 + $0x8] sm:$0xf]
        %v257 = vld [vmem:[%s1 + $0xc] sm:$0xf]
        %v258 = vld [vmem:[%s1 + $0x10] sm:$0xf]
        %v259 = vld [vmem:[%s1 + $0x14] sm:$0xf]
        %v260 = vld [vmem:[%s1 + $0x18] sm:$0xf]
        %v261 = vld [vmem:[%s1 + $0x1c] sm:$0xf]
        %v262 = vld [vmem:[%s2] sm:$0x1]
        %v264 = vlaneseq
        %v265 = vshrl.u32 %v264, 7
        %v266 = vsub.s32 0, %v265
        %v267 = vrot.slane %v262, %v266
        %v277 = vunpack.c.l.b16 %v254
        %v278 = vunpack.c.l.b16 %v255
        %v279 = vunpack.c.l.b16 %v256
        %v280 = vunpack.c.l.b16 %v257
        %v281 = vunpack.c.l.b16 %v258
        %v282 = vunpack.c.l.b16 %v259
        %v283 = vunpack.c.l.b16 %v260
        %v284 = vunpack.c.l.b16 %v261
        %v285 = vpack.c.b16 %v278, %v277
        %v286 = vpack.c.b16 %v280, %v279
        %v287 = vpack.c.b16 %v282, %v281
        %v288 = vpack.c.b16 %v284, %v283
        %vm293 = vcmask 523264
        %v295 = vsel %vm293, %v253, 0
        %297 = vmatprep.subr.bf16.mxu0 0
        %298 = vmatpush1.bf16.msra.mxu0 %v285
        %299 = vmatprep.subr.bf16.mxu0 0
        %300 = vmatpush1.bf16.msra.mxu0 %v286
        %301 = vmatprep.subr.bf16.mxu0 0
        %302 = vmatpush1.bf16.msra.mxu0 %v287
        %303 = vmatprep.subr.bf16.mxu0 0
        %304 = vmatpush1.bf16.msra.mxu0 %v288
        %305 = vmatprep.subr.bf16.mxu0 0
        %306 = vmatpush1.bf16.msra.mxu0 0
        %307 = vmatprep.subr.bf16.mxu0 0
        %308 = vmatpush1.bf16.msra.mxu0 0
        %309 = vmatprep.subr.bf16.mxu0 0
        %310 = vmatpush1.bf16.msra.mxu0 0
        %311 = vmatprep.subr.bf16.mxu0 0
        %312 = vmatpush1.bf16.msra.mxu0 0
        %313 = vmatprep.subr.bf16.mxu0 0
        %314 = vmatpush1.bf16.msra.mxu0 0
        %315 = vmatprep.subr.bf16.mxu0 0
        %316 = vmatpush1.bf16.msra.mxu0 0
        %317 = vmatprep.subr.bf16.mxu0 0
        %318 = vmatpush1.bf16.msra.mxu0 0
        %319 = vmatprep.subr.bf16.mxu0 0
        %320 = vmatpush1.bf16.msra.mxu0 0
        %321 = vmatprep.subr.bf16.mxu0 0
        %322 = vmatpush1.bf16.msra.mxu0 0
        %323 = vmatprep.subr.bf16.mxu0 0
        %324 = vmatpush1.bf16.msra.mxu0 0
        %325 = vmatprep.subr.bf16.mxu0 0
        %326 = vmatpush1.bf16.msra.mxu0 0
        %327 = vmatprep.subr.bf16.mxu0 0
        %328 = vmatpush1.bf16.msra.mxu0 0
        %329 = vmatprep.mubr.bf16.mxu0 0
        %330 = vmatmul.mubr.bf16.gmra.mrb[0].mxu0 %v295
        %v331 = vpop.f32.mrb[0].mxu0
        %v332 = vadd.f32 %v267, %v331
        %v333 = vpop.f32.mrb[0].mxu0
        %v334 = vpop.f32.mrb[0].mxu0
        %v335 = vadd.f32 %v267, %v334
        %v336 = vpop.f32.mrb[0].mxu0
        %337 = vdwg.mxu0
        %vm338 = vcmask 261120
        %v339 = vsel %vm338, %v332, 0.0
        %340 = vadd.xlane.f32.xlu0 %v339
        %v341 = vpop.xlane.xlu0 %340
        %v342 = vsel %vm338, %v335, 0.0
        %343 = vadd.xlane.f32.xlu0 %v342
        %v344 = vpop.xlane.xlu0 %343
        %v345 = vrcp.pop 32.0
        %v346 = vmul.f32 %v341, %v345
        %v347 = vmul.f32 %v344, %v345
        %v348 = vmul.f32 %v332, %v332
        %v349 = vmul.f32 %v335, %v335
        %v350 = vsel %vm338, %v348, 0.0
        %351 = vadd.xlane.f32.xlu0 %v350
        %v352 = vpop.xlane.xlu0 %351
        %v353 = vsel %vm338, %v349, 0.0
        %354 = vadd.xlane.f32.xlu0 %v353
        %v355 = vpop.xlane.xlu0 %354
        %v356 = vmul.f32 %v352, %v345
        %v357 = vmul.f32 %v355, %v345
        %v358 = vmul.f32 %v346, %v346
        %v359 = vmul.f32 %v347, %v347
        %v360 = vsub.f32 %v356, %v358
        %v361 = vsub.f32 %v357, %v359
        %v362 = vsub.f32 %v332, %v346
        %v363 = vsub.f32 %v335, %v347
        %v364 = vadd.f32 %v360, 1e-05
        %v365 = vadd.f32 %v361, 1e-05
        %v366 = vrsqrt.pop %v364
        %v367 = vrsqrt.pop %v365
        %v368 = vmul.f32 %v362, %v366
        %v369 = vmul.f32 %v363, %v367
        %v370 = vld [vmem:[%s3] sm:$0x1]
        %v372 = vlaneseq
        %v373 = vshrl.u32 %v372, 7
        %v374 = vsub.s32 0, %v373
        %v375 = vrot.slane %v370, %v374
        %v377 = vmul.f32 %v368, %v375
        %v378 = vmul.f32 %v369, %v375
        %v379 = vld [vmem:[%s4] sm:$0x1]
        %v381 = vlaneseq
        %v382 = vshrl.u32 %v381, 7
        %v383 = vsub.s32 0, %v382
        %v384 = vrot.slane %v379, %v383
        %v386 = vadd.f32 %v377, %v384
        %v387 = vadd.f32 %v378, %v384
        %v388 = vld [vmem:[%s5] sm:$0xff]
        %v389 = vld [vmem:[%s5 + $0x8] sm:$0xff]
        %v390 = vadd.f32 %v386, %v388
        %v391 = vadd.f32 %v387, %v389
        %392 = vst.msk [vmem:[%s244] sm:$0xff] %vm338, %v390
        %393 = vst.msk [vmem:[%s244 + $0x8] sm:$0xff] %vm338, %v391
        %s394 = sand.u32 %s159, 1
        %s395 = scalar_lea.sflag [#allocation3], %s394
        %s396 = sand.u32 %s159, 1
        %s397 = smul.addr %s396, 16
        %s398 = scalar_lea.vmem [#allocation2], %s397
        // Predicated region
        $region45: #{vit_seg_forward.5} parent=43 // pred_check
          %p399 = pneg %p169
        $region46: #{vit_seg_forward.5} parent=43 // pred_check_branch
          %401 = sbr.rel (%p399) target = $region48
        $region47: #{vit_seg_forward.5} parent=43 // pred_region
          %s403 = ssub.s32 256, 256
          %404 = vsyncadd %s395, %s403
          %s405 = smul.addr %s20, 2
          %s406 = smul.addr %s405, 128
          %s407 = scalar_lea.hbm %s6, %s406
          %s408 = sshll.u32 %s398, 4
          %s409 = int_to_ptr.vmem [resolvable:$true] %s408
          %414 = dma.vmem_to_hbm [thread:$0]  %s409, 256, %s407, %s395, 128, 128, 8
        $region48: #{vit_seg_forward.5} parent=43 // pred_fallthru
          _
      $region44: #{vit_seg_forward.5} parent=5 // pred_fallthru
        _
      %p415 = scmp.le.s32.totalorder 2, %s15
      // Predicated region
      $region49: #{vit_seg_forward.5} parent=5 // pred_check
        %p416 = pneg %p415
      $region50: #{vit_seg_forward.5} parent=5 // pred_check_branch
        %418 = sbr.rel (%p416) target = $region52
      $region51: #{vit_seg_forward.5} parent=5 // pred_region
        %s419 = ssub.s32 %s15, 2
        // Predicated region
        $region53: #{vit_seg_forward.5} parent=51 // pred_check
          %p420 = pneg %p175
        $region54: #{vit_seg_forward.5} parent=51 // pred_check_branch
          %422 = sbr.rel (%p420) target = $region56
        $region55: #{vit_seg_forward.5} parent=51 // pred_region
          %s423 = sand.u32 %s160, 1
          %s424 = scalar_lea.sflag [#allocation3], %s423
          %s425 = sand.u32 %s160, 1
          %s426 = smul.addr %s425, 16
          %s427 = scalar_lea.vmem [#allocation2], %s426
          %428 = dma.done %s424, 256
        $region56: #{vit_seg_forward.5} parent=51 // pred_fallthru
          _
      $region52: #{vit_seg_forward.5} parent=5 // pred_fallthru
        _
    $region6: #{vit_seg_forward.5} parent=1 // loop_footer
      %s19 = sadd.s32 1, %s15
    $region7: #{vit_seg_forward.5} parent=1 // loop_footer_branch
      %14 = sbr.rel target = $region3
    $region8: #{vit_seg_forward.5} parent=1 // loop_exit
      _
    %429 = vsyncpa [#allocation3], 1
    %s430 = scalar_lea.sflag [#allocation3], 1
    %431 = vsyncpa %s430, 1

// kernel: vit_seg_forward.6
$region0: #{vit_seg_forward.6}
  #allocation0 [shape = 'u32[]', space=smem, size = 0x4, offset = 0x4, fixed_abs, tag = 'smem constant byte address 0x4 - core index']
  #allocation1 [shape = 'u32[144,128]{1,0:T(1,128)}', space=vmem, size = 0x12000, scoped, tag = 'internal scratch']
  %s0 = inlined_call_operand.hbm [shape: f32[2,16,32], index: 0, kind: input, shape index: {}]
  %s1 = inlined_call_operand.hbm [shape: f32[2,1,32], index: 1, kind: input, shape index: {}]
  %s2 = inlined_call_operand.hbm [shape: f32[2,1,32], index: 2, kind: input, shape index: {}]
  %s3 = inlined_call_operand.hbm [shape: f32[2,1,32], index: 3, kind: input, shape index: {}]
  %s4 = inlined_call_operand.hbm [shape: f32[2,1,32], index: 4, kind: input, shape index: {}]
  %s5 = inlined_call_operand.hbm [shape: bf16[2,32,96], index: 5, kind: input, shape index: {}]
  %s6 = inlined_call_operand.hbm [shape: f32[2,1,96], index: 6, kind: input, shape index: {}]
  %s7 = inlined_call_operand.hbm [shape: bf16[2,32,32], index: 7, kind: input, shape index: {}]
  %s8 = inlined_call_operand.hbm [shape: f32[2,1,32], index: 8, kind: input, shape index: {}]
  %s9 = inlined_call_operand.hbm [shape: f32[2,1,32], index: 9, kind: input, shape index: {}]
  %s10 = inlined_call_operand.hbm [shape: f32[2,1,32], index: 10, kind: input, shape index: {}]
  %s11 = inlined_call_operand.hbm [shape: bf16[2,32,64], index: 11, kind: input, shape index: {}]
  %s12 = inlined_call_operand.hbm [shape: f32[2,1,64], index: 12, kind: input, shape index: {}]
  %s13 = inlined_call_operand.hbm [shape: bf16[2,64,32], index: 13, kind: input, shape index: {}]
  %s14 = inlined_call_operand.hbm [shape: f32[2,1,32], index: 14, kind: input, shape index: {}]
  %s15 = inlined_call_operand.hbm [shape: f32[2,16,32], index: 15, kind: output, shape index: {}]
  %s16 = sld [smem:[#allocation0]]
  $region157: #{vit_seg_forward.6} parent=0
    _
  %s18 = ssub.s32 1, %s16
  %s19 = scalar_select 0, %s18, %s16
  $region1: #{vit_seg_forward.6} parent=0
    #allocation2 [shape = 'u8[16384]{0}', space=vmem, size = 0x4000, scoped, tag = 'input window, operand 0']
    #allocation3 [shape = 's32[2]{0}', space=sflag, size = 0x8, scoped, tag = 'scoped memory for vit_seg_forward.6']
    #allocation4 [shape = 's32[2]{0}', space=sflag, size = 0x8, scoped, tag = 'scoped memory for vit_seg_forward.6']
    #allocation5 [shape = 'u8[1024]{0}', space=vmem, size = 0x400, scoped, tag = 'input window, operand 1']
    #allocation6 [shape = 's32[2]{0}', space=sflag, size = 0x8, scoped, tag = 'scoped memory for vit_seg_forward.6']
    #allocation7 [shape = 'u8[1024]{0}', space=vmem, size = 0x400, scoped, tag = 'input window, operand 2']
    #allocation8 [shape = 'u8[1024]{0}', space=vmem, size = 0x400, scoped, tag = 'input window, operand 3']
    #allocation9 [shape = 's32[2]{0}', space=sflag, size = 0x8, scoped, tag = 'scoped memory for vit_seg_forward.6']
    #allocation10 [shape = 'u8[1024]{0}', space=vmem, size = 0x400, scoped, tag = 'input window, operand 4']
    #allocation11 [shape = 'u8[16384]{0}', space=vmem, size = 0x4000, scoped, tag = 'input window, operand 5']
    #allocation12 [shape = 's32[2]{0}', space=sflag, size = 0x8, scoped, tag = 'scoped memory for vit_seg_forward.6']
    #allocation13 [shape = 'u8[1024]{0}', space=vmem, size = 0x400, scoped, tag = 'input window, operand 6']
    #allocation14 [shape = 'u8[16384]{0}', space=vmem, size = 0x4000, scoped, tag = 'input window, operand 7']
    #allocation15 [shape = 's32[2]{0}', space=sflag, size = 0x8, scoped, tag = 'scoped memory for vit_seg_forward.6']
    #allocation16 [shape = 'u8[1024]{0}', space=vmem, size = 0x400, scoped, tag = 'input window, operand 8']
    #allocation17 [shape = 'u8[1024]{0}', space=vmem, size = 0x400, scoped, tag = 'input window, operand 9']
    #allocation18 [shape = 's32[2]{0}', space=sflag, size = 0x8, scoped, tag = 'scoped memory for vit_seg_forward.6']
    #allocation19 [shape = 'u8[1024]{0}', space=vmem, size = 0x400, scoped, tag = 'input window, operand 10']
    #allocation20 [shape = 'u8[16384]{0}', space=vmem, size = 0x4000, scoped, tag = 'input window, operand 11']
    #allocation21 [shape = 's32[2]{0}', space=sflag, size = 0x8, scoped, tag = 'scoped memory for vit_seg_forward.6']
    #allocation22 [shape = 'u8[1024]{0}', space=vmem, size = 0x400, scoped, tag = 'input window, operand 12']
    #allocation23 [shape = 'u8[32768]{0}', space=vmem, size = 0x8000, scoped, tag = 'input window, operand 13']
    #allocation24 [shape = 's32[2]{0}', space=sflag, size = 0x8, scoped, tag = 'scoped memory for vit_seg_forward.6']
    #allocation25 [shape = 'u8[1024]{0}', space=vmem, size = 0x400, scoped, tag = 'input window, operand 14']
    #allocation26 [shape = 'u8[16384]{0}', space=vmem, size = 0x4000, scoped, tag = 'output window, operand 0']
    %20 = vsyncpa [#allocation3], 0
    %s21 = scalar_lea.sflag [#allocation3], 1
    %22 = vsyncpa %s21, 0
    %23 = vsyncpa [#allocation6], 0
    %s24 = scalar_lea.sflag [#allocation6], 1
    %25 = vsyncpa %s24, 0
    %26 = vsyncpa [#allocation9], 0
    %s27 = scalar_lea.sflag [#allocation9], 1
    %28 = vsyncpa %s27, 0
    %29 = vsyncpa [#allocation12], 0
    %s30 = scalar_lea.sflag [#allocation12], 1
    %31 = vsyncpa %s30, 0
    %32 = vsyncpa [#allocation15], 0
    %s33 = scalar_lea.sflag [#allocation15], 1
    %34 = vsyncpa %s33, 0
    %35 = vsyncpa [#allocation18], 0
    %s36 = scalar_lea.sflag [#allocation18], 1
    %37 = vsyncpa %s36, 0
    %38 = vsyncpa [#allocation21], 0
    %s39 = scalar_lea.sflag [#allocation21], 1
    %40 = vsyncpa %s39, 0
    %41 = vsyncpa [#allocation24], 0
    %s42 = scalar_lea.sflag [#allocation24], 1
    %43 = vsyncpa %s42, 0
    %44 = vsyncpa [#allocation4], 0
    %s45 = scalar_lea.sflag [#allocation4], 1
    %46 = vsyncpa %s45, 0
    loop: start=0, step=1, limit=6
    $region2: #{vit_seg_forward.6} parent=1 // loop_pre_header
      _
    $region3: #{vit_seg_forward.6} parent=1 // loop_header
      %s48 = sphi 0, %s52
      %p49 = scmp.ge.s32.totalorder %s48, 6
      %s55 = sphi 0, %s67
      %s56 = sphi 0, %s63
      %s57 = sphi 0, %s55
      %s58 = sphi 0, %s56
      %s59 = sphi 0, %s57
      %s60 = sphi 0, %s58
      %s70 = sphi 0, %s72
      %s73 = sphi 0, %s70
      %s74 = sphi 0, %s73
      %s90 = sphi 0, %s74
      %s96 = sphi 0, %s98
      %s99 = sphi 0, %s96
      %s100 = sphi 0, %s99
      %s116 = sphi 0, %s100
      %s122 = sphi 0, %s124
      %s125 = sphi 0, %s122
      %s126 = sphi 0, %s125
      %s142 = sphi 0, %s126
      %s148 = sphi 0, %s150
      %s151 = sphi 0, %s148
      %s152 = sphi 0, %s151
      %s168 = sphi 0, %s152
      %s174 = sphi 0, %s176
      %s177 = sphi 0, %s174
      %s178 = sphi 0, %s177
      %s194 = sphi 0, %s178
      %s200 = sphi 0, %s202
      %s203 = sphi 0, %s200
      %s204 = sphi 0, %s203
      %s220 = sphi 0, %s204
      %s226 = sphi 0, %s228
      %s229 = sphi 0, %s226
      %s230 = sphi 0, %s229
      %s246 = sphi 0, %s230
      %s252 = sphi 0, %s254
      %s255 = sphi 0, %s252
      %s256 = sphi 0, %s255
      %s272 = sphi 0, %s256
      %s278 = sphi 0, %s280
      %s281 = sphi 0, %s278
      %s282 = sphi 0, %s281
      %s298 = sphi 0, %s282
      %s304 = sphi 0, %s306
      %s307 = sphi 0, %s304
      %s308 = sphi 0, %s307
      %s324 = sphi 0, %s308
      %s330 = sphi 0, %s332
      %s333 = sphi 0, %s330
      %s334 = sphi 0, %s333
      %s350 = sphi 0, %s334
      %s356 = sphi 0, %s358
      %s359 = sphi 0, %s356
      %s360 = sphi 0, %s359
      %s376 = sphi 0, %s360
      %s382 = sphi 0, %s384
      %s385 = sphi 0, %s382
      %s386 = sphi 0, %s385
      %s402 = sphi 0, %s386
      %s408 = sphi 0, %s410
      %s411 = sphi 0, %s408
      %s412 = sphi 0, %s411
      %s428 = sphi 0, %s412
      %s434 = sphi 0, %s436
      %s437 = sphi 0, %s434
      %s438 = sphi 0, %s437
      %s454 = sphi 0, %s438
      %s460 = sphi 0, %s462
      %s463 = sphi 0, %s460
      %s464 = sphi 0, %s463
      %s480 = sphi 0, %s464
    $region4: #{vit_seg_forward.6} parent=1 // loop_header_branch
      %51 = sbr.rel (%p49) target = $region8
    $region5: #{vit_seg_forward.6} parent=1 // loop_body
      %s53 = ssub.s32 %s48, 1
      %s54 = ssub.s32 %s48, 2
      %s61 = sadd.s32 1, %s56
      %p62 = scmp.ge.s32.totalorder %s61, 2
      %s63 = scalar_select %p62, 0, %s61
      %s64 = sadd.s32 1, %s55
      %s65 = scalar_select %p62, %s64, %s55
      %p66 = scmp.ge.s32.totalorder %s65, 2
      %s67 = scalar_select %p66, 0, %s65
      %s68 = ssub.s32 %s55, %s67
      %p69 = scmp.eq.s32.totalorder %s68, 0
      %s71 = sadd.s32 %s70, 1
      %s72 = scalar_select %p69, %s70, %s71
      %p75 = pneg %p69
      %p76 = scmp.eq.s32.totalorder %s48, 3
      %p77 = por %p75, %p76
      %p78 = scmp.ne.s32.totalorder %s70, %s73
      %p79 = scmp.eq.s32.totalorder %s48, 0
      %p80 = por %p78, %p79
      %p81 = scmp.ne.s32.totalorder %s70, %s73
      %p82 = scmp.eq.s32.totalorder %s53, 3
      %p83 = por %p81, %p82
      %p84 = scmp.ne.s32.totalorder %s73, %s74
      %p85 = scmp.eq.s32.totalorder %s53, 0
      %p86 = por %p84, %p85
      %p87 = scmp.ne.s32.totalorder %s73, %s74
      %p88 = scmp.eq.s32.totalorder %s54, 3
      %p89 = por %p87, %p88
      %p91 = scmp.ne.s32.totalorder %s74, %s90
      %p92 = scmp.eq.s32.totalorder %s54, 0
      %p93 = por %p91, %p92
      %s94 = ssub.s32 %s56, %s63
      %p95 = scmp.eq.s32.totalorder %s94, 0
      %s97 = sadd.s32 %s96, 1
      %s98 = scalar_select %p95, %s96, %s97
      %p101 = pneg %p95
      %p102 = scmp.eq.s32.totalorder %s48, 3
      %p103 = por %p101, %p102
      %p104 = scmp.ne.s32.totalorder %s96, %s99
      %p105 = scmp.eq.s32.totalorder %s48, 0
      %p106 = por %p104, %p105
      %p107 = scmp.ne.s32.totalorder %s96, %s99
      %p108 = scmp.eq.s32.totalorder %s53, 3
      %p109 = por %p107, %p108
      %p110 = scmp.ne.s32.totalorder %s99, %s100
      %p111 = scmp.eq.s32.totalorder %s53, 0
      %p112 = por %p110, %p111
      %p113 = scmp.ne.s32.totalorder %s99, %s100
      %p114 = scmp.eq.s32.totalorder %s54, 3
      %p115 = por %p113, %p114
      %p117 = scmp.ne.s32.totalorder %s100, %s116
      %p118 = scmp.eq.s32.totalorder %s54, 0
      %p119 = por %p117, %p118
      %s120 = ssub.s32 %s56, %s63
      %p121 = scmp.eq.s32.totalorder %s120, 0
      %s123 = sadd.s32 %s122, 1
      %s124 = scalar_select %p121, %s122, %s123
      %p127 = pneg %p121
      %p128 = scmp.eq.s32.totalorder %s48, 3
      %p129 = por %p127, %p128
      %p130 = scmp.ne.s32.totalorder %s122, %s125
      %p131 = scmp.eq.s32.totalorder %s48, 0
      %p132 = por %p130, %p131
      %p133 = scmp.ne.s32.totalorder %s122, %s125
      %p134 = scmp.eq.s32.totalorder %s53, 3
      %p135 = por %p133, %p134
      %p136 = scmp.ne.s32.totalorder %s125, %s126
      %p137 = scmp.eq.s32.totalorder %s53, 0
      %p138 = por %p136, %p137
      %p139 = scmp.ne.s32.totalorder %s125, %s126
      %p140 = scmp.eq.s32.totalorder %s54, 3
      %p141 = por %p139, %p140
      %p143 = scmp.ne.s32.totalorder %s126, %s142
      %p144 = scmp.eq.s32.totalorder %s54, 0
      %p145 = por %p143, %p144
      %s146 = ssub.s32 %s56, %s63
      %p147 = scmp.eq.s32.totalorder %s146, 0
      %s149 = sadd.s32 %s148, 1
      %s150 = scalar_select %p147, %s148, %s149
      %p153 = pneg %p147
      %p154 = scmp.eq.s32.totalorder %s48, 3
      %p155 = por %p153, %p154
      %p156 = scmp.ne.s32.totalorder %s148, %s151
      %p157 = scmp.eq.s32.totalorder %s48, 0
      %p158 = por %p156, %p157
      %p159 = scmp.ne.s32.totalorder %s148, %s151
      %p160 = scmp.eq.s32.totalorder %s53, 3
      %p161 = por %p159, %p160
      %p162 = scmp.ne.s32.totalorder %s151, %s152
      %p163 = scmp.eq.s32.totalorder %s53, 0
      %p164 = por %p162, %p163
      %p165 = scmp.ne.s32.totalorder %s151, %s152
      %p166 = scmp.eq.s32.totalorder %s54, 3
      %p167 = por %p165, %p166
      %p169 = scmp.ne.s32.totalorder %s152, %s168
      %p170 = scmp.eq.s32.totalorder %s54, 0
      %p171 = por %p169, %p170
      %s172 = ssub.s32 %s56, %s63
      %p173 = scmp.eq.s32.totalorder %s172, 0
      %s175 = sadd.s32 %s174, 1
      %s176 = scalar_select %p173, %s174, %s175
      %p179 = pneg %p173
      %p180 = scmp.eq.s32.totalorder %s48, 3
      %p181 = por %p179, %p180
      %p182 = scmp.ne.s32.totalorder %s174, %s177
      %p183 = scmp.eq.s32.totalorder %s48, 0
      %p184 = por %p182, %p183
      %p185 = scmp.ne.s32.totalorder %s174, %s177
      %p186 = scmp.eq.s32.totalorder %s53, 3
      %p187 = por %p185, %p186
      %p188 = scmp.ne.s32.totalorder %s177, %s178
      %p189 = scmp.eq.s32.totalorder %s53, 0
      %p190 = por %p188, %p189
      %p191 = scmp.ne.s32.totalorder %s177, %s178
      %p192 = scmp.eq.s32.totalorder %s54, 3
      %p193 = por %p191, %p192
      %p195 = scmp.ne.s32.totalorder %s178, %s194
      %p196 = scmp.eq.s32.totalorder %s54, 0
      %p197 = por %p195, %p196
      %s198 = ssub.s32 %s56, %s63
      %p199 = scmp.eq.s32.totalorder %s198, 0
      %s201 = sadd.s32 %s200, 1
      %s202 = scalar_select %p199, %s200, %s201
      %p205 = pneg %p199
      %p206 = scmp.eq.s32.totalorder %s48, 3
      %p207 = por %p205, %p206
      %p208 = scmp.ne.s32.totalorder %s200, %s203
      %p209 = scmp.eq.s32.totalorder %s48, 0
      %p210 = por %p208, %p209
      %p211 = scmp.ne.s32.totalorder %s200, %s203
      %p212 = scmp.eq.s32.totalorder %s53, 3
      %p213 = por %p211, %p212
      %p214 = scmp.ne.s32.totalorder %s203, %s204
      %p215 = scmp.eq.s32.totalorder %s53, 0
      %p216 = por %p214, %p215
      %p217 = scmp.ne.s32.totalorder %s203, %s204
      %p218 = scmp.eq.s32.totalorder %s54, 3
      %p219 = por %p217, %p218
      %p221 = scmp.ne.s32.totalorder %s204, %s220
      %p222 = scmp.eq.s32.totalorder %s54, 0
      %p223 = por %p221, %p222
      %s224 = ssub.s32 %s56, %s63
      %p225 = scmp.eq.s32.totalorder %s224, 0
      %s227 = sadd.s32 %s226, 1
      %s228 = scalar_select %p225, %s226, %s227
      %p231 = pneg %p225
      %p232 = scmp.eq.s32.totalorder %s48, 3
      %p233 = por %p231, %p232
      %p234 = scmp.ne.s32.totalorder %s226, %s229
      %p235 = scmp.eq.s32.totalorder %s48, 0
      %p236 = por %p234, %p235
      %p237 = scmp.ne.s32.totalorder %s226, %s229
      %p238 = scmp.eq.s32.totalorder %s53, 3
      %p239 = por %p237, %p238
      %p240 = scmp.ne.s32.totalorder %s229, %s230
      %p241 = scmp.eq.s32.totalorder %s53, 0
      %p242 = por %p240, %p241
      %p243 = scmp.ne.s32.totalorder %s229, %s230
      %p244 = scmp.eq.s32.totalorder %s54, 3
      %p245 = por %p243, %p244
      %p247 = scmp.ne.s32.totalorder %s230, %s246
      %p248 = scmp.eq.s32.totalorder %s54, 0
      %p249 = por %p247, %p248
      %s250 = ssub.s32 %s56, %s63
      %p251 = scmp.eq.s32.totalorder %s250, 0
      %s253 = sadd.s32 %s252, 1
      %s254 = scalar_select %p251, %s252, %s253
      %p257 = pneg %p251
      %p258 = scmp.eq.s32.totalorder %s48, 3
      %p259 = por %p257, %p258
      %p260 = scmp.ne.s32.totalorder %s252, %s255
      %p261 = scmp.eq.s32.totalorder %s48, 0
      %p262 = por %p260, %p261
      %p263 = scmp.ne.s32.totalorder %s252, %s255
      %p264 = scmp.eq.s32.totalorder %s53, 3
      %p265 = por %p263, %p264
      %p266 = scmp.ne.s32.totalorder %s255, %s256
      %p267 = scmp.eq.s32.totalorder %s53, 0
      %p268 = por %p266, %p267
      %p269 = scmp.ne.s32.totalorder %s255, %s256
      %p270 = scmp.eq.s32.totalorder %s54, 3
      %p271 = por %p269, %p270
      %p273 = scmp.ne.s32.totalorder %s256, %s272
      %p274 = scmp.eq.s32.totalorder %s54, 0
      %p275 = por %p273, %p274
      %s276 = ssub.s32 %s56, %s63
      %p277 = scmp.eq.s32.totalorder %s276, 0
      %s279 = sadd.s32 %s278, 1
      %s280 = scalar_select %p277, %s278, %s279
      %p283 = pneg %p277
      %p284 = scmp.eq.s32.totalorder %s48, 3
      %p285 = por %p283, %p284
      %p286 = scmp.ne.s32.totalorder %s278, %s281
      %p287 = scmp.eq.s32.totalorder %s48, 0
      %p288 = por %p286, %p287
      %p289 = scmp.ne.s32.totalorder %s278, %s281
      %p290 = scmp.eq.s32.totalorder %s53, 3
      %p291 = por %p289, %p290
      %p292 = scmp.ne.s32.totalorder %s281, %s282
      %p293 = scmp.eq.s32.totalorder %s53, 0
      %p294 = por %p292, %p293
      %p295 = scmp.ne.s32.totalorder %s281, %s282
      %p296 = scmp.eq.s32.totalorder %s54, 3
      %p297 = por %p295, %p296
      %p299 = scmp.ne.s32.totalorder %s282, %s298
      %p300 = scmp.eq.s32.totalorder %s54, 0
      %p301 = por %p299, %p300
      %s302 = ssub.s32 %s56, %s63
      %p303 = scmp.eq.s32.totalorder %s302, 0
      %s305 = sadd.s32 %s304, 1
      %s306 = scalar_select %p303, %s304, %s305
      %p309 = pneg %p303
      %p310 = scmp.eq.s32.totalorder %s48, 3
      %p311 = por %p309, %p310
      %p312 = scmp.ne.s32.totalorder %s304, %s307
      %p313 = scmp.eq.s32.totalorder %s48, 0
      %p314 = por %p312, %p313
      %p315 = scmp.ne.s32.totalorder %s304, %s307
      %p316 = scmp.eq.s32.totalorder %s53, 3
      %p317 = por %p315, %p316
      %p318 = scmp.ne.s32.totalorder %s307, %s308
      %p319 = scmp.eq.s32.totalorder %s53, 0
      %p320 = por %p318, %p319
      %p321 = scmp.ne.s32.totalorder %s307, %s308
      %p322 = scmp.eq.s32.totalorder %s54, 3
      %p323 = por %p321, %p322
      %p325 = scmp.ne.s32.totalorder %s308, %s324
      %p326 = scmp.eq.s32.totalorder %s54, 0
      %p327 = por %p325, %p326
      %s328 = ssub.s32 %s56, %s63
      %p329 = scmp.eq.s32.totalorder %s328, 0
      %s331 = sadd.s32 %s330, 1
      %s332 = scalar_select %p329, %s330, %s331
      %p335 = pneg %p329
      %p336 = scmp.eq.s32.totalorder %s48, 3
      %p337 = por %p335, %p336
      %p338 = scmp.ne.s32.totalorder %s330, %s333
      %p339 = scmp.eq.s32.totalorder %s48, 0
      %p340 = por %p338, %p339
      %p341 = scmp.ne.s32.totalorder %s330, %s333
      %p342 = scmp.eq.s32.totalorder %s53, 3
      %p343 = por %p341, %p342
      %p344 = scmp.ne.s32.totalorder %s333, %s334
      %p345 = scmp.eq.s32.totalorder %s53, 0
      %p346 = por %p344, %p345
      %p347 = scmp.ne.s32.totalorder %s333, %s334
      %p348 = scmp.eq.s32.totalorder %s54, 3
      %p349 = por %p347, %p348
      %p351 = scmp.ne.s32.totalorder %s334, %s350
      %p352 = scmp.eq.s32.totalorder %s54, 0
      %p353 = por %p351, %p352
      %s354 = ssub.s32 %s56, %s63
      %p355 = scmp.eq.s32.totalorder %s354, 0
      %s357 = sadd.s32 %s356, 1
      %s358 = scalar_select %p355, %s356, %s357
      %p361 = pneg %p355
      %p362 = scmp.eq.s32.totalorder %s48, 3
      %p363 = por %p361, %p362
      %p364 = scmp.ne.s32.totalorder %s356, %s359
      %p365 = scmp.eq.s32.totalorder %s48, 0
      %p366 = por %p364, %p365
      %p367 = scmp.ne.s32.totalorder %s356, %s359
      %p368 = scmp.eq.s32.totalorder %s53, 3
      %p369 = por %p367, %p368
      %p370 = scmp.ne.s32.totalorder %s359, %s360
      %p371 = scmp.eq.s32.totalorder %s53, 0
      %p372 = por %p370, %p371
      %p373 = scmp.ne.s32.totalorder %s359, %s360
      %p374 = scmp.eq.s32.totalorder %s54, 3
      %p375 = por %p373, %p374
      %p377 = scmp.ne.s32.totalorder %s360, %s376
      %p378 = scmp.eq.s32.totalorder %s54, 0
      %p379 = por %p377, %p378
      %s380 = ssub.s32 %s56, %s63
      %p381 = scmp.eq.s32.totalorder %s380, 0
      %s383 = sadd.s32 %s382, 1
      %s384 = scalar_select %p381, %s382, %s383
      %p387 = pneg %p381
      %p388 = scmp.eq.s32.totalorder %s48, 3
      %p389 = por %p387, %p388
      %p390 = scmp.ne.s32.totalorder %s382, %s385
      %p391 = scmp.eq.s32.totalorder %s48, 0
      %p392 = por %p390, %p391
      %p393 = scmp.ne.s32.totalorder %s382, %s385
      %p394 = scmp.eq.s32.totalorder %s53, 3
      %p395 = por %p393, %p394
      %p396 = scmp.ne.s32.totalorder %s385, %s386
      %p397 = scmp.eq.s32.totalorder %s53, 0
      %p398 = por %p396, %p397
      %p399 = scmp.ne.s32.totalorder %s385, %s386
      %p400 = scmp.eq.s32.totalorder %s54, 3
      %p401 = por %p399, %p400
      %p403 = scmp.ne.s32.totalorder %s386, %s402
      %p404 = scmp.eq.s32.totalorder %s54, 0
      %p405 = por %p403, %p404
      %s406 = ssub.s32 %s56, %s63
      %p407 = scmp.eq.s32.totalorder %s406, 0
      %s409 = sadd.s32 %s408, 1
      %s410 = scalar_select %p407, %s408, %s409
      %p413 = pneg %p407
      %p414 = scmp.eq.s32.totalorder %s48, 3
      %p415 = por %p413, %p414
      %p416 = scmp.ne.s32.totalorder %s408, %s411
      %p417 = scmp.eq.s32.totalorder %s48, 0
      %p418 = por %p416, %p417
      %p419 = scmp.ne.s32.totalorder %s408, %s411
      %p420 = scmp.eq.s32.totalorder %s53, 3
      %p421 = por %p419, %p420
      %p422 = scmp.ne.s32.totalorder %s411, %s412
      %p423 = scmp.eq.s32.totalorder %s53, 0
      %p424 = por %p422, %p423
      %p425 = scmp.ne.s32.totalorder %s411, %s412
      %p426 = scmp.eq.s32.totalorder %s54, 3
      %p427 = por %p425, %p426
      %p429 = scmp.ne.s32.totalorder %s412, %s428
      %p430 = scmp.eq.s32.totalorder %s54, 0
      %p431 = por %p429, %p430
      %s432 = ssub.s32 %s56, %s63
      %p433 = scmp.eq.s32.totalorder %s432, 0
      %s435 = sadd.s32 %s434, 1
      %s436 = scalar_select %p433, %s434, %s435
      %p439 = pneg %p433
      %p440 = scmp.eq.s32.totalorder %s48, 3
      %p441 = por %p439, %p440
      %p442 = scmp.ne.s32.totalorder %s434, %s437
      %p443 = scmp.eq.s32.totalorder %s48, 0
      %p444 = por %p442, %p443
      %p445 = scmp.ne.s32.totalorder %s434, %s437
      %p446 = scmp.eq.s32.totalorder %s53, 3
      %p447 = por %p445, %p446
      %p448 = scmp.ne.s32.totalorder %s437, %s438
      %p449 = scmp.eq.s32.totalorder %s53, 0
      %p450 = por %p448, %p449
      %p451 = scmp.ne.s32.totalorder %s437, %s438
      %p452 = scmp.eq.s32.totalorder %s54, 3
      %p453 = por %p451, %p452
      %p455 = scmp.ne.s32.totalorder %s438, %s454
      %p456 = scmp.eq.s32.totalorder %s54, 0
      %p457 = por %p455, %p456
      %s458 = ssub.s32 %s55, %s67
      %p459 = scmp.eq.s32.totalorder %s458, 0
      %s461 = sadd.s32 %s460, 1
      %s462 = scalar_select %p459, %s460, %s461
      %p465 = pneg %p459
      %p466 = scmp.eq.s32.totalorder %s48, 3
      %p467 = por %p465, %p466
      %p468 = scmp.ne.s32.totalorder %s460, %s463
      %p469 = scmp.eq.s32.totalorder %s48, 0
      %p470 = por %p468, %p469
      %p471 = scmp.ne.s32.totalorder %s460, %s463
      %p472 = scmp.eq.s32.totalorder %s53, 3
      %p473 = por %p471, %p472
      %p474 = scmp.ne.s32.totalorder %s463, %s464
      %p475 = scmp.eq.s32.totalorder %s53, 0
      %p476 = por %p474, %p475
      %p477 = scmp.ne.s32.totalorder %s463, %s464
      %p478 = scmp.eq.s32.totalorder %s54, 3
      %p479 = por %p477, %p478
      %p481 = scmp.ne.s32.totalorder %s464, %s480
      %p482 = scmp.eq.s32.totalorder %s54, 0
      %p483 = por %p481, %p482
      %p484 = scmp.le.s32.totalorder 1, %s48
      %p485 = scmp.lt.s32.totalorder %s48, 5
      %p486 = pnand %p484, %p485
      %p487 = pneg %p486
      // Predicated region
      $region9: #{vit_seg_forward.6} parent=5 // pred_check
        _
      $region10: #{vit_seg_forward.6} parent=5 // pred_check_branch
        %489 = sbr.rel (%p486) target = $region12
      $region11: #{vit_seg_forward.6} parent=5 // pred_region
        %s490 = ssub.s32 %s48, 1
      $region12: #{vit_seg_forward.6} parent=5 // pred_fallthru
        _
      %p491 = scmp.lt.s32.totalorder %s48, 4
      // Predicated region
      $region13: #{vit_seg_forward.6} parent=5 // pred_check
        %p492 = pneg %p491
      $region14: #{vit_seg_forward.6} parent=5 // pred_check_branch
        %494 = sbr.rel (%p492) target = $region16
      $region15: #{vit_seg_forward.6} parent=5 // pred_region
        // Predicated region
        $region17: #{vit_seg_forward.6} parent=15 // pred_check
          %p495 = pneg %p80
        $region18: #{vit_seg_forward.6} parent=15 // pred_check_branch
          %497 = sbr.rel (%p495) target = $region20
        $region19: #{vit_seg_forward.6} parent=15 // pred_region
          %s498 = sand.u32 %s70, 1
          %s499 = scalar_lea.sflag [#allocation3], %s498
          %s500 = sand.u32 %s70, 1
          %s501 = smul.addr %s500, 16
          %s502 = scalar_lea.vmem [#allocation2], %s501
          %s504 = ssub.s32 256, 256
          %505 = vsyncadd %s499, %s504
          %s506 = smul.addr %s55, 2
          %s507 = smul.addr %s506, 128
          %s508 = scalar_lea.hbm %s0, %s507
          %s509 = sshll.u32 %s502, 4
          %s510 = int_to_ptr.vmem [resolvable:$true] %s509
          %515 = dma.hbm_to_vmem [thread:$0]  %s508, 256, %s510, %s499, 128, 128, 8
        $region20: #{vit_seg_forward.6} parent=15 // pred_fallthru
          _
        // Predicated region
        $region21: #{vit_seg_forward.6} parent=15 // pred_check
          %p516 = pneg %p106
        $region22: #{vit_seg_forward.6} parent=15 // pred_check_branch
          %518 = sbr.rel (%p516) target = $region24
        $region23: #{vit_seg_forward.6} parent=15 // pred_region
          %s519 = sand.u32 %s48, 1
          %s520 = scalar_lea.sflag [#allocation6], %s519
          %s521 = sand.u32 %s96, 1
          %s522 = scalar_lea.vmem [#allocation5], %s521
          %s524 = ssub.s32 16, 16
          %525 = vsyncadd %s520, %s524
          %s526 = smul.addr %s56, 16
          %s527 = scalar_lea.hbm %s1, %s526
          %s529 = sshll.u32 %s522, 4
          %s530 = int_to_ptr.vmem [resolvable:$true] %s529
          %532 = dma.hbm_to_vmem [thread:$0]  %s527, 16, %s530, %s520
        $region24: #{vit_seg_forward.6} parent=15 // pred_fallthru
          _
        // Predicated region
        $region25: #{vit_seg_forward.6} parent=15 // pred_check
          %p533 = pneg %p132
        $region26: #{vit_seg_forward.6} parent=15 // pred_check_branch
          %535 = sbr.rel (%p533) target = $region28
        $region27: #{vit_seg_forward.6} parent=15 // pred_region
          %s536 = sand.u32 %s48, 1
          %s537 = scalar_lea.sflag [#allocation6], %s536
          %s538 = sand.u32 %s122, 1
          %s539 = scalar_lea.vmem [#allocation7], %s538
          %s541 = ssub.s32 16, 16
          %542 = vsyncadd %s537, %s541
          %s543 = smul.addr %s56, 16
          %s544 = scalar_lea.hbm %s2, %s543
          %s546 = sshll.u32 %s539, 4
          %s547 = int_to_ptr.vmem [resolvable:$true] %s546
          %549 = dma.hbm_to_vmem [thread:$0]  %s544, 16, %s547, %s537
        $region28: #{vit_seg_forward.6} parent=15 // pred_fallthru
          _
        // Predicated region
        $region29: #{vit_seg_forward.6} parent=15 // pred_check
          %p550 = pneg %p158
        $region30: #{vit_seg_forward.6} parent=15 // pred_check_branch
          %552 = sbr.rel (%p550) target = $region32
        $region31: #{vit_seg_forward.6} parent=15 // pred_region
          %s553 = sand.u32 %s48, 1
          %s554 = scalar_lea.sflag [#allocation9], %s553
          %s555 = sand.u32 %s148, 1
          %s556 = scalar_lea.vmem [#allocation8], %s555
          %s558 = ssub.s32 16, 16
          %559 = vsyncadd %s554, %s558
          %s560 = smul.addr %s56, 16
          %s561 = scalar_lea.hbm %s3, %s560
          %s563 = sshll.u32 %s556, 4
          %s564 = int_to_ptr.vmem [resolvable:$true] %s563
          %566 = dma.hbm_to_vmem [thread:$0]  %s561, 16, %s564, %s554
        $region32: #{vit_seg_forward.6} parent=15 // pred_fallthru
          _
        // Predicated region
        $region33: #{vit_seg_forward.6} parent=15 // pred_check
          %p567 = pneg %p184
        $region34: #{vit_seg_forward.6} parent=15 // pred_check_branch
          %569 = sbr.rel (%p567) target = $region36
        $region35: #{vit_seg_forward.6} parent=15 // pred_region
          %s570 = sand.u32 %s48, 1
          %s571 = scalar_lea.sflag [#allocation9], %s570
          %s572 = sand.u32 %s174, 1
          %s573 = scalar_lea.vmem [#allocation10], %s572
          %s575 = ssub.s32 16, 16
          %576 = vsyncadd %s571, %s575
          %s577 = smul.addr %s56, 16
          %s578 = scalar_lea.hbm %s4, %s577
          %s580 = sshll.u32 %s573, 4
          %s581 = int_to_ptr.vmem [resolvable:$true] %s580
          %583 = dma.hbm_to_vmem [thread:$0]  %s578, 16, %s581, %s571
        $region36: #{vit_seg_forward.6} parent=15 // pred_fallthru
          _
        // Predicated region
        $region37: #{vit_seg_forward.6} parent=15 // pred_check
          %p584 = pneg %p210
        $region38: #{vit_seg_forward.6} parent=15 // pred_check_branch
          %586 = sbr.rel (%p584) target = $region40
        $region39: #{vit_seg_forward.6} parent=15 // pred_region
          %s587 = sand.u32 %s48, 1
          %s588 = scalar_lea.sflag [#allocation12], %s587
          %s589 = sand.u32 %s200, 1
          %s590 = smul.addr %s589, 16
          %s591 = scalar_lea.vmem [#allocation11], %s590
          %s593 = ssub.s32 256, 256
          %594 = vsyncadd %s588, %s593
          %s595 = smul.addr %s56, 4
          %s596 = smul.addr %s595, 64
          %s597 = scalar_lea.hbm %s5, %s596
          %s598 = sshll.u32 %s591, 4
          %s599 = int_to_ptr.vmem [resolvable:$true] %s598
          %604 = dma.hbm_to_vmem [thread:$0]  %s597, 256, %s599, %s588, 64, 64, 4
        $region40: #{vit_seg_forward.6} parent=15 // pred_fallthru
          _
        // Predicated region
        $region41: #{vit_seg_forward.6} parent=15 // pred_check
          %p605 = pneg %p236
        $region42: #{vit_seg_forward.6} parent=15 // pred_check_branch
          %607 = sbr.rel (%p605) target = $region44
        $region43: #{vit_seg_forward.6} parent=15 // pred_region
          %s608 = sand.u32 %s48, 1
          %s609 = scalar_lea.sflag [#allocation12], %s608
          %s610 = sand.u32 %s226, 1
          %s611 = scalar_lea.vmem [#allocation13], %s610
          %s613 = ssub.s32 16, 16
          %614 = vsyncadd %s609, %s613
          %s615 = smul.addr %s56, 16
          %s616 = scalar_lea.hbm %s6, %s615
          %s618 = sshll.u32 %s611, 4
          %s619 = int_to_ptr.vmem [resolvable:$true] %s618
          %621 = dma.hbm_to_vmem [thread:$0]  %s616, 16, %s619, %s609
        $region44: #{vit_seg_forward.6} parent=15 // pred_fallthru
          _
        // Predicated region
        $region45: #{vit_seg_forward.6} parent=15 // pred_check
          %p622 = pneg %p262
        $region46: #{vit_seg_forward.6} parent=15 // pred_check_branch
          %624 = sbr.rel (%p622) target = $region48
        $region47: #{vit_seg_forward.6} parent=15 // pred_region
          %s625 = sand.u32 %s48, 1
          %s626 = scalar_lea.sflag [#allocation15], %s625
          %s627 = sand.u32 %s252, 1
          %s628 = smul.addr %s627, 16
          %s629 = scalar_lea.vmem [#allocation14], %s628
          %s631 = ssub.s32 256, 256
          %632 = vsyncadd %s626, %s631
          %s633 = smul.addr %s56, 4
          %s634 = smul.addr %s633, 64
          %s635 = scalar_lea.hbm %s7, %s634
          %s636 = sshll.u32 %s629, 4
          %s637 = int_to_ptr.vmem [resolvable:$true] %s636
          %642 = dma.hbm_to_vmem [thread:$0]  %s635, 256, %s637, %s626, 64, 64, 4
        $region48: #{vit_seg_forward.6} parent=15 // pred_fallthru
          _
        // Predicated region
        $region49: #{vit_seg_forward.6} parent=15 // pred_check
          %p643 = pneg %p288
        $region50: #{vit_seg_forward.6} parent=15 // pred_check_branch
          %645 = sbr.rel (%p643) target = $region52
        $region51: #{vit_seg_forward.6} parent=15 // pred_region
          %s646 = sand.u32 %s48, 1
          %s647 = scalar_lea.sflag [#allocation15], %s646
          %s648 = sand.u32 %s278, 1
          %s649 = scalar_lea.vmem [#allocation16], %s648
          %s651 = ssub.s32 16, 16
          %652 = vsyncadd %s647, %s651
          %s653 = smul.addr %s56, 16
          %s654 = scalar_lea.hbm %s8, %s653
          %s656 = sshll.u32 %s649, 4
          %s657 = int_to_ptr.vmem [resolvable:$true] %s656
          %659 = dma.hbm_to_vmem [thread:$0]  %s654, 16, %s657, %s647
        $region52: #{vit_seg_forward.6} parent=15 // pred_fallthru
          _
        // Predicated region
        $region53: #{vit_seg_forward.6} parent=15 // pred_check
          %p660 = pneg %p314
        $region54: #{vit_seg_forward.6} parent=15 // pred_check_branch
          %662 = sbr.rel (%p660) target = $region56
        $region55: #{vit_seg_forward.6} parent=15 // pred_region
          %s663 = sand.u32 %s48, 1
          %s664 = scalar_lea.sflag [#allocation18], %s663
          %s665 = sand.u32 %s304, 1
          %s666 = scalar_lea.vmem [#allocation17], %s665
          %s668 = ssub.s32 16, 16
          %669 = vsyncadd %s664, %s668
          %s670 = smul.addr %s56, 16
          %s671 = scalar_lea.hbm %s9, %s670
          %s673 = sshll.u32 %s666, 4
          %s674 = int_to_ptr.vmem [resolvable:$true] %s673
          %676 = dma.hbm_to_vmem [thread:$0]  %s671, 16, %s674, %s664
        $region56: #{vit_seg_forward.6} parent=15 // pred_fallthru
          _
        // Predicated region
        $region57: #{vit_seg_forward.6} parent=15 // pred_check
          %p677 = pneg %p340
        $region58: #{vit_seg_forward.6} parent=15 // pred_check_branch
          %679 = sbr.rel (%p677) target = $region60
        $region59: #{vit_seg_forward.6} parent=15 // pred_region
          %s680 = sand.u32 %s48, 1
          %s681 = scalar_lea.sflag [#allocation18], %s680
          %s682 = sand.u32 %s330, 1
          %s683 = scalar_lea.vmem [#allocation19], %s682
          %s685 = ssub.s32 16, 16
          %686 = vsyncadd %s681, %s685
          %s687 = smul.addr %s56, 16
          %s688 = scalar_lea.hbm %s10, %s687
          %s690 = sshll.u32 %s683, 4
          %s691 = int_to_ptr.vmem [resolvable:$true] %s690
          %693 = dma.hbm_to_vmem [thread:$0]  %s688, 16, %s691, %s681
        $region60: #{vit_seg_forward.6} parent=15 // pred_fallthru
          _
        // Predicated region
        $region61: #{vit_seg_forward.6} parent=15 // pred_check
          %p694 = pneg %p366
        $region62: #{vit_seg_forward.6} parent=15 // pred_check_branch
          %696 = sbr.rel (%p694) target = $region64
        $region63: #{vit_seg_forward.6} parent=15 // pred_region
          %s697 = sand.u32 %s48, 1
          %s698 = scalar_lea.sflag [#allocation21], %s697
          %s699 = sand.u32 %s356, 1
          %s700 = smul.addr %s699, 16
          %s701 = scalar_lea.vmem [#allocation20], %s700
          %s703 = ssub.s32 256, 256
          %704 = vsyncadd %s698, %s703
          %s705 = smul.addr %s56, 4
          %s706 = smul.addr %s705, 64
          %s707 = scalar_lea.hbm %s11, %s706
          %s708 = sshll.u32 %s701, 4
          %s709 = int_to_ptr.vmem [resolvable:$true] %s708
          %714 = dma.hbm_to_vmem [thread:$0]  %s707, 256, %s709, %s698, 64, 64, 4
        $region64: #{vit_seg_forward.6} parent=15 // pred_fallthru
          _
        // Predicated region
        $region65: #{vit_seg_forward.6} parent=15 // pred_check
          %p715 = pneg %p392
        $region66: #{vit_seg_forward.6} parent=15 // pred_check_branch
          %717 = sbr.rel (%p715) target = $region68
        $region67: #{vit_seg_forward.6} parent=15 // pred_region
          %s718 = sand.u32 %s48, 1
          %s719 = scalar_lea.sflag [#allocation21], %s718
          %s720 = sand.u32 %s382, 1
          %s721 = scalar_lea.vmem [#allocation22], %s720
          %s723 = ssub.s32 16, 16
          %724 = vsyncadd %s719, %s723
          %s725 = smul.addr %s56, 16
          %s726 = scalar_lea.hbm %s12, %s725
          %s728 = sshll.u32 %s721, 4
          %s729 = int_to_ptr.vmem [resolvable:$true] %s728
          %731 = dma.hbm_to_vmem [thread:$0]  %s726, 16, %s729, %s719
        $region68: #{vit_seg_forward.6} parent=15 // pred_fallthru
          _
        // Predicated region
        $region69: #{vit_seg_forward.6} parent=15 // pred_check
          %p732 = pneg %p418
        $region70: #{vit_seg_forward.6} parent=15 // pred_check_branch
          %734 = sbr.rel (%p732) target = $region72
        $region71: #{vit_seg_forward.6} parent=15 // pred_region
          %s735 = sand.u32 %s48, 1
          %s736 = scalar_lea.sflag [#allocation24], %s735
          %s737 = sand.u32 %s408, 1
          %s738 = smul.addr %s737, 32
          %s739 = scalar_lea.vmem [#allocation23], %s738
          %s741 = ssub.s32 512, 512
          %742 = vsyncadd %s736, %s741
          %s743 = smul.addr %s56, 8
          %s744 = smul.addr %s743, 64
          %s745 = scalar_lea.hbm %s13, %s744
          %s746 = sshll.u32 %s739, 4
          %s747 = int_to_ptr.vmem [resolvable:$true] %s746
          %752 = dma.hbm_to_vmem [thread:$0]  %s745, 512, %s747, %s736, 64, 64, 4
        $region72: #{vit_seg_forward.6} parent=15 // pred_fallthru
          _
        // Predicated region
        $region73: #{vit_seg_forward.6} parent=15 // pred_check
          %p753 = pneg %p444
        $region74: #{vit_seg_forward.6} parent=15 // pred_check_branch
          %755 = sbr.rel (%p753) target = $region76
        $region75: #{vit_seg_forward.6} parent=15 // pred_region
          %s756 = sand.u32 %s48, 1
          %s757 = scalar_lea.sflag [#allocation24], %s756
          %s758 = sand.u32 %s434, 1
          %s759 = scalar_lea.vmem [#allocation25], %s758
          %s761 = ssub.s32 16, 16
          %762 = vsyncadd %s757, %s761
          %s763 = smul.addr %s56, 16
          %s764 = scalar_lea.hbm %s14, %s763
          %s766 = sshll.u32 %s759, 4
          %s767 = int_to_ptr.vmem [resolvable:$true] %s766
          %769 = dma.hbm_to_vmem [thread:$0]  %s764, 16, %s767, %s757
        $region76: #{vit_seg_forward.6} parent=15 // pred_fallthru
          _
      $region16: #{vit_seg_forward.6} parent=5 // pred_fallthru
        _
      %p770 = scmp.le.s32.totalorder 1, %s48
      %p771 = scmp.lt.s32.totalorder %s48, 5
      %p772 = pnand %p770, %p771
      %p773 = pneg %p772
      // Predicated region
      $region77: #{vit_seg_forward.6} parent=5 // pred_check
        _
      $region78: #{vit_seg_forward.6} parent=5 // pred_check_branch
        %775 = sbr.rel (%p772) target = $region80
      $region79: #{vit_seg_forward.6} parent=5 // pred_region
        %s776 = ssub.s32 %s48, 1
        %s777 = sand.u32 %s73, 1
        %s778 = scalar_lea.sflag [#allocation3], %s777
        %s779 = sand.u32 %s73, 1
        %s780 = smul.addr %s779, 16
        %s781 = scalar_lea.vmem [#allocation2], %s780
        // Predicated region
        $region81: #{vit_seg_forward.6} parent=79 // pred_check
          %p782 = pneg %p86
        $region82: #{vit_seg_forward.6} parent=79 // pred_check_branch
          %784 = sbr.rel (%p782) target = $region84
        $region83: #{vit_seg_forward.6} parent=79 // pred_region
          %785 = dma.done %s778, 256
        $region84: #{vit_seg_forward.6} parent=79 // pred_fallthru
          _
        %s786 = sand.u32 %s53, 1
        %s787 = scalar_lea.sflag [#allocation6], %s786
        %s788 = sand.u32 %s99, 1
        %s789 = scalar_lea.vmem [#allocation5], %s788
        // Predicated region
        $region85: #{vit_seg_forward.6} parent=79 // pred_check
          %p790 = pneg %p112
        $region86: #{vit_seg_forward.6} parent=79 // pred_check_branch
          %792 = sbr.rel (%p790) target = $region88
        $region87: #{vit_seg_forward.6} parent=79 // pred_region
          %793 = dma.done %s787, 16
        $region88: #{vit_seg_forward.6} parent=79 // pred_fallthru
          _
        %s794 = sand.u32 %s53, 1
        %s795 = scalar_lea.sflag [#allocation6], %s794
        %s796 = sand.u32 %s125, 1
        %s797 = scalar_lea.vmem [#allocation7], %s796
        // Predicated region
        $region89: #{vit_seg_forward.6} parent=79 // pred_check
          %p798 = pneg %p138
        $region90: #{vit_seg_forward.6} parent=79 // pred_check_branch
          %800 = sbr.rel (%p798) target = $region92
        $region91: #{vit_seg_forward.6} parent=79 // pred_region
          %801 = dma.done %s795, 16
        $region92: #{vit_seg_forward.6} parent=79 // pred_fallthru
          _
        %s802 = sand.u32 %s53, 1
        %s803 = scalar_lea.sflag [#allocation9], %s802
        %s804 = sand.u32 %s151, 1
        %s805 = scalar_lea.vmem [#allocation8], %s804
        // Predicated region
        $region93: #{vit_seg_forward.6} parent=79 // pred_check
          %p806 = pneg %p164
        $region94: #{vit_seg_forward.6} parent=79 // pred_check_branch
          %808 = sbr.rel (%p806) target = $region96
        $region95: #{vit_seg_forward.6} parent=79 // pred_region
          %809 = dma.done %s803, 16
        $region96: #{vit_seg_forward.6} parent=79 // pred_fallthru
          _
        %s810 = sand.u32 %s53, 1
        %s811 = scalar_lea.sflag [#allocation9], %s810
        %s812 = sand.u32 %s177, 1
        %s813 = scalar_lea.vmem [#allocation10], %s812
        // Predicated region
        $region97: #{vit_seg_forward.6} parent=79 // pred_check
          %p814 = pneg %p190
        $region98: #{vit_seg_forward.6} parent=79 // pred_check_branch
          %816 = sbr.rel (%p814) target = $region100
        $region99: #{vit_seg_forward.6} parent=79 // pred_region
          %817 = dma.done %s811, 16
        $region100: #{vit_seg_forward.6} parent=79 // pred_fallthru
          _
        %s818 = sand.u32 %s53, 1
        %s819 = scalar_lea.sflag [#allocation12], %s818
        %s820 = sand.u32 %s203, 1
        %s821 = smul.addr %s820, 16
        %s822 = scalar_lea.vmem [#allocation11], %s821
        // Predicated region
        $region101: #{vit_seg_forward.6} parent=79 // pred_check
          %p823 = pneg %p216
        $region102: #{vit_seg_forward.6} parent=79 // pred_check_branch
          %825 = sbr.rel (%p823) target = $region104
        $region103: #{vit_seg_forward.6} parent=79 // pred_region
          %826 = dma.done %s819, 256
        $region104: #{vit_seg_forward.6} parent=79 // pred_fallthru
          _
        %s827 = sand.u32 %s53, 1
        %s828 = scalar_lea.sflag [#allocation12], %s827
        %s829 = sand.u32 %s229, 1
        %s830 = scalar_lea.vmem [#allocation13], %s829
        // Predicated region
        $region105: #{vit_seg_forward.6} parent=79 // pred_check
          %p831 = pneg %p242
        $region106: #{vit_seg_forward.6} parent=79 // pred_check_branch
          %833 = sbr.rel (%p831) target = $region108
        $region107: #{vit_seg_forward.6} parent=79 // pred_region
          %834 = dma.done %s828, 16
        $region108: #{vit_seg_forward.6} parent=79 // pred_fallthru
          _
        %s835 = sand.u32 %s53, 1
        %s836 = scalar_lea.sflag [#allocation15], %s835
        %s837 = sand.u32 %s255, 1
        %s838 = smul.addr %s837, 16
        %s839 = scalar_lea.vmem [#allocation14], %s838
        // Predicated region
        $region109: #{vit_seg_forward.6} parent=79 // pred_check
          %p840 = pneg %p268
        $region110: #{vit_seg_forward.6} parent=79 // pred_check_branch
          %842 = sbr.rel (%p840) target = $region112
        $region111: #{vit_seg_forward.6} parent=79 // pred_region
          %843 = dma.done %s836, 256
        $region112: #{vit_seg_forward.6} parent=79 // pred_fallthru
          _
        %s844 = sand.u32 %s53, 1
        %s845 = scalar_lea.sflag [#allocation15], %s844
        %s846 = sand.u32 %s281, 1
        %s847 = scalar_lea.vmem [#allocation16], %s846
        // Predicated region
        $region113: #{vit_seg_forward.6} parent=79 // pred_check
          %p848 = pneg %p294
        $region114: #{vit_seg_forward.6} parent=79 // pred_check_branch
          %850 = sbr.rel (%p848) target = $region116
        $region115: #{vit_seg_forward.6} parent=79 // pred_region
          %851 = dma.done %s845, 16
        $region116: #{vit_seg_forward.6} parent=79 // pred_fallthru
          _
        %s852 = sand.u32 %s53, 1
        %s853 = scalar_lea.sflag [#allocation18], %s852
        %s854 = sand.u32 %s307, 1
        %s855 = scalar_lea.vmem [#allocation17], %s854
        // Predicated region
        $region117: #{vit_seg_forward.6} parent=79 // pred_check
          %p856 = pneg %p320
        $region118: #{vit_seg_forward.6} parent=79 // pred_check_branch
          %858 = sbr.rel (%p856) target = $region120
        $region119: #{vit_seg_forward.6} parent=79 // pred_region
          %859 = dma.done %s853, 16
        $region120: #{vit_seg_forward.6} parent=79 // pred_fallthru
          _
        %s860 = sand.u32 %s53, 1
        %s861 = scalar_lea.sflag [#allocation18], %s860
        %s862 = sand.u32 %s333, 1
        %s863 = scalar_lea.vmem [#allocation19], %s862
        // Predicated region
        $region121: #{vit_seg_forward.6} parent=79 // pred_check
          %p864 = pneg %p346
        $region122: #{vit_seg_forward.6} parent=79 // pred_check_branch
          %866 = sbr.rel (%p864) target = $region124
        $region123: #{vit_seg_forward.6} parent=79 // pred_region
          %867 = dma.done %s861, 16
        $region124: #{vit_seg_forward.6} parent=79 // pred_fallthru
          _
        %s868 = sand.u32 %s53, 1
        %s869 = scalar_lea.sflag [#allocation21], %s868
        %s870 = sand.u32 %s359, 1
        %s871 = smul.addr %s870, 16
        %s872 = scalar_lea.vmem [#allocation20], %s871
        // Predicated region
        $region125: #{vit_seg_forward.6} parent=79 // pred_check
          %p873 = pneg %p372
        $region126: #{vit_seg_forward.6} parent=79 // pred_check_branch
          %875 = sbr.rel (%p873) target = $region128
        $region127: #{vit_seg_forward.6} parent=79 // pred_region
          %876 = dma.done %s869, 256
        $region128: #{vit_seg_forward.6} parent=79 // pred_fallthru
          _
        %s877 = sand.u32 %s53, 1
        %s878 = scalar_lea.sflag [#allocation21], %s877
        %s879 = sand.u32 %s385, 1
        %s880 = scalar_lea.vmem [#allocation22], %s879
        // Predicated region
        $region129: #{vit_seg_forward.6} parent=79 // pred_check
          %p881 = pneg %p398
        $region130: #{vit_seg_forward.6} parent=79 // pred_check_branch
          %883 = sbr.rel (%p881) target = $region132
        $region131: #{vit_seg_forward.6} parent=79 // pred_region
          %884 = dma.done %s878, 16
        $region132: #{vit_seg_forward.6} parent=79 // pred_fallthru
          _
        %s885 = sand.u32 %s53, 1
        %s886 = scalar_lea.sflag [#allocation24], %s885
        %s887 = sand.u32 %s411, 1
        %s888 = smul.addr %s887, 32
        %s889 = scalar_lea.vmem [#allocation23], %s888
        // Predicated region
        $region133: #{vit_seg_forward.6} parent=79 // pred_check
          %p890 = pneg %p424
        $region134: #{vit_seg_forward.6} parent=79 // pred_check_branch
          %892 = sbr.rel (%p890) target = $region136
        $region135: #{vit_seg_forward.6} parent=79 // pred_region
          %893 = dma.done %s886, 512
        $region136: #{vit_seg_forward.6} parent=79 // pred_fallthru
          _
        %s894 = sand.u32 %s53, 1
        %s895 = scalar_lea.sflag [#allocation24], %s894
        %s896 = sand.u32 %s437, 1
        %s897 = scalar_lea.vmem [#allocation25], %s896
        // Predicated region
        $region137: #{vit_seg_forward.6} parent=79 // pred_check
          %p898 = pneg %p450
        $region138: #{vit_seg_forward.6} parent=79 // pred_check_branch
          %900 = sbr.rel (%p898) target = $region140
        $region139: #{vit_seg_forward.6} parent=79 // pred_region
          %901 = dma.done %s895, 16
        $region140: #{vit_seg_forward.6} parent=79 // pred_fallthru
          _
        %s902 = sand.u32 %s73, 1
        %s903 = scalar_lea.sflag [#allocation3], %s902
        %s904 = sand.u32 %s73, 1
        %s905 = smul.addr %s904, 16
        %s906 = scalar_lea.vmem [#allocation2], %s905
        %p907 = pneg %p86
        %p908 = pneg %p83
        %s909 = sand.u32 %s53, 1
        %s910 = scalar_lea.sflag [#allocation6], %s909
        %s911 = sand.u32 %s99, 1
        %s912 = scalar_lea.vmem [#allocation5], %s911
        %p913 = pneg %p112
        %p914 = pneg %p109
        %s915 = sand.u32 %s53, 1
        %s916 = scalar_lea.sflag [#allocation6], %s915
        %s917 = sand.u32 %s125, 1
        %s918 = scalar_lea.vmem [#allocation7], %s917
        %p919 = pneg %p138
        %p920 = pneg %p135
        %s921 = sand.u32 %s53, 1
        %s922 = scalar_lea.sflag [#allocation9], %s921
        %s923 = sand.u32 %s151, 1
        %s924 = scalar_lea.vmem [#allocation8], %s923
        %p925 = pneg %p164
        %p926 = pneg %p161
        %s927 = sand.u32 %s53, 1
        %s928 = scalar_lea.sflag [#allocation9], %s927
        %s929 = sand.u32 %s177, 1
        %s930 = scalar_lea.vmem [#allocation10], %s929
        %p931 = pneg %p190
        %p932 = pneg %p187
        %s933 = sand.u32 %s53, 1
        %s934 = scalar_lea.sflag [#allocation12], %s933
        %s935 = sand.u32 %s203, 1
        %s936 = smul.addr %s935, 16
        %s937 = scalar_lea.vmem [#allocation11], %s936
        %p938 = pneg %p216
        %p939 = pneg %p213
        %s940 = sand.u32 %s53, 1
        %s941 = scalar_lea.sflag [#allocation12], %s940
        %s942 = sand.u32 %s229, 1
        %s943 = scalar_lea.vmem [#allocation13], %s942
        %p944 = pneg %p242
        %p945 = pneg %p239
        %s946 = sand.u32 %s53, 1
        %s947 = scalar_lea.sflag [#allocation15], %s946
        %s948 = sand.u32 %s255, 1
        %s949 = smul.addr %s948, 16
        %s950 = scalar_lea.vmem [#allocation14], %s949
        %p951 = pneg %p268
        %p952 = pneg %p265
        %s953 = sand.u32 %s53, 1
        %s954 = scalar_lea.sflag [#allocation15], %s953
        %s955 = sand.u32 %s281, 1
        %s956 = scalar_lea.vmem [#allocation16], %s955
        %p957 = pneg %p294
        %p958 = pneg %p291
        %s959 = sand.u32 %s53, 1
        %s960 = scalar_lea.sflag [#allocation18], %s959
        %s961 = sand.u32 %s307, 1
        %s962 = scalar_lea.vmem [#allocation17], %s961
        %p963 = pneg %p320
        %p964 = pneg %p317
        %s965 = sand.u32 %s53, 1
        %s966 = scalar_lea.sflag [#allocation18], %s965
        %s967 = sand.u32 %s333, 1
        %s968 = scalar_lea.vmem [#allocation19], %s967
        %p969 = pneg %p346
        %p970 = pneg %p343
        %s971 = sand.u32 %s53, 1
        %s972 = scalar_lea.sflag [#allocation21], %s971
        %s973 = sand.u32 %s359, 1
        %s974 = smul.addr %s973, 16
        %s975 = scalar_lea.vmem [#allocation20], %s974
        %p976 = pneg %p372
        %p977 = pneg %p369
        %s978 = sand.u32 %s53, 1
        %s979 = scalar_lea.sflag [#allocation21], %s978
        %s980 = sand.u32 %s385, 1
        %s981 = scalar_lea.vmem [#allocation22], %s980
        %p982 = pneg %p398
        %p983 = pneg %p395
        %s984 = sand.u32 %s53, 1
        %s985 = scalar_lea.sflag [#allocation24], %s984
        %s986 = sand.u32 %s411, 1
        %s987 = smul.addr %s986, 32
        %s988 = scalar_lea.vmem [#allocation23], %s987
        %p989 = pneg %p424
        %p990 = pneg %p421
        %s991 = sand.u32 %s53, 1
        %s992 = scalar_lea.sflag [#allocation24], %s991
        %s993 = sand.u32 %s437, 1
        %s994 = scalar_lea.vmem [#allocation25], %s993
        %p995 = pneg %p450
        %p996 = pneg %p447
        %p997 = pneg %p476
        %p998 = pneg %p473
        %s999 = sand.u32 %s463, 1
        %s1000 = scalar_lea.sflag [#allocation4], %s999
        %s1001 = sand.u32 %s463, 1
        %s1002 = smul.addr %s1001, 16
        %s1003 = scalar_lea.vmem [#allocation26], %s1002
        %p1005 = scmp.eq.s32.totalorder %s58, 0
        // Predicated region
        $region141: #{vit_seg_forward.6} parent=79 // pred_check
          %p1006 = pneg %p1005
        $region142: #{vit_seg_forward.6} parent=79 // pred_check_branch
          %1008 = sbr.rel (%p1006) target = $region144
        $region143: #{vit_seg_forward.6} parent=79 // pred_region
          %v1009 = vld [vmem:[%s781] sm:$0xff]
          %v1010 = vld [vmem:[%s781 + $0x8] sm:$0xff]
          %vm1011 = vcmask 261120
          %1012 = vst.msk [vmem:[%s1003] sm:$0xff] %vm1011, %v1009
          %1013 = vst.msk [vmem:[%s1003 + $0x8] sm:$0xff] %vm1011, %v1010
        $region144: #{vit_seg_forward.6} parent=79 // pred_fallthru
          _
        %v1014 = vld [vmem:[%s1003] sm:$0xff]
        %v1015 = vld [vmem:[%s1003 + $0x8] sm:$0xff]
        %vm1016 = vcmask 261120
        %v1017 = vsel %vm1016, %v1014, 0.0
        %1018 = vadd.xlane.f32.xlu0 %v1017
        %v1019 = vpop.xlane.xlu0 %1018
        %v1020 = vsel %vm1016, %v1015, 0.0
        %1021 = vadd.xlane.f32.xlu0 %v1020
        %v1022 = vpop.xlane.xlu0 %1021
        %v1023 = vrcp.pop 32.0
        %v1024 = vmul.f32 %v1019, %v1023
        %v1025 = vmul.f32 %v1022, %v1023
        %v1026 = vmul.f32 %v1014, %v1014
        %v1027 = vmul.f32 %v1015, %v1015
        %v1028 = vsel %vm1016, %v1026, 0.0
        %1029 = vadd.xlane.f32.xlu0 %v1028
        %v1030 = vpop.xlane.xlu0 %1029
        %v1031 = vsel %vm1016, %v1027, 0.0
        %1032 = vadd.xlane.f32.xlu0 %v1031
        %v1033 = vpop.xlane.xlu0 %1032
        %v1034 = vmul.f32 %v1030, %v1023
        %v1035 = vmul.f32 %v1033, %v1023
        %v1036 = vmul.f32 %v1024, %v1024
        %v1037 = vmul.f32 %v1025, %v1025
        %v1038 = vsub.f32 %v1034, %v1036
        %v1039 = vsub.f32 %v1035, %v1037
        %v1040 = vsub.f32 %v1014, %v1024
        %v1041 = vsub.f32 %v1015, %v1025
        %v1042 = vadd.f32 %v1038, 1e-05
        %v1043 = vadd.f32 %v1039, 1e-05
        %v1044 = vrsqrt.pop %v1042
        %v1045 = vrsqrt.pop %v1043
        %v1046 = vmul.f32 %v1040, %v1044
        %v1047 = vmul.f32 %v1041, %v1045
        %v1048 = vld [vmem:[%s789] sm:$0x1]
        %v1050 = vlaneseq
        %v1051 = vshrl.u32 %v1050, 7
        %v1052 = vsub.s32 0, %v1051
        %v1053 = vrot.slane %v1048, %v1052
        %v1055 = vmul.f32 %v1046, %v1053
        %v1056 = vmul.f32 %v1047, %v1053
        %v1057 = vld [vmem:[%s797] sm:$0x1]
        %v1059 = vlaneseq
        %v1060 = vshrl.u32 %v1059, 7
        %v1061 = vsub.s32 0, %v1060
        %v1062 = vrot.slane %v1057, %v1061
        %v1064 = vadd.f32 %v1055, %v1062
        %v1065 = vadd.f32 %v1056, %v1062
        %v1066 = vsel %vm1016, %v1064, 0.0
        %1067 = vadd.xlane.f32.xlu0 %v1066
        %v1068 = vpop.xlane.xlu0 %1067
        %v1069 = vsel %vm1016, %v1065, 0.0
        %1070 = vadd.xlane.f32.xlu0 %v1069
        %v1071 = vpop.xlane.xlu0 %1070
        %v1072 = vmul.f32 %v1068, %v1023
        %v1073 = vmul.f32 %v1071, %v1023
        %v1074 = vmul.f32 %v1064, %v1064
        %v1075 = vmul.f32 %v1065, %v1065
        %v1076 = vsel %vm1016, %v1074, 0.0
        %1077 = vadd.xlane.f32.xlu0 %v1076
        %v1078 = vpop.xlane.xlu0 %1077
        %v1079 = vsel %vm1016, %v1075, 0.0
        %1080 = vadd.xlane.f32.xlu0 %v1079
        %v1081 = vpop.xlane.xlu0 %1080
        %v1082 = vmul.f32 %v1078, %v1023
        %v1083 = vmul.f32 %v1081, %v1023
        %v1084 = vmul.f32 %v1072, %v1072
        %v1085 = vmul.f32 %v1073, %v1073
        %v1086 = vsub.f32 %v1082, %v1084
        %v1087 = vsub.f32 %v1083, %v1085
        %v1088 = vsub.f32 %v1064, %v1072
        %v1089 = vsub.f32 %v1065, %v1073
        %v1090 = vadd.f32 %v1086, 1e-05
        %v1091 = vadd.f32 %v1087, 1e-05
        %v1092 = vrsqrt.pop %v1090
        %v1093 = vrsqrt.pop %v1091
        %v1094 = vmul.f32 %v1088, %v1092
        %v1095 = vmul.f32 %v1089, %v1093
        %v1096 = vld [vmem:[%s805] sm:$0x1]
        %v1098 = vlaneseq
        %v1099 = vshrl.u32 %v1098, 7
        %v1100 = vsub.s32 0, %v1099
        %v1101 = vrot.slane %v1096, %v1100
        %v1103 = vmul.f32 %v1094, %v1101
        %v1104 = vmul.f32 %v1095, %v1101
        %v1105 = vld [vmem:[%s813] sm:$0x1]
        %v1107 = vlaneseq
        %v1108 = vshrl.u32 %v1107, 7
        %v1109 = vsub.s32 0, %v1108
        %v1110 = vrot.slane %v1105, %v1109
        %v1112 = vadd.f32 %v1103, %v1110
        %v1113 = vadd.f32 %v1104, %v1110
        %v1114 = vpack.c.bf16 %v1113, %v1112
        %v1115 = vld [vmem:[%s822] sm:$0xf]
        %v1116 = vld [vmem:[%s822 + $0x4] sm:$0xf]
        %v1117 = vld [vmem:[%s822 + $0x8] sm:$0xf]
        %v1118 = vld [vmem:[%s822 + $0xc] sm:$0xf]
        %v1119 = vld [vmem:[%s830] sm:$0x1]
        %v1121 = vlaneseq
        %v1122 = vshrl.u32 %v1121, 7
        %v1123 = vsub.s32 0, %v1122
        %v1124 = vrot.slane %v1119, %v1123
        %v1130 = vunpack.c.l.b16 %v1115
        %v1131 = vunpack.c.l.b16 %v1116
        %v1132 = vunpack.c.l.b16 %v1117
        %v1133 = vunpack.c.l.b16 %v1118
        %v1134 = vpack.c.b16 %v1131, %v1130
        %v1135 = vpack.c.b16 %v1133, %v1132
        %v1139 = vsel %vm1016, %v1114, 0
        %1141 = vmatprep.subr.bf16.mxu0 0
        %1142 = vmatpush1.bf16.msra.mxu0 %v1134
        %1143 = vmatprep.subr.bf16.mxu0 0
        %1144 = vmatpush1.bf16.msra.mxu0 %v1135
        %1145 = vmatprep.subr.bf16.mxu0 0
        %1146 = vmatpush1.bf16.msra.mxu0 0
        %1147 = vmatprep.subr.bf16.mxu0 0
        %1148 = vmatpush1.bf16.msra.mxu0 0
        %1149 = vmatprep.subr.bf16.mxu0 0
        %1150 = vmatpush1.bf16.msra.mxu0 0
        %1151 = vmatprep.subr.bf16.mxu0 0
        %1152 = vmatpush1.bf16.msra.mxu0 0
        %1153 = vmatprep.subr.bf16.mxu0 0
        %1154 = vmatpush1.bf16.msra.mxu0 0
        %1155 = vmatprep.subr.bf16.mxu0 0
        %1156 = vmatpush1.bf16.msra.mxu0 0
        %1157 = vmatprep.subr.bf16.mxu0 0
        %1158 = vmatpush1.bf16.msra.mxu0 0
        %1159 = vmatprep.subr.bf16.mxu0 0
        %1160 = vmatpush1.bf16.msra.mxu0 0
        %1161 = vmatprep.subr.bf16.mxu0 0
        %1162 = vmatpush1.bf16.msra.mxu0 0
        %1163 = vmatprep.subr.bf16.mxu0 0
        %1164 = vmatpush1.bf16.msra.mxu0 0
        %1165 = vmatprep.subr.bf16.mxu0 0
        %1166 = vmatpush1.bf16.msra.mxu0 0
        %1167 = vmatprep.subr.bf16.mxu0 0
        %1168 = vmatpush1.bf16.msra.mxu0 0
        %1169 = vmatprep.subr.bf16.mxu0 0
        %1170 = vmatpush1.bf16.msra.mxu0 0
        %1171 = vmatprep.subr.bf16.mxu0 0
        %1172 = vmatpush1.bf16.msra.mxu0 0
        %1173 = vmatprep.mubr.bf16.mxu0 0
        %1174 = vmatmul.mubr.bf16.gmra.mrb[0].mxu0 %v1139
        %v1175 = vpop.f32.mrb[0].mxu0
        %v1176 = vadd.f32 %v1124, %v1175
        %v1177 = vpop.f32.mrb[0].mxu0
        %v1178 = vpop.f32.mrb[0].mxu0
        %v1179 = vadd.f32 %v1124, %v1178
        %v1180 = vpop.f32.mrb[0].mxu0
        %1181 = vdwg.mxu0
        %v1182 = vmul.f32 %v1176, 0.35355338
        %v1183 = vmul.f32 %v1179, 0.35355338
        %v1184 = vpack.c.bf16 %v1183, %v1182
        %v1185 = vpack.c.bf16 %v1179, %v1176
        %1187 = vrot.lane.b32.xlu0 %v1185, 96
        %v1188 = vpop.permute.xlu0 %1187
        %vm1189 = vcmask 64512
        %v1191 = vsel %vm1189, %v1184, 0
        %v1194 = vsel %vm1189, %v1188, 0
        %1196 = vmatprep.subr.bf16.mxu0 0
        %1197 = vmatpush1.bf16.xpose.msra.mxu0 %v1194
        %1198 = vmatprep.subr.bf16.mxu0 0
        %1199 = vmatpush1.bf16.xpose.msra.mxu0 0
        %1200 = vmatprep.subr.bf16.mxu0 0
        %1201 = vmatpush1.bf16.xpose.msra.mxu0 0
        %1202 = vmatprep.subr.bf16.mxu0 0
        %1203 = vmatpush1.bf16.xpose.msra.mxu0 0
        %1204 = vmatprep.subr.bf16.mxu0 0
        %1205 = vmatpush1.bf16.xpose.msra.mxu0 0
        %1206 = vmatprep.subr.bf16.mxu0 0
        %1207 = vmatpush1.bf16.xpose.msra.mxu0 0
        %1208 = vmatprep.subr.bf16.mxu0 0
        %1209 = vmatpush1.bf16.xpose.msra.mxu0 0
        %1210 = vmatprep.subr.bf16.mxu0 0
        %1211 = vmatpush1.bf16.xpose.msra.mxu0 0
        %1212 = vmatprep.subr.bf16.mxu0 0
        %1213 = vmatpush1.bf16.xpose.msra.mxu0 0
        %1214 = vmatprep.subr.bf16.mxu0 0
        %1215 = vmatpush1.bf16.xpose.msra.mxu0 0
        %1216 = vmatprep.subr.bf16.mxu0 0
        %1217 = vmatpush1.bf16.xpose.msra.mxu0 0
        %1218 = vmatprep.subr.bf16.mxu0 0
        %1219 = vmatpush1.bf16.xpose.msra.mxu0 0
        %1220 = vmatprep.subr.bf16.mxu0 0
        %1221 = vmatpush1.bf16.xpose.msra.mxu0 0
        %1222 = vmatprep.subr.bf16.mxu0 0
        %1223 = vmatpush1.bf16.xpose.msra.mxu0 0
        %1224 = vmatprep.subr.bf16.mxu0 0
        %1225 = vmatpush1.bf16.xpose.msra.mxu0 0
        %1226 = vmatprep.subr.bf16.mxu0 0
        %1227 = vmatpush1.bf16.xpose.msra.mxu0 0
        %1228 = vmatprep.mubr.bf16.mxu0 0
        %1229 = vmatmul.mubr.bf16.gmra.mrb[0].mxu0 %v1191
        %v1230 = vpop.f32.mrb[0].mxu0
        %v1231 = vadd.f32 0.0, %v1230
        %v1232 = vpop.f32.mrb[0].mxu0
        %v1233 = vpop.f32.mrb[0].mxu0
        %v1234 = vadd.f32 0.0, %v1233
        %v1235 = vpop.f32.mrb[0].mxu0
        %1236 = vdwg.mxu0
        %vm1237 = vcmask 130048
        %v1238 = vsel %vm1237, %v1231, -inf
        %1239 = vmax.xlane.f32.xlu0 %v1238
        %v1240 = vpop.xlane.xlu0 %1239
        %v1241 = vsel %vm1237, %v1234, -inf
        %1242 = vmax.xlane.f32.xlu0 %v1241
        %v1243 = vpop.xlane.xlu0 %1242
        %v1244 = vsub.f32 %v1231, %v1240
        %v1245 = vsub.f32 %v1234, %v1243
        %v1246 = vmul.f32 %v1244, 1.442695
        %v1247 = vpow.pop %v1246
        %v1248 = vmul.f32 %v1245, 1.442695
        %v1249 = vpow.pop %v1248
        %v1250 = vsel %vm1237, %v1247, 0.0
        %1251 = vadd.xlane.f32.xlu0 %v1250
        %v1252 = vpop.xlane.xlu0 %1251
        %v1253 = vsel %vm1237, %v1249, 0.0
        %1254 = vadd.xlane.f32.xlu0 %v1253
        %v1255 = vpop.xlane.xlu0 %1254
        %v1256 = vrcp.pop %v1252
        %v1257 = vmul.f32 %v1247, %v1256
        %v1258 = vrcp.pop %v1255
        %v1259 = vmul.f32 %v1249, %v1258
        %v1260 = vpack.c.bf16 %v1259, %v1257
        %1261 = vrot.lane.b32.xlu0 %v1185, 64
        %v1262 = vpop.permute.xlu0 %1261
        %v1265 = vsel %vm1237, %v1260, 0
        %1267 = vmatprep.subr.bf16.mxu0 0
        %1268 = vmatpush1.bf16.msra.mxu0 %v1262
        %1269 = vmatprep.subr.bf16.mxu0 0
        %1270 = vmatpush1.bf16.msra.mxu0 0
        %1271 = vmatprep.subr.bf16.mxu0 0
        %1272 = vmatpush1.bf16.msra.mxu0 0
        %1273 = vmatprep.subr.bf16.mxu0 0
        %1274 = vmatpush1.bf16.msra.mxu0 0
        %1275 = vmatprep.subr.bf16.mxu0 0
        %1276 = vmatpush1.bf16.msra.mxu0 0
        %1277 = vmatprep.subr.bf16.mxu0 0
        %1278 = vmatpush1.bf16.msra.mxu0 0
        %1279 = vmatprep.subr.bf16.mxu0 0
        %1280 = vmatpush1.bf16.msra.mxu0 0
        %1281 = vmatprep.subr.bf16.mxu0 0
        %1282 = vmatpush1.bf16.msra.mxu0 0
        %1283 = vmatprep.subr.bf16.mxu0 0
        %1284 = vmatpush1.bf16.msra.mxu0 0
        %1285 = vmatprep.subr.bf16.mxu0 0
        %1286 = vmatpush1.bf16.msra.mxu0 0
        %1287 = vmatprep.subr.bf16.mxu0 0
        %1288 = vmatpush1.bf16.msra.mxu0 0
        %1289 = vmatprep.subr.bf16.mxu0 0
        %1290 = vmatpush1.bf16.msra.mxu0 0
        %1291 = vmatprep.subr.bf16.mxu0 0
        %1292 = vmatpush1.bf16.msra.mxu0 0
        %1293 = vmatprep.subr.bf16.mxu0 0
        %1294 = vmatpush1.bf16.msra.mxu0 0
        %1295 = vmatprep.subr.bf16.mxu0 0
        %1296 = vmatpush1.bf16.msra.mxu0 0
        %1297 = vmatprep.subr.bf16.mxu0 0
        %1298 = vmatpush1.bf16.msra.mxu0 0
        %1299 = vmatprep.mubr.bf16.mxu0 0
        %1300 = vmatmul.mubr.bf16.gmra.mrb[0].mxu0 %v1265
        %v1301 = vpop.f32.mrb[0].mxu0
        %v1302 = vadd.f32 0.0, %v1301
        %v1303 = vpop.f32.mrb[0].mxu0
        %v1304 = vpop.f32.mrb[0].mxu0
        %v1305 = vadd.f32 0.0, %v1304
        %v1306 = vpop.f32.mrb[0].mxu0
        %1307 = vdwg.mxu0
        %1309 = vrot.lane.b32.xlu0 %v1184, 120
        %v1310 = vpop.permute.xlu0 %1309
        %1311 = vrot.lane.b32.xlu0 %v1185, 88
        %v1312 = vpop.permute.xlu0 %1311
        %v1314 = vsel %vm1189, %v1310, 0
        %v1317 = vsel %vm1189, %v1312, 0
        %1319 = vmatprep.subr.bf16.mxu0 0
        %1320 = vmatpush1.bf16.xpose.msra.mxu0 %v1317
        %1321 = vmatprep.subr.bf16.mxu0 0
        %1322 = vmatpush1.bf16.xpose.msra.mxu0 0
        %1323 = vmatprep.subr.bf16.mxu0 0
        %1324 = vmatpush1.bf16.xpose.msra.mxu0 0
        %1325 = vmatprep.subr.bf16.mxu0 0
        %1326 = vmatpush1.bf16.xpose.msra.mxu0 0
        %1327 = vmatprep.subr.bf16.mxu0 0
        %1328 = vmatpush1.bf16.xpose.msra.mxu0 0
        %1329 = vmatprep.subr.bf16.mxu0 0
        %1330 = vmatpush1.bf16.xpose.msra.mxu0 0
        %1331 = vmatprep.subr.bf16.mxu0 0
        %1332 = vmatpush1.bf16.xpose.msra.mxu0 0
        %1333 = vmatprep.subr.bf16.mxu0 0
        %1334 = vmatpush1.bf16.xpose.msra.mxu0 0
        %1335 = vmatprep.subr.bf16.mxu0 0
        %1336 = vmatpush1.bf16.xpose.msra.mxu0 0
        %1337 = vmatprep.subr.bf16.mxu0 0
        %1338 = vmatpush1.bf16.xpose.msra.mxu0 0
        %1339 = vmatprep.subr.bf16.mxu0 0
        %1340 = vmatpush1.bf16.xpose.msra.mxu0 0
        %1341 = vmatprep.subr.bf16.mxu0 0
        %1342 = vmatpush1.bf16.xpose.msra.mxu0 0
        %1343 = vmatprep.subr.bf16.mxu0 0
        %1344 = vmatpush1.bf16.xpose.msra.mxu0 0
        %1345 = vmatprep.subr.bf16.mxu0 0
        %1346 = vmatpush1.bf16.xpose.msra.mxu0 0
        %1347 = vmatprep.subr.bf16.mxu0 0
        %1348 = vmatpush1.bf16.xpose.msra.mxu0 0
        %1349 = vmatprep.subr.bf16.mxu0 0
        %1350 = vmatpush1.bf16.xpose.msra.mxu0 0
        %1351 = vmatprep.mubr.bf16.mxu0 0
        %1352 = vmatmul.mubr.bf16.gmra.mrb[0].mxu0 %v1314
        %v1353 = vpop.f32.mrb[0].mxu0
        %v1354 = vadd.f32 0.0, %v1353
        %v1355 = vpop.f32.mrb[0].mxu0
        %v1356 = vpop.f32.mrb[0].mxu0
        %v1357 = vadd.f32 0.0, %v1356
        %v1358 = vpop.f32.mrb[0].mxu0
        %1359 = vdwg.mxu0
        %v1360 = vsel %vm1237, %v1354, -inf
        %1361 = vmax.xlane.f32.xlu0 %v1360
        %v1362 = vpop.xlane.xlu0 %1361
        %v1363 = vsel %vm1237, %v1357, -inf
        %1364 = vmax.xlane.f32.xlu0 %v1363
        %v1365 = vpop.xlane.xlu0 %1364
        %v1366 = vsub.f32 %v1354, %v1362
        %v1367 = vsub.f32 %v1357, %v1365
        %v1368 = vmul.f32 %v1366, 1.442695
        %v1369 = vpow.pop %v1368
        %v1370 = vmul.f32 %v1367, 1.442695
        %v1371 = vpow.pop %v1370
        %v1372 = vsel %vm1237, %v1369, 0.0
        %1373 = vadd.xlane.f32.xlu0 %v1372
        %v1374 = vpop.xlane.xlu0 %1373
        %v1375 = vsel %vm1237, %v1371, 0.0
        %1376 = vadd.xlane.f32.xlu0 %v1375
        %v1377 = vpop.xlane.xlu0 %1376
        %v1378 = vrcp.pop %v1374
        %v1379 = vmul.f32 %v1369, %v1378
        %v1380 = vrcp.pop %v1377
        %v1381 = vmul.f32 %v1371, %v1380
        %v1382 = vpack.c.bf16 %v1381, %v1379
        %1383 = vrot.lane.b32.xlu0 %v1185, 56
        %v1384 = vpop.permute.xlu0 %1383
        %v1387 = vsel %vm1237, %v1382, 0
        %1389 = vmatprep.subr.bf16.mxu0 0
        %1390 = vmatpush1.bf16.msra.mxu0 %v1384
        %1391 = vmatprep.subr.bf16.mxu0 0
        %1392 = vmatpush1.bf16.msra.mxu0 0
        %1393 = vmatprep.subr.bf16.mxu0 0
        %1394 = vmatpush1.bf16.msra.mxu0 0
        %1395 = vmatprep.subr.bf16.mxu0 0
        %1396 = vmatpush1.bf16.msra.mxu0 0
        %1397 = vmatprep.subr.bf16.mxu0 0
        %1398 = vmatpush1.bf16.msra.mxu0 0
        %1399 = vmatprep.subr.bf16.mxu0 0
        %1400 = vmatpush1.bf16.msra.mxu0 0
        %1401 = vmatprep.subr.bf16.mxu0 0
        %1402 = vmatpush1.bf16.msra.mxu0 0
        %1403 = vmatprep.subr.bf16.mxu0 0
        %1404 = vmatpush1.bf16.msra.mxu0 0
        %1405 = vmatprep.subr.bf16.mxu0 0
        %1406 = vmatpush1.bf16.msra.mxu0 0
        %1407 = vmatprep.subr.bf16.mxu0 0
        %1408 = vmatpush1.bf16.msra.mxu0 0
        %1409 = vmatprep.subr.bf16.mxu0 0
        %1410 = vmatpush1.bf16.msra.mxu0 0
        %1411 = vmatprep.subr.bf16.mxu0 0
        %1412 = vmatpush1.bf16.msra.mxu0 0
        %1413 = vmatprep.subr.bf16.mxu0 0
        %1414 = vmatpush1.bf16.msra.mxu0 0
        %1415 = vmatprep.subr.bf16.mxu0 0
        %1416 = vmatpush1.bf16.msra.mxu0 0
        %1417 = vmatprep.subr.bf16.mxu0 0
        %1418 = vmatpush1.bf16.msra.mxu0 0
        %1419 = vmatprep.subr.bf16.mxu0 0
        %1420 = vmatpush1.bf16.msra.mxu0 0
        %1421 = vmatprep.mubr.bf16.mxu0 0
        %1422 = vmatmul.mubr.bf16.gmra.mrb[0].mxu0 %v1387
        %v1423 = vpop.f32.mrb[0].mxu0
        %v1424 = vadd.f32 0.0, %v1423
        %v1425 = vpop.f32.mrb[0].mxu0
        %v1426 = vpop.f32.mrb[0].mxu0
        %v1427 = vadd.f32 0.0, %v1426
        %v1428 = vpop.f32.mrb[0].mxu0
        %1429 = vdwg.mxu0
        %1430 = vrot.lane.b32.xlu0 %v1184, 112
        %v1431 = vpop.permute.xlu0 %1430
        %1432 = vrot.lane.b32.xlu0 %v1185, 80
        %v1433 = vpop.permute.xlu0 %1432
        %v1435 = vsel %vm1189, %v1431, 0
        %v1438 = vsel %vm1189, %v1433, 0
        %1440 = vmatprep.subr.bf16.mxu0 0
        %1441 = vmatpush1.bf16.xpose.msra.mxu0 %v1438
        %1442 = vmatprep.subr.bf16.mxu0 0
        %1443 = vmatpush1.bf16.xpose.msra.mxu0 0
        %1444 = vmatprep.subr.bf16.mxu0 0
        %1445 = vmatpush1.bf16.xpose.msra.mxu0 0
        %1446 = vmatprep.subr.bf16.mxu0 0
        %1447 = vmatpush1.bf16.xpose.msra.mxu0 0
        %1448 = vmatprep.subr.bf16.mxu0 0
        %1449 = vmatpush1.bf16.xpose.msra.mxu0 0
        %1450 = vmatprep.subr.bf16.mxu0 0
        %1451 = vmatpush1.bf16.xpose.msra.mxu0 0
        %1452 = vmatprep.subr.bf16.mxu0 0
        %1453 = vmatpush1.bf16.xpose.msra.mxu0 0
        %1454 = vmatprep.subr.bf16.mxu0 0
        %1455 = vmatpush1.bf16.xpose.msra.mxu0 0
        %1456 = vmatprep.subr.bf16.mxu0 0
        %1457 = vmatpush1.bf16.xpose.msra.mxu0 0
        %1458 = vmatprep.subr.bf16.mxu0 0
        %1459 = vmatpush1.bf16.xpose.msra.mxu0 0
        %1460 = vmatprep.subr.bf16.mxu0 0
        %1461 = vmatpush1.bf16.xpose.msra.mxu0 0
        %1462 = vmatprep.subr.bf16.mxu0 0
        %1463 = vmatpush1.bf16.xpose.msra.mxu0 0
        %1464 = vmatprep.subr.bf16.mxu0 0
        %1465 = vmatpush1.bf16.xpose.msra.mxu0 0
        %1466 = vmatprep.subr.bf16.mxu0 0
        %1467 = vmatpush1.bf16.xpose.msra.mxu0 0
        %1468 = vmatprep.subr.bf16.mxu0 0
        %1469 = vmatpush1.bf16.xpose.msra.mxu0 0
        %1470 = vmatprep.subr.bf16.mxu0 0
        %1471 = vmatpush1.bf16.xpose.msra.mxu0 0
        %1472 = vmatprep.mubr.bf16.mxu0 0
        %1473 = vmatmul.mubr.bf16.gmra.mrb[0].mxu0 %v1435
        %v1474 = vpop.f32.mrb[0].mxu0
        %v1475 = vadd.f32 0.0, %v1474
        %v1476 = vpop.f32.mrb[0].mxu0
        %v1477 = vpop.f32.mrb[0].mxu0
        %v1478 = vadd.f32 0.0, %v1477
        %v1479 = vpop.f32.mrb[0].mxu0
        %1480 = vdwg.mxu0
        %v1481 = vsel %vm1237, %v1475, -inf
        %1482 = vmax.xlane.f32.xlu0 %v1481
        %v1483 = vpop.xlane.xlu0 %1482
        %v1484 = vsel %vm1237, %v1478, -inf
        %1485 = vmax.xlane.f32.xlu0 %v1484
        %v1486 = vpop.xlane.xlu0 %1485
        %v1487 = vsub.f32 %v1475, %v1483
        %v1488 = vsub.f32 %v1478, %v1486
        %v1489 = vmul.f32 %v1487, 1.442695
        %v1490 = vpow.pop %v1489
        %v1491 = vmul.f32 %v1488, 1.442695
        %v1492 = vpow.pop %v1491
        %v1493 = vsel %vm1237, %v1490, 0.0
        %1494 = vadd.xlane.f32.xlu0 %v1493
        %v1495 = vpop.xlane.xlu0 %1494
        %v1496 = vsel %vm1237, %v1492, 0.0
        %1497 = vadd.xlane.f32.xlu0 %v1496
        %v1498 = vpop.xlane.xlu0 %1497
        %v1499 = vrcp.pop %v1495
        %v1500 = vmul.f32 %v1490, %v1499
        %v1501 = vrcp.pop %v1498
        %v1502 = vmul.f32 %v1492, %v1501
        %v1503 = vpack.c.bf16 %v1502, %v1500
        %1504 = vrot.lane.b32.xlu0 %v1185, 48
        %v1505 = vpop.permute.xlu0 %1504
        %v1508 = vsel %vm1237, %v1503, 0
        %1510 = vmatprep.subr.bf16.mxu0 0
        %1511 = vmatpush1.bf16.msra.mxu0 %v1505
        %1512 = vmatprep.subr.bf16.mxu0 0
        %1513 = vmatpush1.bf16.msra.mxu0 0
        %1514 = vmatprep.subr.bf16.mxu0 0
        %1515 = vmatpush1.bf16.msra.mxu0 0
        %1516 = vmatprep.subr.bf16.mxu0 0
        %1517 = vmatpush1.bf16.msra.mxu0 0
        %1518 = vmatprep.subr.bf16.mxu0 0
        %1519 = vmatpush1.bf16.msra.mxu0 0
        %1520 = vmatprep.subr.bf16.mxu0 0
        %1521 = vmatpush1.bf16.msra.mxu0 0
        %1522 = vmatprep.subr.bf16.mxu0 0
        %1523 = vmatpush1.bf16.msra.mxu0 0
        %1524 = vmatprep.subr.bf16.mxu0 0
        %1525 = vmatpush1.bf16.msra.mxu0 0
        %1526 = vmatprep.subr.bf16.mxu0 0
        %1527 = vmatpush1.bf16.msra.mxu0 0
        %1528 = vmatprep.subr.bf16.mxu0 0
        %1529 = vmatpush1.bf16.msra.mxu0 0
        %1530 = vmatprep.subr.bf16.mxu0 0
        %1531 = vmatpush1.bf16.msra.mxu0 0
        %1532 = vmatprep.subr.bf16.mxu0 0
        %1533 = vmatpush1.bf16.msra.mxu0 0
        %1534 = vmatprep.subr.bf16.mxu0 0
        %1535 = vmatpush1.bf16.msra.mxu0 0
        %1536 = vmatprep.subr.bf16.mxu0 0
        %1537 = vmatpush1.bf16.msra.mxu0 0
        %1538 = vmatprep.subr.bf16.mxu0 0
        %1539 = vmatpush1.bf16.msra.mxu0 0
        %1540 = vmatprep.subr.bf16.mxu0 0
        %1541 = vmatpush1.bf16.msra.mxu0 0
        %1542 = vmatprep.mubr.bf16.mxu0 0
        %1543 = vmatmul.mubr.bf16.gmra.mrb[0].mxu0 %v1508
        %v1544 = vpop.f32.mrb[0].mxu0
        %v1545 = vadd.f32 0.0, %v1544
        %v1546 = vpop.f32.mrb[0].mxu0
        %v1547 = vpop.f32.mrb[0].mxu0
        %v1548 = vadd.f32 0.0, %v1547
        %v1549 = vpop.f32.mrb[0].mxu0
        %1550 = vdwg.mxu0
        %1551 = vrot.lane.b32.xlu0 %v1184, 104
        %v1552 = vpop.permute.xlu0 %1551
        %1553 = vrot.lane.b32.xlu0 %v1185, 72
        %v1554 = vpop.permute.xlu0 %1553
        %v1556 = vsel %vm1189, %v1552, 0
        %v1559 = vsel %vm1189, %v1554, 0
        %1561 = vmatprep.subr.bf16.mxu0 0
        %1562 = vmatpush1.bf16.xpose.msra.mxu0 %v1559
        %1563 = vmatprep.subr.bf16.mxu0 0
        %1564 = vmatpush1.bf16.xpose.msra.mxu0 0
        %1565 = vmatprep.subr.bf16.mxu0 0
        %1566 = vmatpush1.bf16.xpose.msra.mxu0 0
        %1567 = vmatprep.subr.bf16.mxu0 0
        %1568 = vmatpush1.bf16.xpose.msra.mxu0 0
        %1569 = vmatprep.subr.bf16.mxu0 0
        %1570 = vmatpush1.bf16.xpose.msra.mxu0 0
        %1571 = vmatprep.subr.bf16.mxu0 0
        %1572 = vmatpush1.bf16.xpose.msra.mxu0 0
        %1573 = vmatprep.subr.bf16.mxu0 0
        %1574 = vmatpush1.bf16.xpose.msra.mxu0 0
        %1575 = vmatprep.subr.bf16.mxu0 0
        %1576 = vmatpush1.bf16.xpose.msra.mxu0 0
        %1577 = vmatprep.subr.bf16.mxu0 0
        %1578 = vmatpush1.bf16.xpose.msra.mxu0 0
        %1579 = vmatprep.subr.bf16.mxu0 0
        %1580 = vmatpush1.bf16.xpose.msra.mxu0 0
        %1581 = vmatprep.subr.bf16.mxu0 0
        %1582 = vmatpush1.bf16.xpose.msra.mxu0 0
        %1583 = vmatprep.subr.bf16.mxu0 0
        %1584 = vmatpush1.bf16.xpose.msra.mxu0 0
        %1585 = vmatprep.subr.bf16.mxu0 0
        %1586 = vmatpush1.bf16.xpose.msra.mxu0 0
        %1587 = vmatprep.subr.bf16.mxu0 0
        %1588 = vmatpush1.bf16.xpose.msra.mxu0 0
        %1589 = vmatprep.subr.bf16.mxu0 0
        %1590 = vmatpush1.bf16.xpose.msra.mxu0 0
        %1591 = vmatprep.subr.bf16.mxu0 0
        %1592 = vmatpush1.bf16.xpose.msra.mxu0 0
        %1593 = vmatprep.mubr.bf16.mxu0 0
        %1594 = vmatmul.mubr.bf16.gmra.mrb[0].mxu0 %v1556
        %v1595 = vpop.f32.mrb[0].mxu0
        %v1596 = vadd.f32 0.0, %v1595
        %v1597 = vpop.f32.mrb[0].mxu0
        %v1598 = vpop.f32.mrb[0].mxu0
        %v1599 = vadd.f32 0.0, %v1598
        %v1600 = vpop.f32.mrb[0].mxu0
        %1601 = vdwg.mxu0
        %v1602 = vsel %vm1237, %v1596, -inf
        %1603 = vmax.xlane.f32.xlu0 %v1602
        %v1604 = vpop.xlane.xlu0 %1603
        %v1605 = vsel %vm1237, %v1599, -inf
        %1606 = vmax.xlane.f32.xlu0 %v1605
        %v1607 = vpop.xlane.xlu0 %1606
        %v1608 = vsub.f32 %v1596, %v1604
        %v1609 = vsub.f32 %v1599, %v1607
        %v1610 = vmul.f32 %v1608, 1.442695
        %v1611 = vpow.pop %v1610
        %v1612 = vmul.f32 %v1609, 1.442695
        %v1613 = vpow.pop %v1612
        %v1614 = vsel %vm1237, %v1611, 0.0
        %1615 = vadd.xlane.f32.xlu0 %v1614
        %v1616 = vpop.xlane.xlu0 %1615
        %v1617 = vsel %vm1237, %v1613, 0.0
        %1618 = vadd.xlane.f32.xlu0 %v1617
        %v1619 = vpop.xlane.xlu0 %1618
        %v1620 = vrcp.pop %v1616
        %v1621 = vmul.f32 %v1611, %v1620
        %v1622 = vrcp.pop %v1619
        %v1623 = vmul.f32 %v1613, %v1622
        %v1624 = vpack.c.bf16 %v1623, %v1621
        %1625 = vrot.lane.b32.xlu0 %v1185, 40
        %v1626 = vpop.permute.xlu0 %1625
        %v1629 = vsel %vm1237, %v1624, 0
        %1631 = vmatprep.subr.bf16.mxu0 0
        %1632 = vmatpush1.bf16.msra.mxu0 %v1626
        %1633 = vmatprep.subr.bf16.mxu0 0
        %1634 = vmatpush1.bf16.msra.mxu0 0
        %1635 = vmatprep.subr.bf16.mxu0 0
        %1636 = vmatpush1.bf16.msra.mxu0 0
        %1637 = vmatprep.subr.bf16.mxu0 0
        %1638 = vmatpush1.bf16.msra.mxu0 0
        %1639 = vmatprep.subr.bf16.mxu0 0
        %1640 = vmatpush1.bf16.msra.mxu0 0
        %1641 = vmatprep.subr.bf16.mxu0 0
        %1642 = vmatpush1.bf16.msra.mxu0 0
        %1643 = vmatprep.subr.bf16.mxu0 0
        %1644 = vmatpush1.bf16.msra.mxu0 0
        %1645 = vmatprep.subr.bf16.mxu0 0
        %1646 = vmatpush1.bf16.msra.mxu0 0
        %1647 = vmatprep.subr.bf16.mxu0 0
        %1648 = vmatpush1.bf16.msra.mxu0 0
        %1649 = vmatprep.subr.bf16.mxu0 0
        %1650 = vmatpush1.bf16.msra.mxu0 0
        %1651 = vmatprep.subr.bf16.mxu0 0
        %1652 = vmatpush1.bf16.msra.mxu0 0
        %1653 = vmatprep.subr.bf16.mxu0 0
        %1654 = vmatpush1.bf16.msra.mxu0 0
        %1655 = vmatprep.subr.bf16.mxu0 0
        %1656 = vmatpush1.bf16.msra.mxu0 0
        %1657 = vmatprep.subr.bf16.mxu0 0
        %1658 = vmatpush1.bf16.msra.mxu0 0
        %1659 = vmatprep.subr.bf16.mxu0 0
        %1660 = vmatpush1.bf16.msra.mxu0 0
        %1661 = vmatprep.subr.bf16.mxu0 0
        %1662 = vmatpush1.bf16.msra.mxu0 0
        %1663 = vmatprep.mubr.bf16.mxu0 0
        %1664 = vmatmul.mubr.bf16.gmra.mrb[0].mxu0 %v1629
        %v1665 = vpop.f32.mrb[0].mxu0
        %v1666 = vadd.f32 0.0, %v1665
        %v1667 = vpop.f32.mrb[0].mxu0
        %v1668 = vpop.f32.mrb[0].mxu0
        %v1669 = vadd.f32 0.0, %v1668
        %v1670 = vpop.f32.mrb[0].mxu0
        %1671 = vdwg.mxu0
        %1674 = vrot.lane.b32.xlu0 %v1424, 8
        %v1675 = vpop.permute.xlu0 %1674
        %1676 = vrot.lane.b32.xlu0 %v1427, 8
        %v1677 = vpop.permute.xlu0 %1676
        %1682 = vrot.lane.b32.xlu0 %v1545, 16
        %v1683 = vpop.permute.xlu0 %1682
        %1684 = vrot.lane.b32.xlu0 %v1548, 16
        %v1685 = vpop.permute.xlu0 %1684
        %1690 = vrot.lane.b32.xlu0 %v1666, 24
        %v1691 = vpop.permute.xlu0 %1690
        %1692 = vrot.lane.b32.xlu0 %v1669, 24
        %v1693 = vpop.permute.xlu0 %1692
        %v1696 = vsel %vm1189, %v1302, %v1675
        %v1697 = vsel %vm1189, %v1305, %v1677
        %v1698 = vsel %vm1237, %v1696, %v1683
        %v1699 = vsel %vm1237, %v1697, %v1685
        %vm1700 = vcmask 195584
        %v1701 = vsel %vm1700, %v1698, %v1691
        %v1702 = vsel %vm1700, %v1699, %v1693
        %v1703 = vpack.c.bf16 %v1702, %v1701
        %v1704 = vld [vmem:[%s839] sm:$0xf]
        %v1705 = vld [vmem:[%s839 + $0x4] sm:$0xf]
        %v1706 = vld [vmem:[%s839 + $0x8] sm:$0xf]
        %v1707 = vld [vmem:[%s839 + $0xc] sm:$0xf]
        %v1708 = vld [vmem:[%s847] sm:$0x1]
        %v1710 = vlaneseq
        %v1711 = vshrl.u32 %v1710, 7
        %v1712 = vsub.s32 0, %v1711
        %v1713 = vrot.slane %v1708, %v1712
        %v1719 = vunpack.c.l.b16 %v1704
        %v1720 = vunpack.c.l.b16 %v1705
        %v1721 = vunpack.c.l.b16 %v1706
        %v1722 = vunpack.c.l.b16 %v1707
        %v1723 = vpack.c.b16 %v1720, %v1719
        %v1724 = vpack.c.b16 %v1722, %v1721
        %v1728 = vsel %vm1016, %v1703, 0
        %1730 = vmatprep.subr.bf16.mxu0 0
        %1731 = vmatpush1.bf16.msra.mxu0 %v1723
        %1732 = vmatprep.subr.bf16.mxu0 0
        %1733 = vmatpush1.bf16.msra.mxu0 %v1724
        %1734 = vmatprep.subr.bf16.mxu0 0
        %1735 = vmatpush1.bf16.msra.mxu0 0
        %1736 = vmatprep.subr.bf16.mxu0 0
        %1737 = vmatpush1.bf16.msra.mxu0 0
        %1738 = vmatprep.subr.bf16.mxu0 0
        %1739 = vmatpush1.bf16.msra.mxu0 0
        %1740 = vmatprep.subr.bf16.mxu0 0
        %1741 = vmatpush1.bf16.msra.mxu0 0
        %1742 = vmatprep.subr.bf16.mxu0 0
        %1743 = vmatpush1.bf16.msra.mxu0 0
        %1744 = vmatprep.subr.bf16.mxu0 0
        %1745 = vmatpush1.bf16.msra.mxu0 0
        %1746 = vmatprep.subr.bf16.mxu0 0
        %1747 = vmatpush1.bf16.msra.mxu0 0
        %1748 = vmatprep.subr.bf16.mxu0 0
        %1749 = vmatpush1.bf16.msra.mxu0 0
        %1750 = vmatprep.subr.bf16.mxu0 0
        %1751 = vmatpush1.bf16.msra.mxu0 0
        %1752 = vmatprep.subr.bf16.mxu0 0
        %1753 = vmatpush1.bf16.msra.mxu0 0
        %1754 = vmatprep.subr.bf16.mxu0 0
        %1755 = vmatpush1.bf16.msra.mxu0 0
        %1756 = vmatprep.subr.bf16.mxu0 0
        %1757 = vmatpush1.bf16.msra.mxu0 0
        %1758 = vmatprep.subr.bf16.mxu0 0
        %1759 = vmatpush1.bf16.msra.mxu0 0
        %1760 = vmatprep.subr.bf16.mxu0 0
        %1761 = vmatpush1.bf16.msra.mxu0 0
        %1762 = vmatprep.mubr.bf16.mxu0 0
        %1763 = vmatmul.mubr.bf16.gmra.mrb[0].mxu0 %v1728
        %v1764 = vpop.f32.mrb[0].mxu0
        %v1765 = vadd.f32 %v1713, %v1764
        %v1766 = vpop.f32.mrb[0].mxu0
        %v1767 = vpop.f32.mrb[0].mxu0
        %v1768 = vadd.f32 %v1713, %v1767
        %v1769 = vpop.f32.mrb[0].mxu0
        %1770 = vdwg.mxu0
        %v1771 = vadd.f32 %v1014, %v1765
        %v1772 = vadd.f32 %v1015, %v1768
        %v1773 = vsel %vm1016, %v1771, 0.0
        %1774 = vadd.xlane.f32.xlu0 %v1773
        %v1775 = vpop.xlane.xlu0 %1774
        %v1776 = vsel %vm1016, %v1772, 0.0
        %1777 = vadd.xlane.f32.xlu0 %v1776
        %v1778 = vpop.xlane.xlu0 %1777
        %v1779 = vmul.f32 %v1775, %v1023
        %v1780 = vmul.f32 %v1778, %v1023
        %v1781 = vmul.f32 %v1771, %v1771
        %v1782 = vmul.f32 %v1772, %v1772
        %v1783 = vsel %vm1016, %v1781, 0.0
        %1784 = vadd.xlane.f32.xlu0 %v1783
        %v1785 = vpop.xlane.xlu0 %1784
        %v1786 = vsel %vm1016, %v1782, 0.0
        %1787 = vadd.xlane.f32.xlu0 %v1786
        %v1788 = vpop.xlane.xlu0 %1787
        %v1789 = vmul.f32 %v1785, %v1023
        %v1790 = vmul.f32 %v1788, %v1023
        %v1791 = vmul.f32 %v1779, %v1779
        %v1792 = vmul.f32 %v1780, %v1780
        %v1793 = vsub.f32 %v1789, %v1791
        %v1794 = vsub.f32 %v1790, %v1792
        %v1795 = vsub.f32 %v1771, %v1779
        %v1796 = vsub.f32 %v1772, %v1780
        %v1797 = vadd.f32 %v1793, 1e-05
        %v1798 = vadd.f32 %v1794, 1e-05
        %v1799 = vrsqrt.pop %v1797
        %v1800 = vrsqrt.pop %v1798
        %v1801 = vmul.f32 %v1795, %v1799
        %v1802 = vmul.f32 %v1796, %v1800
        %v1803 = vld [vmem:[%s855] sm:$0x1]
        %v1805 = vlaneseq
        %v1806 = vshrl.u32 %v1805, 7
        %v1807 = vsub.s32 0, %v1806
        %v1808 = vrot.slane %v1803, %v1807
        %v1810 = vmul.f32 %v1801, %v1808
        %v1811 = vmul.f32 %v1802, %v1808
        %v1812 = vld [vmem:[%s863] sm:$0x1]
        %v1814 = vlaneseq
        %v1815 = vshrl.u32 %v1814, 7
        %v1816 = vsub.s32 0, %v1815
        %v1817 = vrot.slane %v1812, %v1816
        %v1819 = vadd.f32 %v1810, %v1817
        %v1820 = vadd.f32 %v1811, %v1817
        %v1821 = vpack.c.bf16 %v1820, %v1819
        %v1822 = vld [vmem:[%s872] sm:$0xf]
        %v1823 = vld [vmem:[%s872 + $0x4] sm:$0xf]
        %v1824 = vld [vmem:[%s872 + $0x8] sm:$0xf]
        %v1825 = vld [vmem:[%s872 + $0xc] sm:$0xf]
        %v1826 = vld [vmem:[%s880] sm:$0x1]
        %v1828 = vlaneseq
        %v1829 = vshrl.u32 %v1828, 7
        %v1830 = vsub.s32 0, %v1829
        %v1831 = vrot.slane %v1826, %v1830
        %v1837 = vunpack.c.l.b16 %v1822
        %v1838 = vunpack.c.l.b16 %v1823
        %v1839 = vunpack.c.l.b16 %v1824
        %v1840 = vunpack.c.l.b16 %v1825
        %v1841 = vpack.c.b16 %v1838, %v1837
        %v1842 = vpack.c.b16 %v1840, %v1839
        %v1846 = vsel %vm1016, %v1821, 0
        %1848 = vmatprep.subr.bf16.mxu0 0
        %1849 = vmatpush1.bf16.msra.mxu0 %v1841
        %1850 = vmatprep.subr.bf16.mxu0 0
        %1851 = vmatpush1.bf16.msra.mxu0 %v1842
        %1852 = vmatprep.subr.bf16.mxu0 0
        %1853 = vmatpush1.bf16.msra.mxu0 0
        %1854 = vmatprep.subr.bf16.mxu0 0
        %1855 = vmatpush1.bf16.msra.mxu0 0
        %1856 = vmatprep.subr.bf16.mxu0 0
        %1857 = vmatpush1.bf16.msra.mxu0 0
        %1858 = vmatprep.subr.bf16.mxu0 0
        %1859 = vmatpush1.bf16.msra.mxu0 0
        %1860 = vmatprep.subr.bf16.mxu0 0
        %1861 = vmatpush1.bf16.msra.mxu0 0
        %1862 = vmatprep.subr.bf16.mxu0 0
        %1863 = vmatpush1.bf16.msra.mxu0 0
        %1864 = vmatprep.subr.bf16.mxu0 0
        %1865 = vmatpush1.bf16.msra.mxu0 0
        %1866 = vmatprep.subr.bf16.mxu0 0
        %1867 = vmatpush1.bf16.msra.mxu0 0
        %1868 = vmatprep.subr.bf16.mxu0 0
        %1869 = vmatpush1.bf16.msra.mxu0 0
        %1870 = vmatprep.subr.bf16.mxu0 0
        %1871 = vmatpush1.bf16.msra.mxu0 0
        %1872 = vmatprep.subr.bf16.mxu0 0
        %1873 = vmatpush1.bf16.msra.mxu0 0
        %1874 = vmatprep.subr.bf16.mxu0 0
        %1875 = vmatpush1.bf16.msra.mxu0 0
        %1876 = vmatprep.subr.bf16.mxu0 0
        %1877 = vmatpush1.bf16.msra.mxu0 0
        %1878 = vmatprep.subr.bf16.mxu0 0
        %1879 = vmatpush1.bf16.msra.mxu0 0
        %1880 = vmatprep.mubr.bf16.mxu0 0
        %1881 = vmatmul.mubr.bf16.gmra.mrb[0].mxu0 %v1846
        %v1882 = vpop.f32.mrb[0].mxu0
        %v1883 = vadd.f32 %v1831, %v1882
        %v1884 = vpop.f32.mrb[0].mxu0
        %v1885 = vpop.f32.mrb[0].mxu0
        %v1886 = vadd.f32 %v1831, %v1885
        %v1887 = vpop.f32.mrb[0].mxu0
        %1888 = vdwg.mxu0
        %v1889 = vmul.f32 %v1883, 0.5
        %v1890 = vmul.f32 %v1886, 0.5
        %v1891 = vmul.f32 %v1883, 0.044715
        %v1892 = vmul.f32 %v1886, 0.044715
        %v1893 = vmul.f32 %v1891, %v1883
        %v1894 = vmul.f32 %v1892, %v1886
        %v1895 = vmul.f32 %v1893, %v1883
        %v1896 = vmul.f32 %v1894, %v1886
        %v1897 = vadd.f32 %v1883, %v1895
        %v1898 = vadd.f32 %v1886, %v1896
        %v1899 = vmul.f32 %v1897, 0.7978846
        %v1900 = vmul.f32 %v1898, 0.7978846
        %v1901 = vtanh.pop %v1899
        %v1902 = vtanh.pop %v1900
        %v1903 = vadd.f32 %v1901, 1.0
        %v1904 = vadd.f32 %v1902, 1.0
        %v1905 = vmul.f32 %v1889, %v1903
        %v1906 = vmul.f32 %v1890, %v1904
        %v1907 = vpack.c.bf16 %v1906, %v1905
        %v1908 = vld [vmem:[%s889] sm:$0xf]
        %v1909 = vld [vmem:[%s889 + $0x4] sm:$0xf]
        %v1910 = vld [vmem:[%s889 + $0x8] sm:$0xf]
        %v1911 = vld [vmem:[%s889 + $0xc] sm:$0xf]
        %v1912 = vld [vmem:[%s889 + $0x10] sm:$0xf]
        %v1913 = vld [vmem:[%s889 + $0x14] sm:$0xf]
        %v1914 = vld [vmem:[%s889 + $0x18] sm:$0xf]
        %v1915 = vld [vmem:[%s889 + $0x1c] sm:$0xf]
        %v1916 = vld [vmem:[%s897] sm:$0x1]
        %v1918 = vlaneseq
        %v1919 = vshrl.u32 %v1918, 7
        %v1920 = vsub.s32 0, %v1919
        %v1921 = vrot.slane %v1916, %v1920
        %v1931 = vunpack.c.l.b16 %v1908
        %v1932 = vunpack.c.l.b16 %v1909
        %v1933 = vunpack.c.l.b16 %v1910
        %v1934 = vunpack.c.l.b16 %v1911
        %v1935 = vunpack.c.l.b16 %v1912
        %v1936 = vunpack.c.l.b16 %v1913
        %v1937 = vunpack.c.l.b16 %v1914
        %v1938 = vunpack.c.l.b16 %v1915
        %v1939 = vpack.c.b16 %v1932, %v1931
        %v1940 = vpack.c.b16 %v1934, %v1933
        %v1941 = vpack.c.b16 %v1936, %v1935
        %v1942 = vpack.c.b16 %v1938, %v1937
        %vm1947 = vcmask 523264
        %v1949 = vsel %vm1947, %v1907, 0
        %1951 = vmatprep.subr.bf16.mxu0 0
        %1952 = vmatpush1.bf16.msra.mxu0 %v1939
        %1953 = vmatprep.subr.bf16.mxu0 0
        %1954 = vmatpush1.bf16.msra.mxu0 %v1940
        %1955 = vmatprep.subr.bf16.mxu0 0
        %1956 = vmatpush1.bf16.msra.mxu0 %v1941
        %1957 = vmatprep.subr.bf16.mxu0 0
        %1958 = vmatpush1.bf16.msra.mxu0 %v1942
        %1959 = vmatprep.subr.bf16.mxu0 0
        %1960 = vmatpush1.bf16.msra.mxu0 0
        %1961 = vmatprep.subr.bf16.mxu0 0
        %1962 = vmatpush1.bf16.msra.mxu0 0
        %1963 = vmatprep.subr.bf16.mxu0 0
        %1964 = vmatpush1.bf16.msra.mxu0 0
        %1965 = vmatprep.subr.bf16.mxu0 0
        %1966 = vmatpush1.bf16.msra.mxu0 0
        %1967 = vmatprep.subr.bf16.mxu0 0
        %1968 = vmatpush1.bf16.msra.mxu0 0
        %1969 = vmatprep.subr.bf16.mxu0 0
        %1970 = vmatpush1.bf16.msra.mxu0 0
        %1971 = vmatprep.subr.bf16.mxu0 0
        %1972 = vmatpush1.bf16.msra.mxu0 0
        %1973 = vmatprep.subr.bf16.mxu0 0
        %1974 = vmatpush1.bf16.msra.mxu0 0
        %1975 = vmatprep.subr.bf16.mxu0 0
        %1976 = vmatpush1.bf16.msra.mxu0 0
        %1977 = vmatprep.subr.bf16.mxu0 0
        %1978 = vmatpush1.bf16.msra.mxu0 0
        %1979 = vmatprep.subr.bf16.mxu0 0
        %1980 = vmatpush1.bf16.msra.mxu0 0
        %1981 = vmatprep.subr.bf16.mxu0 0
        %1982 = vmatpush1.bf16.msra.mxu0 0
        %1983 = vmatprep.mubr.bf16.mxu0 0
        %1984 = vmatmul.mubr.bf16.gmra.mrb[0].mxu0 %v1949
        %v1985 = vpop.f32.mrb[0].mxu0
        %v1986 = vadd.f32 %v1921, %v1985
        %v1987 = vpop.f32.mrb[0].mxu0
        %v1988 = vpop.f32.mrb[0].mxu0
        %v1989 = vadd.f32 %v1921, %v1988
        %v1990 = vpop.f32.mrb[0].mxu0
        %1991 = vdwg.mxu0
        %v1992 = vadd.f32 %v1771, %v1986
        %v1993 = vadd.f32 %v1772, %v1989
        %1994 = vst.msk [vmem:[%s1003] sm:$0xff] %vm1016, %v1992
        %1995 = vst.msk [vmem:[%s1003 + $0x8] sm:$0xff] %vm1016, %v1993
        %s1996 = sand.u32 %s463, 1
        %s1997 = scalar_lea.sflag [#allocation4], %s1996
        %s1998 = sand.u32 %s463, 1
        %s1999 = smul.addr %s1998, 16
        %s2000 = scalar_lea.vmem [#allocation26], %s1999
        // Predicated region
        $region145: #{vit_seg_forward.6} parent=79 // pred_check
          %p2001 = pneg %p473
        $region146: #{vit_seg_forward.6} parent=79 // pred_check_branch
          %2003 = sbr.rel (%p2001) target = $region148
        $region147: #{vit_seg_forward.6} parent=79 // pred_region
          %s2005 = ssub.s32 256, 256
          %2006 = vsyncadd %s1997, %s2005
          %s2007 = smul.addr %s57, 2
          %s2008 = smul.addr %s2007, 128
          %s2009 = scalar_lea.hbm %s15, %s2008
          %s2010 = sshll.u32 %s2000, 4
          %s2011 = int_to_ptr.vmem [resolvable:$true] %s2010
          %2016 = dma.vmem_to_hbm [thread:$0]  %s2011, 256, %s2009, %s1997, 128, 128, 8
        $region148: #{vit_seg_forward.6} parent=79 // pred_fallthru
          _
      $region80: #{vit_seg_forward.6} parent=5 // pred_fallthru
        _
      %p2017 = scmp.le.s32.totalorder 2, %s48
      // Predicated region
      $region149: #{vit_seg_forward.6} parent=5 // pred_check
        %p2018 = pneg %p2017
      $region150: #{vit_seg_forward.6} parent=5 // pred_check_branch
        %2020 = sbr.rel (%p2018) target = $region152
      $region151: #{vit_seg_forward.6} parent=5 // pred_region
        %s2021 = ssub.s32 %s48, 2
        // Predicated region
        $region153: #{vit_seg_forward.6} parent=151 // pred_check
          %p2022 = pneg %p479
        $region154: #{vit_seg_forward.6} parent=151 // pred_check_branch
          %2024 = sbr.rel (%p2022) target = $region156
        $region155: #{vit_seg_forward.6} parent=151 // pred_region
          %s2025 = sand.u32 %s464, 1
          %s2026 = scalar_lea.sflag [#allocation4], %s2025
          %s2027 = sand.u32 %s464, 1
          %s2028 = smul.addr %s2027, 16
          %s2029 = scalar_lea.vmem [#allocation26], %s2028
          %2030 = dma.done %s2026, 256
        $region156: #{vit_seg_forward.6} parent=151 // pred_fallthru
          _
      $region152: #{vit_seg_forward.6} parent=5 // pred_fallthru
        _
    $region6: #{vit_seg_forward.6} parent=1 // loop_footer
      %s52 = sadd.s32 1, %s48
    $region7: #{vit_seg_forward.6} parent=1 // loop_footer_branch
      %47 = sbr.rel target = $region3
    $region8: #{vit_seg_forward.6} parent=1 // loop_exit
      _
    %2031 = vsyncpa [#allocation3], 1
    %s2032 = scalar_lea.sflag [#allocation3], 1
    %2033 = vsyncpa %s2032, 1
    %2034 = vsyncpa [#allocation6], 1
    %s2035 = scalar_lea.sflag [#allocation6], 1
    %2036 = vsyncpa %s2035, 1
    %2037 = vsyncpa [#allocation9], 1
    %s2038 = scalar_lea.sflag [#allocation9], 1
    %2039 = vsyncpa %s2038, 1
    %2040 = vsyncpa [#allocation12], 1
    %s2041 = scalar_lea.sflag [#allocation12], 1
    %2042 = vsyncpa %s2041, 1
    %2043 = vsyncpa [#allocation15], 1
    %s2044 = scalar_lea.sflag [#allocation15], 1
    %2045 = vsyncpa %s2044, 1
    %2046 = vsyncpa [#allocation18], 1
    %s2047 = scalar_lea.sflag [#allocation18], 1
    %2048 = vsyncpa %s2047, 1
    %2049 = vsyncpa [#allocation21], 1
    %s2050 = scalar_lea.sflag [#allocation21], 1
    %2051 = vsyncpa %s2050, 1
    %2052 = vsyncpa [#allocation24], 1
    %s2053 = scalar_lea.sflag [#allocation24], 1
    %2054 = vsyncpa %s2053, 1
    %2055 = vsyncpa [#allocation4], 1
    %s2056 = scalar_lea.sflag [#allocation4], 1
    %2057 = vsyncpa %s2056, 1

// kernel: vit_seg_forward.7
$region0: #{vit_seg_forward.7}
  #allocation0 [shape = 'u32[]', space=smem, size = 0x4, offset = 0x4, fixed_abs, tag = 'smem constant byte address 0x4 - core index']
  #allocation1 [shape = 'u32[144,128]{1,0:T(1,128)}', space=vmem, size = 0x12000, scoped, tag = 'internal scratch']
  %s0 = inlined_call_operand.hbm [shape: f32[2,6,6,32], index: 0, kind: input, shape index: {}]
  %s1 = inlined_call_operand.hbm [shape: bf16[288,16], index: 1, kind: input, shape index: {}]
  %s2 = inlined_call_operand.hbm [shape: f32[1,16], index: 2, kind: input, shape index: {}]
  %s3 = inlined_call_operand.hbm [shape: f32[1,16], index: 3, kind: input, shape index: {}]
  %s4 = inlined_call_operand.hbm [shape: bf16[8,4], index: 4, kind: input, shape index: {}, may-alias: {4,5}]
  %s5 = inlined_call_operand.hbm [shape: bf16[8,4], index: 5, kind: input, shape index: {}, may-alias: {4,5}]
  %s6 = inlined_call_operand.hbm [shape: f32[2,8,8,16], index: 6, kind: output, shape index: {}]
  %s7 = sld [smem:[#allocation0]]
  $region81: #{vit_seg_forward.7} parent=0
    _
  %s9 = ssub.s32 1, %s7
  %s10 = scalar_select 0, %s9, %s7
  $region1: #{vit_seg_forward.7} parent=0
    #allocation2 [shape = 'u8[49152]{0}', space=vmem, size = 0xc000, scoped, tag = 'input window, operand 0']
    #allocation3 [shape = 's32[2]{0}', space=sflag, size = 0x8, scoped, tag = 'scoped memory for vit_seg_forward.7']
    #allocation4 [shape = 's32[2]{0}', space=sflag, size = 0x8, scoped, tag = 'scoped memory for vit_seg_forward.7']
    #allocation5 [shape = 'u8[73728]{0}', space=vmem, size = 0x12000, scoped, tag = 'input window, operand 1, single buffered']
    #allocation6 [shape = 's32[1]{0}', space=sflag, size = 0x4, scoped, tag = 'scoped memory for vit_seg_forward.7']
    #allocation7 [shape = 'u8[512]{0}', space=vmem, size = 0x400, scoped, tag = 'input window, operand 2, single buffered']
    #allocation8 [shape = 'u8[512]{0}', space=vmem, size = 0x400, scoped, tag = 'input window, operand 3, single buffered']
    #allocation9 [shape = 's32[1]{0}', space=sflag, size = 0x4, scoped, tag = 'scoped memory for vit_seg_forward.7']
    #allocation10 [shape = 'u8[2048]{0}', space=vmem, size = 0x800, scoped, tag = 'input window, operand 4, single buffered']
    #allocation11 [shape = 'u8[2048]{0}', space=vmem, size = 0x800, scoped, tag = 'input window, operand 5, single buffered']
    #allocation12 [shape = 's32[1]{0}', space=sflag, size = 0x4, scoped, tag = 'scoped memory for vit_seg_forward.7']
    #allocation13 [shape = 'u8[65536]{0}', space=vmem, size = 0x10000, scoped, tag = 'output window, operand 0']
    %11 = vsyncpa [#allocation3], 0
    %s12 = scalar_lea.sflag [#allocation3], 1
    %13 = vsyncpa %s12, 0
    %14 = vsyncpa [#allocation6], 0
    %15 = vsyncpa [#allocation9], 0
    %16 = vsyncpa [#allocation12], 0
    %17 = vsyncpa [#allocation4], 0
    %s18 = scalar_lea.sflag [#allocation4], 1
    %19 = vsyncpa %s18, 0
    loop: start=0, step=1, limit=4
    $region2: #{vit_seg_forward.7} parent=1 // loop_pre_header
      _
    $region3: #{vit_seg_forward.7} parent=1 // loop_header
      %s21 = sphi 0, %s25
      %p22 = scmp.ge.s32.totalorder %s21, 4
      %s31 = sphi 0, %s33
      %s34 = sphi 0, %s31
      %s35 = sphi 0, %s34
      %s51 = sphi 0, %s35
      %s55 = sphi 0, %s55
      %s57 = sphi 0, %s55
      %s58 = sphi 0, %s57
      %s72 = sphi 0, %s58
      %s76 = sphi 0, %s76
      %s78 = sphi 0, %s76
      %s79 = sphi 0, %s78
      %s93 = sphi 0, %s79
      %s97 = sphi 0, %s97
      %s99 = sphi 0, %s97
      %s100 = sphi 0, %s99
      %s114 = sphi 0, %s100
      %s118 = sphi 0, %s118
      %s120 = sphi 0, %s118
      %s121 = sphi 0, %s120
      %s135 = sphi 0, %s121
      %s139 = sphi 0, %s139
      %s141 = sphi 0, %s139
      %s142 = sphi 0, %s141
      %s156 = sphi 0, %s142
      %s162 = sphi 0, %s164
      %s165 = sphi 0, %s162
      %s166 = sphi 0, %s165
      %s182 = sphi 0, %s166
    $region4: #{vit_seg_forward.7} parent=1 // loop_header_branch
      %24 = sbr.rel (%p22) target = $region8
    $region5: #{vit_seg_forward.7} parent=1 // loop_body
      %s26 = ssub.s32 %s21, 1
      %s27 = ssub.s32 %s21, 2
      %s28 = sadd.s32 %s21, 1
      %s29 = ssub.s32 %s21, %s28
      %p30 = scmp.eq.s32.totalorder %s29, 0
      %s32 = sadd.s32 %s31, 1
      %s33 = scalar_select %p30, %s31, %s32
      %p36 = pneg %p30
      %p37 = scmp.eq.s32.totalorder %s21, 1
      %p38 = por %p36, %p37
      %p39 = scmp.ne.s32.totalorder %s31, %s34
      %p40 = scmp.eq.s32.totalorder %s21, 0
      %p41 = por %p39, %p40
      %p42 = scmp.ne.s32.totalorder %s31, %s34
      %p43 = scmp.eq.s32.totalorder %s26, 1
      %p44 = por %p42, %p43
      %p45 = scmp.ne.s32.totalorder %s34, %s35
      %p46 = scmp.eq.s32.totalorder %s26, 0
      %p47 = por %p45, %p46
      %p48 = scmp.ne.s32.totalorder %s34, %s35
      %p49 = scmp.eq.s32.totalorder %s27, 1
      %p50 = por %p48, %p49
      %p52 = scmp.ne.s32.totalorder %s35, %s51
      %p53 = scmp.eq.s32.totalorder %s27, 0
      %p54 = por %p52, %p53
      %s56 = sadd.s32 %s55, 1
      %p59 = scmp.eq.s32.totalorder %s21, 1
      %p60 = scmp.ne.s32.totalorder %s55, %s57
      %p61 = scmp.eq.s32.totalorder %s21, 0
      %p62 = por %p60, %p61
      %p63 = scmp.ne.s32.totalorder %s55, %s57
      %p64 = scmp.eq.s32.totalorder %s26, 1
      %p65 = por %p63, %p64
      %p66 = scmp.ne.s32.totalorder %s57, %s58
      %p67 = scmp.eq.s32.totalorder %s26, 0
      %p68 = por %p66, %p67
      %p69 = scmp.ne.s32.totalorder %s57, %s58
      %p70 = scmp.eq.s32.totalorder %s27, 1
      %p71 = por %p69, %p70
      %p73 = scmp.ne.s32.totalorder %s58, %s72
      %p74 = scmp.eq.s32.totalorder %s27, 0
      %p75 = por %p73, %p74
      %s77 = sadd.s32 %s76, 1
      %p80 = scmp.eq.s32.totalorder %s21, 1
      %p81 = scmp.ne.s32.totalorder %s76, %s78
      %p82 = scmp.eq.s32.totalorder %s21, 0
      %p83 = por %p81, %p82
      %p84 = scmp.ne.s32.totalorder %s76, %s78
      %p85 = scmp.eq.s32.totalorder %s26, 1
      %p86 = por %p84, %p85
      %p87 = scmp.ne.s32.totalorder %s78, %s79
      %p88 = scmp.eq.s32.totalorder %s26, 0
      %p89 = por %p87, %p88
      %p90 = scmp.ne.s32.totalorder %s78, %s79
      %p91 = scmp.eq.s32.totalorder %s27, 1
      %p92 = por %p90, %p91
      %p94 = scmp.ne.s32.totalorder %s79, %s93
      %p95 = scmp.eq.s32.totalorder %s27, 0
      %p96 = por %p94, %p95
      %s98 = sadd.s32 %s97, 1
      %p101 = scmp.eq.s32.totalorder %s21, 1
      %p102 = scmp.ne.s32.totalorder %s97, %s99
      %p103 = scmp.eq.s32.totalorder %s21, 0
      %p104 = por %p102, %p103
      %p105 = scmp.ne.s32.totalorder %s97, %s99
      %p106 = scmp.eq.s32.totalorder %s26, 1
      %p107 = por %p105, %p106
      %p108 = scmp.ne.s32.totalorder %s99, %s100
      %p109 = scmp.eq.s32.totalorder %s26, 0
      %p110 = por %p108, %p109
      %p111 = scmp.ne.s32.totalorder %s99, %s100
      %p112 = scmp.eq.s32.totalorder %s27, 1
      %p113 = por %p111, %p112
      %p115 = scmp.ne.s32.totalorder %s100, %s114
      %p116 = scmp.eq.s32.totalorder %s27, 0
      %p117 = por %p115, %p116
      %s119 = sadd.s32 %s118, 1
      %p122 = scmp.eq.s32.totalorder %s21, 1
      %p123 = scmp.ne.s32.totalorder %s118, %s120
      %p124 = scmp.eq.s32.totalorder %s21, 0
      %p125 = por %p123, %p124
      %p126 = scmp.ne.s32.totalorder %s118, %s120
      %p127 = scmp.eq.s32.totalorder %s26, 1
      %p128 = por %p126, %p127
      %p129 = scmp.ne.s32.totalorder %s120, %s121
      %p130 = scmp.eq.s32.totalorder %s26, 0
      %p131 = por %p129, %p130
      %p132 = scmp.ne.s32.totalorder %s120, %s121
      %p133 = scmp.eq.s32.totalorder %s27, 1
      %p134 = por %p132, %p133
      %p136 = scmp.ne.s32.totalorder %s121, %s135
      %p137 = scmp.eq.s32.totalorder %s27, 0
      %p138 = por %p136, %p137
      %s140 = sadd.s32 %s139, 1
      %p143 = scmp.eq.s32.totalorder %s21, 1
      %p144 = scmp.ne.s32.totalorder %s139, %s141
      %p145 = scmp.eq.s32.totalorder %s21, 0
      %p146 = por %p144, %p145
      %p147 = scmp.ne.s32.totalorder %s139, %s141
      %p148 = scmp.eq.s32.totalorder %s26, 1
      %p149 = por %p147, %p148
      %p150 = scmp.ne.s32.totalorder %s141, %s142
      %p151 = scmp.eq.s32.totalorder %s26, 0
      %p152 = por %p150, %p151
      %p153 = scmp.ne.s32.totalorder %s141, %s142
      %p154 = scmp.eq.s32.totalorder %s27, 1
      %p155 = por %p153, %p154
      %p157 = scmp.ne.s32.totalorder %s142, %s156
      %p158 = scmp.eq.s32.totalorder %s27, 0
      %p159 = por %p157, %p158
      %s160 = ssub.s32 %s21, %s28
      %p161 = scmp.eq.s32.totalorder %s160, 0
      %s163 = sadd.s32 %s162, 1
      %s164 = scalar_select %p161, %s162, %s163
      %p167 = pneg %p161
      %p168 = scmp.eq.s32.totalorder %s21, 1
      %p169 = por %p167, %p168
      %p170 = scmp.ne.s32.totalorder %s162, %s165
      %p171 = scmp.eq.s32.totalorder %s21, 0
      %p172 = por %p170, %p171
      %p173 = scmp.ne.s32.totalorder %s162, %s165
      %p174 = scmp.eq.s32.totalorder %s26, 1
      %p175 = por %p173, %p174
      %p176 = scmp.ne.s32.totalorder %s165, %s166
      %p177 = scmp.eq.s32.totalorder %s26, 0
      %p178 = por %p176, %p177
      %p179 = scmp.ne.s32.totalorder %s165, %s166
      %p180 = scmp.eq.s32.totalorder %s27, 1
      %p181 = por %p179, %p180
      %p183 = scmp.ne.s32.totalorder %s166, %s182
      %p184 = scmp.eq.s32.totalorder %s27, 0
      %p185 = por %p183, %p184
      %p186 = scmp.le.s32.totalorder 1, %s21
      %p187 = scmp.lt.s32.totalorder %s21, 3
      %p188 = pnand %p186, %p187
      %p189 = pneg %p188
      // Predicated region
      $region9: #{vit_seg_forward.7} parent=5 // pred_check
        _
      $region10: #{vit_seg_forward.7} parent=5 // pred_check_branch
        %191 = sbr.rel (%p188) target = $region12
      $region11: #{vit_seg_forward.7} parent=5 // pred_region
        %s192 = ssub.s32 %s21, 1
        // Predicated region
        $region13: #{vit_seg_forward.7} parent=11 // pred_check
          %p193 = pneg %p68
        $region14: #{vit_seg_forward.7} parent=11 // pred_check_branch
          %195 = sbr.rel (%p193) target = $region16
        $region15: #{vit_seg_forward.7} parent=11 // pred_region
          %s197 = ssub.s32 2304, 2304
          %198 = vsyncadd [#allocation6], %s197
          %s199 = sshll.u32 [#allocation5], 4
          %s200 = int_to_ptr.vmem [resolvable:$true] %s199
          %205 = dma.hbm_to_vmem [thread:$0]  %s1, 2304, %s200, [#allocation6], 64, 64, 4
        $region16: #{vit_seg_forward.7} parent=11 // pred_fallthru
          _
        // Predicated region
        $region17: #{vit_seg_forward.7} parent=11 // pred_check
          %p206 = pneg %p89
        $region18: #{vit_seg_forward.7} parent=11 // pred_check_branch
          %208 = sbr.rel (%p206) target = $region20
        $region19: #{vit_seg_forward.7} parent=11 // pred_region
          %s210 = ssub.s32 16, 16
          %211 = vsyncadd [#allocation6], %s210
          %s213 = sshll.u32 [#allocation7], 4
          %s214 = int_to_ptr.vmem [resolvable:$true] %s213
          %216 = dma.hbm_to_vmem [thread:$0]  %s2, 16, %s214, [#allocation6]
        $region20: #{vit_seg_forward.7} parent=11 // pred_fallthru
          _
        // Predicated region
        $region21: #{vit_seg_forward.7} parent=11 // pred_check
          %p217 = pneg %p110
        $region22: #{vit_seg_forward.7} parent=11 // pred_check_branch
          %219 = sbr.rel (%p217) target = $region24
        $region23: #{vit_seg_forward.7} parent=11 // pred_region
          %s221 = ssub.s32 16, 16
          %222 = vsyncadd [#allocation9], %s221
          %s224 = sshll.u32 [#allocation8], 4
          %s225 = int_to_ptr.vmem [resolvable:$true] %s224
          %227 = dma.hbm_to_vmem [thread:$0]  %s3, 16, %s225, [#allocation9]
        $region24: #{vit_seg_forward.7} parent=11 // pred_fallthru
          _
        // Predicated region
        $region25: #{vit_seg_forward.7} parent=11 // pred_check
          %p228 = pneg %p131
        $region26: #{vit_seg_forward.7} parent=11 // pred_check_branch
          %230 = sbr.rel (%p228) target = $region28
        $region27: #{vit_seg_forward.7} parent=11 // pred_region
          %s232 = ssub.s32 64, 64
          %233 = vsyncadd [#allocation9], %s232
          %s235 = sshll.u32 [#allocation10], 4
          %s236 = int_to_ptr.vmem [resolvable:$true] %s235
          %238 = dma.hbm_to_vmem [thread:$0]  %s4, 64, %s236, [#allocation9]
        $region28: #{vit_seg_forward.7} parent=11 // pred_fallthru
          _
        // Predicated region
        $region29: #{vit_seg_forward.7} parent=11 // pred_check
          %p239 = pneg %p152
        $region30: #{vit_seg_forward.7} parent=11 // pred_check_branch
          %241 = sbr.rel (%p239) target = $region32
        $region31: #{vit_seg_forward.7} parent=11 // pred_region
          %s243 = ssub.s32 64, 64
          %244 = vsyncadd [#allocation12], %s243
          %s246 = sshll.u32 [#allocation11], 4
          %s247 = int_to_ptr.vmem [resolvable:$true] %s246
          %249 = dma.hbm_to_vmem [thread:$0]  %s5, 64, %s247, [#allocation12]
        $region32: #{vit_seg_forward.7} parent=11 // pred_fallthru
          _
      $region12: #{vit_seg_forward.7} parent=5 // pred_fallthru
        _
      %p250 = scmp.lt.s32.totalorder %s21, 2
      // Predicated region
      $region33: #{vit_seg_forward.7} parent=5 // pred_check
        %p251 = pneg %p250
      $region34: #{vit_seg_forward.7} parent=5 // pred_check_branch
        %253 = sbr.rel (%p251) target = $region36
      $region35: #{vit_seg_forward.7} parent=5 // pred_region
        // Predicated region
        $region37: #{vit_seg_forward.7} parent=35 // pred_check
          %p254 = pneg %p41
        $region38: #{vit_seg_forward.7} parent=35 // pred_check_branch
          %256 = sbr.rel (%p254) target = $region40
        $region39: #{vit_seg_forward.7} parent=35 // pred_region
          %s257 = sand.u32 %s31, 1
          %s258 = scalar_lea.sflag [#allocation3], %s257
          %s259 = sand.u32 %s31, 1
          %s260 = smul.addr %s259, 48
          %s261 = scalar_lea.vmem [#allocation2], %s260
          %s263 = ssub.s32 768, 768
          %264 = vsyncadd %s258, %s263
          %s265 = smul.addr %s21, 6
          %s266 = smul.addr %s265, 128
          %s267 = scalar_lea.hbm %s0, %s266
          %s268 = sshll.u32 %s261, 4
          %s269 = int_to_ptr.vmem [resolvable:$true] %s268
          %274 = dma.hbm_to_vmem [thread:$0]  %s267, 768, %s269, %s258, 128, 128, 8
        $region40: #{vit_seg_forward.7} parent=35 // pred_fallthru
          _
      $region36: #{vit_seg_forward.7} parent=5 // pred_fallthru
        _
      %p275 = scmp.le.s32.totalorder 1, %s21
      %p276 = scmp.lt.s32.totalorder %s21, 3
      %p277 = pnand %p275, %p276
      %p278 = pneg %p277
      // Predicated region
      $region41: #{vit_seg_forward.7} parent=5 // pred_check
        _
      $region42: #{vit_seg_forward.7} parent=5 // pred_check_branch
        %280 = sbr.rel (%p277) target = $region44
      $region43: #{vit_seg_forward.7} parent=5 // pred_region
        %s281 = ssub.s32 %s21, 1
        %s282 = sand.u32 %s34, 1
        %s283 = scalar_lea.sflag [#allocation3], %s282
        %s284 = sand.u32 %s34, 1
        %s285 = smul.addr %s284, 48
        %s286 = scalar_lea.vmem [#allocation2], %s285
        // Predicated region
        $region45: #{vit_seg_forward.7} parent=43 // pred_check
          %p287 = pneg %p47
        $region46: #{vit_seg_forward.7} parent=43 // pred_check_branch
          %289 = sbr.rel (%p287) target = $region48
        $region47: #{vit_seg_forward.7} parent=43 // pred_region
          %290 = dma.done %s283, 768
        $region48: #{vit_seg_forward.7} parent=43 // pred_fallthru
          _
        // Predicated region
        $region49: #{vit_seg_forward.7} parent=43 // pred_check
          %p291 = pneg %p68
        $region50: #{vit_seg_forward.7} parent=43 // pred_check_branch
          %293 = sbr.rel (%p291) target = $region52
        $region51: #{vit_seg_forward.7} parent=43 // pred_region
          %294 = dma.done [#allocation6], 2304
        $region52: #{vit_seg_forward.7} parent=43 // pred_fallthru
          _
        // Predicated region
        $region53: #{vit_seg_forward.7} parent=43 // pred_check
          %p295 = pneg %p89
        $region54: #{vit_seg_forward.7} parent=43 // pred_check_branch
          %297 = sbr.rel (%p295) target = $region56
        $region55: #{vit_seg_forward.7} parent=43 // pred_region
          %298 = dma.done [#allocation6], 16
        $region56: #{vit_seg_forward.7} parent=43 // pred_fallthru
          _
        // Predicated region
        $region57: #{vit_seg_forward.7} parent=43 // pred_check
          %p299 = pneg %p110
        $region58: #{vit_seg_forward.7} parent=43 // pred_check_branch
          %301 = sbr.rel (%p299) target = $region60
        $region59: #{vit_seg_forward.7} parent=43 // pred_region
          %302 = dma.done [#allocation9], 16
        $region60: #{vit_seg_forward.7} parent=43 // pred_fallthru
          _
        // Predicated region
        $region61: #{vit_seg_forward.7} parent=43 // pred_check
          %p303 = pneg %p131
        $region62: #{vit_seg_forward.7} parent=43 // pred_check_branch
          %305 = sbr.rel (%p303) target = $region64
        $region63: #{vit_seg_forward.7} parent=43 // pred_region
          %306 = dma.done [#allocation9], 64
        $region64: #{vit_seg_forward.7} parent=43 // pred_fallthru
          _
        // Predicated region
        $region65: #{vit_seg_forward.7} parent=43 // pred_check
          %p307 = pneg %p152
        $region66: #{vit_seg_forward.7} parent=43 // pred_check_branch
          %309 = sbr.rel (%p307) target = $region68
        $region67: #{vit_seg_forward.7} parent=43 // pred_region
          %310 = dma.done [#allocation12], 64
        $region68: #{vit_seg_forward.7} parent=43 // pred_fallthru
          _
        %s311 = sand.u32 %s34, 1
        %s312 = scalar_lea.sflag [#allocation3], %s311
        %s313 = sand.u32 %s34, 1
        %s314 = smul.addr %s313, 48
        %s315 = scalar_lea.vmem [#allocation2], %s314
        %p316 = pneg %p47
        %p317 = pneg %p44
        %p318 = pneg %p68
        %p319 = pneg %p65
        %p320 = pneg %p89
        %p321 = pneg %p86
        %p322 = pneg %p110
        %p323 = pneg %p107
        %p324 = pneg %p131
        %p325 = pneg %p128
        %p326 = pneg %p152
        %p327 = pneg %p149
        %p328 = pneg %p178
        %p329 = pneg %p175
        %s330 = sand.u32 %s165, 1
        %s331 = scalar_lea.sflag [#allocation4], %s330
        %s332 = sand.u32 %s165, 1
        %s333 = smul.addr %s332, 64
        %s334 = scalar_lea.vmem [#allocation13], %s333
        %v336 = vld [vmem:[%s286] sm:$0xf]
        %v337 = vld [vmem:[%s286 + $0x8] sm:$0xf]
        %v338 = vld [vmem:[%s286 + $0x10] sm:$0xf]
        %v339 = vld [vmem:[%s286 + $0x18] sm:$0xf]
        %v340 = vpack.c.bf16 %v336, %v336
        %v341 = vpack.c.bf16 %v337, %v337
        %v342 = vpack.c.bf16 %v338, %v338
        %v343 = vpack.c.bf16 %v339, %v339
        %v344 = vld [vmem:[%s286 + $0x1] sm:$0xf]
        %v345 = vld [vmem:[%s286 + $0x9] sm:$0xf]
        %v346 = vld [vmem:[%s286 + $0x11] sm:$0xf]
        %v347 = vld [vmem:[%s286 + $0x19] sm:$0xf]
        %v348 = vpack.c.bf16 %v344, %v344
        %v349 = vpack.c.bf16 %v345, %v345
        %v350 = vpack.c.bf16 %v346, %v346
        %v351 = vpack.c.bf16 %v347, %v347
        %v352 = vld [vmem:[%s286 + $0x2] sm:$0xf]
        %v353 = vld [vmem:[%s286 + $0xa] sm:$0xf]
        %v354 = vld [vmem:[%s286 + $0x12] sm:$0xf]
        %v355 = vld [vmem:[%s286 + $0x1a] sm:$0xf]
        %v356 = vpack.c.bf16 %v352, %v352
        %v357 = vpack.c.bf16 %v353, %v353
        %v358 = vpack.c.bf16 %v354, %v354
        %v359 = vpack.c.bf16 %v355, %v355
        %s360 = scalar_lea.vmem %s286, 8 [#allocation2]
        %v361 = vld [vmem:[%s360] sm:$0xf]
        %v362 = vld [vmem:[%s360 + $0x8] sm:$0xf]
        %v363 = vld [vmem:[%s360 + $0x10] sm:$0xf]
        %v364 = vld [vmem:[%s360 + $0x18] sm:$0xf]
        %v365 = vpack.c.bf16 %v361, %v361
        %v366 = vpack.c.bf16 %v362, %v362
        %v367 = vpack.c.bf16 %v363, %v363
        %v368 = vpack.c.bf16 %v364, %v364
        %v369 = vld [vmem:[%s360 + $0x1] sm:$0xf]
        %v370 = vld [vmem:[%s360 + $0x9] sm:$0xf]
        %v371 = vld [vmem:[%s360 + $0x11] sm:$0xf]
        %v372 = vld [vmem:[%s360 + $0x19] sm:$0xf]
        %v373 = vpack.c.bf16 %v369, %v369
        %v374 = vpack.c.bf16 %v370, %v370
        %v375 = vpack.c.bf16 %v371, %v371
        %v376 = vpack.c.bf16 %v372, %v372
        %v377 = vld [vmem:[%s360 + $0x2] sm:$0xf]
        %v378 = vld [vmem:[%s360 + $0xa] sm:$0xf]
        %v379 = vld [vmem:[%s360 + $0x12] sm:$0xf]
        %v380 = vld [vmem:[%s360 + $0x1a] sm:$0xf]
        %v381 = vpack.c.bf16 %v377, %v377
        %v382 = vpack.c.bf16 %v378, %v378
        %v383 = vpack.c.bf16 %v379, %v379
        %v384 = vpack.c.bf16 %v380, %v380
        %s385 = scalar_lea.vmem %s286, 16 [#allocation2]
        %v386 = vld [vmem:[%s385] sm:$0xf]
        %v387 = vld [vmem:[%s385 + $0x8] sm:$0xf]
        %v388 = vld [vmem:[%s385 + $0x10] sm:$0xf]
        %v389 = vld [vmem:[%s385 + $0x18] sm:$0xf]
        %v390 = vpack.c.bf16 %v386, %v386
        %v391 = vpack.c.bf16 %v387, %v387
        %v392 = vpack.c.bf16 %v388, %v388
        %v393 = vpack.c.bf16 %v389, %v389
        %v394 = vld [vmem:[%s385 + $0x1] sm:$0xf]
        %v395 = vld [vmem:[%s385 + $0x9] sm:$0xf]
        %v396 = vld [vmem:[%s385 + $0x11] sm:$0xf]
        %v397 = vld [vmem:[%s385 + $0x19] sm:$0xf]
        %v398 = vpack.c.bf16 %v394, %v394
        %v399 = vpack.c.bf16 %v395, %v395
        %v400 = vpack.c.bf16 %v396, %v396
        %v401 = vpack.c.bf16 %v397, %v397
        %v402 = vld [vmem:[%s385 + $0x2] sm:$0xf]
        %v403 = vld [vmem:[%s385 + $0xa] sm:$0xf]
        %v404 = vld [vmem:[%s385 + $0x12] sm:$0xf]
        %v405 = vld [vmem:[%s385 + $0x1a] sm:$0xf]
        %v406 = vpack.c.bf16 %v402, %v402
        %v407 = vpack.c.bf16 %v403, %v403
        %v408 = vpack.c.bf16 %v404, %v404
        %v409 = vpack.c.bf16 %v405, %v405
        %414 = vrot.lane.b32.xlu0 %v348, 32
        %v415 = vpop.permute.xlu0 %414
        %416 = vrot.lane.b32.xlu0 %v349, 32
        %v417 = vpop.permute.xlu0 %416
        %418 = vrot.lane.b32.xlu0 %v350, 32
        %v419 = vpop.permute.xlu0 %418
        %420 = vrot.lane.b32.xlu0 %v351, 32
        %v421 = vpop.permute.xlu0 %420
        %426 = vrot.lane.b32.xlu0 %v356, 64
        %v427 = vpop.permute.xlu0 %426
        %428 = vrot.lane.b32.xlu0 %v357, 64
        %v429 = vpop.permute.xlu0 %428
        %430 = vrot.lane.b32.xlu0 %v358, 64
        %v431 = vpop.permute.xlu0 %430
        %432 = vrot.lane.b32.xlu0 %v359, 64
        %v433 = vpop.permute.xlu0 %432
        %438 = vrot.lane.b32.xlu0 %v365, 96
        %v439 = vpop.permute.xlu0 %438
        %440 = vrot.lane.b32.xlu0 %v366, 96
        %v441 = vpop.permute.xlu0 %440
        %442 = vrot.lane.b32.xlu0 %v367, 96
        %v443 = vpop.permute.xlu0 %442
        %444 = vrot.lane.b32.xlu0 %v368, 96
        %v445 = vpop.permute.xlu0 %444
        %450 = vrot.lane.b32.xlu0 %v381, 32
        %v451 = vpop.permute.xlu0 %450
        %452 = vrot.lane.b32.xlu0 %v382, 32
        %v453 = vpop.permute.xlu0 %452
        %454 = vrot.lane.b32.xlu0 %v383, 32
        %v455 = vpop.permute.xlu0 %454
        %456 = vrot.lane.b32.xlu0 %v384, 32
        %v457 = vpop.permute.xlu0 %456
        %462 = vrot.lane.b32.xlu0 %v390, 64
        %v463 = vpop.permute.xlu0 %462
        %464 = vrot.lane.b32.xlu0 %v391, 64
        %v465 = vpop.permute.xlu0 %464
        %466 = vrot.lane.b32.xlu0 %v392, 64
        %v467 = vpop.permute.xlu0 %466
        %468 = vrot.lane.b32.xlu0 %v393, 64
        %v469 = vpop.permute.xlu0 %468
        %474 = vrot.lane.b32.xlu0 %v398, 96
        %v475 = vpop.permute.xlu0 %474
        %476 = vrot.lane.b32.xlu0 %v399, 96
        %v477 = vpop.permute.xlu0 %476
        %478 = vrot.lane.b32.xlu0 %v400, 96
        %v479 = vpop.permute.xlu0 %478
        %480 = vrot.lane.b32.xlu0 %v401, 96
        %v481 = vpop.permute.xlu0 %480
        %vm482 = vcmask 261120
        %v485 = vsel %vm482, %v340, %v415
        %v488 = vsel %vm482, %v341, %v417
        %v491 = vsel %vm482, %v342, %v419
        %v494 = vsel %vm482, %v343, %v421
        %vm495 = vcmask 523264
        %v497 = vsel %vm495, %v485, %v427
        %v499 = vsel %vm495, %v488, %v429
        %v501 = vsel %vm495, %v491, %v431
        %v503 = vsel %vm495, %v494, %v433
        %vm504 = vcmask 785408
        %v506 = vsel %vm504, %v497, %v439
        %v509 = vsel %vm504, %v499, %v441
        %v512 = vsel %vm504, %v501, %v443
        %v515 = vsel %vm504, %v503, %v445
        %v519 = vsel %vm482, %v373, %v451
        %v522 = vsel %vm482, %v374, %v453
        %v525 = vsel %vm482, %v375, %v455
        %v528 = vsel %vm482, %v376, %v457
        %v530 = vsel %vm495, %v519, %v463
        %v532 = vsel %vm495, %v522, %v465
        %v534 = vsel %vm495, %v525, %v467
        %v536 = vsel %vm495, %v528, %v469
        %v538 = vsel %vm504, %v530, %v475
        %v541 = vsel %vm504, %v532, %v477
        %v544 = vsel %vm504, %v534, %v479
        %v547 = vsel %vm504, %v536, %v481
        %v549 = vld [vmem:[#allocation5] sm:$0xf]
        %v550 = vld [vmem:[#allocation5 + $0x4] sm:$0xf]
        %v551 = vld [vmem:[#allocation5 + $0x8] sm:$0xf]
        %v552 = vld [vmem:[#allocation5 + $0xc] sm:$0xf]
        %v553 = vld [vmem:[#allocation5 + $0x10] sm:$0xf]
        %v554 = vld [vmem:[#allocation5 + $0x14] sm:$0xf]
        %v555 = vld [vmem:[#allocation5 + $0x18] sm:$0xf]
        %v556 = vld [vmem:[#allocation5 + $0x1c] sm:$0xf]
        %v557 = vld [vmem:[#allocation5 + $0x20] sm:$0xf]
        %v558 = vld [vmem:[#allocation5 + $0x24] sm:$0xf]
        %v559 = vld [vmem:[#allocation5 + $0x28] sm:$0xf]
        %v560 = vld [vmem:[#allocation5 + $0x2c] sm:$0xf]
        %v561 = vld [vmem:[#allocation5 + $0x30] sm:$0xf]
        %v562 = vld [vmem:[#allocation5 + $0x34] sm:$0xf]
        %v563 = vld [vmem:[#allocation5 + $0x38] sm:$0xf]
        %v564 = vld [vmem:[#allocation5 + $0x3c] sm:$0xf]
        %v565 = vld [vmem:[#allocation5 + $0x40] sm:$0xf]
        %v566 = vld [vmem:[#allocation5 + $0x44] sm:$0xf]
        %v567 = vld [vmem:[#allocation5 + $0x48] sm:$0xf]
        %v568 = vld [vmem:[#allocation5 + $0x4c] sm:$0xf]
        %v569 = vld [vmem:[#allocation5 + $0x50] sm:$0xf]
        %v570 = vld [vmem:[#allocation5 + $0x54] sm:$0xf]
        %v571 = vld [vmem:[#allocation5 + $0x58] sm:$0xf]
        %v572 = vld [vmem:[#allocation5 + $0x5c] sm:$0xf]
        %v573 = vld [vmem:[#allocation5 + $0x60] sm:$0xf]
        %v574 = vld [vmem:[#allocation5 + $0x64] sm:$0xf]
        %v575 = vld [vmem:[#allocation5 + $0x68] sm:$0xf]
        %v576 = vld [vmem:[#allocation5 + $0x6c] sm:$0xf]
        %v577 = vld [vmem:[#allocation5 + $0x70] sm:$0xf]
        %v578 = vld [vmem:[#allocation5 + $0x74] sm:$0xf]
        %v579 = vld [vmem:[#allocation5 + $0x78] sm:$0xf]
        %v580 = vld [vmem:[#allocation5 + $0x7c] sm:$0xf]
        %v581 = vld [vmem:[#allocation5 + $0x80] sm:$0xf]
        %v582 = vld [vmem:[#allocation5 + $0x84] sm:$0xf]
        %v583 = vld [vmem:[#allocation5 + $0x88] sm:$0xf]
        %v584 = vld [vmem:[#allocation5 + $0x8c] sm:$0xf]
        %v621 = vunpack.c.l.b16 %v549
        %v622 = vunpack.c.l.b16 %v550
        %v623 = vunpack.c.l.b16 %v551
        %v624 = vunpack.c.l.b16 %v552
        %v625 = vunpack.c.l.b16 %v553
        %v626 = vunpack.c.l.b16 %v554
        %v627 = vunpack.c.l.b16 %v555
        %v628 = vunpack.c.l.b16 %v556
        %v629 = vunpack.c.l.b16 %v557
        %v630 = vunpack.c.l.b16 %v558
        %v631 = vunpack.c.l.b16 %v559
        %v632 = vunpack.c.l.b16 %v560
        %v633 = vunpack.c.l.b16 %v561
        %v634 = vunpack.c.l.b16 %v562
        %v635 = vunpack.c.l.b16 %v563
        %v636 = vunpack.c.l.b16 %v564
        %v637 = vunpack.c.l.b16 %v565
        %v638 = vunpack.c.l.b16 %v566
        %v639 = vunpack.c.l.b16 %v567
        %v640 = vunpack.c.l.b16 %v568
        %v641 = vunpack.c.l.b16 %v569
        %v642 = vunpack.c.l.b16 %v570
        %v643 = vunpack.c.l.b16 %v571
        %v644 = vunpack.c.l.b16 %v572
        %v645 = vunpack.c.l.b16 %v573
        %v646 = vunpack.c.l.b16 %v574
        %v647 = vunpack.c.l.b16 %v575
        %v648 = vunpack.c.l.b16 %v576
        %v649 = vunpack.c.l.b16 %v577
        %v650 = vunpack.c.l.b16 %v578
        %v651 = vunpack.c.l.b16 %v579
        %v652 = vunpack.c.l.b16 %v580
        %v653 = vunpack.c.l.b16 %v581
        %v654 = vunpack.c.l.b16 %v582
        %v655 = vunpack.c.l.b16 %v583
        %v656 = vunpack.c.l.b16 %v584
        %v657 = vpack.c.b16 %v622, %v621
        %v658 = vpack.c.b16 %v624, %v623
        %v659 = vpack.c.b16 %v626, %v625
        %v660 = vpack.c.b16 %v628, %v627
        %v661 = vpack.c.b16 %v630, %v629
        %v662 = vpack.c.b16 %v632, %v631
        %v663 = vpack.c.b16 %v634, %v633
        %v664 = vpack.c.b16 %v636, %v635
        %v665 = vpack.c.b16 %v638, %v637
        %v666 = vpack.c.b16 %v640, %v639
        %v667 = vpack.c.b16 %v642, %v641
        %v668 = vpack.c.b16 %v644, %v643
        %v669 = vpack.c.b16 %v646, %v645
        %v670 = vpack.c.b16 %v648, %v647
        %v671 = vpack.c.b16 %v650, %v649
        %v672 = vpack.c.b16 %v652, %v651
        %v673 = vpack.c.b16 %v654, %v653
        %v674 = vpack.c.b16 %v656, %v655
        %v694 = vsel %vm482, %v406, 0
        %696 = vmatprep.subr.bf16.mxu0 0
        %697 = vmatpush1.bf16.msra.mxu0 %v657
        %698 = vmatprep.subr.bf16.mxu0 0
        %699 = vmatpush1.bf16.msra.mxu0 %v658
        %700 = vmatprep.subr.bf16.mxu0 0
        %701 = vmatpush1.bf16.msra.mxu0 %v659
        %702 = vmatprep.subr.bf16.mxu0 0
        %703 = vmatpush1.bf16.msra.mxu0 %v660
        %704 = vmatprep.subr.bf16.mxu0 0
        %705 = vmatpush1.bf16.msra.mxu0 %v661
        %706 = vmatprep.subr.bf16.mxu0 0
        %707 = vmatpush1.bf16.msra.mxu0 %v662
        %708 = vmatprep.subr.bf16.mxu0 0
        %709 = vmatpush1.bf16.msra.mxu0 %v663
        %710 = vmatprep.subr.bf16.mxu0 0
        %711 = vmatpush1.bf16.msra.mxu0 %v664
        %712 = vmatprep.subr.bf16.mxu0 0
        %713 = vmatpush1.bf16.msra.mxu0 %v665
        %714 = vmatprep.subr.bf16.mxu0 0
        %715 = vmatpush1.bf16.msra.mxu0 %v666
        %716 = vmatprep.subr.bf16.mxu0 0
        %717 = vmatpush1.bf16.msra.mxu0 %v667
        %718 = vmatprep.subr.bf16.mxu0 0
        %719 = vmatpush1.bf16.msra.mxu0 %v668
        %720 = vmatprep.subr.bf16.mxu0 0
        %721 = vmatpush1.bf16.msra.mxu0 %v669
        %722 = vmatprep.subr.bf16.mxu0 0
        %723 = vmatpush1.bf16.msra.mxu0 %v670
        %724 = vmatprep.subr.bf16.mxu0 0
        %725 = vmatpush1.bf16.msra.mxu0 %v671
        %726 = vmatprep.subr.bf16.mxu0 0
        %727 = vmatpush1.bf16.msra.mxu0 %v672
        %728 = vmatprep.mubr.bf16.mxu0 %v538
        %729 = vmatmul.mubr.bf16.gmra.mrb[0].mxu0 %v506
        %v730 = vpop.f32.mrb[0].mxu0
        %v731 = vadd.f32 0.0, %v730
        %v732 = vpop.f32.mrb[0].mxu0
        %v733 = vpop.f32.mrb[0].mxu0
        %v734 = vpop.f32.mrb[0].mxu0
        %735 = vdwg.mxu0
        %736 = vmatprep.subr.bf16.mxu0 0
        %737 = vmatpush1.bf16.msra.mxu0 %v673
        %738 = vmatprep.subr.bf16.mxu0 0
        %739 = vmatpush1.bf16.msra.mxu0 %v674
        %740 = vmatprep.subr.bf16.mxu0 0
        %741 = vmatpush1.bf16.msra.mxu0 0
        %742 = vmatprep.subr.bf16.mxu0 0
        %743 = vmatpush1.bf16.msra.mxu0 0
        %744 = vmatprep.subr.bf16.mxu0 0
        %745 = vmatpush1.bf16.msra.mxu0 0
        %746 = vmatprep.subr.bf16.mxu0 0
        %747 = vmatpush1.bf16.msra.mxu0 0
        %748 = vmatprep.subr.bf16.mxu0 0
        %749 = vmatpush1.bf16.msra.mxu0 0
        %750 = vmatprep.subr.bf16.mxu0 0
        %751 = vmatpush1.bf16.msra.mxu0 0
        %752 = vmatprep.subr.bf16.mxu0 0
        %753 = vmatpush1.bf16.msra.mxu0 0
        %754 = vmatprep.subr.bf16.mxu0 0
        %755 = vmatpush1.bf16.msra.mxu0 0
        %756 = vmatprep.subr.bf16.mxu0 0
        %757 = vmatpush1.bf16.msra.mxu0 0
        %758 = vmatprep.subr.bf16.mxu0 0
        %759 = vmatpush1.bf16.msra.mxu0 0
        %760 = vmatprep.subr.bf16.mxu0 0
        %761 = vmatpush1.bf16.msra.mxu0 0
        %762 = vmatprep.subr.bf16.mxu0 0
        %763 = vmatpush1.bf16.msra.mxu0 0
        %764 = vmatprep.subr.bf16.mxu0 0
        %765 = vmatpush1.bf16.msra.mxu0 0
        %766 = vmatprep.subr.bf16.mxu0 0
        %767 = vmatpush1.bf16.msra.mxu0 0
        %768 = vmatprep.mubr.bf16.mxu0 0
        %769 = vmatmul.mubr.bf16.gmra.mrb[0].mxu0 %v694
        %v770 = vpop.f32.mrb[0].mxu0
        %v771 = vadd.f32 %v731, %v770
        %v772 = vpop.f32.mrb[0].mxu0
        %v773 = vpop.f32.mrb[0].mxu0
        %v774 = vpop.f32.mrb[0].mxu0
        %775 = vdwg.mxu0
        %v777 = vsel %vm482, %v407, 0
        %779 = vmatprep.subr.bf16.mxu0 0
        %780 = vmatpush1.bf16.msra.mxu0 %v657
        %781 = vmatprep.subr.bf16.mxu0 0
        %782 = vmatpush1.bf16.msra.mxu0 %v658
        %783 = vmatprep.subr.bf16.mxu0 0
        %784 = vmatpush1.bf16.msra.mxu0 %v659
        %785 = vmatprep.subr.bf16.mxu0 0
        %786 = vmatpush1.bf16.msra.mxu0 %v660
        %787 = vmatprep.subr.bf16.mxu0 0
        %788 = vmatpush1.bf16.msra.mxu0 %v661
        %789 = vmatprep.subr.bf16.mxu0 0
        %790 = vmatpush1.bf16.msra.mxu0 %v662
        %791 = vmatprep.subr.bf16.mxu0 0
        %792 = vmatpush1.bf16.msra.mxu0 %v663
        %793 = vmatprep.subr.bf16.mxu0 0
        %794 = vmatpush1.bf16.msra.mxu0 %v664
        %795 = vmatprep.subr.bf16.mxu0 0
        %796 = vmatpush1.bf16.msra.mxu0 %v665
        %797 = vmatprep.subr.bf16.mxu0 0
        %798 = vmatpush1.bf16.msra.mxu0 %v666
        %799 = vmatprep.subr.bf16.mxu0 0
        %800 = vmatpush1.bf16.msra.mxu0 %v667
        %801 = vmatprep.subr.bf16.mxu0 0
        %802 = vmatpush1.bf16.msra.mxu0 %v668
        %803 = vmatprep.subr.bf16.mxu0 0
        %804 = vmatpush1.bf16.msra.mxu0 %v669
        %805 = vmatprep.subr.bf16.mxu0 0
        %806 = vmatpush1.bf16.msra.mxu0 %v670
        %807 = vmatprep.subr.bf16.mxu0 0
        %808 = vmatpush1.bf16.msra.mxu0 %v671
        %809 = vmatprep.subr.bf16.mxu0 0
        %810 = vmatpush1.bf16.msra.mxu0 %v672
        %811 = vmatprep.mubr.bf16.mxu0 %v541
        %812 = vmatmul.mubr.bf16.gmra.mrb[0].mxu0 %v509
        %v813 = vpop.f32.mrb[0].mxu0
        %v814 = vadd.f32 0.0, %v813
        %v815 = vpop.f32.mrb[0].mxu0
        %v816 = vpop.f32.mrb[0].mxu0
        %v817 = vpop.f32.mrb[0].mxu0
        %818 = vdwg.mxu0
        %819 = vmatprep.subr.bf16.mxu0 0
        %820 = vmatpush1.bf16.msra.mxu0 %v673
        %821 = vmatprep.subr.bf16.mxu0 0
        %822 = vmatpush1.bf16.msra.mxu0 %v674
        %823 = vmatprep.subr.bf16.mxu0 0
        %824 = vmatpush1.bf16.msra.mxu0 0
        %825 = vmatprep.subr.bf16.mxu0 0
        %826 = vmatpush1.bf16.msra.mxu0 0
        %827 = vmatprep.subr.bf16.mxu0 0
        %828 = vmatpush1.bf16.msra.mxu0 0
        %829 = vmatprep.subr.bf16.mxu0 0
        %830 = vmatpush1.bf16.msra.mxu0 0
        %831 = vmatprep.subr.bf16.mxu0 0
        %832 = vmatpush1.bf16.msra.mxu0 0
        %833 = vmatprep.subr.bf16.mxu0 0
        %834 = vmatpush1.bf16.msra.mxu0 0
        %835 = vmatprep.subr.bf16.mxu0 0
        %836 = vmatpush1.bf16.msra.mxu0 0
        %837 = vmatprep.subr.bf16.mxu0 0
        %838 = vmatpush1.bf16.msra.mxu0 0
        %839 = vmatprep.subr.bf16.mxu0 0
        %840 = vmatpush1.bf16.msra.mxu0 0
        %841 = vmatprep.subr.bf16.mxu0 0
        %842 = vmatpush1.bf16.msra.mxu0 0
        %843 = vmatprep.subr.bf16.mxu0 0
        %844 = vmatpush1.bf16.msra.mxu0 0
        %845 = vmatprep.subr.bf16.mxu0 0
        %846 = vmatpush1.bf16.msra.mxu0 0
        %847 = vmatprep.subr.bf16.mxu0 0
        %848 = vmatpush1.bf16.msra.mxu0 0
        %849 = vmatprep.subr.bf16.mxu0 0
        %850 = vmatpush1.bf16.msra.mxu0 0
        %851 = vmatprep.mubr.bf16.mxu0 0
        %852 = vmatmul.mubr.bf16.gmra.mrb[0].mxu0 %v777
        %v853 = vpop.f32.mrb[0].mxu0
        %v854 = vadd.f32 %v814, %v853
        %v855 = vpop.f32.mrb[0].mxu0
        %v856 = vpop.f32.mrb[0].mxu0
        %v857 = vpop.f32.mrb[0].mxu0
        %858 = vdwg.mxu0
        %v860 = vsel %vm482, %v408, 0
        %862 = vmatprep.subr.bf16.mxu0 0
        %863 = vmatpush1.bf16.msra.mxu0 %v657
        %864 = vmatprep.subr.bf16.mxu0 0
        %865 = vmatpush1.bf16.msra.mxu0 %v658
        %866 = vmatprep.subr.bf16.mxu0 0
        %867 = vmatpush1.bf16.msra.mxu0 %v659
        %868 = vmatprep.subr.bf16.mxu0 0
        %869 = vmatpush1.bf16.msra.mxu0 %v660
        %870 = vmatprep.subr.bf16.mxu0 0
        %871 = vmatpush1.bf16.msra.mxu0 %v661
        %872 = vmatprep.subr.bf16.mxu0 0
        %873 = vmatpush1.bf16.msra.mxu0 %v662
        %874 = vmatprep.subr.bf16.mxu0 0
        %875 = vmatpush1.bf16.msra.mxu0 %v663
        %876 = vmatprep.subr.bf16.mxu0 0
        %877 = vmatpush1.bf16.msra.mxu0 %v664
        %878 = vmatprep.subr.bf16.mxu0 0
        %879 = vmatpush1.bf16.msra.mxu0 %v665
        %880 = vmatprep.subr.bf16.mxu0 0
        %881 = vmatpush1.bf16.msra.mxu0 %v666
        %882 = vmatprep.subr.bf16.mxu0 0
        %883 = vmatpush1.bf16.msra.mxu0 %v667
        %884 = vmatprep.subr.bf16.mxu0 0
        %885 = vmatpush1.bf16.msra.mxu0 %v668
        %886 = vmatprep.subr.bf16.mxu0 0
        %887 = vmatpush1.bf16.msra.mxu0 %v669
        %888 = vmatprep.subr.bf16.mxu0 0
        %889 = vmatpush1.bf16.msra.mxu0 %v670
        %890 = vmatprep.subr.bf16.mxu0 0
        %891 = vmatpush1.bf16.msra.mxu0 %v671
        %892 = vmatprep.subr.bf16.mxu0 0
        %893 = vmatpush1.bf16.msra.mxu0 %v672
        %894 = vmatprep.mubr.bf16.mxu0 %v544
        %895 = vmatmul.mubr.bf16.gmra.mrb[0].mxu0 %v512
        %v896 = vpop.f32.mrb[0].mxu0
        %v897 = vadd.f32 0.0, %v896
        %v898 = vpop.f32.mrb[0].mxu0
        %v899 = vpop.f32.mrb[0].mxu0
        %v900 = vpop.f32.mrb[0].mxu0
        %901 = vdwg.mxu0
        %902 = vmatprep.subr.bf16.mxu0 0
        %903 = vmatpush1.bf16.msra.mxu0 %v673
        %904 = vmatprep.subr.bf16.mxu0 0
        %905 = vmatpush1.bf16.msra.mxu0 %v674
        %906 = vmatprep.subr.bf16.mxu0 0
        %907 = vmatpush1.bf16.msra.mxu0 0
        %908 = vmatprep.subr.bf16.mxu0 0
        %909 = vmatpush1.bf16.msra.mxu0 0
        %910 = vmatprep.subr.bf16.mxu0 0
        %911 = vmatpush1.bf16.msra.mxu0 0
        %912 = vmatprep.subr.bf16.mxu0 0
        %913 = vmatpush1.bf16.msra.mxu0 0
        %914 = vmatprep.subr.bf16.mxu0 0
        %915 = vmatpush1.bf16.msra.mxu0 0
        %916 = vmatprep.subr.bf16.mxu0 0
        %917 = vmatpush1.bf16.msra.mxu0 0
        %918 = vmatprep.subr.bf16.mxu0 0
        %919 = vmatpush1.bf16.msra.mxu0 0
        %920 = vmatprep.subr.bf16.mxu0 0
        %921 = vmatpush1.bf16.msra.mxu0 0
        %922 = vmatprep.subr.bf16.mxu0 0
        %923 = vmatpush1.bf16.msra.mxu0 0
        %924 = vmatprep.subr.bf16.mxu0 0
        %925 = vmatpush1.bf16.msra.mxu0 0
        %926 = vmatprep.subr.bf16.mxu0 0
        %927 = vmatpush1.bf16.msra.mxu0 0
        %928 = vmatprep.subr.bf16.mxu0 0
        %929 = vmatpush1.bf16.msra.mxu0 0
        %930 = vmatprep.subr.bf16.mxu0 0
        %931 = vmatpush1.bf16.msra.mxu0 0
        %932 = vmatprep.subr.bf16.mxu0 0
        %933 = vmatpush1.bf16.msra.mxu0 0
        %934 = vmatprep.mubr.bf16.mxu0 0
        %935 = vmatmul.mubr.bf16.gmra.mrb[0].mxu0 %v860
        %v936 = vpop.f32.mrb[0].mxu0
        %v937 = vadd.f32 %v897, %v936
        %v938 = vpop.f32.mrb[0].mxu0
        %v939 = vpop.f32.mrb[0].mxu0
        %v940 = vpop.f32.mrb[0].mxu0
        %941 = vdwg.mxu0
        %v943 = vsel %vm482, %v409, 0
        %945 = vmatprep.subr.bf16.mxu0 0
        %946 = vmatpush1.bf16.msra.mxu0 %v657
        %947 = vmatprep.subr.bf16.mxu0 0
        %948 = vmatpush1.bf16.msra.mxu0 %v658
        %949 = vmatprep.subr.bf16.mxu0 0
        %950 = vmatpush1.bf16.msra.mxu0 %v659
        %951 = vmatprep.subr.bf16.mxu0 0
        %952 = vmatpush1.bf16.msra.mxu0 %v660
        %953 = vmatprep.subr.bf16.mxu0 0
        %954 = vmatpush1.bf16.msra.mxu0 %v661
        %955 = vmatprep.subr.bf16.mxu0 0
        %956 = vmatpush1.bf16.msra.mxu0 %v662
        %957 = vmatprep.subr.bf16.mxu0 0
        %958 = vmatpush1.bf16.msra.mxu0 %v663
        %959 = vmatprep.subr.bf16.mxu0 0
        %960 = vmatpush1.bf16.msra.mxu0 %v664
        %961 = vmatprep.subr.bf16.mxu0 0
        %962 = vmatpush1.bf16.msra.mxu0 %v665
        %963 = vmatprep.subr.bf16.mxu0 0
        %964 = vmatpush1.bf16.msra.mxu0 %v666
        %965 = vmatprep.subr.bf16.mxu0 0
        %966 = vmatpush1.bf16.msra.mxu0 %v667
        %967 = vmatprep.subr.bf16.mxu0 0
        %968 = vmatpush1.bf16.msra.mxu0 %v668
        %969 = vmatprep.subr.bf16.mxu0 0
        %970 = vmatpush1.bf16.msra.mxu0 %v669
        %971 = vmatprep.subr.bf16.mxu0 0
        %972 = vmatpush1.bf16.msra.mxu0 %v670
        %973 = vmatprep.subr.bf16.mxu0 0
        %974 = vmatpush1.bf16.msra.mxu0 %v671
        %975 = vmatprep.subr.bf16.mxu0 0
        %976 = vmatpush1.bf16.msra.mxu0 %v672
        %977 = vmatprep.mubr.bf16.mxu0 %v547
        %978 = vmatmul.mubr.bf16.gmra.mrb[0].mxu0 %v515
        %v979 = vpop.f32.mrb[0].mxu0
        %v980 = vadd.f32 0.0, %v979
        %v981 = vpop.f32.mrb[0].mxu0
        %v982 = vpop.f32.mrb[0].mxu0
        %v983 = vpop.f32.mrb[0].mxu0
        %984 = vdwg.mxu0
        %985 = vmatprep.subr.bf16.mxu0 0
        %986 = vmatpush1.bf16.msra.mxu0 %v673
        %987 = vmatprep.subr.bf16.mxu0 0
        %988 = vmatpush1.bf16.msra.mxu0 %v674
        %989 = vmatprep.subr.bf16.mxu0 0
        %990 = vmatpush1.bf16.msra.mxu0 0
        %991 = vmatprep.subr.bf16.mxu0 0
        %992 = vmatpush1.bf16.msra.mxu0 0
        %993 = vmatprep.subr.bf16.mxu0 0
        %994 = vmatpush1.bf16.msra.mxu0 0
        %995 = vmatprep.subr.bf16.mxu0 0
        %996 = vmatpush1.bf16.msra.mxu0 0
        %997 = vmatprep.subr.bf16.mxu0 0
        %998 = vmatpush1.bf16.msra.mxu0 0
        %999 = vmatprep.subr.bf16.mxu0 0
        %1000 = vmatpush1.bf16.msra.mxu0 0
        %1001 = vmatprep.subr.bf16.mxu0 0
        %1002 = vmatpush1.bf16.msra.mxu0 0
        %1003 = vmatprep.subr.bf16.mxu0 0
        %1004 = vmatpush1.bf16.msra.mxu0 0
        %1005 = vmatprep.subr.bf16.mxu0 0
        %1006 = vmatpush1.bf16.msra.mxu0 0
        %1007 = vmatprep.subr.bf16.mxu0 0
        %1008 = vmatpush1.bf16.msra.mxu0 0
        %1009 = vmatprep.subr.bf16.mxu0 0
        %1010 = vmatpush1.bf16.msra.mxu0 0
        %1011 = vmatprep.subr.bf16.mxu0 0
        %1012 = vmatpush1.bf16.msra.mxu0 0
        %1013 = vmatprep.subr.bf16.mxu0 0
        %1014 = vmatpush1.bf16.msra.mxu0 0
        %1015 = vmatprep.subr.bf16.mxu0 0
        %1016 = vmatpush1.bf16.msra.mxu0 0
        %1017 = vmatprep.mubr.bf16.mxu0 0
        %1018 = vmatmul.mubr.bf16.gmra.mrb[0].mxu0 %v943
        %v1019 = vpop.f32.mrb[0].mxu0
        %v1020 = vadd.f32 %v980, %v1019
        %v1021 = vpop.f32.mrb[0].mxu0
        %v1022 = vpop.f32.mrb[0].mxu0
        %v1023 = vpop.f32.mrb[0].mxu0
        %1024 = vdwg.mxu0
        %v1025 = vld [vmem:[#allocation7] sm:$0x1]
        %v1027 = vlaneseq
        %v1028 = vshrl.u32 %v1027, 7
        %v1029 = vsub.s32 0, %v1028
        %v1030 = vrot.slane %v1025, %v1029
        %v1032 = vmul.f32 %v771, %v1030
        %v1033 = vmul.f32 %v854, %v1030
        %v1034 = vmul.f32 %v937, %v1030
        %v1035 = vmul.f32 %v1020, %v1030
        %v1036 = vld [vmem:[#allocation8] sm:$0x1]
        %v1038 = vlaneseq
        %v1039 = vshrl.u32 %v1038, 7
        %v1040 = vsub.s32 0, %v1039
        %v1041 = vrot.slane %v1036, %v1040
        %v1043 = vadd.f32 %v1032, %v1041
        %v1044 = vadd.f32 %v1033, %v1041
        %v1045 = vadd.f32 %v1034, %v1041
        %v1046 = vadd.f32 %v1035, %v1041
        %v1047 = vmax.f32 %v1043, 0.0
        %v1048 = vmax.f32 %v1044, 0.0
        %v1049 = vmax.f32 %v1045, 0.0
        %v1050 = vmax.f32 %v1046, 0.0
        %v1051 = vld [vmem:[#allocation10] sm:$0xf]
        %v1052 = vpack.c.bf16 %v1047, %v1047
        %v1053 = vpack.c.bf16 %v1048, %v1048
        %v1054 = vpack.c.bf16 %v1049, %v1049
        %v1055 = vpack.c.bf16 %v1050, %v1050
        %vm1056 = vcmask 31744
        %v1058 = vsel %vm1056, %v1051, 0
        %vm1060 = vcmask 1041408
        %v1062 = vsel %vm1060, %v1052, 0
        %1064 = vmatprep.subr.bf16.mxu0 0
        %1065 = vmatpush1.bf16.msra.mxu0 %v1062
        %1066 = vmatprep.subr.bf16.mxu0 0
        %1067 = vmatpush1.bf16.msra.mxu0 0
        %1068 = vmatprep.subr.bf16.mxu0 0
        %1069 = vmatpush1.bf16.msra.mxu0 0
        %1070 = vmatprep.subr.bf16.mxu0 0
        %1071 = vmatpush1.bf16.msra.mxu0 0
        %1072 = vmatprep.subr.bf16.mxu0 0
        %1073 = vmatpush1.bf16.msra.mxu0 0
        %1074 = vmatprep.subr.bf16.mxu0 0
        %1075 = vmatpush1.bf16.msra.mxu0 0
        %1076 = vmatprep.subr.bf16.mxu0 0
        %1077 = vmatpush1.bf16.msra.mxu0 0
        %1078 = vmatprep.subr.bf16.mxu0 0
        %1079 = vmatpush1.bf16.msra.mxu0 0
        %1080 = vmatprep.subr.bf16.mxu0 0
        %1081 = vmatpush1.bf16.msra.mxu0 0
        %1082 = vmatprep.subr.bf16.mxu0 0
        %1083 = vmatpush1.bf16.msra.mxu0 0
        %1084 = vmatprep.subr.bf16.mxu0 0
        %1085 = vmatpush1.bf16.msra.mxu0 0
        %1086 = vmatprep.subr.bf16.mxu0 0
        %1087 = vmatpush1.bf16.msra.mxu0 0
        %1088 = vmatprep.subr.bf16.mxu0 0
        %1089 = vmatpush1.bf16.msra.mxu0 0
        %1090 = vmatprep.subr.bf16.mxu0 0
        %1091 = vmatpush1.bf16.msra.mxu0 0
        %1092 = vmatprep.subr.bf16.mxu0 0
        %1093 = vmatpush1.bf16.msra.mxu0 0
        %1094 = vmatprep.subr.bf16.mxu0 0
        %1095 = vmatpush1.bf16.msra.mxu0 0
        %1096 = vmatprep.mubr.bf16.mxu0 0
        %1097 = vmatmul.mubr.bf16.gmra.mrb[0].mxu0 %v1058
        %v1098 = vpop.f32.mrb[0].mxu0
        %v1099 = vadd.f32 0.0, %v1098
        %v1100 = vpop.f32.mrb[0].mxu0
        %v1101 = vpop.f32.mrb[0].mxu0
        %v1102 = vpop.f32.mrb[0].mxu0
        %1103 = vdwg.mxu0
        %v1105 = vsel %vm1060, %v1053, 0
        %1107 = vmatprep.subr.bf16.mxu0 0
        %1108 = vmatpush1.bf16.msra.mxu0 %v1105
        %1109 = vmatprep.subr.bf16.mxu0 0
        %1110 = vmatpush1.bf16.msra.mxu0 0
        %1111 = vmatprep.subr.bf16.mxu0 0
        %1112 = vmatpush1.bf16.msra.mxu0 0
        %1113 = vmatprep.subr.bf16.mxu0 0
        %1114 = vmatpush1.bf16.msra.mxu0 0
        %1115 = vmatprep.subr.bf16.mxu0 0
        %1116 = vmatpush1.bf16.msra.mxu0 0
        %1117 = vmatprep.subr.bf16.mxu0 0
        %1118 = vmatpush1.bf16.msra.mxu0 0
        %1119 = vmatprep.subr.bf16.mxu0 0
        %1120 = vmatpush1.bf16.msra.mxu0 0
        %1121 = vmatprep.subr.bf16.mxu0 0
        %1122 = vmatpush1.bf16.msra.mxu0 0
        %1123 = vmatprep.subr.bf16.mxu0 0
        %1124 = vmatpush1.bf16.msra.mxu0 0
        %1125 = vmatprep.subr.bf16.mxu0 0
        %1126 = vmatpush1.bf16.msra.mxu0 0
        %1127 = vmatprep.subr.bf16.mxu0 0
        %1128 = vmatpush1.bf16.msra.mxu0 0
        %1129 = vmatprep.subr.bf16.mxu0 0
        %1130 = vmatpush1.bf16.msra.mxu0 0
        %1131 = vmatprep.subr.bf16.mxu0 0
        %1132 = vmatpush1.bf16.msra.mxu0 0
        %1133 = vmatprep.subr.bf16.mxu0 0
        %1134 = vmatpush1.bf16.msra.mxu0 0
        %1135 = vmatprep.subr.bf16.mxu0 0
        %1136 = vmatpush1.bf16.msra.mxu0 0
        %1137 = vmatprep.subr.bf16.mxu0 0
        %1138 = vmatpush1.bf16.msra.mxu0 0
        %1139 = vmatprep.mubr.bf16.mxu0 0
        %1140 = vmatmul.mubr.bf16.gmra.mrb[0].mxu0 %v1058
        %v1141 = vpop.f32.mrb[0].mxu0
        %v1142 = vadd.f32 0.0, %v1141
        %v1143 = vpop.f32.mrb[0].mxu0
        %v1144 = vpop.f32.mrb[0].mxu0
        %v1145 = vpop.f32.mrb[0].mxu0
        %1146 = vdwg.mxu0
        %v1148 = vsel %vm1060, %v1054, 0
        %1150 = vmatprep.subr.bf16.mxu0 0
        %1151 = vmatpush1.bf16.msra.mxu0 %v1148
        %1152 = vmatprep.subr.bf16.mxu0 0
        %1153 = vmatpush1.bf16.msra.mxu0 0
        %1154 = vmatprep.subr.bf16.mxu0 0
        %1155 = vmatpush1.bf16.msra.mxu0 0
        %1156 = vmatprep.subr.bf16.mxu0 0
        %1157 = vmatpush1.bf16.msra.mxu0 0
        %1158 = vmatprep.subr.bf16.mxu0 0
        %1159 = vmatpush1.bf16.msra.mxu0 0
        %1160 = vmatprep.subr.bf16.mxu0 0
        %1161 = vmatpush1.bf16.msra.mxu0 0
        %1162 = vmatprep.subr.bf16.mxu0 0
        %1163 = vmatpush1.bf16.msra.mxu0 0
        %1164 = vmatprep.subr.bf16.mxu0 0
        %1165 = vmatpush1.bf16.msra.mxu0 0
        %1166 = vmatprep.subr.bf16.mxu0 0
        %1167 = vmatpush1.bf16.msra.mxu0 0
        %1168 = vmatprep.subr.bf16.mxu0 0
        %1169 = vmatpush1.bf16.msra.mxu0 0
        %1170 = vmatprep.subr.bf16.mxu0 0
        %1171 = vmatpush1.bf16.msra.mxu0 0
        %1172 = vmatprep.subr.bf16.mxu0 0
        %1173 = vmatpush1.bf16.msra.mxu0 0
        %1174 = vmatprep.subr.bf16.mxu0 0
        %1175 = vmatpush1.bf16.msra.mxu0 0
        %1176 = vmatprep.subr.bf16.mxu0 0
        %1177 = vmatpush1.bf16.msra.mxu0 0
        %1178 = vmatprep.subr.bf16.mxu0 0
        %1179 = vmatpush1.bf16.msra.mxu0 0
        %1180 = vmatprep.subr.bf16.mxu0 0
        %1181 = vmatpush1.bf16.msra.mxu0 0
        %1182 = vmatprep.mubr.bf16.mxu0 0
        %1183 = vmatmul.mubr.bf16.gmra.mrb[0].mxu0 %v1058
        %v1184 = vpop.f32.mrb[0].mxu0
        %v1185 = vadd.f32 0.0, %v1184
        %v1186 = vpop.f32.mrb[0].mxu0
        %v1187 = vpop.f32.mrb[0].mxu0
        %v1188 = vpop.f32.mrb[0].mxu0
        %1189 = vdwg.mxu0
        %v1191 = vsel %vm1060, %v1055, 0
        %1193 = vmatprep.subr.bf16.mxu0 0
        %1194 = vmatpush1.bf16.msra.mxu0 %v1191
        %1195 = vmatprep.subr.bf16.mxu0 0
        %1196 = vmatpush1.bf16.msra.mxu0 0
        %1197 = vmatprep.subr.bf16.mxu0 0
        %1198 = vmatpush1.bf16.msra.mxu0 0
        %1199 = vmatprep.subr.bf16.mxu0 0
        %1200 = vmatpush1.bf16.msra.mxu0 0
        %1201 = vmatprep.subr.bf16.mxu0 0
        %1202 = vmatpush1.bf16.msra.mxu0 0
        %1203 = vmatprep.subr.bf16.mxu0 0
        %1204 = vmatpush1.bf16.msra.mxu0 0
        %1205 = vmatprep.subr.bf16.mxu0 0
        %1206 = vmatpush1.bf16.msra.mxu0 0
        %1207 = vmatprep.subr.bf16.mxu0 0
        %1208 = vmatpush1.bf16.msra.mxu0 0
        %1209 = vmatprep.subr.bf16.mxu0 0
        %1210 = vmatpush1.bf16.msra.mxu0 0
        %1211 = vmatprep.subr.bf16.mxu0 0
        %1212 = vmatpush1.bf16.msra.mxu0 0
        %1213 = vmatprep.subr.bf16.mxu0 0
        %1214 = vmatpush1.bf16.msra.mxu0 0
        %1215 = vmatprep.subr.bf16.mxu0 0
        %1216 = vmatpush1.bf16.msra.mxu0 0
        %1217 = vmatprep.subr.bf16.mxu0 0
        %1218 = vmatpush1.bf16.msra.mxu0 0
        %1219 = vmatprep.subr.bf16.mxu0 0
        %1220 = vmatpush1.bf16.msra.mxu0 0
        %1221 = vmatprep.subr.bf16.mxu0 0
        %1222 = vmatpush1.bf16.msra.mxu0 0
        %1223 = vmatprep.subr.bf16.mxu0 0
        %1224 = vmatpush1.bf16.msra.mxu0 0
        %1225 = vmatprep.mubr.bf16.mxu0 0
        %1226 = vmatmul.mubr.bf16.gmra.mrb[0].mxu0 %v1058
        %v1227 = vpop.f32.mrb[0].mxu0
        %v1228 = vadd.f32 0.0, %v1227
        %v1229 = vpop.f32.mrb[0].mxu0
        %v1230 = vpop.f32.mrb[0].mxu0
        %v1231 = vpop.f32.mrb[0].mxu0
        %1232 = vdwg.mxu0
        %v1233 = vcombine.low %v1099, %v1185
        %v1234 = vcombine.high %v1099, %v1185
        %v1236 = vunpack.c.l.s4 1983009808
        %v1237 = vunpack.c.0.s8 %v1236
        %v1238 = vlaneseq
        %v1239 = vshrl.u32 %v1238, 7
        %v1240 = vsub.s32 %v1237, %v1239
        %v1241 = vrot.slane %v1233, %v1240
        %v1243 = vunpack.c.l.s4 1983009808
        %v1244 = vunpack.c.0.s8 %v1243
        %v1245 = vlaneseq
        %v1246 = vshrl.u32 %v1245, 7
        %v1247 = vsub.s32 %v1244, %v1246
        %v1248 = vrot.slane %v1234, %v1247
        %v1249 = vcombine.low %v1142, %v1228
        %v1250 = vcombine.high %v1142, %v1228
        %v1252 = vunpack.c.l.s4 1983009808
        %v1253 = vunpack.c.0.s8 %v1252
        %v1254 = vlaneseq
        %v1255 = vshrl.u32 %v1254, 7
        %v1256 = vsub.s32 %v1253, %v1255
        %v1257 = vrot.slane %v1249, %v1256
        %v1259 = vunpack.c.l.s4 1983009808
        %v1260 = vunpack.c.0.s8 %v1259
        %v1261 = vlaneseq
        %v1262 = vshrl.u32 %v1261, 7
        %v1263 = vsub.s32 %v1260, %v1262
        %v1264 = vrot.slane %v1250, %v1263
        %v1265 = vcombine.low %v1241, %v1257
        %v1266 = vcombine.high %v1241, %v1257
        %v1268 = vunpack.c.l.s4 1934713408
        %v1269 = vunpack.c.0.s8 %v1268
        %v1270 = vlaneseq
        %v1271 = vshrl.u32 %v1270, 7
        %v1272 = vsub.s32 %v1269, %v1271
        %v1273 = vrot.slane %v1265, %v1272
        %v1275 = vunpack.c.l.s4 1934713408
        %v1276 = vunpack.c.0.s8 %v1275
        %v1277 = vlaneseq
        %v1278 = vshrl.u32 %v1277, 7
        %v1279 = vsub.s32 %v1276, %v1278
        %v1280 = vrot.slane %v1266, %v1279
        %v1281 = vcombine.low %v1248, %v1264
        %v1282 = vcombine.high %v1248, %v1264
        %v1284 = vunpack.c.l.s4 1934713408
        %v1285 = vunpack.c.0.s8 %v1284
        %v1286 = vlaneseq
        %v1287 = vshrl.u32 %v1286, 7
        %v1288 = vsub.s32 %v1285, %v1287
        %v1289 = vrot.slane %v1281, %v1288
        %v1291 = vunpack.c.l.s4 1934713408
        %v1292 = vunpack.c.0.s8 %v1291
        %v1293 = vlaneseq
        %v1294 = vshrl.u32 %v1293, 7
        %v1295 = vsub.s32 %v1292, %v1294
        %v1296 = vrot.slane %v1282, %v1295
        %v1297 = vcombine.high %v1273, 0.0
        %v1298 = vcombine.high %v1280, 0.0
        %v1299 = vcombine.high %v1289, 0.0
        %v1300 = vcombine.high %v1296, 0.0
        %v1301 = vpack.c.bf16 %v1273, %v1273
        %v1302 = vpack.c.bf16 %v1297, %v1297
        %v1303 = vpack.c.bf16 %v1280, %v1280
        %v1304 = vpack.c.bf16 %v1298, %v1298
        %v1305 = vpack.c.bf16 %v1289, %v1289
        %v1306 = vpack.c.bf16 %v1299, %v1299
        %v1307 = vpack.c.bf16 %v1296, %v1296
        %v1308 = vpack.c.bf16 %v1300, %v1300
        %v1309 = vld [vmem:[#allocation11] sm:$0xf]
        %v1311 = vsel %vm1056, %v1309, 0
        %v1314 = vsel %vm1060, %v1301, 0
        %1316 = vmatprep.subr.bf16.mxu0 0
        %1317 = vmatpush1.bf16.msra.mxu0 %v1314
        %1318 = vmatprep.subr.bf16.mxu0 0
        %1319 = vmatpush1.bf16.msra.mxu0 0
        %1320 = vmatprep.subr.bf16.mxu0 0
        %1321 = vmatpush1.bf16.msra.mxu0 0
        %1322 = vmatprep.subr.bf16.mxu0 0
        %1323 = vmatpush1.bf16.msra.mxu0 0
        %1324 = vmatprep.subr.bf16.mxu0 0
        %1325 = vmatpush1.bf16.msra.mxu0 0
        %1326 = vmatprep.subr.bf16.mxu0 0
        %1327 = vmatpush1.bf16.msra.mxu0 0
        %1328 = vmatprep.subr.bf16.mxu0 0
        %1329 = vmatpush1.bf16.msra.mxu0 0
        %1330 = vmatprep.subr.bf16.mxu0 0
        %1331 = vmatpush1.bf16.msra.mxu0 0
        %1332 = vmatprep.subr.bf16.mxu0 0
        %1333 = vmatpush1.bf16.msra.mxu0 0
        %1334 = vmatprep.subr.bf16.mxu0 0
        %1335 = vmatpush1.bf16.msra.mxu0 0
        %1336 = vmatprep.subr.bf16.mxu0 0
        %1337 = vmatpush1.bf16.msra.mxu0 0
        %1338 = vmatprep.subr.bf16.mxu0 0
        %1339 = vmatpush1.bf16.msra.mxu0 0
        %1340 = vmatprep.subr.bf16.mxu0 0
        %1341 = vmatpush1.bf16.msra.mxu0 0
        %1342 = vmatprep.subr.bf16.mxu0 0
        %1343 = vmatpush1.bf16.msra.mxu0 0
        %1344 = vmatprep.subr.bf16.mxu0 0
        %1345 = vmatpush1.bf16.msra.mxu0 0
        %1346 = vmatprep.subr.bf16.mxu0 0
        %1347 = vmatpush1.bf16.msra.mxu0 0
        %1348 = vmatprep.mubr.bf16.mxu0 0
        %1349 = vmatmul.mubr.bf16.gmra.mrb[0].mxu0 %v1311
        %v1350 = vpop.f32.mrb[0].mxu0
        %v1351 = vadd.f32 0.0, %v1350
        %v1352 = vpop.f32.mrb[0].mxu0
        %v1353 = vpop.f32.mrb[0].mxu0
        %v1354 = vpop.f32.mrb[0].mxu0
        %1355 = vdwg.mxu0
        %v1357 = vsel %vm1060, %v1302, 0
        %1359 = vmatprep.subr.bf16.mxu0 0
        %1360 = vmatpush1.bf16.msra.mxu0 %v1357
        %1361 = vmatprep.subr.bf16.mxu0 0
        %1362 = vmatpush1.bf16.msra.mxu0 0
        %1363 = vmatprep.subr.bf16.mxu0 0
        %1364 = vmatpush1.bf16.msra.mxu0 0
        %1365 = vmatprep.subr.bf16.mxu0 0
        %1366 = vmatpush1.bf16.msra.mxu0 0
        %1367 = vmatprep.subr.bf16.mxu0 0
        %1368 = vmatpush1.bf16.msra.mxu0 0
        %1369 = vmatprep.subr.bf16.mxu0 0
        %1370 = vmatpush1.bf16.msra.mxu0 0
        %1371 = vmatprep.subr.bf16.mxu0 0
        %1372 = vmatpush1.bf16.msra.mxu0 0
        %1373 = vmatprep.subr.bf16.mxu0 0
        %1374 = vmatpush1.bf16.msra.mxu0 0
        %1375 = vmatprep.subr.bf16.mxu0 0
        %1376 = vmatpush1.bf16.msra.mxu0 0
        %1377 = vmatprep.subr.bf16.mxu0 0
        %1378 = vmatpush1.bf16.msra.mxu0 0
        %1379 = vmatprep.subr.bf16.mxu0 0
        %1380 = vmatpush1.bf16.msra.mxu0 0
        %1381 = vmatprep.subr.bf16.mxu0 0
        %1382 = vmatpush1.bf16.msra.mxu0 0
        %1383 = vmatprep.subr.bf16.mxu0 0
        %1384 = vmatpush1.bf16.msra.mxu0 0
        %1385 = vmatprep.subr.bf16.mxu0 0
        %1386 = vmatpush1.bf16.msra.mxu0 0
        %1387 = vmatprep.subr.bf16.mxu0 0
        %1388 = vmatpush1.bf16.msra.mxu0 0
        %1389 = vmatprep.subr.bf16.mxu0 0
        %1390 = vmatpush1.bf16.msra.mxu0 0
        %1391 = vmatprep.mubr.bf16.mxu0 0
        %1392 = vmatmul.mubr.bf16.gmra.mrb[0].mxu0 %v1311
        %v1393 = vpop.f32.mrb[0].mxu0
        %v1394 = vadd.f32 0.0, %v1393
        %v1395 = vpop.f32.mrb[0].mxu0
        %v1396 = vpop.f32.mrb[0].mxu0
        %v1397 = vpop.f32.mrb[0].mxu0
        %1398 = vdwg.mxu0
        %v1400 = vsel %vm1060, %v1303, 0
        %1402 = vmatprep.subr.bf16.mxu0 0
        %1403 = vmatpush1.bf16.msra.mxu0 %v1400
        %1404 = vmatprep.subr.bf16.mxu0 0
        %1405 = vmatpush1.bf16.msra.mxu0 0
        %1406 = vmatprep.subr.bf16.mxu0 0
        %1407 = vmatpush1.bf16.msra.mxu0 0
        %1408 = vmatprep.subr.bf16.mxu0 0
        %1409 = vmatpush1.bf16.msra.mxu0 0
        %1410 = vmatprep.subr.bf16.mxu0 0
        %1411 = vmatpush1.bf16.msra.mxu0 0
        %1412 = vmatprep.subr.bf16.mxu0 0
        %1413 = vmatpush1.bf16.msra.mxu0 0
        %1414 = vmatprep.subr.bf16.mxu0 0
        %1415 = vmatpush1.bf16.msra.mxu0 0
        %1416 = vmatprep.subr.bf16.mxu0 0
        %1417 = vmatpush1.bf16.msra.mxu0 0
        %1418 = vmatprep.subr.bf16.mxu0 0
        %1419 = vmatpush1.bf16.msra.mxu0 0
        %1420 = vmatprep.subr.bf16.mxu0 0
        %1421 = vmatpush1.bf16.msra.mxu0 0
        %1422 = vmatprep.subr.bf16.mxu0 0
        %1423 = vmatpush1.bf16.msra.mxu0 0
        %1424 = vmatprep.subr.bf16.mxu0 0
        %1425 = vmatpush1.bf16.msra.mxu0 0
        %1426 = vmatprep.subr.bf16.mxu0 0
        %1427 = vmatpush1.bf16.msra.mxu0 0
        %1428 = vmatprep.subr.bf16.mxu0 0
        %1429 = vmatpush1.bf16.msra.mxu0 0
        %1430 = vmatprep.subr.bf16.mxu0 0
        %1431 = vmatpush1.bf16.msra.mxu0 0
        %1432 = vmatprep.subr.bf16.mxu0 0
        %1433 = vmatpush1.bf16.msra.mxu0 0
        %1434 = vmatprep.mubr.bf16.mxu0 0
        %1435 = vmatmul.mubr.bf16.gmra.mrb[0].mxu0 %v1311
        %v1436 = vpop.f32.mrb[0].mxu0
        %v1437 = vadd.f32 0.0, %v1436
        %v1438 = vpop.f32.mrb[0].mxu0
        %v1439 = vpop.f32.mrb[0].mxu0
        %v1440 = vpop.f32.mrb[0].mxu0
        %1441 = vdwg.mxu0
        %v1443 = vsel %vm1060, %v1304, 0
        %1445 = vmatprep.subr.bf16.mxu0 0
        %1446 = vmatpush1.bf16.msra.mxu0 %v1443
        %1447 = vmatprep.subr.bf16.mxu0 0
        %1448 = vmatpush1.bf16.msra.mxu0 0
        %1449 = vmatprep.subr.bf16.mxu0 0
        %1450 = vmatpush1.bf16.msra.mxu0 0
        %1451 = vmatprep.subr.bf16.mxu0 0
        %1452 = vmatpush1.bf16.msra.mxu0 0
        %1453 = vmatprep.subr.bf16.mxu0 0
        %1454 = vmatpush1.bf16.msra.mxu0 0
        %1455 = vmatprep.subr.bf16.mxu0 0
        %1456 = vmatpush1.bf16.msra.mxu0 0
        %1457 = vmatprep.subr.bf16.mxu0 0
        %1458 = vmatpush1.bf16.msra.mxu0 0
        %1459 = vmatprep.subr.bf16.mxu0 0
        %1460 = vmatpush1.bf16.msra.mxu0 0
        %1461 = vmatprep.subr.bf16.mxu0 0
        %1462 = vmatpush1.bf16.msra.mxu0 0
        %1463 = vmatprep.subr.bf16.mxu0 0
        %1464 = vmatpush1.bf16.msra.mxu0 0
        %1465 = vmatprep.subr.bf16.mxu0 0
        %1466 = vmatpush1.bf16.msra.mxu0 0
        %1467 = vmatprep.subr.bf16.mxu0 0
        %1468 = vmatpush1.bf16.msra.mxu0 0
        %1469 = vmatprep.subr.bf16.mxu0 0
        %1470 = vmatpush1.bf16.msra.mxu0 0
        %1471 = vmatprep.subr.bf16.mxu0 0
        %1472 = vmatpush1.bf16.msra.mxu0 0
        %1473 = vmatprep.subr.bf16.mxu0 0
        %1474 = vmatpush1.bf16.msra.mxu0 0
        %1475 = vmatprep.subr.bf16.mxu0 0
        %1476 = vmatpush1.bf16.msra.mxu0 0
        %1477 = vmatprep.mubr.bf16.mxu0 0
        %1478 = vmatmul.mubr.bf16.gmra.mrb[0].mxu0 %v1311
        %v1479 = vpop.f32.mrb[0].mxu0
        %v1480 = vadd.f32 0.0, %v1479
        %v1481 = vpop.f32.mrb[0].mxu0
        %v1482 = vpop.f32.mrb[0].mxu0
        %v1483 = vpop.f32.mrb[0].mxu0
        %1484 = vdwg.mxu0
        %v1486 = vsel %vm1060, %v1305, 0
        %1488 = vmatprep.subr.bf16.mxu0 0
        %1489 = vmatpush1.bf16.msra.mxu0 %v1486
        %1490 = vmatprep.subr.bf16.mxu0 0
        %1491 = vmatpush1.bf16.msra.mxu0 0
        %1492 = vmatprep.subr.bf16.mxu0 0
        %1493 = vmatpush1.bf16.msra.mxu0 0
        %1494 = vmatprep.subr.bf16.mxu0 0
        %1495 = vmatpush1.bf16.msra.mxu0 0
        %1496 = vmatprep.subr.bf16.mxu0 0
        %1497 = vmatpush1.bf16.msra.mxu0 0
        %1498 = vmatprep.subr.bf16.mxu0 0
        %1499 = vmatpush1.bf16.msra.mxu0 0
        %1500 = vmatprep.subr.bf16.mxu0 0
        %1501 = vmatpush1.bf16.msra.mxu0 0
        %1502 = vmatprep.subr.bf16.mxu0 0
        %1503 = vmatpush1.bf16.msra.mxu0 0
        %1504 = vmatprep.subr.bf16.mxu0 0
        %1505 = vmatpush1.bf16.msra.mxu0 0
        %1506 = vmatprep.subr.bf16.mxu0 0
        %1507 = vmatpush1.bf16.msra.mxu0 0
        %1508 = vmatprep.subr.bf16.mxu0 0
        %1509 = vmatpush1.bf16.msra.mxu0 0
        %1510 = vmatprep.subr.bf16.mxu0 0
        %1511 = vmatpush1.bf16.msra.mxu0 0
        %1512 = vmatprep.subr.bf16.mxu0 0
        %1513 = vmatpush1.bf16.msra.mxu0 0
        %1514 = vmatprep.subr.bf16.mxu0 0
        %1515 = vmatpush1.bf16.msra.mxu0 0
        %1516 = vmatprep.subr.bf16.mxu0 0
        %1517 = vmatpush1.bf16.msra.mxu0 0
        %1518 = vmatprep.subr.bf16.mxu0 0
        %1519 = vmatpush1.bf16.msra.mxu0 0
        %1520 = vmatprep.mubr.bf16.mxu0 0
        %1521 = vmatmul.mubr.bf16.gmra.mrb[0].mxu0 %v1311
        %v1522 = vpop.f32.mrb[0].mxu0
        %v1523 = vadd.f32 0.0, %v1522
        %v1524 = vpop.f32.mrb[0].mxu0
        %v1525 = vpop.f32.mrb[0].mxu0
        %v1526 = vpop.f32.mrb[0].mxu0
        %1527 = vdwg.mxu0
        %v1529 = vsel %vm1060, %v1306, 0
        %1531 = vmatprep.subr.bf16.mxu0 0
        %1532 = vmatpush1.bf16.msra.mxu0 %v1529
        %1533 = vmatprep.subr.bf16.mxu0 0
        %1534 = vmatpush1.bf16.msra.mxu0 0
        %1535 = vmatprep.subr.bf16.mxu0 0
        %1536 = vmatpush1.bf16.msra.mxu0 0
        %1537 = vmatprep.subr.bf16.mxu0 0
        %1538 = vmatpush1.bf16.msra.mxu0 0
        %1539 = vmatprep.subr.bf16.mxu0 0
        %1540 = vmatpush1.bf16.msra.mxu0 0
        %1541 = vmatprep.subr.bf16.mxu0 0
        %1542 = vmatpush1.bf16.msra.mxu0 0
        %1543 = vmatprep.subr.bf16.mxu0 0
        %1544 = vmatpush1.bf16.msra.mxu0 0
        %1545 = vmatprep.subr.bf16.mxu0 0
        %1546 = vmatpush1.bf16.msra.mxu0 0
        %1547 = vmatprep.subr.bf16.mxu0 0
        %1548 = vmatpush1.bf16.msra.mxu0 0
        %1549 = vmatprep.subr.bf16.mxu0 0
        %1550 = vmatpush1.bf16.msra.mxu0 0
        %1551 = vmatprep.subr.bf16.mxu0 0
        %1552 = vmatpush1.bf16.msra.mxu0 0
        %1553 = vmatprep.subr.bf16.mxu0 0
        %1554 = vmatpush1.bf16.msra.mxu0 0
        %1555 = vmatprep.subr.bf16.mxu0 0
        %1556 = vmatpush1.bf16.msra.mxu0 0
        %1557 = vmatprep.subr.bf16.mxu0 0
        %1558 = vmatpush1.bf16.msra.mxu0 0
        %1559 = vmatprep.subr.bf16.mxu0 0
        %1560 = vmatpush1.bf16.msra.mxu0 0
        %1561 = vmatprep.subr.bf16.mxu0 0
        %1562 = vmatpush1.bf16.msra.mxu0 0
        %1563 = vmatprep.mubr.bf16.mxu0 0
        %1564 = vmatmul.mubr.bf16.gmra.mrb[0].mxu0 %v1311
        %v1565 = vpop.f32.mrb[0].mxu0
        %v1566 = vadd.f32 0.0, %v1565
        %v1567 = vpop.f32.mrb[0].mxu0
        %v1568 = vpop.f32.mrb[0].mxu0
        %v1569 = vpop.f32.mrb[0].mxu0
        %1570 = vdwg.mxu0
        %v1572 = vsel %vm1060, %v1307, 0
        %1574 = vmatprep.subr.bf16.mxu0 0
        %1575 = vmatpush1.bf16.msra.mxu0 %v1572
        %1576 = vmatprep.subr.bf16.mxu0 0
        %1577 = vmatpush1.bf16.msra.mxu0 0
        %1578 = vmatprep.subr.bf16.mxu0 0
        %1579 = vmatpush1.bf16.msra.mxu0 0
        %1580 = vmatprep.subr.bf16.mxu0 0
        %1581 = vmatpush1.bf16.msra.mxu0 0
        %1582 = vmatprep.subr.bf16.mxu0 0
        %1583 = vmatpush1.bf16.msra.mxu0 0
        %1584 = vmatprep.subr.bf16.mxu0 0
        %1585 = vmatpush1.bf16.msra.mxu0 0
        %1586 = vmatprep.subr.bf16.mxu0 0
        %1587 = vmatpush1.bf16.msra.mxu0 0
        %1588 = vmatprep.subr.bf16.mxu0 0
        %1589 = vmatpush1.bf16.msra.mxu0 0
        %1590 = vmatprep.subr.bf16.mxu0 0
        %1591 = vmatpush1.bf16.msra.mxu0 0
        %1592 = vmatprep.subr.bf16.mxu0 0
        %1593 = vmatpush1.bf16.msra.mxu0 0
        %1594 = vmatprep.subr.bf16.mxu0 0
        %1595 = vmatpush1.bf16.msra.mxu0 0
        %1596 = vmatprep.subr.bf16.mxu0 0
        %1597 = vmatpush1.bf16.msra.mxu0 0
        %1598 = vmatprep.subr.bf16.mxu0 0
        %1599 = vmatpush1.bf16.msra.mxu0 0
        %1600 = vmatprep.subr.bf16.mxu0 0
        %1601 = vmatpush1.bf16.msra.mxu0 0
        %1602 = vmatprep.subr.bf16.mxu0 0
        %1603 = vmatpush1.bf16.msra.mxu0 0
        %1604 = vmatprep.subr.bf16.mxu0 0
        %1605 = vmatpush1.bf16.msra.mxu0 0
        %1606 = vmatprep.mubr.bf16.mxu0 0
        %1607 = vmatmul.mubr.bf16.gmra.mrb[0].mxu0 %v1311
        %v1608 = vpop.f32.mrb[0].mxu0
        %v1609 = vadd.f32 0.0, %v1608
        %v1610 = vpop.f32.mrb[0].mxu0
        %v1611 = vpop.f32.mrb[0].mxu0
        %v1612 = vpop.f32.mrb[0].mxu0
        %1613 = vdwg.mxu0
        %v1615 = vsel %vm1060, %v1308, 0
        %1617 = vmatprep.subr.bf16.mxu0 0
        %1618 = vmatpush1.bf16.msra.mxu0 %v1615
        %1619 = vmatprep.subr.bf16.mxu0 0
        %1620 = vmatpush1.bf16.msra.mxu0 0
        %1621 = vmatprep.subr.bf16.mxu0 0
        %1622 = vmatpush1.bf16.msra.mxu0 0
        %1623 = vmatprep.subr.bf16.mxu0 0
        %1624 = vmatpush1.bf16.msra.mxu0 0
        %1625 = vmatprep.subr.bf16.mxu0 0
        %1626 = vmatpush1.bf16.msra.mxu0 0
        %1627 = vmatprep.subr.bf16.mxu0 0
        %1628 = vmatpush1.bf16.msra.mxu0 0
        %1629 = vmatprep.subr.bf16.mxu0 0
        %1630 = vmatpush1.bf16.msra.mxu0 0
        %1631 = vmatprep.subr.bf16.mxu0 0
        %1632 = vmatpush1.bf16.msra.mxu0 0
        %1633 = vmatprep.subr.bf16.mxu0 0
        %1634 = vmatpush1.bf16.msra.mxu0 0
        %1635 = vmatprep.subr.bf16.mxu0 0
        %1636 = vmatpush1.bf16.msra.mxu0 0
        %1637 = vmatprep.subr.bf16.mxu0 0
        %1638 = vmatpush1.bf16.msra.mxu0 0
        %1639 = vmatprep.subr.bf16.mxu0 0
        %1640 = vmatpush1.bf16.msra.mxu0 0
        %1641 = vmatprep.subr.bf16.mxu0 0
        %1642 = vmatpush1.bf16.msra.mxu0 0
        %1643 = vmatprep.subr.bf16.mxu0 0
        %1644 = vmatpush1.bf16.msra.mxu0 0
        %1645 = vmatprep.subr.bf16.mxu0 0
        %1646 = vmatpush1.bf16.msra.mxu0 0
        %1647 = vmatprep.subr.bf16.mxu0 0
        %1648 = vmatpush1.bf16.msra.mxu0 0
        %1649 = vmatprep.mubr.bf16.mxu0 0
        %1650 = vmatmul.mubr.bf16.gmra.mrb[0].mxu0 %v1311
        %v1651 = vpop.f32.mrb[0].mxu0
        %v1652 = vadd.f32 0.0, %v1651
        %v1653 = vpop.f32.mrb[0].mxu0
        %v1654 = vpop.f32.mrb[0].mxu0
        %v1655 = vpop.f32.mrb[0].mxu0
        %1656 = vdwg.mxu0
        %v1657 = vcombine.low %v1351, %v1437
        %v1658 = vcombine.high %v1351, %v1437
        %v1660 = vunpack.c.l.s4 1983009808
        %v1661 = vunpack.c.0.s8 %v1660
        %v1662 = vlaneseq
        %v1663 = vshrl.u32 %v1662, 7
        %v1664 = vsub.s32 %v1661, %v1663
        %v1665 = vrot.slane %v1657, %v1664
        %v1667 = vunpack.c.l.s4 1983009808
        %v1668 = vunpack.c.0.s8 %v1667
        %v1669 = vlaneseq
        %v1670 = vshrl.u32 %v1669, 7
        %v1671 = vsub.s32 %v1668, %v1670
        %v1672 = vrot.slane %v1658, %v1671
        %v1673 = vcombine.low %v1394, %v1480
        %v1674 = vcombine.high %v1394, %v1480
        %v1676 = vunpack.c.l.s4 1983009808
        %v1677 = vunpack.c.0.s8 %v1676
        %v1678 = vlaneseq
        %v1679 = vshrl.u32 %v1678, 7
        %v1680 = vsub.s32 %v1677, %v1679
        %v1681 = vrot.slane %v1673, %v1680
        %v1683 = vunpack.c.l.s4 1983009808
        %v1684 = vunpack.c.0.s8 %v1683
        %v1685 = vlaneseq
        %v1686 = vshrl.u32 %v1685, 7
        %v1687 = vsub.s32 %v1684, %v1686
        %v1688 = vrot.slane %v1674, %v1687
        %v1689 = vcombine.low %v1523, %v1609
        %v1690 = vcombine.high %v1523, %v1609
        %v1692 = vunpack.c.l.s4 1983009808
        %v1693 = vunpack.c.0.s8 %v1692
        %v1694 = vlaneseq
        %v1695 = vshrl.u32 %v1694, 7
        %v1696 = vsub.s32 %v1693, %v1695
        %v1697 = vrot.slane %v1689, %v1696
        %v1699 = vunpack.c.l.s4 1983009808
        %v1700 = vunpack.c.0.s8 %v1699
        %v1701 = vlaneseq
        %v1702 = vshrl.u32 %v1701, 7
        %v1703 = vsub.s32 %v1700, %v1702
        %v1704 = vrot.slane %v1690, %v1703
        %v1705 = vcombine.low %v1566, %v1652
        %v1706 = vcombine.high %v1566, %v1652
        %v1708 = vunpack.c.l.s4 1983009808
        %v1709 = vunpack.c.0.s8 %v1708
        %v1710 = vlaneseq
        %v1711 = vshrl.u32 %v1710, 7
        %v1712 = vsub.s32 %v1709, %v1711
        %v1713 = vrot.slane %v1705, %v1712
        %v1715 = vunpack.c.l.s4 1983009808
        %v1716 = vunpack.c.0.s8 %v1715
        %v1717 = vlaneseq
        %v1718 = vshrl.u32 %v1717, 7
        %v1719 = vsub.s32 %v1716, %v1718
        %v1720 = vrot.slane %v1706, %v1719
        %v1721 = vcombine.low %v1665, %v1681
        %v1722 = vcombine.high %v1665, %v1681
        %v1724 = vunpack.c.l.s4 1934713408
        %v1725 = vunpack.c.0.s8 %v1724
        %v1726 = vlaneseq
        %v1727 = vshrl.u32 %v1726, 7
        %v1728 = vsub.s32 %v1725, %v1727
        %v1729 = vrot.slane %v1721, %v1728
        %v1731 = vunpack.c.l.s4 1934713408
        %v1732 = vunpack.c.0.s8 %v1731
        %v1733 = vlaneseq
        %v1734 = vshrl.u32 %v1733, 7
        %v1735 = vsub.s32 %v1732, %v1734
        %v1736 = vrot.slane %v1722, %v1735
        %v1737 = vcombine.low %v1672, %v1688
        %v1738 = vcombine.high %v1672, %v1688
        %v1740 = vunpack.c.l.s4 1934713408
        %v1741 = vunpack.c.0.s8 %v1740
        %v1742 = vlaneseq
        %v1743 = vshrl.u32 %v1742, 7
        %v1744 = vsub.s32 %v1741, %v1743
        %v1745 = vrot.slane %v1737, %v1744
        %v1747 = vunpack.c.l.s4 1934713408
        %v1748 = vunpack.c.0.s8 %v1747
        %v1749 = vlaneseq
        %v1750 = vshrl.u32 %v1749, 7
        %v1751 = vsub.s32 %v1748, %v1750
        %v1752 = vrot.slane %v1738, %v1751
        %v1753 = vcombine.low %v1697, %v1713
        %v1754 = vcombine.high %v1697, %v1713
        %v1756 = vunpack.c.l.s4 1934713408
        %v1757 = vunpack.c.0.s8 %v1756
        %v1758 = vlaneseq
        %v1759 = vshrl.u32 %v1758, 7
        %v1760 = vsub.s32 %v1757, %v1759
        %v1761 = vrot.slane %v1753, %v1760
        %v1763 = vunpack.c.l.s4 1934713408
        %v1764 = vunpack.c.0.s8 %v1763
        %v1765 = vlaneseq
        %v1766 = vshrl.u32 %v1765, 7
        %v1767 = vsub.s32 %v1764, %v1766
        %v1768 = vrot.slane %v1754, %v1767
        %v1769 = vcombine.low %v1704, %v1720
        %v1770 = vcombine.high %v1704, %v1720
        %v1772 = vunpack.c.l.s4 1934713408
        %v1773 = vunpack.c.0.s8 %v1772
        %v1774 = vlaneseq
        %v1775 = vshrl.u32 %v1774, 7
        %v1776 = vsub.s32 %v1773, %v1775
        %v1777 = vrot.slane %v1769, %v1776
        %v1779 = vunpack.c.l.s4 1934713408
        %v1780 = vunpack.c.0.s8 %v1779
        %v1781 = vlaneseq
        %v1782 = vshrl.u32 %v1781, 7
        %v1783 = vsub.s32 %v1780, %v1782
        %v1784 = vrot.slane %v1770, %v1783
        %v1785 = vcombine.low %v1729, %v1761
        %v1786 = vcombine.high %v1729, %v1761
        %v1787 = vcombine.low %v1736, %v1768
        %v1788 = vcombine.high %v1736, %v1768
        %v1789 = vcombine.low %v1745, %v1777
        %v1790 = vcombine.high %v1745, %v1777
        %v1791 = vcombine.low %v1752, %v1784
        %v1792 = vcombine.high %v1752, %v1784
        %vm1793 = vcmask 130048
        %1794 = vst.msk [vmem:[%s334] sm:$0xff] %vm1793, %v1785
        %1795 = vst.msk [vmem:[%s334 + $0x8] sm:$0xff] %vm1793, %v1786
        %1796 = vst.msk [vmem:[%s334 + $0x10] sm:$0xff] %vm1793, %v1787
        %1797 = vst.msk [vmem:[%s334 + $0x18] sm:$0xff] %vm1793, %v1788
        %1798 = vst.msk [vmem:[%s334 + $0x20] sm:$0xff] %vm1793, %v1789
        %1799 = vst.msk [vmem:[%s334 + $0x28] sm:$0xff] %vm1793, %v1790
        %1800 = vst.msk [vmem:[%s334 + $0x30] sm:$0xff] %vm1793, %v1791
        %1801 = vst.msk [vmem:[%s334 + $0x38] sm:$0xff] %vm1793, %v1792
        %s1802 = sand.u32 %s165, 1
        %s1803 = scalar_lea.sflag [#allocation4], %s1802
        %s1804 = sand.u32 %s165, 1
        %s1805 = smul.addr %s1804, 64
        %s1806 = scalar_lea.vmem [#allocation13], %s1805
        // Predicated region
        $region69: #{vit_seg_forward.7} parent=43 // pred_check
          %p1807 = pneg %p175
        $region70: #{vit_seg_forward.7} parent=43 // pred_check_branch
          %1809 = sbr.rel (%p1807) target = $region72
        $region71: #{vit_seg_forward.7} parent=43 // pred_region
          %s1811 = ssub.s32 1024, 1024
          %1812 = vsyncadd %s1803, %s1811
          %s1813 = smul.addr %s26, 8
          %s1814 = smul.addr %s1813, 128
          %s1815 = scalar_lea.hbm %s6, %s1814
          %s1816 = sshll.u32 %s1806, 4
          %s1817 = int_to_ptr.vmem [resolvable:$true] %s1816
          %1822 = dma.vmem_to_hbm [thread:$0]  %s1817, 1024, %s1815, %s1803, 128, 128, 8
        $region72: #{vit_seg_forward.7} parent=43 // pred_fallthru
          _
      $region44: #{vit_seg_forward.7} parent=5 // pred_fallthru
        _
      %p1823 = scmp.le.s32.totalorder 2, %s21
      // Predicated region
      $region73: #{vit_seg_forward.7} parent=5 // pred_check
        %p1824 = pneg %p1823
      $region74: #{vit_seg_forward.7} parent=5 // pred_check_branch
        %1826 = sbr.rel (%p1824) target = $region76
      $region75: #{vit_seg_forward.7} parent=5 // pred_region
        %s1827 = ssub.s32 %s21, 2
        // Predicated region
        $region77: #{vit_seg_forward.7} parent=75 // pred_check
          %p1828 = pneg %p181
        $region78: #{vit_seg_forward.7} parent=75 // pred_check_branch
          %1830 = sbr.rel (%p1828) target = $region80
        $region79: #{vit_seg_forward.7} parent=75 // pred_region
          %s1831 = sand.u32 %s166, 1
          %s1832 = scalar_lea.sflag [#allocation4], %s1831
          %s1833 = sand.u32 %s166, 1
          %s1834 = smul.addr %s1833, 64
          %s1835 = scalar_lea.vmem [#allocation13], %s1834
          %1836 = dma.done %s1832, 1024
        $region80: #{vit_seg_forward.7} parent=75 // pred_fallthru
          _
      $region76: #{vit_seg_forward.7} parent=5 // pred_fallthru
        _
    $region6: #{vit_seg_forward.7} parent=1 // loop_footer
      %s25 = sadd.s32 1, %s21
    $region7: #{vit_seg_forward.7} parent=1 // loop_footer_branch
      %20 = sbr.rel target = $region3
    $region8: #{vit_seg_forward.7} parent=1 // loop_exit
      _
    %1837 = vsyncpa [#allocation3], 1
    %s1838 = scalar_lea.sflag [#allocation3], 1
    %1839 = vsyncpa %s1838, 1
    %1840 = vsyncpa [#allocation6], 1
    %1841 = vsyncpa [#allocation9], 1
    %1842 = vsyncpa [#allocation12], 1
    %1843 = vsyncpa [#allocation4], 1
    %s1844 = scalar_lea.sflag [#allocation4], 1
    %1845 = vsyncpa %s1844, 1

// kernel: vit_seg_forward.9
$region0: #{vit_seg_forward.9}
  #allocation0 [shape = 'u32[]', space=smem, size = 0x4, offset = 0x4, fixed_abs, tag = 'smem constant byte address 0x4 - core index']
  #allocation1 [shape = 'u32[144,128]{1,0:T(1,128)}', space=vmem, size = 0x12000, scoped, tag = 'internal scratch']
  %s0 = inlined_call_operand.hbm [shape: f32[512,8], index: 0, kind: input, shape index: {}]
  %s1 = inlined_call_operand.hbm [shape: bf16[8,128], index: 1, kind: input, shape index: {}]
  %s2 = inlined_call_operand.vmem [shape: f32[1,128], index: 2, kind: input, shape index: {}]
  %s3 = inlined_call_operand.vmem [shape: f32[512,128], index: 3, kind: output, shape index: {}]
  %s4 = sld [smem:[#allocation0]]
  $region53: #{vit_seg_forward.9} parent=0
    _
  %s6 = ssub.s32 1, %s4
  %s7 = scalar_select 0, %s6, %s4
  $region1: #{vit_seg_forward.9} parent=0
    #allocation2 [shape = 'u8[262144]{0}', space=vmem, size = 0x40000, scoped, tag = 'input window, operand 0']
    #allocation3 [shape = 's32[2]{0}', space=sflag, size = 0x8, scoped, tag = 'scoped memory for vit_seg_forward.9']
    #allocation4 [shape = 'u8[2048]{0}', space=vmem, size = 0x800, scoped, tag = 'input window, operand 1, single buffered']
    #allocation5 [shape = 's32[1]{0}', space=sflag, size = 0x4, scoped, tag = 'scoped memory for vit_seg_forward.9']
    %8 = vsyncpa [#allocation3], 0
    %s9 = scalar_lea.sflag [#allocation3], 1
    %10 = vsyncpa %s9, 0
    %11 = vsyncpa [#allocation5], 0
    loop: start=0, step=1, limit=4
    $region2: #{vit_seg_forward.9} parent=1 // loop_pre_header
      _
    $region3: #{vit_seg_forward.9} parent=1 // loop_header
      %s13 = sphi 0, %s17
      %p14 = scmp.ge.s32.totalorder %s13, 4
      %s23 = sphi 0, %s25
      %s26 = sphi 0, %s23
      %s27 = sphi 0, %s26
      %s43 = sphi 0, %s27
      %s47 = sphi 0, %s47
      %s49 = sphi 0, %s47
      %s50 = sphi 0, %s49
      %s64 = sphi 0, %s50
      %s68 = sphi 0, %s68
      %s70 = sphi 0, %s68
      %s71 = sphi 0, %s70
      %s85 = sphi 0, %s71
      %s91 = sphi 0, %s93
      %s94 = sphi 0, %s91
      %s95 = sphi 0, %s94
      %s111 = sphi 0, %s95
    $region4: #{vit_seg_forward.9} parent=1 // loop_header_branch
      %16 = sbr.rel (%p14) target = $region8
    $region5: #{vit_seg_forward.9} parent=1 // loop_body
      %s18 = ssub.s32 %s13, 1
      %s19 = ssub.s32 %s13, 2
      %s20 = sadd.s32 %s13, 1
      %s21 = ssub.s32 %s13, %s20
      %p22 = scmp.eq.s32.totalorder %s21, 0
      %s24 = sadd.s32 %s23, 1
      %s25 = scalar_select %p22, %s23, %s24
      %p28 = pneg %p22
      %p29 = scmp.eq.s32.totalorder %s13, 1
      %p30 = por %p28, %p29
      %p31 = scmp.ne.s32.totalorder %s23, %s26
      %p32 = scmp.eq.s32.totalorder %s13, 0
      %p33 = por %p31, %p32
      %p34 = scmp.ne.s32.totalorder %s23, %s26
      %p35 = scmp.eq.s32.totalorder %s18, 1
      %p36 = por %p34, %p35
      %p37 = scmp.ne.s32.totalorder %s26, %s27
      %p38 = scmp.eq.s32.totalorder %s18, 0
      %p39 = por %p37, %p38
      %p40 = scmp.ne.s32.totalorder %s26, %s27
      %p41 = scmp.eq.s32.totalorder %s19, 1
      %p42 = por %p40, %p41
      %p44 = scmp.ne.s32.totalorder %s27, %s43
      %p45 = scmp.eq.s32.totalorder %s19, 0
      %p46 = por %p44, %p45
      %s48 = sadd.s32 %s47, 1
      %p51 = scmp.eq.s32.totalorder %s13, 1
      %p52 = scmp.ne.s32.totalorder %s47, %s49
      %p53 = scmp.eq.s32.totalorder %s13, 0
      %p54 = por %p52, %p53
      %p55 = scmp.ne.s32.totalorder %s47, %s49
      %p56 = scmp.eq.s32.totalorder %s18, 1
      %p57 = por %p55, %p56
      %p58 = scmp.ne.s32.totalorder %s49, %s50
      %p59 = scmp.eq.s32.totalorder %s18, 0
      %p60 = por %p58, %p59
      %p61 = scmp.ne.s32.totalorder %s49, %s50
      %p62 = scmp.eq.s32.totalorder %s19, 1
      %p63 = por %p61, %p62
      %p65 = scmp.ne.s32.totalorder %s50, %s64
      %p66 = scmp.eq.s32.totalorder %s19, 0
      %p67 = por %p65, %p66
      %s69 = sadd.s32 %s68, 1
      %p72 = scmp.eq.s32.totalorder %s13, 1
      %p73 = scmp.ne.s32.totalorder %s68, %s70
      %p74 = scmp.eq.s32.totalorder %s13, 0
      %p75 = por %p73, %p74
      %p76 = scmp.ne.s32.totalorder %s68, %s70
      %p77 = scmp.eq.s32.totalorder %s18, 1
      %p78 = por %p76, %p77
      %p79 = scmp.ne.s32.totalorder %s70, %s71
      %p80 = scmp.eq.s32.totalorder %s18, 0
      %p81 = por %p79, %p80
      %p82 = scmp.ne.s32.totalorder %s70, %s71
      %p83 = scmp.eq.s32.totalorder %s19, 1
      %p84 = por %p82, %p83
      %p86 = scmp.ne.s32.totalorder %s71, %s85
      %p87 = scmp.eq.s32.totalorder %s19, 0
      %p88 = por %p86, %p87
      %s89 = ssub.s32 %s13, %s20
      %p90 = scmp.eq.s32.totalorder %s89, 0
      %s92 = sadd.s32 %s91, 1
      %s93 = scalar_select %p90, %s91, %s92
      %p96 = pneg %p90
      %p97 = scmp.eq.s32.totalorder %s13, 1
      %p98 = por %p96, %p97
      %p99 = scmp.ne.s32.totalorder %s91, %s94
      %p100 = scmp.eq.s32.totalorder %s13, 0
      %p101 = por %p99, %p100
      %p102 = scmp.ne.s32.totalorder %s91, %s94
      %p103 = scmp.eq.s32.totalorder %s18, 1
      %p104 = por %p102, %p103
      %p105 = scmp.ne.s32.totalorder %s94, %s95
      %p106 = scmp.eq.s32.totalorder %s18, 0
      %p107 = por %p105, %p106
      %p108 = scmp.ne.s32.totalorder %s94, %s95
      %p109 = scmp.eq.s32.totalorder %s19, 1
      %p110 = por %p108, %p109
      %p112 = scmp.ne.s32.totalorder %s95, %s111
      %p113 = scmp.eq.s32.totalorder %s19, 0
      %p114 = por %p112, %p113
      %p115 = scmp.le.s32.totalorder 1, %s13
      %p116 = scmp.lt.s32.totalorder %s13, 3
      %p117 = pnand %p115, %p116
      %p118 = pneg %p117
      // Predicated region
      $region9: #{vit_seg_forward.9} parent=5 // pred_check
        _
      $region10: #{vit_seg_forward.9} parent=5 // pred_check_branch
        %120 = sbr.rel (%p117) target = $region12
      $region11: #{vit_seg_forward.9} parent=5 // pred_region
        %s121 = ssub.s32 %s13, 1
        // Predicated region
        $region13: #{vit_seg_forward.9} parent=11 // pred_check
          %p122 = pneg %p60
        $region14: #{vit_seg_forward.9} parent=11 // pred_check_branch
          %124 = sbr.rel (%p122) target = $region16
        $region15: #{vit_seg_forward.9} parent=11 // pred_region
          %s126 = ssub.s32 64, 64
          %127 = vsyncadd [#allocation5], %s126
          %s129 = sshll.u32 [#allocation4], 4
          %s130 = int_to_ptr.vmem [resolvable:$true] %s129
          %132 = dma.hbm_to_vmem [thread:$0]  %s1, 64, %s130, [#allocation5]
        $region16: #{vit_seg_forward.9} parent=11 // pred_fallthru
          _
        // Predicated region
        $region17: #{vit_seg_forward.9} parent=11 // pred_check
          %p133 = pneg %p81
        $region18: #{vit_seg_forward.9} parent=11 // pred_check_branch
          %135 = sbr.rel (%p133) target = $region20
        $region19: #{vit_seg_forward.9} parent=11 // pred_region
          _
        $region20: #{vit_seg_forward.9} parent=11 // pred_fallthru
          _
      $region12: #{vit_seg_forward.9} parent=5 // pred_fallthru
        _
      %p136 = scmp.lt.s32.totalorder %s13, 2
      // Predicated region
      $region21: #{vit_seg_forward.9} parent=5 // pred_check
        %p137 = pneg %p136
      $region22: #{vit_seg_forward.9} parent=5 // pred_check_branch
        %139 = sbr.rel (%p137) target = $region24
      $region23: #{vit_seg_forward.9} parent=5 // pred_region
        // Predicated region
        $region25: #{vit_seg_forward.9} parent=23 // pred_check
          %p140 = pneg %p33
        $region26: #{vit_seg_forward.9} parent=23 // pred_check_branch
          %142 = sbr.rel (%p140) target = $region28
        $region27: #{vit_seg_forward.9} parent=23 // pred_region
          %s143 = sand.u32 %s23, 1
          %s144 = scalar_lea.sflag [#allocation3], %s143
          %s145 = sand.u32 %s23, 1
          %s146 = smul.addr %s145, 256
          %s147 = scalar_lea.vmem [#allocation2], %s146
          %s148 = smul.u32 32, %s13
          %s150 = ssub.s32 4096, 4096
          %151 = vsyncadd %s144, %s150
          %s152 = smul.addr %s148, 128
          %s153 = scalar_lea.hbm %s0, %s152
          %s154 = sshll.u32 %s147, 4
          %s155 = int_to_ptr.vmem [resolvable:$true] %s154
          %160 = dma.hbm_to_vmem [thread:$0]  %s153, 4096, %s155, %s144, 128, 128, 8
        $region28: #{vit_seg_forward.9} parent=23 // pred_fallthru
          _
      $region24: #{vit_seg_forward.9} parent=5 // pred_fallthru
        _
      %p161 = scmp.le.s32.totalorder 1, %s13
      %p162 = scmp.lt.s32.totalorder %s13, 3
      %p163 = pnand %p161, %p162
      %p164 = pneg %p163
      // Predicated region
      $region29: #{vit_seg_forward.9} parent=5 // pred_check
        _
      $region30: #{vit_seg_forward.9} parent=5 // pred_check_branch
        %166 = sbr.rel (%p163) target = $region32
      $region31: #{vit_seg_forward.9} parent=5 // pred_region
        %s167 = ssub.s32 %s13, 1
        %s168 = sand.u32 %s26, 1
        %s169 = scalar_lea.sflag [#allocation3], %s168
        %s170 = sand.u32 %s26, 1
        %s171 = smul.addr %s170, 256
        %s172 = scalar_lea.vmem [#allocation2], %s171
        // Predicated region
        $region33: #{vit_seg_forward.9} parent=31 // pred_check
          %p173 = pneg %p39
        $region34: #{vit_seg_forward.9} parent=31 // pred_check_branch
          %175 = sbr.rel (%p173) target = $region36
        $region35: #{vit_seg_forward.9} parent=31 // pred_region
          %176 = dma.done %s169, 4096
        $region36: #{vit_seg_forward.9} parent=31 // pred_fallthru
          _
        // Predicated region
        $region37: #{vit_seg_forward.9} parent=31 // pred_check
          %p177 = pneg %p60
        $region38: #{vit_seg_forward.9} parent=31 // pred_check_branch
          %179 = sbr.rel (%p177) target = $region40
        $region39: #{vit_seg_forward.9} parent=31 // pred_region
          %180 = dma.done [#allocation5], 64
        $region40: #{vit_seg_forward.9} parent=31 // pred_fallthru
          _
        %s181 = sand.u32 %s26, 1
        %s182 = scalar_lea.sflag [#allocation3], %s181
        %s183 = sand.u32 %s26, 1
        %s184 = smul.addr %s183, 256
        %s185 = scalar_lea.vmem [#allocation2], %s184
        %p186 = pneg %p39
        %p187 = pneg %p36
        %p188 = pneg %p60
        %p189 = pneg %p57
        %p190 = pneg %p81
        %p191 = pneg %p78
        %p192 = pneg %p107
        %p193 = pneg %p104
        %s194 = smul.u32 32, %s18
        %p195 = scmp.lt.s32.totalorder %s194, 63
        %s196 = scalar_select %p195, %s194, 63
        %s197 = smul.addr %s196, 8
        %s198 = scalar_lea.vmem %s3, %s197
        %s199 = smul.u32 32, %s18
        %s200 = smul.u32 32, %s18
        %p201 = scmp.lt.s32.totalorder %s200, 63
        %s202 = scalar_select %p201, %s200, 63
        %s203 = smul.addr %s202, 8
        %s204 = scalar_lea.vmem %s3, %s203
        %s205 = smul.u32 32, %s18
        %v207 = vld [vmem:[%s172] sm:$0xff]
        %v208 = vld [vmem:[%s172 + $0x8] sm:$0xff]
        %v209 = vld [vmem:[%s172 + $0x10] sm:$0xff]
        %v210 = vld [vmem:[%s172 + $0x18] sm:$0xff]
        %v211 = vld [vmem:[%s172 + $0x20] sm:$0xff]
        %v212 = vld [vmem:[%s172 + $0x28] sm:$0xff]
        %v213 = vld [vmem:[%s172 + $0x30] sm:$0xff]
        %v214 = vld [vmem:[%s172 + $0x38] sm:$0xff]
        %v215 = vld [vmem:[%s172 + $0x40] sm:$0xff]
        %v216 = vld [vmem:[%s172 + $0x48] sm:$0xff]
        %v217 = vld [vmem:[%s172 + $0x50] sm:$0xff]
        %v218 = vld [vmem:[%s172 + $0x58] sm:$0xff]
        %v219 = vld [vmem:[%s172 + $0x60] sm:$0xff]
        %v220 = vld [vmem:[%s172 + $0x68] sm:$0xff]
        %v221 = vld [vmem:[%s172 + $0x70] sm:$0xff]
        %v222 = vld [vmem:[%s172 + $0x78] sm:$0xff]
        %v223 = vld [vmem:[%s172 + $0x80] sm:$0xff]
        %v224 = vld [vmem:[%s172 + $0x88] sm:$0xff]
        %v225 = vld [vmem:[%s172 + $0x90] sm:$0xff]
        %v226 = vld [vmem:[%s172 + $0x98] sm:$0xff]
        %v227 = vld [vmem:[%s172 + $0xa0] sm:$0xff]
        %v228 = vld [vmem:[%s172 + $0xa8] sm:$0xff]
        %v229 = vld [vmem:[%s172 + $0xb0] sm:$0xff]
        %v230 = vld [vmem:[%s172 + $0xb8] sm:$0xff]
        %v231 = vld [vmem:[%s172 + $0xc0] sm:$0xff]
        %v232 = vld [vmem:[%s172 + $0xc8] sm:$0xff]
        %v233 = vld [vmem:[%s172 + $0xd0] sm:$0xff]
        %v234 = vld [vmem:[%s172 + $0xd8] sm:$0xff]
        %v235 = vld [vmem:[%s172 + $0xe0] sm:$0xff]
        %v236 = vld [vmem:[%s172 + $0xe8] sm:$0xff]
        %v237 = vld [vmem:[%s172 + $0xf0] sm:$0xff]
        %v238 = vld [vmem:[%s172 + $0xf8] sm:$0xff]
        %v239 = vpack.c.bf16 %v208, %v207
        %v240 = vpack.c.bf16 %v210, %v209
        %v241 = vpack.c.bf16 %v212, %v211
        %v242 = vpack.c.bf16 %v214, %v213
        %v243 = vpack.c.bf16 %v216, %v215
        %v244 = vpack.c.bf16 %v218, %v217
        %v245 = vpack.c.bf16 %v220, %v219
        %v246 = vpack.c.bf16 %v222, %v221
        %v247 = vpack.c.bf16 %v224, %v223
        %v248 = vpack.c.bf16 %v226, %v225
        %v249 = vpack.c.bf16 %v228, %v227
        %v250 = vpack.c.bf16 %v230, %v229
        %v251 = vpack.c.bf16 %v232, %v231
        %v252 = vpack.c.bf16 %v234, %v233
        %v253 = vpack.c.bf16 %v236, %v235
        %v254 = vpack.c.bf16 %v238, %v237
        %v255 = vld [vmem:[#allocation4] sm:$0xf]
        %v256 = vld [vmem:[%s2] sm:$0x1]
        %v258 = vlaneseq
        %v259 = vshrl.u32 %v258, 7
        %v260 = vsub.s32 0, %v259
        %v261 = vrot.slane %v256, %v260
        %vm263 = vcmask 64512
        %v265 = vsel %vm263, %v239, 0
        %v268 = vsel %vm263, %v240, 0
        %v271 = vsel %vm263, %v241, 0
        %v274 = vsel %vm263, %v242, 0
        %v277 = vsel %vm263, %v243, 0
        %v280 = vsel %vm263, %v244, 0
        %v283 = vsel %vm263, %v245, 0
        %v286 = vsel %vm263, %v246, 0
        %v289 = vsel %vm263, %v247, 0
        %v292 = vsel %vm263, %v248, 0
        %v295 = vsel %vm263, %v249, 0
        %v298 = vsel %vm263, %v250, 0
        %v301 = vsel %vm263, %v251, 0
        %v304 = vsel %vm263, %v252, 0
        %v307 = vsel %vm263, %v253, 0
        %v310 = vsel %vm263, %v254, 0
        %vm312 = vcmask 1043456
        %v314 = vsel %vm312, %v255, 0
        %316 = vmatprep.subr.bf16.mxu0 0
        %317 = vmatpush1.bf16.msra.mxu0 %v314
        %318 = vmatprep.subr.bf16.mxu0 0
        %319 = vmatpush1.bf16.msra.mxu0 0
        %320 = vmatprep.subr.bf16.mxu0 0
        %321 = vmatpush1.bf16.msra.mxu0 0
        %322 = vmatprep.subr.bf16.mxu0 0
        %323 = vmatpush1.bf16.msra.mxu0 0
        %324 = vmatprep.subr.bf16.mxu0 0
        %325 = vmatpush1.bf16.msra.mxu0 0
        %326 = vmatprep.subr.bf16.mxu0 0
        %327 = vmatpush1.bf16.msra.mxu0 0
        %328 = vmatprep.subr.bf16.mxu0 0
        %329 = vmatpush1.bf16.msra.mxu0 0
        %330 = vmatprep.subr.bf16.mxu0 0
        %331 = vmatpush1.bf16.msra.mxu0 0
        %332 = vmatprep.subr.bf16.mxu0 0
        %333 = vmatpush1.bf16.msra.mxu0 0
        %334 = vmatprep.subr.bf16.mxu0 0
        %335 = vmatpush1.bf16.msra.mxu0 0
        %336 = vmatprep.subr.bf16.mxu0 0
        %337 = vmatpush1.bf16.msra.mxu0 0
        %338 = vmatprep.subr.bf16.mxu0 0
        %339 = vmatpush1.bf16.msra.mxu0 0
        %340 = vmatprep.subr.bf16.mxu0 0
        %341 = vmatpush1.bf16.msra.mxu0 0
        %342 = vmatprep.subr.bf16.mxu0 0
        %343 = vmatpush1.bf16.msra.mxu0 0
        %344 = vmatprep.subr.bf16.mxu0 0
        %345 = vmatpush1.bf16.msra.mxu0 0
        %346 = vmatprep.subr.bf16.mxu0 0
        %347 = vmatpush1.bf16.msra.mxu0 0
        %348 = vmatprep.mubr.bf16.mxu0 0
        %349 = vmatmul.mubr.bf16.gmra.mrb[0].mxu0 %v265
        %v350 = vpop.f32.mrb[0].mxu0
        %v351 = vadd.f32 %v261, %v350
        %v352 = vpop.f32.mrb[0].mxu0
        %v353 = vpop.f32.mrb[0].mxu0
        %v354 = vadd.f32 %v261, %v353
        %v355 = vpop.f32.mrb[0].mxu0
        %356 = vmatprep.mubr.bf16.mxu0 0
        %357 = vmatmul.mubr.bf16.gmra.mrb[0].mxu0 %v268
        %v358 = vpop.f32.mrb[0].mxu0
        %v359 = vadd.f32 %v261, %v358
        %v360 = vpop.f32.mrb[0].mxu0
        %v361 = vpop.f32.mrb[0].mxu0
        %v362 = vadd.f32 %v261, %v361
        %v363 = vpop.f32.mrb[0].mxu0
        %364 = vmatprep.mubr.bf16.mxu0 0
        %365 = vmatmul.mubr.bf16.gmra.mrb[0].mxu0 %v271
        %v366 = vpop.f32.mrb[0].mxu0
        %v367 = vadd.f32 %v261, %v366
        %v368 = vpop.f32.mrb[0].mxu0
        %v369 = vpop.f32.mrb[0].mxu0
        %v370 = vadd.f32 %v261, %v369
        %v371 = vpop.f32.mrb[0].mxu0
        %372 = vmatprep.mubr.bf16.mxu0 0
        %373 = vmatmul.mubr.bf16.gmra.mrb[0].mxu0 %v274
        %v374 = vpop.f32.mrb[0].mxu0
        %v375 = vadd.f32 %v261, %v374
        %v376 = vpop.f32.mrb[0].mxu0
        %v377 = vpop.f32.mrb[0].mxu0
        %v378 = vadd.f32 %v261, %v377
        %v379 = vpop.f32.mrb[0].mxu0
        %380 = vmatprep.mubr.bf16.mxu0 0
        %381 = vmatmul.mubr.bf16.gmra.mrb[0].mxu0 %v277
        %v382 = vpop.f32.mrb[0].mxu0
        %v383 = vadd.f32 %v261, %v382
        %v384 = vpop.f32.mrb[0].mxu0
        %v385 = vpop.f32.mrb[0].mxu0
        %v386 = vadd.f32 %v261, %v385
        %v387 = vpop.f32.mrb[0].mxu0
        %388 = vmatprep.mubr.bf16.mxu0 0
        %389 = vmatmul.mubr.bf16.gmra.mrb[0].mxu0 %v280
        %v390 = vpop.f32.mrb[0].mxu0
        %v391 = vadd.f32 %v261, %v390
        %v392 = vpop.f32.mrb[0].mxu0
        %v393 = vpop.f32.mrb[0].mxu0
        %v394 = vadd.f32 %v261, %v393
        %v395 = vpop.f32.mrb[0].mxu0
        %396 = vmatprep.mubr.bf16.mxu0 0
        %397 = vmatmul.mubr.bf16.gmra.mrb[0].mxu0 %v283
        %v398 = vpop.f32.mrb[0].mxu0
        %v399 = vadd.f32 %v261, %v398
        %v400 = vpop.f32.mrb[0].mxu0
        %v401 = vpop.f32.mrb[0].mxu0
        %v402 = vadd.f32 %v261, %v401
        %v403 = vpop.f32.mrb[0].mxu0
        %404 = vmatprep.mubr.bf16.mxu0 0
        %405 = vmatmul.mubr.bf16.gmra.mrb[0].mxu0 %v286
        %v406 = vpop.f32.mrb[0].mxu0
        %v407 = vadd.f32 %v261, %v406
        %v408 = vpop.f32.mrb[0].mxu0
        %v409 = vpop.f32.mrb[0].mxu0
        %v410 = vadd.f32 %v261, %v409
        %v411 = vpop.f32.mrb[0].mxu0
        %412 = vmatprep.mubr.bf16.mxu0 0
        %413 = vmatmul.mubr.bf16.gmra.mrb[0].mxu0 %v289
        %v414 = vpop.f32.mrb[0].mxu0
        %v415 = vadd.f32 %v261, %v414
        %v416 = vpop.f32.mrb[0].mxu0
        %v417 = vpop.f32.mrb[0].mxu0
        %v418 = vadd.f32 %v261, %v417
        %v419 = vpop.f32.mrb[0].mxu0
        %420 = vmatprep.mubr.bf16.mxu0 0
        %421 = vmatmul.mubr.bf16.gmra.mrb[0].mxu0 %v292
        %v422 = vpop.f32.mrb[0].mxu0
        %v423 = vadd.f32 %v261, %v422
        %v424 = vpop.f32.mrb[0].mxu0
        %v425 = vpop.f32.mrb[0].mxu0
        %v426 = vadd.f32 %v261, %v425
        %v427 = vpop.f32.mrb[0].mxu0
        %428 = vmatprep.mubr.bf16.mxu0 0
        %429 = vmatmul.mubr.bf16.gmra.mrb[0].mxu0 %v295
        %v430 = vpop.f32.mrb[0].mxu0
        %v431 = vadd.f32 %v261, %v430
        %v432 = vpop.f32.mrb[0].mxu0
        %v433 = vpop.f32.mrb[0].mxu0
        %v434 = vadd.f32 %v261, %v433
        %v435 = vpop.f32.mrb[0].mxu0
        %436 = vmatprep.mubr.bf16.mxu0 0
        %437 = vmatmul.mubr.bf16.gmra.mrb[0].mxu0 %v298
        %v438 = vpop.f32.mrb[0].mxu0
        %v439 = vadd.f32 %v261, %v438
        %v440 = vpop.f32.mrb[0].mxu0
        %v441 = vpop.f32.mrb[0].mxu0
        %v442 = vadd.f32 %v261, %v441
        %v443 = vpop.f32.mrb[0].mxu0
        %444 = vmatprep.mubr.bf16.mxu0 0
        %445 = vmatmul.mubr.bf16.gmra.mrb[0].mxu0 %v301
        %v446 = vpop.f32.mrb[0].mxu0
        %v447 = vadd.f32 %v261, %v446
        %v448 = vpop.f32.mrb[0].mxu0
        %v449 = vpop.f32.mrb[0].mxu0
        %v450 = vadd.f32 %v261, %v449
        %v451 = vpop.f32.mrb[0].mxu0
        %452 = vmatprep.mubr.bf16.mxu0 0
        %453 = vmatmul.mubr.bf16.gmra.mrb[0].mxu0 %v304
        %v454 = vpop.f32.mrb[0].mxu0
        %v455 = vadd.f32 %v261, %v454
        %v456 = vpop.f32.mrb[0].mxu0
        %v457 = vpop.f32.mrb[0].mxu0
        %v458 = vadd.f32 %v261, %v457
        %v459 = vpop.f32.mrb[0].mxu0
        %460 = vmatprep.mubr.bf16.mxu0 0
        %461 = vmatmul.mubr.bf16.gmra.mrb[0].mxu0 %v307
        %v462 = vpop.f32.mrb[0].mxu0
        %v463 = vadd.f32 %v261, %v462
        %v464 = vpop.f32.mrb[0].mxu0
        %v465 = vpop.f32.mrb[0].mxu0
        %v466 = vadd.f32 %v261, %v465
        %v467 = vpop.f32.mrb[0].mxu0
        %468 = vmatprep.mubr.bf16.mxu0 0
        %469 = vmatmul.mubr.bf16.gmra.mrb[0].mxu0 %v310
        %v470 = vpop.f32.mrb[0].mxu0
        %v471 = vadd.f32 %v261, %v470
        %v472 = vpop.f32.mrb[0].mxu0
        %v473 = vpop.f32.mrb[0].mxu0
        %v474 = vadd.f32 %v261, %v473
        %v475 = vpop.f32.mrb[0].mxu0
        %476 = vdwg.mxu0
        %477 = vst [vmem:[%s204] sm:$0xff] %v351
        %478 = vst [vmem:[%s204 + $0x8] sm:$0xff] %v354
        %479 = vst [vmem:[%s204 + $0x10] sm:$0xff] %v359
        %480 = vst [vmem:[%s204 + $0x18] sm:$0xff] %v362
        %481 = vst [vmem:[%s204 + $0x20] sm:$0xff] %v367
        %482 = vst [vmem:[%s204 + $0x28] sm:$0xff] %v370
        %483 = vst [vmem:[%s204 + $0x30] sm:$0xff] %v375
        %484 = vst [vmem:[%s204 + $0x38] sm:$0xff] %v378
        %485 = vst [vmem:[%s204 + $0x40] sm:$0xff] %v383
        %486 = vst [vmem:[%s204 + $0x48] sm:$0xff] %v386
        %487 = vst [vmem:[%s204 + $0x50] sm:$0xff] %v391
        %488 = vst [vmem:[%s204 + $0x58] sm:$0xff] %v394
        %489 = vst [vmem:[%s204 + $0x60] sm:$0xff] %v399
        %490 = vst [vmem:[%s204 + $0x68] sm:$0xff] %v402
        %491 = vst [vmem:[%s204 + $0x70] sm:$0xff] %v407
        %492 = vst [vmem:[%s204 + $0x78] sm:$0xff] %v410
        %493 = vst [vmem:[%s204 + $0x80] sm:$0xff] %v415
        %494 = vst [vmem:[%s204 + $0x88] sm:$0xff] %v418
        %495 = vst [vmem:[%s204 + $0x90] sm:$0xff] %v423
        %496 = vst [vmem:[%s204 + $0x98] sm:$0xff] %v426
        %497 = vst [vmem:[%s204 + $0xa0] sm:$0xff] %v431
        %498 = vst [vmem:[%s204 + $0xa8] sm:$0xff] %v434
        %499 = vst [vmem:[%s204 + $0xb0] sm:$0xff] %v439
        %500 = vst [vmem:[%s204 + $0xb8] sm:$0xff] %v442
        %501 = vst [vmem:[%s204 + $0xc0] sm:$0xff] %v447
        %502 = vst [vmem:[%s204 + $0xc8] sm:$0xff] %v450
        %503 = vst [vmem:[%s204 + $0xd0] sm:$0xff] %v455
        %504 = vst [vmem:[%s204 + $0xd8] sm:$0xff] %v458
        %505 = vst [vmem:[%s204 + $0xe0] sm:$0xff] %v463
        %506 = vst [vmem:[%s204 + $0xe8] sm:$0xff] %v466
        %507 = vst [vmem:[%s204 + $0xf0] sm:$0xff] %v471
        %508 = vst [vmem:[%s204 + $0xf8] sm:$0xff] %v474
        %s509 = smul.u32 32, %s18
        %p510 = scmp.lt.s32.totalorder %s509, 63
        %s511 = scalar_select %p510, %s509, 63
        %s512 = smul.addr %s511, 8
        %s513 = scalar_lea.vmem %s3, %s512
        // Predicated region
        $region41: #{vit_seg_forward.9} parent=31 // pred_check
          %p514 = pneg %p104
        $region42: #{vit_seg_forward.9} parent=31 // pred_check_branch
          %516 = sbr.rel (%p514) target = $region44
        $region43: #{vit_seg_forward.9} parent=31 // pred_region
          %s517 = smul.u32 32, %s18
        $region44: #{vit_seg_forward.9} parent=31 // pred_fallthru
          _
      $region32: #{vit_seg_forward.9} parent=5 // pred_fallthru
        _
      %p518 = scmp.le.s32.totalorder 2, %s13
      // Predicated region
      $region45: #{vit_seg_forward.9} parent=5 // pred_check
        %p519 = pneg %p518
      $region46: #{vit_seg_forward.9} parent=5 // pred_check_branch
        %521 = sbr.rel (%p519) target = $region48
      $region47: #{vit_seg_forward.9} parent=5 // pred_region
        %s522 = ssub.s32 %s13, 2
        // Predicated region
        $region49: #{vit_seg_forward.9} parent=47 // pred_check
          %p523 = pneg %p110
        $region50: #{vit_seg_forward.9} parent=47 // pred_check_branch
          %525 = sbr.rel (%p523) target = $region52
        $region51: #{vit_seg_forward.9} parent=47 // pred_region
          %s526 = smul.u32 32, %s19
          %p527 = scmp.lt.s32.totalorder %s526, 63
          %s528 = scalar_select %p527, %s526, 63
          %s529 = smul.addr %s528, 8
          %s530 = scalar_lea.vmem %s3, %s529
        $region52: #{vit_seg_forward.9} parent=47 // pred_fallthru
          _
      $region48: #{vit_seg_forward.9} parent=5 // pred_fallthru
        _
    $region6: #{vit_seg_forward.9} parent=1 // loop_footer
      %s17 = sadd.s32 1, %s13
    $region7: #{vit_seg_forward.9} parent=1 // loop_footer_branch
      %12 = sbr.rel target = $region3
    $region8: #{vit_seg_forward.9} parent=1 // loop_exit
      _
    %531 = vsyncpa [#allocation3], 1
    %s532 = scalar_lea.sflag [#allocation3], 1
    %533 = vsyncpa %s532, 1
    %534 = vsyncpa [#allocation5], 1

// kernel: vit_seg_forward.8
$region0: #{vit_seg_forward.8}
  #allocation0 [shape = 'u32[]', space=smem, size = 0x4, offset = 0x4, fixed_abs, tag = 'smem constant byte address 0x4 - core index']
  #allocation1 [shape = 'u32[144,128]{1,0:T(1,128)}', space=vmem, size = 0x12000, scoped, tag = 'internal scratch']
  %s0 = inlined_call_operand.hbm [shape: f32[2,10,10,16], index: 0, kind: input, shape index: {}]
  %s1 = inlined_call_operand.hbm [shape: bf16[144,8], index: 1, kind: input, shape index: {}]
  %s2 = inlined_call_operand.hbm [shape: f32[1,8], index: 2, kind: input, shape index: {}]
  %s3 = inlined_call_operand.hbm [shape: f32[1,8], index: 3, kind: input, shape index: {}]
  %s4 = inlined_call_operand.hbm [shape: bf16[16,8], index: 4, kind: input, shape index: {}, may-alias: {4,5}]
  %s5 = inlined_call_operand.hbm [shape: bf16[16,8], index: 5, kind: input, shape index: {}, may-alias: {4,5}]
  %s6 = inlined_call_operand.hbm [shape: f32[2,16,16,8], index: 6, kind: output, shape index: {}]
  %s7 = sld [smem:[#allocation0]]
  $region81: #{vit_seg_forward.8} parent=0
    _
  %s9 = ssub.s32 1, %s7
  %s10 = scalar_select 0, %s9, %s7
  $region1: #{vit_seg_forward.8} parent=0
    #allocation2 [shape = 'u8[163840]{0}', space=vmem, size = 0x28000, scoped, tag = 'input window, operand 0']
    #allocation3 [shape = 's32[2]{0}', space=sflag, size = 0x8, scoped, tag = 'scoped memory for vit_seg_forward.8']
    #allocation4 [shape = 's32[2]{0}', space=sflag, size = 0x8, scoped, tag = 'scoped memory for vit_seg_forward.8']
    #allocation5 [shape = 'u8[36864]{0}', space=vmem, size = 0x9000, scoped, tag = 'input window, operand 1, single buffered']
    #allocation6 [shape = 's32[1]{0}', space=sflag, size = 0x4, scoped, tag = 'scoped memory for vit_seg_forward.8']
    #allocation7 [shape = 'u8[512]{0}', space=vmem, size = 0x400, scoped, tag = 'input window, operand 2, single buffered']
    #allocation8 [shape = 'u8[512]{0}', space=vmem, size = 0x400, scoped, tag = 'input window, operand 3, single buffered']
    #allocation9 [shape = 's32[1]{0}', space=sflag, size = 0x4, scoped, tag = 'scoped memory for vit_seg_forward.8']
    #allocation10 [shape = 'u8[4096]{0}', space=vmem, size = 0x1000, scoped, tag = 'input window, operand 4, single buffered']
    #allocation11 [shape = 'u8[4096]{0}', space=vmem, size = 0x1000, scoped, tag = 'input window, operand 5, single buffered']
    #allocation12 [shape = 's32[1]{0}', space=sflag, size = 0x4, scoped, tag = 'scoped memory for vit_seg_forward.8']
    #allocation13 [shape = 'u8[262144]{0}', space=vmem, size = 0x40000, scoped, tag = 'output window, operand 0']
    %11 = vsyncpa [#allocation3], 0
    %s12 = scalar_lea.sflag [#allocation3], 1
    %13 = vsyncpa %s12, 0
    %14 = vsyncpa [#allocation6], 0
    %15 = vsyncpa [#allocation9], 0
    %16 = vsyncpa [#allocation12], 0
    %17 = vsyncpa [#allocation4], 0
    %s18 = scalar_lea.sflag [#allocation4], 1
    %19 = vsyncpa %s18, 0
    loop: start=0, step=1, limit=4
    $region2: #{vit_seg_forward.8} parent=1 // loop_pre_header
      _
    $region3: #{vit_seg_forward.8} parent=1 // loop_header
      %s21 = sphi 0, %s25
      %p22 = scmp.ge.s32.totalorder %s21, 4
      %s31 = sphi 0, %s33
      %s34 = sphi 0, %s31
      %s35 = sphi 0, %s34
      %s51 = sphi 0, %s35
      %s55 = sphi 0, %s55
      %s57 = sphi 0, %s55
      %s58 = sphi 0, %s57
      %s72 = sphi 0, %s58
      %s76 = sphi 0, %s76
      %s78 = sphi 0, %s76
      %s79 = sphi 0, %s78
      %s93 = sphi 0, %s79
      %s97 = sphi 0, %s97
      %s99 = sphi 0, %s97
      %s100 = sphi 0, %s99
      %s114 = sphi 0, %s100
      %s118 = sphi 0, %s118
      %s120 = sphi 0, %s118
      %s121 = sphi 0, %s120
      %s135 = sphi 0, %s121
      %s139 = sphi 0, %s139
      %s141 = sphi 0, %s139
      %s142 = sphi 0, %s141
      %s156 = sphi 0, %s142
      %s162 = sphi 0, %s164
      %s165 = sphi 0, %s162
      %s166 = sphi 0, %s165
      %s182 = sphi 0, %s166
    $region4: #{vit_seg_forward.8} parent=1 // loop_header_branch
      %24 = sbr.rel (%p22) target = $region8
    $region5: #{vit_seg_forward.8} parent=1 // loop_body
      %s26 = ssub.s32 %s21, 1
      %s27 = ssub.s32 %s21, 2
      %s28 = sadd.s32 %s21, 1
      %s29 = ssub.s32 %s21, %s28
      %p30 = scmp.eq.s32.totalorder %s29, 0
      %s32 = sadd.s32 %s31, 1
      %s33 = scalar_select %p30, %s31, %s32
      %p36 = pneg %p30
      %p37 = scmp.eq.s32.totalorder %s21, 1
      %p38 = por %p36, %p37
      %p39 = scmp.ne.s32.totalorder %s31, %s34
      %p40 = scmp.eq.s32.totalorder %s21, 0
      %p41 = por %p39, %p40
      %p42 = scmp.ne.s32.totalorder %s31, %s34
      %p43 = scmp.eq.s32.totalorder %s26, 1
      %p44 = por %p42, %p43
      %p45 = scmp.ne.s32.totalorder %s34, %s35
      %p46 = scmp.eq.s32.totalorder %s26, 0
      %p47 = por %p45, %p46
      %p48 = scmp.ne.s32.totalorder %s34, %s35
      %p49 = scmp.eq.s32.totalorder %s27, 1
      %p50 = por %p48, %p49
      %p52 = scmp.ne.s32.totalorder %s35, %s51
      %p53 = scmp.eq.s32.totalorder %s27, 0
      %p54 = por %p52, %p53
      %s56 = sadd.s32 %s55, 1
      %p59 = scmp.eq.s32.totalorder %s21, 1
      %p60 = scmp.ne.s32.totalorder %s55, %s57
      %p61 = scmp.eq.s32.totalorder %s21, 0
      %p62 = por %p60, %p61
      %p63 = scmp.ne.s32.totalorder %s55, %s57
      %p64 = scmp.eq.s32.totalorder %s26, 1
      %p65 = por %p63, %p64
      %p66 = scmp.ne.s32.totalorder %s57, %s58
      %p67 = scmp.eq.s32.totalorder %s26, 0
      %p68 = por %p66, %p67
      %p69 = scmp.ne.s32.totalorder %s57, %s58
      %p70 = scmp.eq.s32.totalorder %s27, 1
      %p71 = por %p69, %p70
      %p73 = scmp.ne.s32.totalorder %s58, %s72
      %p74 = scmp.eq.s32.totalorder %s27, 0
      %p75 = por %p73, %p74
      %s77 = sadd.s32 %s76, 1
      %p80 = scmp.eq.s32.totalorder %s21, 1
      %p81 = scmp.ne.s32.totalorder %s76, %s78
      %p82 = scmp.eq.s32.totalorder %s21, 0
      %p83 = por %p81, %p82
      %p84 = scmp.ne.s32.totalorder %s76, %s78
      %p85 = scmp.eq.s32.totalorder %s26, 1
      %p86 = por %p84, %p85
      %p87 = scmp.ne.s32.totalorder %s78, %s79
      %p88 = scmp.eq.s32.totalorder %s26, 0
      %p89 = por %p87, %p88
      %p90 = scmp.ne.s32.totalorder %s78, %s79
      %p91 = scmp.eq.s32.totalorder %s27, 1
      %p92 = por %p90, %p91
      %p94 = scmp.ne.s32.totalorder %s79, %s93
      %p95 = scmp.eq.s32.totalorder %s27, 0
      %p96 = por %p94, %p95
      %s98 = sadd.s32 %s97, 1
      %p101 = scmp.eq.s32.totalorder %s21, 1
      %p102 = scmp.ne.s32.totalorder %s97, %s99
      %p103 = scmp.eq.s32.totalorder %s21, 0
      %p104 = por %p102, %p103
      %p105 = scmp.ne.s32.totalorder %s97, %s99
      %p106 = scmp.eq.s32.totalorder %s26, 1
      %p107 = por %p105, %p106
      %p108 = scmp.ne.s32.totalorder %s99, %s100
      %p109 = scmp.eq.s32.totalorder %s26, 0
      %p110 = por %p108, %p109
      %p111 = scmp.ne.s32.totalorder %s99, %s100
      %p112 = scmp.eq.s32.totalorder %s27, 1
      %p113 = por %p111, %p112
      %p115 = scmp.ne.s32.totalorder %s100, %s114
      %p116 = scmp.eq.s32.totalorder %s27, 0
      %p117 = por %p115, %p116
      %s119 = sadd.s32 %s118, 1
      %p122 = scmp.eq.s32.totalorder %s21, 1
      %p123 = scmp.ne.s32.totalorder %s118, %s120
      %p124 = scmp.eq.s32.totalorder %s21, 0
      %p125 = por %p123, %p124
      %p126 = scmp.ne.s32.totalorder %s118, %s120
      %p127 = scmp.eq.s32.totalorder %s26, 1
      %p128 = por %p126, %p127
      %p129 = scmp.ne.s32.totalorder %s120, %s121
      %p130 = scmp.eq.s32.totalorder %s26, 0
      %p131 = por %p129, %p130
      %p132 = scmp.ne.s32.totalorder %s120, %s121
      %p133 = scmp.eq.s32.totalorder %s27, 1
      %p134 = por %p132, %p133
      %p136 = scmp.ne.s32.totalorder %s121, %s135
      %p137 = scmp.eq.s32.totalorder %s27, 0
      %p138 = por %p136, %p137
      %s140 = sadd.s32 %s139, 1
      %p143 = scmp.eq.s32.totalorder %s21, 1
      %p144 = scmp.ne.s32.totalorder %s139, %s141
      %p145 = scmp.eq.s32.totalorder %s21, 0
      %p146 = por %p144, %p145
      %p147 = scmp.ne.s32.totalorder %s139, %s141
      %p148 = scmp.eq.s32.totalorder %s26, 1
      %p149 = por %p147, %p148
      %p150 = scmp.ne.s32.totalorder %s141, %s142
      %p151 = scmp.eq.s32.totalorder %s26, 0
      %p152 = por %p150, %p151
      %p153 = scmp.ne.s32.totalorder %s141, %s142
      %p154 = scmp.eq.s32.totalorder %s27, 1
      %p155 = por %p153, %p154
      %p157 = scmp.ne.s32.totalorder %s142, %s156
      %p158 = scmp.eq.s32.totalorder %s27, 0
      %p159 = por %p157, %p158
      %s160 = ssub.s32 %s21, %s28
      %p161 = scmp.eq.s32.totalorder %s160, 0
      %s163 = sadd.s32 %s162, 1
      %s164 = scalar_select %p161, %s162, %s163
      %p167 = pneg %p161
      %p168 = scmp.eq.s32.totalorder %s21, 1
      %p169 = por %p167, %p168
      %p170 = scmp.ne.s32.totalorder %s162, %s165
      %p171 = scmp.eq.s32.totalorder %s21, 0
      %p172 = por %p170, %p171
      %p173 = scmp.ne.s32.totalorder %s162, %s165
      %p174 = scmp.eq.s32.totalorder %s26, 1
      %p175 = por %p173, %p174
      %p176 = scmp.ne.s32.totalorder %s165, %s166
      %p177 = scmp.eq.s32.totalorder %s26, 0
      %p178 = por %p176, %p177
      %p179 = scmp.ne.s32.totalorder %s165, %s166
      %p180 = scmp.eq.s32.totalorder %s27, 1
      %p181 = por %p179, %p180
      %p183 = scmp.ne.s32.totalorder %s166, %s182
      %p184 = scmp.eq.s32.totalorder %s27, 0
      %p185 = por %p183, %p184
      %p186 = scmp.le.s32.totalorder 1, %s21
      %p187 = scmp.lt.s32.totalorder %s21, 3
      %p188 = pnand %p186, %p187
      %p189 = pneg %p188
      // Predicated region
      $region9: #{vit_seg_forward.8} parent=5 // pred_check
        _
      $region10: #{vit_seg_forward.8} parent=5 // pred_check_branch
        %191 = sbr.rel (%p188) target = $region12
      $region11: #{vit_seg_forward.8} parent=5 // pred_region
        %s192 = ssub.s32 %s21, 1
        // Predicated region
        $region13: #{vit_seg_forward.8} parent=11 // pred_check
          %p193 = pneg %p68
        $region14: #{vit_seg_forward.8} parent=11 // pred_check_branch
          %195 = sbr.rel (%p193) target = $region16
        $region15: #{vit_seg_forward.8} parent=11 // pred_region
          %s197 = ssub.s32 1152, 1152
          %198 = vsyncadd [#allocation6], %s197
          %s199 = sshll.u32 [#allocation5], 4
          %s200 = int_to_ptr.vmem [resolvable:$true] %s199
          %205 = dma.hbm_to_vmem [thread:$0]  %s1, 1152, %s200, [#allocation6], 64, 64, 4
        $region16: #{vit_seg_forward.8} parent=11 // pred_fallthru
          _
        // Predicated region
        $region17: #{vit_seg_forward.8} parent=11 // pred_check
          %p206 = pneg %p89
        $region18: #{vit_seg_forward.8} parent=11 // pred_check_branch
          %208 = sbr.rel (%p206) target = $region20
        $region19: #{vit_seg_forward.8} parent=11 // pred_region
          %s210 = ssub.s32 16, 16
          %211 = vsyncadd [#allocation6], %s210
          %s213 = sshll.u32 [#allocation7], 4
          %s214 = int_to_ptr.vmem [resolvable:$true] %s213
          %216 = dma.hbm_to_vmem [thread:$0]  %s2, 16, %s214, [#allocation6]
        $region20: #{vit_seg_forward.8} parent=11 // pred_fallthru
          _
        // Predicated region
        $region21: #{vit_seg_forward.8} parent=11 // pred_check
          %p217 = pneg %p110
        $region22: #{vit_seg_forward.8} parent=11 // pred_check_branch
          %219 = sbr.rel (%p217) target = $region24
        $region23: #{vit_seg_forward.8} parent=11 // pred_region
          %s221 = ssub.s32 16, 16
          %222 = vsyncadd [#allocation9], %s221
          %s224 = sshll.u32 [#allocation8], 4
          %s225 = int_to_ptr.vmem [resolvable:$true] %s224
          %227 = dma.hbm_to_vmem [thread:$0]  %s3, 16, %s225, [#allocation9]
        $region24: #{vit_seg_forward.8} parent=11 // pred_fallthru
          _
        // Predicated region
        $region25: #{vit_seg_forward.8} parent=11 // pred_check
          %p228 = pneg %p131
        $region26: #{vit_seg_forward.8} parent=11 // pred_check_branch
          %230 = sbr.rel (%p228) target = $region28
        $region27: #{vit_seg_forward.8} parent=11 // pred_region
          %s232 = ssub.s32 128, 128
          %233 = vsyncadd [#allocation9], %s232
          %s234 = sshll.u32 [#allocation10], 4
          %s235 = int_to_ptr.vmem [resolvable:$true] %s234
          %240 = dma.hbm_to_vmem [thread:$0]  %s4, 128, %s235, [#allocation9], 64, 64, 4
        $region28: #{vit_seg_forward.8} parent=11 // pred_fallthru
          _
        // Predicated region
        $region29: #{vit_seg_forward.8} parent=11 // pred_check
          %p241 = pneg %p152
        $region30: #{vit_seg_forward.8} parent=11 // pred_check_branch
          %243 = sbr.rel (%p241) target = $region32
        $region31: #{vit_seg_forward.8} parent=11 // pred_region
          %s245 = ssub.s32 128, 128
          %246 = vsyncadd [#allocation12], %s245
          %s247 = sshll.u32 [#allocation11], 4
          %s248 = int_to_ptr.vmem [resolvable:$true] %s247
          %253 = dma.hbm_to_vmem [thread:$0]  %s5, 128, %s248, [#allocation12], 64, 64, 4
        $region32: #{vit_seg_forward.8} parent=11 // pred_fallthru
          _
      $region12: #{vit_seg_forward.8} parent=5 // pred_fallthru
        _
      %p254 = scmp.lt.s32.totalorder %s21, 2
      // Predicated region
      $region33: #{vit_seg_forward.8} parent=5 // pred_check
        %p255 = pneg %p254
      $region34: #{vit_seg_forward.8} parent=5 // pred_check_branch
        %257 = sbr.rel (%p255) target = $region36
      $region35: #{vit_seg_forward.8} parent=5 // pred_region
        // Predicated region
        $region37: #{vit_seg_forward.8} parent=35 // pred_check
          %p258 = pneg %p41
        $region38: #{vit_seg_forward.8} parent=35 // pred_check_branch
          %260 = sbr.rel (%p258) target = $region40
        $region39: #{vit_seg_forward.8} parent=35 // pred_region
          %s261 = sand.u32 %s31, 1
          %s262 = scalar_lea.sflag [#allocation3], %s261
          %s263 = sand.u32 %s31, 1
          %s264 = smul.addr %s263, 160
          %s265 = scalar_lea.vmem [#allocation2], %s264
          %s267 = ssub.s32 2560, 2560
          %268 = vsyncadd %s262, %s267
          %s269 = smul.addr %s21, 20
          %s270 = smul.addr %s269, 128
          %s271 = scalar_lea.hbm %s0, %s270
          %s272 = sshll.u32 %s265, 4
          %s273 = int_to_ptr.vmem [resolvable:$true] %s272
          %278 = dma.hbm_to_vmem [thread:$0]  %s271, 2560, %s273, %s262, 128, 128, 8
        $region40: #{vit_seg_forward.8} parent=35 // pred_fallthru
          _
      $region36: #{vit_seg_forward.8} parent=5 // pred_fallthru
        _
      %p279 = scmp.le.s32.totalorder 1, %s21
      %p280 = scmp.lt.s32.totalorder %s21, 3
      %p281 = pnand %p279, %p280
      %p282 = pneg %p281
      // Predicated region
      $region41: #{vit_seg_forward.8} parent=5 // pred_check
        _
      $region42: #{vit_seg_forward.8} parent=5 // pred_check_branch
        %284 = sbr.rel (%p281) target = $region44
      $region43: #{vit_seg_forward.8} parent=5 // pred_region
        %s285 = ssub.s32 %s21, 1
        %s286 = sand.u32 %s34, 1
        %s287 = scalar_lea.sflag [#allocation3], %s286
        %s288 = sand.u32 %s34, 1
        %s289 = smul.addr %s288, 160
        %s290 = scalar_lea.vmem [#allocation2], %s289
        // Predicated region
        $region45: #{vit_seg_forward.8} parent=43 // pred_check
          %p291 = pneg %p47
        $region46: #{vit_seg_forward.8} parent=43 // pred_check_branch
          %293 = sbr.rel (%p291) target = $region48
        $region47: #{vit_seg_forward.8} parent=43 // pred_region
          %294 = dma.done %s287, 2560
        $region48: #{vit_seg_forward.8} parent=43 // pred_fallthru
          _
        // Predicated region
        $region49: #{vit_seg_forward.8} parent=43 // pred_check
          %p295 = pneg %p68
        $region50: #{vit_seg_forward.8} parent=43 // pred_check_branch
          %297 = sbr.rel (%p295) target = $region52
        $region51: #{vit_seg_forward.8} parent=43 // pred_region
          %298 = dma.done [#allocation6], 1152
        $region52: #{vit_seg_forward.8} parent=43 // pred_fallthru
          _
        // Predicated region
        $region53: #{vit_seg_forward.8} parent=43 // pred_check
          %p299 = pneg %p89
        $region54: #{vit_seg_forward.8} parent=43 // pred_check_branch
          %301 = sbr.rel (%p299) target = $region56
        $region55: #{vit_seg_forward.8} parent=43 // pred_region
          %302 = dma.done [#allocation6], 16
        $region56: #{vit_seg_forward.8} parent=43 // pred_fallthru
          _
        // Predicated region
        $region57: #{vit_seg_forward.8} parent=43 // pred_check
          %p303 = pneg %p110
        $region58: #{vit_seg_forward.8} parent=43 // pred_check_branch
          %305 = sbr.rel (%p303) target = $region60
        $region59: #{vit_seg_forward.8} parent=43 // pred_region
          %306 = dma.done [#allocation9], 16
        $region60: #{vit_seg_forward.8} parent=43 // pred_fallthru
          _
        // Predicated region
        $region61: #{vit_seg_forward.8} parent=43 // pred_check
          %p307 = pneg %p131
        $region62: #{vit_seg_forward.8} parent=43 // pred_check_branch
          %309 = sbr.rel (%p307) target = $region64
        $region63: #{vit_seg_forward.8} parent=43 // pred_region
          %310 = dma.done [#allocation9], 128
        $region64: #{vit_seg_forward.8} parent=43 // pred_fallthru
          _
        // Predicated region
        $region65: #{vit_seg_forward.8} parent=43 // pred_check
          %p311 = pneg %p152
        $region66: #{vit_seg_forward.8} parent=43 // pred_check_branch
          %313 = sbr.rel (%p311) target = $region68
        $region67: #{vit_seg_forward.8} parent=43 // pred_region
          %314 = dma.done [#allocation12], 128
        $region68: #{vit_seg_forward.8} parent=43 // pred_fallthru
          _
        %s315 = sand.u32 %s34, 1
        %s316 = scalar_lea.sflag [#allocation3], %s315
        %s317 = sand.u32 %s34, 1
        %s318 = smul.addr %s317, 160
        %s319 = scalar_lea.vmem [#allocation2], %s318
        %p320 = pneg %p47
        %p321 = pneg %p44
        %p322 = pneg %p68
        %p323 = pneg %p65
        %p324 = pneg %p89
        %p325 = pneg %p86
        %p326 = pneg %p110
        %p327 = pneg %p107
        %p328 = pneg %p131
        %p329 = pneg %p128
        %p330 = pneg %p152
        %p331 = pneg %p149
        %p332 = pneg %p178
        %p333 = pneg %p175
        %s334 = sand.u32 %s165, 1
        %s335 = scalar_lea.sflag [#allocation4], %s334
        %s336 = sand.u32 %s165, 1
        %s337 = smul.addr %s336, 256
        %s338 = scalar_lea.vmem [#allocation13], %s337
        %v340 = vld [vmem:[%s290] sm:$0xff]
        %v341 = vld [vmem:[%s290 + $0x10] sm:$0xff]
        %v342 = vld [vmem:[%s290 + $0x20] sm:$0xff]
        %v343 = vld [vmem:[%s290 + $0x30] sm:$0xff]
        %v344 = vld [vmem:[%s290 + $0x40] sm:$0xff]
        %v345 = vld [vmem:[%s290 + $0x50] sm:$0xff]
        %v346 = vld [vmem:[%s290 + $0x60] sm:$0xff]
        %v347 = vld [vmem:[%s290 + $0x70] sm:$0xff]
        %v348 = vpack.c.bf16 %v340, %v340
        %v349 = vpack.c.bf16 %v341, %v341
        %v350 = vpack.c.bf16 %v342, %v342
        %v351 = vpack.c.bf16 %v343, %v343
        %v352 = vpack.c.bf16 %v344, %v344
        %v353 = vpack.c.bf16 %v345, %v345
        %v354 = vpack.c.bf16 %v346, %v346
        %v355 = vpack.c.bf16 %v347, %v347
        %v356 = vld [vmem:[%s290 + $0x1] sm:$0xff]
        %v357 = vld [vmem:[%s290 + $0x11] sm:$0xff]
        %v358 = vld [vmem:[%s290 + $0x21] sm:$0xff]
        %v359 = vld [vmem:[%s290 + $0x31] sm:$0xff]
        %v360 = vld [vmem:[%s290 + $0x41] sm:$0xff]
        %v361 = vld [vmem:[%s290 + $0x51] sm:$0xff]
        %v362 = vld [vmem:[%s290 + $0x61] sm:$0xff]
        %v363 = vld [vmem:[%s290 + $0x71] sm:$0xff]
        %v364 = vpack.c.bf16 %v356, %v356
        %v365 = vpack.c.bf16 %v357, %v357
        %v366 = vpack.c.bf16 %v358, %v358
        %v367 = vpack.c.bf16 %v359, %v359
        %v368 = vpack.c.bf16 %v360, %v360
        %v369 = vpack.c.bf16 %v361, %v361
        %v370 = vpack.c.bf16 %v362, %v362
        %v371 = vpack.c.bf16 %v363, %v363
        %v372 = vld [vmem:[%s290 + $0x2] sm:$0xff]
        %v373 = vld [vmem:[%s290 + $0x12] sm:$0xff]
        %v374 = vld [vmem:[%s290 + $0x22] sm:$0xff]
        %v375 = vld [vmem:[%s290 + $0x32] sm:$0xff]
        %v376 = vld [vmem:[%s290 + $0x42] sm:$0xff]
        %v377 = vld [vmem:[%s290 + $0x52] sm:$0xff]
        %v378 = vld [vmem:[%s290 + $0x62] sm:$0xff]
        %v379 = vld [vmem:[%s290 + $0x72] sm:$0xff]
        %v380 = vpack.c.bf16 %v372, %v372
        %v381 = vpack.c.bf16 %v373, %v373
        %v382 = vpack.c.bf16 %v374, %v374
        %v383 = vpack.c.bf16 %v375, %v375
        %v384 = vpack.c.bf16 %v376, %v376
        %v385 = vpack.c.bf16 %v377, %v377
        %v386 = vpack.c.bf16 %v378, %v378
        %v387 = vpack.c.bf16 %v379, %v379
        %s388 = scalar_lea.vmem %s290, 16 [#allocation2]
        %v389 = vld [vmem:[%s388] sm:$0xff]
        %v390 = vld [vmem:[%s388 + $0x10] sm:$0xff]
        %v391 = vld [vmem:[%s388 + $0x20] sm:$0xff]
        %v392 = vld [vmem:[%s388 + $0x30] sm:$0xff]
        %v393 = vld [vmem:[%s388 + $0x40] sm:$0xff]
        %v394 = vld [vmem:[%s388 + $0x50] sm:$0xff]
        %v395 = vld [vmem:[%s388 + $0x60] sm:$0xff]
        %v396 = vld [vmem:[%s388 + $0x70] sm:$0xff]
        %v397 = vpack.c.bf16 %v389, %v389
        %v398 = vpack.c.bf16 %v390, %v390
        %v399 = vpack.c.bf16 %v391, %v391
        %v400 = vpack.c.bf16 %v392, %v392
        %v401 = vpack.c.bf16 %v393, %v393
        %v402 = vpack.c.bf16 %v394, %v394
        %v403 = vpack.c.bf16 %v395, %v395
        %v404 = vpack.c.bf16 %v396, %v396
        %v405 = vld [vmem:[%s388 + $0x1] sm:$0xff]
        %v406 = vld [vmem:[%s388 + $0x11] sm:$0xff]
        %v407 = vld [vmem:[%s388 + $0x21] sm:$0xff]
        %v408 = vld [vmem:[%s388 + $0x31] sm:$0xff]
        %v409 = vld [vmem:[%s388 + $0x41] sm:$0xff]
        %v410 = vld [vmem:[%s388 + $0x51] sm:$0xff]
        %v411 = vld [vmem:[%s388 + $0x61] sm:$0xff]
        %v412 = vld [vmem:[%s388 + $0x71] sm:$0xff]
        %v413 = vpack.c.bf16 %v405, %v405
        %v414 = vpack.c.bf16 %v406, %v406
        %v415 = vpack.c.bf16 %v407, %v407
        %v416 = vpack.c.bf16 %v408, %v408
        %v417 = vpack.c.bf16 %v409, %v409
        %v418 = vpack.c.bf16 %v410, %v410
        %v419 = vpack.c.bf16 %v411, %v411
        %v420 = vpack.c.bf16 %v412, %v412
        %v421 = vld [vmem:[%s388 + $0x2] sm:$0xff]
        %v422 = vld [vmem:[%s388 + $0x12] sm:$0xff]
        %v423 = vld [vmem:[%s388 + $0x22] sm:$0xff]
        %v424 = vld [vmem:[%s388 + $0x32] sm:$0xff]
        %v425 = vld [vmem:[%s388 + $0x42] sm:$0xff]
        %v426 = vld [vmem:[%s388 + $0x52] sm:$0xff]
        %v427 = vld [vmem:[%s388 + $0x62] sm:$0xff]
        %v428 = vld [vmem:[%s388 + $0x72] sm:$0xff]
        %v429 = vpack.c.bf16 %v421, %v421
        %v430 = vpack.c.bf16 %v422, %v422
        %v431 = vpack.c.bf16 %v423, %v423
        %v432 = vpack.c.bf16 %v424, %v424
        %v433 = vpack.c.bf16 %v425, %v425
        %v434 = vpack.c.bf16 %v426, %v426
        %v435 = vpack.c.bf16 %v427, %v427
        %v436 = vpack.c.bf16 %v428, %v428
        %s437 = scalar_lea.vmem %s290, 32 [#allocation2]
        %v438 = vld [vmem:[%s437] sm:$0xff]
        %v439 = vld [vmem:[%s437 + $0x10] sm:$0xff]
        %v440 = vld [vmem:[%s437 + $0x20] sm:$0xff]
        %v441 = vld [vmem:[%s437 + $0x30] sm:$0xff]
        %v442 = vld [vmem:[%s437 + $0x40] sm:$0xff]
        %v443 = vld [vmem:[%s437 + $0x50] sm:$0xff]
        %v444 = vld [vmem:[%s437 + $0x60] sm:$0xff]
        %v445 = vld [vmem:[%s437 + $0x70] sm:$0xff]
        %v446 = vpack.c.bf16 %v438, %v438
        %v447 = vpack.c.bf16 %v439, %v439
        %v448 = vpack.c.bf16 %v440, %v440
        %v449 = vpack.c.bf16 %v441, %v441
        %v450 = vpack.c.bf16 %v442, %v442
        %v451 = vpack.c.bf16 %v443, %v443
        %v452 = vpack.c.bf16 %v444, %v444
        %v453 = vpack.c.bf16 %v445, %v445
        %v454 = vld [vmem:[%s437 + $0x1] sm:$0xff]
        %v455 = vld [vmem:[%s437 + $0x11] sm:$0xff]
        %v456 = vld [vmem:[%s437 + $0x21] sm:$0xff]
        %v457 = vld [vmem:[%s437 + $0x31] sm:$0xff]
        %v458 = vld [vmem:[%s437 + $0x41] sm:$0xff]
        %v459 = vld [vmem:[%s437 + $0x51] sm:$0xff]
        %v460 = vld [vmem:[%s437 + $0x61] sm:$0xff]
        %v461 = vld [vmem:[%s437 + $0x71] sm:$0xff]
        %v462 = vpack.c.bf16 %v454, %v454
        %v463 = vpack.c.bf16 %v455, %v455
        %v464 = vpack.c.bf16 %v456, %v456
        %v465 = vpack.c.bf16 %v457, %v457
        %v466 = vpack.c.bf16 %v458, %v458
        %v467 = vpack.c.bf16 %v459, %v459
        %v468 = vpack.c.bf16 %v460, %v460
        %v469 = vpack.c.bf16 %v461, %v461
        %v470 = vld [vmem:[%s437 + $0x2] sm:$0xff]
        %v471 = vld [vmem:[%s437 + $0x12] sm:$0xff]
        %v472 = vld [vmem:[%s437 + $0x22] sm:$0xff]
        %v473 = vld [vmem:[%s437 + $0x32] sm:$0xff]
        %v474 = vld [vmem:[%s437 + $0x42] sm:$0xff]
        %v475 = vld [vmem:[%s437 + $0x52] sm:$0xff]
        %v476 = vld [vmem:[%s437 + $0x62] sm:$0xff]
        %v477 = vld [vmem:[%s437 + $0x72] sm:$0xff]
        %v478 = vpack.c.bf16 %v470, %v470
        %v479 = vpack.c.bf16 %v471, %v471
        %v480 = vpack.c.bf16 %v472, %v472
        %v481 = vpack.c.bf16 %v473, %v473
        %v482 = vpack.c.bf16 %v474, %v474
        %v483 = vpack.c.bf16 %v475, %v475
        %v484 = vpack.c.bf16 %v476, %v476
        %v485 = vpack.c.bf16 %v477, %v477
        %494 = vrot.lane.b32.xlu0 %v364, 16
        %v495 = vpop.permute.xlu0 %494
        %496 = vrot.lane.b32.xlu0 %v365, 16
        %v497 = vpop.permute.xlu0 %496
        %498 = vrot.lane.b32.xlu0 %v366, 16
        %v499 = vpop.permute.xlu0 %498
        %500 = vrot.lane.b32.xlu0 %v367, 16
        %v501 = vpop.permute.xlu0 %500
        %502 = vrot.lane.b32.xlu0 %v368, 16
        %v503 = vpop.permute.xlu0 %502
        %504 = vrot.lane.b32.xlu0 %v369, 16
        %v505 = vpop.permute.xlu0 %504
        %506 = vrot.lane.b32.xlu0 %v370, 16
        %v507 = vpop.permute.xlu0 %506
        %508 = vrot.lane.b32.xlu0 %v371, 16
        %v509 = vpop.permute.xlu0 %508
        %518 = vrot.lane.b32.xlu0 %v380, 32
        %v519 = vpop.permute.xlu0 %518
        %520 = vrot.lane.b32.xlu0 %v381, 32
        %v521 = vpop.permute.xlu0 %520
        %522 = vrot.lane.b32.xlu0 %v382, 32
        %v523 = vpop.permute.xlu0 %522
        %524 = vrot.lane.b32.xlu0 %v383, 32
        %v525 = vpop.permute.xlu0 %524
        %526 = vrot.lane.b32.xlu0 %v384, 32
        %v527 = vpop.permute.xlu0 %526
        %528 = vrot.lane.b32.xlu0 %v385, 32
        %v529 = vpop.permute.xlu0 %528
        %530 = vrot.lane.b32.xlu0 %v386, 32
        %v531 = vpop.permute.xlu0 %530
        %532 = vrot.lane.b32.xlu0 %v387, 32
        %v533 = vpop.permute.xlu0 %532
        %542 = vrot.lane.b32.xlu0 %v397, 48
        %v543 = vpop.permute.xlu0 %542
        %544 = vrot.lane.b32.xlu0 %v398, 48
        %v545 = vpop.permute.xlu0 %544
        %546 = vrot.lane.b32.xlu0 %v399, 48
        %v547 = vpop.permute.xlu0 %546
        %548 = vrot.lane.b32.xlu0 %v400, 48
        %v549 = vpop.permute.xlu0 %548
        %550 = vrot.lane.b32.xlu0 %v401, 48
        %v551 = vpop.permute.xlu0 %550
        %552 = vrot.lane.b32.xlu0 %v402, 48
        %v553 = vpop.permute.xlu0 %552
        %554 = vrot.lane.b32.xlu0 %v403, 48
        %v555 = vpop.permute.xlu0 %554
        %556 = vrot.lane.b32.xlu0 %v404, 48
        %v557 = vpop.permute.xlu0 %556
        %566 = vrot.lane.b32.xlu0 %v413, 64
        %v567 = vpop.permute.xlu0 %566
        %568 = vrot.lane.b32.xlu0 %v414, 64
        %v569 = vpop.permute.xlu0 %568
        %570 = vrot.lane.b32.xlu0 %v415, 64
        %v571 = vpop.permute.xlu0 %570
        %572 = vrot.lane.b32.xlu0 %v416, 64
        %v573 = vpop.permute.xlu0 %572
        %574 = vrot.lane.b32.xlu0 %v417, 64
        %v575 = vpop.permute.xlu0 %574
        %576 = vrot.lane.b32.xlu0 %v418, 64
        %v577 = vpop.permute.xlu0 %576
        %578 = vrot.lane.b32.xlu0 %v419, 64
        %v579 = vpop.permute.xlu0 %578
        %580 = vrot.lane.b32.xlu0 %v420, 64
        %v581 = vpop.permute.xlu0 %580
        %590 = vrot.lane.b32.xlu0 %v429, 80
        %v591 = vpop.permute.xlu0 %590
        %592 = vrot.lane.b32.xlu0 %v430, 80
        %v593 = vpop.permute.xlu0 %592
        %594 = vrot.lane.b32.xlu0 %v431, 80
        %v595 = vpop.permute.xlu0 %594
        %596 = vrot.lane.b32.xlu0 %v432, 80
        %v597 = vpop.permute.xlu0 %596
        %598 = vrot.lane.b32.xlu0 %v433, 80
        %v599 = vpop.permute.xlu0 %598
        %600 = vrot.lane.b32.xlu0 %v434, 80
        %v601 = vpop.permute.xlu0 %600
        %602 = vrot.lane.b32.xlu0 %v435, 80
        %v603 = vpop.permute.xlu0 %602
        %604 = vrot.lane.b32.xlu0 %v436, 80
        %v605 = vpop.permute.xlu0 %604
        %614 = vrot.lane.b32.xlu0 %v446, 96
        %v615 = vpop.permute.xlu0 %614
        %616 = vrot.lane.b32.xlu0 %v447, 96
        %v617 = vpop.permute.xlu0 %616
        %618 = vrot.lane.b32.xlu0 %v448, 96
        %v619 = vpop.permute.xlu0 %618
        %620 = vrot.lane.b32.xlu0 %v449, 96
        %v621 = vpop.permute.xlu0 %620
        %622 = vrot.lane.b32.xlu0 %v450, 96
        %v623 = vpop.permute.xlu0 %622
        %624 = vrot.lane.b32.xlu0 %v451, 96
        %v625 = vpop.permute.xlu0 %624
        %626 = vrot.lane.b32.xlu0 %v452, 96
        %v627 = vpop.permute.xlu0 %626
        %628 = vrot.lane.b32.xlu0 %v453, 96
        %v629 = vpop.permute.xlu0 %628
        %638 = vrot.lane.b32.xlu0 %v462, 112
        %v639 = vpop.permute.xlu0 %638
        %640 = vrot.lane.b32.xlu0 %v463, 112
        %v641 = vpop.permute.xlu0 %640
        %642 = vrot.lane.b32.xlu0 %v464, 112
        %v643 = vpop.permute.xlu0 %642
        %644 = vrot.lane.b32.xlu0 %v465, 112
        %v645 = vpop.permute.xlu0 %644
        %646 = vrot.lane.b32.xlu0 %v466, 112
        %v647 = vpop.permute.xlu0 %646
        %648 = vrot.lane.b32.xlu0 %v467, 112
        %v649 = vpop.permute.xlu0 %648
        %650 = vrot.lane.b32.xlu0 %v468, 112
        %v651 = vpop.permute.xlu0 %650
        %652 = vrot.lane.b32.xlu0 %v469, 112
        %v653 = vpop.permute.xlu0 %652
        %vm654 = vcmask 130048
        %v657 = vsel %vm654, %v348, %v495
        %v660 = vsel %vm654, %v349, %v497
        %v663 = vsel %vm654, %v350, %v499
        %v666 = vsel %vm654, %v351, %v501
        %v669 = vsel %vm654, %v352, %v503
        %v672 = vsel %vm654, %v353, %v505
        %v675 = vsel %vm654, %v354, %v507
        %v678 = vsel %vm654, %v355, %v509
        %vm679 = vcmask 261120
        %v681 = vsel %vm679, %v657, %v519
        %v683 = vsel %vm679, %v660, %v521
        %v685 = vsel %vm679, %v663, %v523
        %v687 = vsel %vm679, %v666, %v525
        %v689 = vsel %vm679, %v669, %v527
        %v691 = vsel %vm679, %v672, %v529
        %v693 = vsel %vm679, %v675, %v531
        %v695 = vsel %vm679, %v678, %v533
        %vm696 = vcmask 392192
        %v698 = vsel %vm696, %v681, %v543
        %v700 = vsel %vm696, %v683, %v545
        %v702 = vsel %vm696, %v685, %v547
        %v704 = vsel %vm696, %v687, %v549
        %v706 = vsel %vm696, %v689, %v551
        %v708 = vsel %vm696, %v691, %v553
        %v710 = vsel %vm696, %v693, %v555
        %v712 = vsel %vm696, %v695, %v557
        %vm713 = vcmask 523264
        %v715 = vsel %vm713, %v698, %v567
        %v717 = vsel %vm713, %v700, %v569
        %v719 = vsel %vm713, %v702, %v571
        %v721 = vsel %vm713, %v704, %v573
        %v723 = vsel %vm713, %v706, %v575
        %v725 = vsel %vm713, %v708, %v577
        %v727 = vsel %vm713, %v710, %v579
        %v729 = vsel %vm713, %v712, %v581
        %vm730 = vcmask 654336
        %v732 = vsel %vm730, %v715, %v591
        %v734 = vsel %vm730, %v717, %v593
        %v736 = vsel %vm730, %v719, %v595
        %v738 = vsel %vm730, %v721, %v597
        %v740 = vsel %vm730, %v723, %v599
        %v742 = vsel %vm730, %v725, %v601
        %v744 = vsel %vm730, %v727, %v603
        %v746 = vsel %vm730, %v729, %v605
        %vm747 = vcmask 785408
        %v749 = vsel %vm747, %v732, %v615
        %v751 = vsel %vm747, %v734, %v617
        %v753 = vsel %vm747, %v736, %v619
        %v755 = vsel %vm747, %v738, %v621
        %v757 = vsel %vm747, %v740, %v623
        %v759 = vsel %vm747, %v742, %v625
        %v761 = vsel %vm747, %v744, %v627
        %v763 = vsel %vm747, %v746, %v629
        %vm764 = vcmask 916480
        %v766 = vsel %vm764, %v749, %v639
        %v769 = vsel %vm764, %v751, %v641
        %v772 = vsel %vm764, %v753, %v643
        %v775 = vsel %vm764, %v755, %v645
        %v778 = vsel %vm764, %v757, %v647
        %v781 = vsel %vm764, %v759, %v649
        %v784 = vsel %vm764, %v761, %v651
        %v787 = vsel %vm764, %v763, %v653
        %v789 = vld [vmem:[#allocation5] sm:$0xf]
        %v790 = vld [vmem:[#allocation5 + $0x4] sm:$0xf]
        %v791 = vld [vmem:[#allocation5 + $0x8] sm:$0xf]
        %v792 = vld [vmem:[#allocation5 + $0xc] sm:$0xf]
        %v793 = vld [vmem:[#allocation5 + $0x10] sm:$0xf]
        %v794 = vld [vmem:[#allocation5 + $0x14] sm:$0xf]
        %v795 = vld [vmem:[#allocation5 + $0x18] sm:$0xf]
        %v796 = vld [vmem:[#allocation5 + $0x1c] sm:$0xf]
        %v797 = vld [vmem:[#allocation5 + $0x20] sm:$0xf]
        %v798 = vld [vmem:[#allocation5 + $0x24] sm:$0xf]
        %v799 = vld [vmem:[#allocation5 + $0x28] sm:$0xf]
        %v800 = vld [vmem:[#allocation5 + $0x2c] sm:$0xf]
        %v801 = vld [vmem:[#allocation5 + $0x30] sm:$0xf]
        %v802 = vld [vmem:[#allocation5 + $0x34] sm:$0xf]
        %v803 = vld [vmem:[#allocation5 + $0x38] sm:$0xf]
        %v804 = vld [vmem:[#allocation5 + $0x3c] sm:$0xf]
        %v805 = vld [vmem:[#allocation5 + $0x40] sm:$0xf]
        %v806 = vld [vmem:[#allocation5 + $0x44] sm:$0xf]
        %v825 = vunpack.c.l.b16 %v789
        %v826 = vunpack.c.l.b16 %v790
        %v827 = vunpack.c.l.b16 %v791
        %v828 = vunpack.c.l.b16 %v792
        %v829 = vunpack.c.l.b16 %v793
        %v830 = vunpack.c.l.b16 %v794
        %v831 = vunpack.c.l.b16 %v795
        %v832 = vunpack.c.l.b16 %v796
        %v833 = vunpack.c.l.b16 %v797
        %v834 = vunpack.c.l.b16 %v798
        %v835 = vunpack.c.l.b16 %v799
        %v836 = vunpack.c.l.b16 %v800
        %v837 = vunpack.c.l.b16 %v801
        %v838 = vunpack.c.l.b16 %v802
        %v839 = vunpack.c.l.b16 %v803
        %v840 = vunpack.c.l.b16 %v804
        %v841 = vunpack.c.l.b16 %v805
        %v842 = vunpack.c.l.b16 %v806
        %v843 = vpack.c.b16 %v826, %v825
        %v844 = vpack.c.b16 %v828, %v827
        %v845 = vpack.c.b16 %v830, %v829
        %v846 = vpack.c.b16 %v832, %v831
        %v847 = vpack.c.b16 %v834, %v833
        %v848 = vpack.c.b16 %v836, %v835
        %v849 = vpack.c.b16 %v838, %v837
        %v850 = vpack.c.b16 %v840, %v839
        %v851 = vpack.c.b16 %v842, %v841
        %v862 = vsel %vm654, %v478, 0
        %864 = vmatprep.subr.bf16.mxu0 0
        %865 = vmatpush1.bf16.msra.mxu0 %v843
        %866 = vmatprep.subr.bf16.mxu0 0
        %867 = vmatpush1.bf16.msra.mxu0 %v844
        %868 = vmatprep.subr.bf16.mxu0 0
        %869 = vmatpush1.bf16.msra.mxu0 %v845
        %870 = vmatprep.subr.bf16.mxu0 0
        %871 = vmatpush1.bf16.msra.mxu0 %v846
        %872 = vmatprep.subr.bf16.mxu0 0
        %873 = vmatpush1.bf16.msra.mxu0 %v847
        %874 = vmatprep.subr.bf16.mxu0 0
        %875 = vmatpush1.bf16.msra.mxu0 %v848
        %876 = vmatprep.subr.bf16.mxu0 0
        %877 = vmatpush1.bf16.msra.mxu0 %v849
        %878 = vmatprep.subr.bf16.mxu0 0
        %879 = vmatpush1.bf16.msra.mxu0 %v850
        %880 = vmatprep.subr.bf16.mxu0 0
        %881 = vmatpush1.bf16.msra.mxu0 %v851
        %882 = vmatprep.subr.bf16.mxu0 0
        %883 = vmatpush1.bf16.msra.mxu0 0
        %884 = vmatprep.subr.bf16.mxu0 0
        %885 = vmatpush1.bf16.msra.mxu0 0
        %886 = vmatprep.subr.bf16.mxu0 0
        %887 = vmatpush1.bf16.msra.mxu0 0
        %888 = vmatprep.subr.bf16.mxu0 0
        %889 = vmatpush1.bf16.msra.mxu0 0
        %890 = vmatprep.subr.bf16.mxu0 0
        %891 = vmatpush1.bf16.msra.mxu0 0
        %892 = vmatprep.subr.bf16.mxu0 0
        %893 = vmatpush1.bf16.msra.mxu0 0
        %894 = vmatprep.subr.bf16.mxu0 0
        %895 = vmatpush1.bf16.msra.mxu0 0
        %896 = vmatprep.mubr.bf16.mxu0 %v862
        %897 = vmatmul.mubr.bf16.gmra.mrb[0].mxu0 %v766
        %v898 = vpop.f32.mrb[0].mxu0
        %v899 = vadd.f32 0.0, %v898
        %v900 = vpop.f32.mrb[0].mxu0
        %v901 = vpop.f32.mrb[0].mxu0
        %v902 = vpop.f32.mrb[0].mxu0
        %903 = vdwg.mxu0
        %v905 = vsel %vm654, %v479, 0
        %907 = vmatprep.subr.bf16.mxu0 0
        %908 = vmatpush1.bf16.msra.mxu0 %v843
        %909 = vmatprep.subr.bf16.mxu0 0
        %910 = vmatpush1.bf16.msra.mxu0 %v844
        %911 = vmatprep.subr.bf16.mxu0 0
        %912 = vmatpush1.bf16.msra.mxu0 %v845
        %913 = vmatprep.subr.bf16.mxu0 0
        %914 = vmatpush1.bf16.msra.mxu0 %v846
        %915 = vmatprep.subr.bf16.mxu0 0
        %916 = vmatpush1.bf16.msra.mxu0 %v847
        %917 = vmatprep.subr.bf16.mxu0 0
        %918 = vmatpush1.bf16.msra.mxu0 %v848
        %919 = vmatprep.subr.bf16.mxu0 0
        %920 = vmatpush1.bf16.msra.mxu0 %v849
        %921 = vmatprep.subr.bf16.mxu0 0
        %922 = vmatpush1.bf16.msra.mxu0 %v850
        %923 = vmatprep.subr.bf16.mxu0 0
        %924 = vmatpush1.bf16.msra.mxu0 %v851
        %925 = vmatprep.subr.bf16.mxu0 0
        %926 = vmatpush1.bf16.msra.mxu0 0
        %927 = vmatprep.subr.bf16.mxu0 0
        %928 = vmatpush1.bf16.msra.mxu0 0
        %929 = vmatprep.subr.bf16.mxu0 0
        %930 = vmatpush1.bf16.msra.mxu0 0
        %931 = vmatprep.subr.bf16.mxu0 0
        %932 = vmatpush1.bf16.msra.mxu0 0
        %933 = vmatprep.subr.bf16.mxu0 0
        %934 = vmatpush1.bf16.msra.mxu0 0
        %935 = vmatprep.subr.bf16.mxu0 0
        %936 = vmatpush1.bf16.msra.mxu0 0
        %937 = vmatprep.subr.bf16.mxu0 0
        %938 = vmatpush1.bf16.msra.mxu0 0
        %939 = vmatprep.mubr.bf16.mxu0 %v905
        %940 = vmatmul.mubr.bf16.gmra.mrb[0].mxu0 %v769
        %v941 = vpop.f32.mrb[0].mxu0
        %v942 = vadd.f32 0.0, %v941
        %v943 = vpop.f32.mrb[0].mxu0
        %v944 = vpop.f32.mrb[0].mxu0
        %v945 = vpop.f32.mrb[0].mxu0
        %946 = vdwg.mxu0
        %v948 = vsel %vm654, %v480, 0
        %950 = vmatprep.subr.bf16.mxu0 0
        %951 = vmatpush1.bf16.msra.mxu0 %v843
        %952 = vmatprep.subr.bf16.mxu0 0
        %953 = vmatpush1.bf16.msra.mxu0 %v844
        %954 = vmatprep.subr.bf16.mxu0 0
        %955 = vmatpush1.bf16.msra.mxu0 %v845
        %956 = vmatprep.subr.bf16.mxu0 0
        %957 = vmatpush1.bf16.msra.mxu0 %v846
        %958 = vmatprep.subr.bf16.mxu0 0
        %959 = vmatpush1.bf16.msra.mxu0 %v847
        %960 = vmatprep.subr.bf16.mxu0 0
        %961 = vmatpush1.bf16.msra.mxu0 %v848
        %962 = vmatprep.subr.bf16.mxu0 0
        %963 = vmatpush1.bf16.msra.mxu0 %v849
        %964 = vmatprep.subr.bf16.mxu0 0
        %965 = vmatpush1.bf16.msra.mxu0 %v850
        %966 = vmatprep.subr.bf16.mxu0 0
        %967 = vmatpush1.bf16.msra.mxu0 %v851
        %968 = vmatprep.subr.bf16.mxu0 0
        %969 = vmatpush1.bf16.msra.mxu0 0
        %970 = vmatprep.subr.bf16.mxu0 0
        %971 = vmatpush1.bf16.msra.mxu0 0
        %972 = vmatprep.subr.bf16.mxu0 0
        %973 = vmatpush1.bf16.msra.mxu0 0
        %974 = vmatprep.subr.bf16.mxu0 0
        %975 = vmatpush1.bf16.msra.mxu0 0
        %976 = vmatprep.subr.bf16.mxu0 0
        %977 = vmatpush1.bf16.msra.mxu0 0
        %978 = vmatprep.subr.bf16.mxu0 0
        %979 = vmatpush1.bf16.msra.mxu0 0
        %980 = vmatprep.subr.bf16.mxu0 0
        %981 = vmatpush1.bf16.msra.mxu0 0
        %982 = vmatprep.mubr.bf16.mxu0 %v948
        %983 = vmatmul.mubr.bf16.gmra.mrb[0].mxu0 %v772
        %v984 = vpop.f32.mrb[0].mxu0
        %v985 = vadd.f32 0.0, %v984
        %v986 = vpop.f32.mrb[0].mxu0
        %v987 = vpop.f32.mrb[0].mxu0
        %v988 = vpop.f32.mrb[0].mxu0
        %989 = vdwg.mxu0
        %v991 = vsel %vm654, %v481, 0
        %993 = vmatprep.subr.bf16.mxu0 0
        %994 = vmatpush1.bf16.msra.mxu0 %v843
        %995 = vmatprep.subr.bf16.mxu0 0
        %996 = vmatpush1.bf16.msra.mxu0 %v844
        %997 = vmatprep.subr.bf16.mxu0 0
        %998 = vmatpush1.bf16.msra.mxu0 %v845
        %999 = vmatprep.subr.bf16.mxu0 0
        %1000 = vmatpush1.bf16.msra.mxu0 %v846
        %1001 = vmatprep.subr.bf16.mxu0 0
        %1002 = vmatpush1.bf16.msra.mxu0 %v847
        %1003 = vmatprep.subr.bf16.mxu0 0
        %1004 = vmatpush1.bf16.msra.mxu0 %v848
        %1005 = vmatprep.subr.bf16.mxu0 0
        %1006 = vmatpush1.bf16.msra.mxu0 %v849
        %1007 = vmatprep.subr.bf16.mxu0 0
        %1008 = vmatpush1.bf16.msra.mxu0 %v850
        %1009 = vmatprep.subr.bf16.mxu0 0
        %1010 = vmatpush1.bf16.msra.mxu0 %v851
        %1011 = vmatprep.subr.bf16.mxu0 0
        %1012 = vmatpush1.bf16.msra.mxu0 0
        %1013 = vmatprep.subr.bf16.mxu0 0
        %1014 = vmatpush1.bf16.msra.mxu0 0
        %1015 = vmatprep.subr.bf16.mxu0 0
        %1016 = vmatpush1.bf16.msra.mxu0 0
        %1017 = vmatprep.subr.bf16.mxu0 0
        %1018 = vmatpush1.bf16.msra.mxu0 0
        %1019 = vmatprep.subr.bf16.mxu0 0
        %1020 = vmatpush1.bf16.msra.mxu0 0
        %1021 = vmatprep.subr.bf16.mxu0 0
        %1022 = vmatpush1.bf16.msra.mxu0 0
        %1023 = vmatprep.subr.bf16.mxu0 0
        %1024 = vmatpush1.bf16.msra.mxu0 0
        %1025 = vmatprep.mubr.bf16.mxu0 %v991
        %1026 = vmatmul.mubr.bf16.gmra.mrb[0].mxu0 %v775
        %v1027 = vpop.f32.mrb[0].mxu0
        %v1028 = vadd.f32 0.0, %v1027
        %v1029 = vpop.f32.mrb[0].mxu0
        %v1030 = vpop.f32.mrb[0].mxu0
        %v1031 = vpop.f32.mrb[0].mxu0
        %1032 = vdwg.mxu0
        %v1034 = vsel %vm654, %v482, 0
        %1036 = vmatprep.subr.bf16.mxu0 0
        %1037 = vmatpush1.bf16.msra.mxu0 %v843
        %1038 = vmatprep.subr.bf16.mxu0 0
        %1039 = vmatpush1.bf16.msra.mxu0 %v844
        %1040 = vmatprep.subr.bf16.mxu0 0
        %1041 = vmatpush1.bf16.msra.mxu0 %v845
        %1042 = vmatprep.subr.bf16.mxu0 0
        %1043 = vmatpush1.bf16.msra.mxu0 %v846
        %1044 = vmatprep.subr.bf16.mxu0 0
        %1045 = vmatpush1.bf16.msra.mxu0 %v847
        %1046 = vmatprep.subr.bf16.mxu0 0
        %1047 = vmatpush1.bf16.msra.mxu0 %v848
        %1048 = vmatprep.subr.bf16.mxu0 0
        %1049 = vmatpush1.bf16.msra.mxu0 %v849
        %1050 = vmatprep.subr.bf16.mxu0 0
        %1051 = vmatpush1.bf16.msra.mxu0 %v850
        %1052 = vmatprep.subr.bf16.mxu0 0
        %1053 = vmatpush1.bf16.msra.mxu0 %v851
        %1054 = vmatprep.subr.bf16.mxu0 0
        %1055 = vmatpush1.bf16.msra.mxu0 0
        %1056 = vmatprep.subr.bf16.mxu0 0
        %1057 = vmatpush1.bf16.msra.mxu0 0
        %1058 = vmatprep.subr.bf16.mxu0 0
        %1059 = vmatpush1.bf16.msra.mxu0 0
        %1060 = vmatprep.subr.bf16.mxu0 0
        %1061 = vmatpush1.bf16.msra.mxu0 0
        %1062 = vmatprep.subr.bf16.mxu0 0
        %1063 = vmatpush1.bf16.msra.mxu0 0
        %1064 = vmatprep.subr.bf16.mxu0 0
        %1065 = vmatpush1.bf16.msra.mxu0 0
        %1066 = vmatprep.subr.bf16.mxu0 0
        %1067 = vmatpush1.bf16.msra.mxu0 0
        %1068 = vmatprep.mubr.bf16.mxu0 %v1034
        %1069 = vmatmul.mubr.bf16.gmra.mrb[0].mxu0 %v778
        %v1070 = vpop.f32.mrb[0].mxu0
        %v1071 = vadd.f32 0.0, %v1070
        %v1072 = vpop.f32.mrb[0].mxu0
        %v1073 = vpop.f32.mrb[0].mxu0
        %v1074 = vpop.f32.mrb[0].mxu0
        %1075 = vdwg.mxu0
        %v1077 = vsel %vm654, %v483, 0
        %1079 = vmatprep.subr.bf16.mxu0 0
        %1080 = vmatpush1.bf16.msra.mxu0 %v843
        %1081 = vmatprep.subr.bf16.mxu0 0
        %1082 = vmatpush1.bf16.msra.mxu0 %v844
        %1083 = vmatprep.subr.bf16.mxu0 0
        %1084 = vmatpush1.bf16.msra.mxu0 %v845
        %1085 = vmatprep.subr.bf16.mxu0 0
        %1086 = vmatpush1.bf16.msra.mxu0 %v846
        %1087 = vmatprep.subr.bf16.mxu0 0
        %1088 = vmatpush1.bf16.msra.mxu0 %v847
        %1089 = vmatprep.subr.bf16.mxu0 0
        %1090 = vmatpush1.bf16.msra.mxu0 %v848
        %1091 = vmatprep.subr.bf16.mxu0 0
        %1092 = vmatpush1.bf16.msra.mxu0 %v849
        %1093 = vmatprep.subr.bf16.mxu0 0
        %1094 = vmatpush1.bf16.msra.mxu0 %v850
        %1095 = vmatprep.subr.bf16.mxu0 0
        %1096 = vmatpush1.bf16.msra.mxu0 %v851
        %1097 = vmatprep.subr.bf16.mxu0 0
        %1098 = vmatpush1.bf16.msra.mxu0 0
        %1099 = vmatprep.subr.bf16.mxu0 0
        %1100 = vmatpush1.bf16.msra.mxu0 0
        %1101 = vmatprep.subr.bf16.mxu0 0
        %1102 = vmatpush1.bf16.msra.mxu0 0
        %1103 = vmatprep.subr.bf16.mxu0 0
        %1104 = vmatpush1.bf16.msra.mxu0 0
        %1105 = vmatprep.subr.bf16.mxu0 0
        %1106 = vmatpush1.bf16.msra.mxu0 0
        %1107 = vmatprep.subr.bf16.mxu0 0
        %1108 = vmatpush1.bf16.msra.mxu0 0
        %1109 = vmatprep.subr.bf16.mxu0 0
        %1110 = vmatpush1.bf16.msra.mxu0 0
        %1111 = vmatprep.mubr.bf16.mxu0 %v1077
        %1112 = vmatmul.mubr.bf16.gmra.mrb[0].mxu0 %v781
        %v1113 = vpop.f32.mrb[0].mxu0
        %v1114 = vadd.f32 0.0, %v1113
        %v1115 = vpop.f32.mrb[0].mxu0
        %v1116 = vpop.f32.mrb[0].mxu0
        %v1117 = vpop.f32.mrb[0].mxu0
        %1118 = vdwg.mxu0
        %v1120 = vsel %vm654, %v484, 0
        %1122 = vmatprep.subr.bf16.mxu0 0
        %1123 = vmatpush1.bf16.msra.mxu0 %v843
        %1124 = vmatprep.subr.bf16.mxu0 0
        %1125 = vmatpush1.bf16.msra.mxu0 %v844
        %1126 = vmatprep.subr.bf16.mxu0 0
        %1127 = vmatpush1.bf16.msra.mxu0 %v845
        %1128 = vmatprep.subr.bf16.mxu0 0
        %1129 = vmatpush1.bf16.msra.mxu0 %v846
        %1130 = vmatprep.subr.bf16.mxu0 0
        %1131 = vmatpush1.bf16.msra.mxu0 %v847
        %1132 = vmatprep.subr.bf16.mxu0 0
        %1133 = vmatpush1.bf16.msra.mxu0 %v848
        %1134 = vmatprep.subr.bf16.mxu0 0
        %1135 = vmatpush1.bf16.msra.mxu0 %v849
        %1136 = vmatprep.subr.bf16.mxu0 0
        %1137 = vmatpush1.bf16.msra.mxu0 %v850
        %1138 = vmatprep.subr.bf16.mxu0 0
        %1139 = vmatpush1.bf16.msra.mxu0 %v851
        %1140 = vmatprep.subr.bf16.mxu0 0
        %1141 = vmatpush1.bf16.msra.mxu0 0
        %1142 = vmatprep.subr.bf16.mxu0 0
        %1143 = vmatpush1.bf16.msra.mxu0 0
        %1144 = vmatprep.subr.bf16.mxu0 0
        %1145 = vmatpush1.bf16.msra.mxu0 0
        %1146 = vmatprep.subr.bf16.mxu0 0
        %1147 = vmatpush1.bf16.msra.mxu0 0
        %1148 = vmatprep.subr.bf16.mxu0 0
        %1149 = vmatpush1.bf16.msra.mxu0 0
        %1150 = vmatprep.subr.bf16.mxu0 0
        %1151 = vmatpush1.bf16.msra.mxu0 0
        %1152 = vmatprep.subr.bf16.mxu0 0
        %1153 = vmatpush1.bf16.msra.mxu0 0
        %1154 = vmatprep.mubr.bf16.mxu0 %v1120
        %1155 = vmatmul.mubr.bf16.gmra.mrb[0].mxu0 %v784
        %v1156 = vpop.f32.mrb[0].mxu0
        %v1157 = vadd.f32 0.0, %v1156
        %v1158 = vpop.f32.mrb[0].mxu0
        %v1159 = vpop.f32.mrb[0].mxu0
        %v1160 = vpop.f32.mrb[0].mxu0
        %1161 = vdwg.mxu0
        %v1163 = vsel %vm654, %v485, 0
        %1165 = vmatprep.subr.bf16.mxu0 0
        %1166 = vmatpush1.bf16.msra.mxu0 %v843
        %1167 = vmatprep.subr.bf16.mxu0 0
        %1168 = vmatpush1.bf16.msra.mxu0 %v844
        %1169 = vmatprep.subr.bf16.mxu0 0
        %1170 = vmatpush1.bf16.msra.mxu0 %v845
        %1171 = vmatprep.subr.bf16.mxu0 0
        %1172 = vmatpush1.bf16.msra.mxu0 %v846
        %1173 = vmatprep.subr.bf16.mxu0 0
        %1174 = vmatpush1.bf16.msra.mxu0 %v847
        %1175 = vmatprep.subr.bf16.mxu0 0
        %1176 = vmatpush1.bf16.msra.mxu0 %v848
        %1177 = vmatprep.subr.bf16.mxu0 0
        %1178 = vmatpush1.bf16.msra.mxu0 %v849
        %1179 = vmatprep.subr.bf16.mxu0 0
        %1180 = vmatpush1.bf16.msra.mxu0 %v850
        %1181 = vmatprep.subr.bf16.mxu0 0
        %1182 = vmatpush1.bf16.msra.mxu0 %v851
        %1183 = vmatprep.subr.bf16.mxu0 0
        %1184 = vmatpush1.bf16.msra.mxu0 0
        %1185 = vmatprep.subr.bf16.mxu0 0
        %1186 = vmatpush1.bf16.msra.mxu0 0
        %1187 = vmatprep.subr.bf16.mxu0 0
        %1188 = vmatpush1.bf16.msra.mxu0 0
        %1189 = vmatprep.subr.bf16.mxu0 0
        %1190 = vmatpush1.bf16.msra.mxu0 0
        %1191 = vmatprep.subr.bf16.mxu0 0
        %1192 = vmatpush1.bf16.msra.mxu0 0
        %1193 = vmatprep.subr.bf16.mxu0 0
        %1194 = vmatpush1.bf16.msra.mxu0 0
        %1195 = vmatprep.subr.bf16.mxu0 0
        %1196 = vmatpush1.bf16.msra.mxu0 0
        %1197 = vmatprep.mubr.bf16.mxu0 %v1163
        %1198 = vmatmul.mubr.bf16.gmra.mrb[0].mxu0 %v787
        %v1199 = vpop.f32.mrb[0].mxu0
        %v1200 = vadd.f32 0.0, %v1199
        %v1201 = vpop.f32.mrb[0].mxu0
        %v1202 = vpop.f32.mrb[0].mxu0
        %v1203 = vpop.f32.mrb[0].mxu0
        %1204 = vdwg.mxu0
        %v1205 = vld [vmem:[#allocation7] sm:$0x1]
        %v1207 = vlaneseq
        %v1208 = vshrl.u32 %v1207, 7
        %v1209 = vsub.s32 0, %v1208
        %v1210 = vrot.slane %v1205, %v1209
        %v1212 = vmul.f32 %v899, %v1210
        %v1213 = vmul.f32 %v942, %v1210
        %v1214 = vmul.f32 %v985, %v1210
        %v1215 = vmul.f32 %v1028, %v1210
        %v1216 = vmul.f32 %v1071, %v1210
        %v1217 = vmul.f32 %v1114, %v1210
        %v1218 = vmul.f32 %v1157, %v1210
        %v1219 = vmul.f32 %v1200, %v1210
        %v1220 = vld [vmem:[#allocation8] sm:$0x1]
        %v1222 = vlaneseq
        %v1223 = vshrl.u32 %v1222, 7
        %v1224 = vsub.s32 0, %v1223
        %v1225 = vrot.slane %v1220, %v1224
        %v1227 = vadd.f32 %v1212, %v1225
        %v1228 = vadd.f32 %v1213, %v1225
        %v1229 = vadd.f32 %v1214, %v1225
        %v1230 = vadd.f32 %v1215, %v1225
        %v1231 = vadd.f32 %v1216, %v1225
        %v1232 = vadd.f32 %v1217, %v1225
        %v1233 = vadd.f32 %v1218, %v1225
        %v1234 = vadd.f32 %v1219, %v1225
        %v1235 = vmax.f32 %v1227, 0.0
        %v1236 = vmax.f32 %v1228, 0.0
        %v1237 = vmax.f32 %v1229, 0.0
        %v1238 = vmax.f32 %v1230, 0.0
        %v1239 = vmax.f32 %v1231, 0.0
        %v1240 = vmax.f32 %v1232, 0.0
        %v1241 = vmax.f32 %v1233, 0.0
        %v1242 = vmax.f32 %v1234, 0.0
        %v1243 = vld [vmem:[#allocation10] sm:$0xf]
        %v1244 = vld [vmem:[#allocation10 + $0x4] sm:$0xf]
        %v1245 = vpack.c.bf16 %v1235, %v1235
        %v1246 = vpack.c.bf16 %v1236, %v1236
        %v1247 = vpack.c.bf16 %v1237, %v1237
        %v1248 = vpack.c.bf16 %v1238, %v1238
        %v1249 = vpack.c.bf16 %v1239, %v1239
        %v1250 = vpack.c.bf16 %v1240, %v1240
        %v1251 = vpack.c.bf16 %v1241, %v1241
        %v1252 = vpack.c.bf16 %v1242, %v1242
        %v1255 = vunpack.c.l.b16 %v1243
        %v1256 = vunpack.c.l.b16 %v1244
        %v1257 = vpack.c.b16 %v1256, %v1255
        %vm1258 = vcmask 64512
        %v1260 = vsel %vm1258, %v1257, 0
        %vm1262 = vcmask 1043456
        %v1264 = vsel %vm1262, %v1245, 0
        %1266 = vmatprep.subr.bf16.mxu0 0
        %1267 = vmatpush1.bf16.msra.mxu0 %v1264
        %1268 = vmatprep.subr.bf16.mxu0 0
        %1269 = vmatpush1.bf16.msra.mxu0 0
        %1270 = vmatprep.subr.bf16.mxu0 0
        %1271 = vmatpush1.bf16.msra.mxu0 0
        %1272 = vmatprep.subr.bf16.mxu0 0
        %1273 = vmatpush1.bf16.msra.mxu0 0
        %1274 = vmatprep.subr.bf16.mxu0 0
        %1275 = vmatpush1.bf16.msra.mxu0 0
        %1276 = vmatprep.subr.bf16.mxu0 0
        %1277 = vmatpush1.bf16.msra.mxu0 0
        %1278 = vmatprep.subr.bf16.mxu0 0
        %1279 = vmatpush1.bf16.msra.mxu0 0
        %1280 = vmatprep.subr.bf16.mxu0 0
        %1281 = vmatpush1.bf16.msra.mxu0 0
        %1282 = vmatprep.subr.bf16.mxu0 0
        %1283 = vmatpush1.bf16.msra.mxu0 0
        %1284 = vmatprep.subr.bf16.mxu0 0
        %1285 = vmatpush1.bf16.msra.mxu0 0
        %1286 = vmatprep.subr.bf16.mxu0 0
        %1287 = vmatpush1.bf16.msra.mxu0 0
        %1288 = vmatprep.subr.bf16.mxu0 0
        %1289 = vmatpush1.bf16.msra.mxu0 0
        %1290 = vmatprep.subr.bf16.mxu0 0
        %1291 = vmatpush1.bf16.msra.mxu0 0
        %1292 = vmatprep.subr.bf16.mxu0 0
        %1293 = vmatpush1.bf16.msra.mxu0 0
        %1294 = vmatprep.subr.bf16.mxu0 0
        %1295 = vmatpush1.bf16.msra.mxu0 0
        %1296 = vmatprep.subr.bf16.mxu0 0
        %1297 = vmatpush1.bf16.msra.mxu0 0
        %1298 = vmatprep.mubr.bf16.mxu0 0
        %1299 = vmatmul.mubr.bf16.gmra.mrb[0].mxu0 %v1260
        %v1300 = vpop.f32.mrb[0].mxu0
        %v1301 = vadd.f32 0.0, %v1300
        %v1302 = vpop.f32.mrb[0].mxu0
        %v1303 = vpop.f32.mrb[0].mxu0
        %v1304 = vadd.f32 0.0, %v1303
        %v1305 = vpop.f32.mrb[0].mxu0
        %1306 = vdwg.mxu0
        %v1308 = vsel %vm1262, %v1246, 0
        %1310 = vmatprep.subr.bf16.mxu0 0
        %1311 = vmatpush1.bf16.msra.mxu0 %v1308
        %1312 = vmatprep.subr.bf16.mxu0 0
        %1313 = vmatpush1.bf16.msra.mxu0 0
        %1314 = vmatprep.subr.bf16.mxu0 0
        %1315 = vmatpush1.bf16.msra.mxu0 0
        %1316 = vmatprep.subr.bf16.mxu0 0
        %1317 = vmatpush1.bf16.msra.mxu0 0
        %1318 = vmatprep.subr.bf16.mxu0 0
        %1319 = vmatpush1.bf16.msra.mxu0 0
        %1320 = vmatprep.subr.bf16.mxu0 0
        %1321 = vmatpush1.bf16.msra.mxu0 0
        %1322 = vmatprep.subr.bf16.mxu0 0
        %1323 = vmatpush1.bf16.msra.mxu0 0
        %1324 = vmatprep.subr.bf16.mxu0 0
        %1325 = vmatpush1.bf16.msra.mxu0 0
        %1326 = vmatprep.subr.bf16.mxu0 0
        %1327 = vmatpush1.bf16.msra.mxu0 0
        %1328 = vmatprep.subr.bf16.mxu0 0
        %1329 = vmatpush1.bf16.msra.mxu0 0
        %1330 = vmatprep.subr.bf16.mxu0 0
        %1331 = vmatpush1.bf16.msra.mxu0 0
        %1332 = vmatprep.subr.bf16.mxu0 0
        %1333 = vmatpush1.bf16.msra.mxu0 0
        %1334 = vmatprep.subr.bf16.mxu0 0
        %1335 = vmatpush1.bf16.msra.mxu0 0
        %1336 = vmatprep.subr.bf16.mxu0 0
        %1337 = vmatpush1.bf16.msra.mxu0 0
        %1338 = vmatprep.subr.bf16.mxu0 0
        %1339 = vmatpush1.bf16.msra.mxu0 0
        %1340 = vmatprep.subr.bf16.mxu0 0
        %1341 = vmatpush1.bf16.msra.mxu0 0
        %1342 = vmatprep.mubr.bf16.mxu0 0
        %1343 = vmatmul.mubr.bf16.gmra.mrb[0].mxu0 %v1260
        %v1344 = vpop.f32.mrb[0].mxu0
        %v1345 = vadd.f32 0.0, %v1344
        %v1346 = vpop.f32.mrb[0].mxu0
        %v1347 = vpop.f32.mrb[0].mxu0
        %v1348 = vadd.f32 0.0, %v1347
        %v1349 = vpop.f32.mrb[0].mxu0
        %1350 = vdwg.mxu0
        %v1352 = vsel %vm1262, %v1247, 0
        %1354 = vmatprep.subr.bf16.mxu0 0
        %1355 = vmatpush1.bf16.msra.mxu0 %v1352
        %1356 = vmatprep.subr.bf16.mxu0 0
        %1357 = vmatpush1.bf16.msra.mxu0 0
        %1358 = vmatprep.subr.bf16.mxu0 0
        %1359 = vmatpush1.bf16.msra.mxu0 0
        %1360 = vmatprep.subr.bf16.mxu0 0
        %1361 = vmatpush1.bf16.msra.mxu0 0
        %1362 = vmatprep.subr.bf16.mxu0 0
        %1363 = vmatpush1.bf16.msra.mxu0 0
        %1364 = vmatprep.subr.bf16.mxu0 0
        %1365 = vmatpush1.bf16.msra.mxu0 0
        %1366 = vmatprep.subr.bf16.mxu0 0
        %1367 = vmatpush1.bf16.msra.mxu0 0
        %1368 = vmatprep.subr.bf16.mxu0 0
        %1369 = vmatpush1.bf16.msra.mxu0 0
        %1370 = vmatprep.subr.bf16.mxu0 0
        %1371 = vmatpush1.bf16.msra.mxu0 0
        %1372 = vmatprep.subr.bf16.mxu0 0
        %1373 = vmatpush1.bf16.msra.mxu0 0
        %1374 = vmatprep.subr.bf16.mxu0 0
        %1375 = vmatpush1.bf16.msra.mxu0 0
        %1376 = vmatprep.subr.bf16.mxu0 0
        %1377 = vmatpush1.bf16.msra.mxu0 0
        %1378 = vmatprep.subr.bf16.mxu0 0
        %1379 = vmatpush1.bf16.msra.mxu0 0
        %1380 = vmatprep.subr.bf16.mxu0 0
        %1381 = vmatpush1.bf16.msra.mxu0 0
        %1382 = vmatprep.subr.bf16.mxu0 0
        %1383 = vmatpush1.bf16.msra.mxu0 0
        %1384 = vmatprep.subr.bf16.mxu0 0
        %1385 = vmatpush1.bf16.msra.mxu0 0
        %1386 = vmatprep.mubr.bf16.mxu0 0
        %1387 = vmatmul.mubr.bf16.gmra.mrb[0].mxu0 %v1260
        %v1388 = vpop.f32.mrb[0].mxu0
        %v1389 = vadd.f32 0.0, %v1388
        %v1390 = vpop.f32.mrb[0].mxu0
        %v1391 = vpop.f32.mrb[0].mxu0
        %v1392 = vadd.f32 0.0, %v1391
        %v1393 = vpop.f32.mrb[0].mxu0
        %1394 = vdwg.mxu0
        %v1396 = vsel %vm1262, %v1248, 0
        %1398 = vmatprep.subr.bf16.mxu0 0
        %1399 = vmatpush1.bf16.msra.mxu0 %v1396
        %1400 = vmatprep.subr.bf16.mxu0 0
        %1401 = vmatpush1.bf16.msra.mxu0 0
        %1402 = vmatprep.subr.bf16.mxu0 0
        %1403 = vmatpush1.bf16.msra.mxu0 0
        %1404 = vmatprep.subr.bf16.mxu0 0
        %1405 = vmatpush1.bf16.msra.mxu0 0
        %1406 = vmatprep.subr.bf16.mxu0 0
        %1407 = vmatpush1.bf16.msra.mxu0 0
        %1408 = vmatprep.subr.bf16.mxu0 0
        %1409 = vmatpush1.bf16.msra.mxu0 0
        %1410 = vmatprep.subr.bf16.mxu0 0
        %1411 = vmatpush1.bf16.msra.mxu0 0
        %1412 = vmatprep.subr.bf16.mxu0 0
        %1413 = vmatpush1.bf16.msra.mxu0 0
        %1414 = vmatprep.subr.bf16.mxu0 0
        %1415 = vmatpush1.bf16.msra.mxu0 0
        %1416 = vmatprep.subr.bf16.mxu0 0
        %1417 = vmatpush1.bf16.msra.mxu0 0
        %1418 = vmatprep.subr.bf16.mxu0 0
        %1419 = vmatpush1.bf16.msra.mxu0 0
        %1420 = vmatprep.subr.bf16.mxu0 0
        %1421 = vmatpush1.bf16.msra.mxu0 0
        %1422 = vmatprep.subr.bf16.mxu0 0
        %1423 = vmatpush1.bf16.msra.mxu0 0
        %1424 = vmatprep.subr.bf16.mxu0 0
        %1425 = vmatpush1.bf16.msra.mxu0 0
        %1426 = vmatprep.subr.bf16.mxu0 0
        %1427 = vmatpush1.bf16.msra.mxu0 0
        %1428 = vmatprep.subr.bf16.mxu0 0
        %1429 = vmatpush1.bf16.msra.mxu0 0
        %1430 = vmatprep.mubr.bf16.mxu0 0
        %1431 = vmatmul.mubr.bf16.gmra.mrb[0].mxu0 %v1260
        %v1432 = vpop.f32.mrb[0].mxu0
        %v1433 = vadd.f32 0.0, %v1432
        %v1434 = vpop.f32.mrb[0].mxu0
        %v1435 = vpop.f32.mrb[0].mxu0
        %v1436 = vadd.f32 0.0, %v1435
        %v1437 = vpop.f32.mrb[0].mxu0
        %1438 = vdwg.mxu0
        %v1440 = vsel %vm1262, %v1249, 0
        %1442 = vmatprep.subr.bf16.mxu0 0
        %1443 = vmatpush1.bf16.msra.mxu0 %v1440
        %1444 = vmatprep.subr.bf16.mxu0 0
        %1445 = vmatpush1.bf16.msra.mxu0 0
        %1446 = vmatprep.subr.bf16.mxu0 0
        %1447 = vmatpush1.bf16.msra.mxu0 0
        %1448 = vmatprep.subr.bf16.mxu0 0
        %1449 = vmatpush1.bf16.msra.mxu0 0
        %1450 = vmatprep.subr.bf16.mxu0 0
        %1451 = vmatpush1.bf16.msra.mxu0 0
        %1452 = vmatprep.subr.bf16.mxu0 0
        %1453 = vmatpush1.bf16.msra.mxu0 0
        %1454 = vmatprep.subr.bf16.mxu0 0
        %1455 = vmatpush1.bf16.msra.mxu0 0
        %1456 = vmatprep.subr.bf16.mxu0 0
        %1457 = vmatpush1.bf16.msra.mxu0 0
        %1458 = vmatprep.subr.bf16.mxu0 0
        %1459 = vmatpush1.bf16.msra.mxu0 0
        %1460 = vmatprep.subr.bf16.mxu0 0
        %1461 = vmatpush1.bf16.msra.mxu0 0
        %1462 = vmatprep.subr.bf16.mxu0 0
        %1463 = vmatpush1.bf16.msra.mxu0 0
        %1464 = vmatprep.subr.bf16.mxu0 0
        %1465 = vmatpush1.bf16.msra.mxu0 0
        %1466 = vmatprep.subr.bf16.mxu0 0
        %1467 = vmatpush1.bf16.msra.mxu0 0
        %1468 = vmatprep.subr.bf16.mxu0 0
        %1469 = vmatpush1.bf16.msra.mxu0 0
        %1470 = vmatprep.subr.bf16.mxu0 0
        %1471 = vmatpush1.bf16.msra.mxu0 0
        %1472 = vmatprep.subr.bf16.mxu0 0
        %1473 = vmatpush1.bf16.msra.mxu0 0
        %1474 = vmatprep.mubr.bf16.mxu0 0
        %1475 = vmatmul.mubr.bf16.gmra.mrb[0].mxu0 %v1260
        %v1476 = vpop.f32.mrb[0].mxu0
        %v1477 = vadd.f32 0.0, %v1476
        %v1478 = vpop.f32.mrb[0].mxu0
        %v1479 = vpop.f32.mrb[0].mxu0
        %v1480 = vadd.f32 0.0, %v1479
        %v1481 = vpop.f32.mrb[0].mxu0
        %1482 = vdwg.mxu0
        %v1484 = vsel %vm1262, %v1250, 0
        %1486 = vmatprep.subr.bf16.mxu0 0
        %1487 = vmatpush1.bf16.msra.mxu0 %v1484
        %1488 = vmatprep.subr.bf16.mxu0 0
        %1489 = vmatpush1.bf16.msra.mxu0 0
        %1490 = vmatprep.subr.bf16.mxu0 0
        %1491 = vmatpush1.bf16.msra.mxu0 0
        %1492 = vmatprep.subr.bf16.mxu0 0
        %1493 = vmatpush1.bf16.msra.mxu0 0
        %1494 = vmatprep.subr.bf16.mxu0 0
        %1495 = vmatpush1.bf16.msra.mxu0 0
        %1496 = vmatprep.subr.bf16.mxu0 0
        %1497 = vmatpush1.bf16.msra.mxu0 0
        %1498 = vmatprep.subr.bf16.mxu0 0
        %1499 = vmatpush1.bf16.msra.mxu0 0
        %1500 = vmatprep.subr.bf16.mxu0 0
        %1501 = vmatpush1.bf16.msra.mxu0 0
        %1502 = vmatprep.subr.bf16.mxu0 0
        %1503 = vmatpush1.bf16.msra.mxu0 0
        %1504 = vmatprep.subr.bf16.mxu0 0
        %1505 = vmatpush1.bf16.msra.mxu0 0
        %1506 = vmatprep.subr.bf16.mxu0 0
        %1507 = vmatpush1.bf16.msra.mxu0 0
        %1508 = vmatprep.subr.bf16.mxu0 0
        %1509 = vmatpush1.bf16.msra.mxu0 0
        %1510 = vmatprep.subr.bf16.mxu0 0
        %1511 = vmatpush1.bf16.msra.mxu0 0
        %1512 = vmatprep.subr.bf16.mxu0 0
        %1513 = vmatpush1.bf16.msra.mxu0 0
        %1514 = vmatprep.subr.bf16.mxu0 0
        %1515 = vmatpush1.bf16.msra.mxu0 0
        %1516 = vmatprep.subr.bf16.mxu0 0
        %1517 = vmatpush1.bf16.msra.mxu0 0
        %1518 = vmatprep.mubr.bf16.mxu0 0
        %1519 = vmatmul.mubr.bf16.gmra.mrb[0].mxu0 %v1260
        %v1520 = vpop.f32.mrb[0].mxu0
        %v1521 = vadd.f32 0.0, %v1520
        %v1522 = vpop.f32.mrb[0].mxu0
        %v1523 = vpop.f32.mrb[0].mxu0
        %v1524 = vadd.f32 0.0, %v1523
        %v1525 = vpop.f32.mrb[0].mxu0
        %1526 = vdwg.mxu0
        %v1528 = vsel %vm1262, %v1251, 0
        %1530 = vmatprep.subr.bf16.mxu0 0
        %1531 = vmatpush1.bf16.msra.mxu0 %v1528
        %1532 = vmatprep.subr.bf16.mxu0 0
        %1533 = vmatpush1.bf16.msra.mxu0 0
        %1534 = vmatprep.subr.bf16.mxu0 0
        %1535 = vmatpush1.bf16.msra.mxu0 0
        %1536 = vmatprep.subr.bf16.mxu0 0
        %1537 = vmatpush1.bf16.msra.mxu0 0
        %1538 = vmatprep.subr.bf16.mxu0 0
        %1539 = vmatpush1.bf16.msra.mxu0 0
        %1540 = vmatprep.subr.bf16.mxu0 0
        %1541 = vmatpush1.bf16.msra.mxu0 0
        %1542 = vmatprep.subr.bf16.mxu0 0
        %1543 = vmatpush1.bf16.msra.mxu0 0
        %1544 = vmatprep.subr.bf16.mxu0 0
        %1545 = vmatpush1.bf16.msra.mxu0 0
        %1546 = vmatprep.subr.bf16.mxu0 0
        %1547 = vmatpush1.bf16.msra.mxu0 0
        %1548 = vmatprep.subr.bf16.mxu0 0
        %1549 = vmatpush1.bf16.msra.mxu0 0
        %1550 = vmatprep.subr.bf16.mxu0 0
        %1551 = vmatpush1.bf16.msra.mxu0 0
        %1552 = vmatprep.subr.bf16.mxu0 0
        %1553 = vmatpush1.bf16.msra.mxu0 0
        %1554 = vmatprep.subr.bf16.mxu0 0
        %1555 = vmatpush1.bf16.msra.mxu0 0
        %1556 = vmatprep.subr.bf16.mxu0 0
        %1557 = vmatpush1.bf16.msra.mxu0 0
        %1558 = vmatprep.subr.bf16.mxu0 0
        %1559 = vmatpush1.bf16.msra.mxu0 0
        %1560 = vmatprep.subr.bf16.mxu0 0
        %1561 = vmatpush1.bf16.msra.mxu0 0
        %1562 = vmatprep.mubr.bf16.mxu0 0
        %1563 = vmatmul.mubr.bf16.gmra.mrb[0].mxu0 %v1260
        %v1564 = vpop.f32.mrb[0].mxu0
        %v1565 = vadd.f32 0.0, %v1564
        %v1566 = vpop.f32.mrb[0].mxu0
        %v1567 = vpop.f32.mrb[0].mxu0
        %v1568 = vadd.f32 0.0, %v1567
        %v1569 = vpop.f32.mrb[0].mxu0
        %1570 = vdwg.mxu0
        %v1572 = vsel %vm1262, %v1252, 0
        %1574 = vmatprep.subr.bf16.mxu0 0
        %1575 = vmatpush1.bf16.msra.mxu0 %v1572
        %1576 = vmatprep.subr.bf16.mxu0 0
        %1577 = vmatpush1.bf16.msra.mxu0 0
        %1578 = vmatprep.subr.bf16.mxu0 0
        %1579 = vmatpush1.bf16.msra.mxu0 0
        %1580 = vmatprep.subr.bf16.mxu0 0
        %1581 = vmatpush1.bf16.msra.mxu0 0
        %1582 = vmatprep.subr.bf16.mxu0 0
        %1583 = vmatpush1.bf16.msra.mxu0 0
        %1584 = vmatprep.subr.bf16.mxu0 0
        %1585 = vmatpush1.bf16.msra.mxu0 0
        %1586 = vmatprep.subr.bf16.mxu0 0
        %1587 = vmatpush1.bf16.msra.mxu0 0
        %1588 = vmatprep.subr.bf16.mxu0 0
        %1589 = vmatpush1.bf16.msra.mxu0 0
        %1590 = vmatprep.subr.bf16.mxu0 0
        %1591 = vmatpush1.bf16.msra.mxu0 0
        %1592 = vmatprep.subr.bf16.mxu0 0
        %1593 = vmatpush1.bf16.msra.mxu0 0
        %1594 = vmatprep.subr.bf16.mxu0 0
        %1595 = vmatpush1.bf16.msra.mxu0 0
        %1596 = vmatprep.subr.bf16.mxu0 0
        %1597 = vmatpush1.bf16.msra.mxu0 0
        %1598 = vmatprep.subr.bf16.mxu0 0
        %1599 = vmatpush1.bf16.msra.mxu0 0
        %1600 = vmatprep.subr.bf16.mxu0 0
        %1601 = vmatpush1.bf16.msra.mxu0 0
        %1602 = vmatprep.subr.bf16.mxu0 0
        %1603 = vmatpush1.bf16.msra.mxu0 0
        %1604 = vmatprep.subr.bf16.mxu0 0
        %1605 = vmatpush1.bf16.msra.mxu0 0
        %1606 = vmatprep.mubr.bf16.mxu0 0
        %1607 = vmatmul.mubr.bf16.gmra.mrb[0].mxu0 %v1260
        %v1608 = vpop.f32.mrb[0].mxu0
        %v1609 = vadd.f32 0.0, %v1608
        %v1610 = vpop.f32.mrb[0].mxu0
        %v1611 = vpop.f32.mrb[0].mxu0
        %v1612 = vadd.f32 0.0, %v1611
        %v1613 = vpop.f32.mrb[0].mxu0
        %1614 = vdwg.mxu0
        %v1615 = vcombine.low %v1301, %v1389
        %v1616 = vcombine.high %v1301, %v1389
        %v1618 = vunpack.c.l.s4 1983009808
        %v1619 = vunpack.c.0.s8 %v1618
        %v1620 = vlaneseq
        %v1621 = vshrl.u32 %v1620, 7
        %v1622 = vsub.s32 %v1619, %v1621
        %v1623 = vrot.slane %v1615, %v1622
        %v1625 = vunpack.c.l.s4 1983009808
        %v1626 = vunpack.c.0.s8 %v1625
        %v1627 = vlaneseq
        %v1628 = vshrl.u32 %v1627, 7
        %v1629 = vsub.s32 %v1626, %v1628
        %v1630 = vrot.slane %v1616, %v1629
        %v1631 = vcombine.low %v1345, %v1433
        %v1632 = vcombine.high %v1345, %v1433
        %v1634 = vunpack.c.l.s4 1983009808
        %v1635 = vunpack.c.0.s8 %v1634
        %v1636 = vlaneseq
        %v1637 = vshrl.u32 %v1636, 7
        %v1638 = vsub.s32 %v1635, %v1637
        %v1639 = vrot.slane %v1631, %v1638
        %v1641 = vunpack.c.l.s4 1983009808
        %v1642 = vunpack.c.0.s8 %v1641
        %v1643 = vlaneseq
        %v1644 = vshrl.u32 %v1643, 7
        %v1645 = vsub.s32 %v1642, %v1644
        %v1646 = vrot.slane %v1632, %v1645
        %v1647 = vcombine.low %v1477, %v1565
        %v1648 = vcombine.high %v1477, %v1565
        %v1650 = vunpack.c.l.s4 1983009808
        %v1651 = vunpack.c.0.s8 %v1650
        %v1652 = vlaneseq
        %v1653 = vshrl.u32 %v1652, 7
        %v1654 = vsub.s32 %v1651, %v1653
        %v1655 = vrot.slane %v1647, %v1654
        %v1657 = vunpack.c.l.s4 1983009808
        %v1658 = vunpack.c.0.s8 %v1657
        %v1659 = vlaneseq
        %v1660 = vshrl.u32 %v1659, 7
        %v1661 = vsub.s32 %v1658, %v1660
        %v1662 = vrot.slane %v1648, %v1661
        %v1663 = vcombine.low %v1521, %v1609
        %v1664 = vcombine.high %v1521, %v1609
        %v1666 = vunpack.c.l.s4 1983009808
        %v1667 = vunpack.c.0.s8 %v1666
        %v1668 = vlaneseq
        %v1669 = vshrl.u32 %v1668, 7
        %v1670 = vsub.s32 %v1667, %v1669
        %v1671 = vrot.slane %v1663, %v1670
        %v1673 = vunpack.c.l.s4 1983009808
        %v1674 = vunpack.c.0.s8 %v1673
        %v1675 = vlaneseq
        %v1676 = vshrl.u32 %v1675, 7
        %v1677 = vsub.s32 %v1674, %v1676
        %v1678 = vrot.slane %v1664, %v1677
        %v1679 = vcombine.low %v1623, %v1639
        %v1680 = vcombine.high %v1623, %v1639
        %v1682 = vunpack.c.l.s4 1934713408
        %v1683 = vunpack.c.0.s8 %v1682
        %v1684 = vlaneseq
        %v1685 = vshrl.u32 %v1684, 7
        %v1686 = vsub.s32 %v1683, %v1685
        %v1687 = vrot.slane %v1679, %v1686
        %v1689 = vunpack.c.l.s4 1934713408
        %v1690 = vunpack.c.0.s8 %v1689
        %v1691 = vlaneseq
        %v1692 = vshrl.u32 %v1691, 7
        %v1693 = vsub.s32 %v1690, %v1692
        %v1694 = vrot.slane %v1680, %v1693
        %v1695 = vcombine.low %v1630, %v1646
        %v1696 = vcombine.high %v1630, %v1646
        %v1698 = vunpack.c.l.s4 1934713408
        %v1699 = vunpack.c.0.s8 %v1698
        %v1700 = vlaneseq
        %v1701 = vshrl.u32 %v1700, 7
        %v1702 = vsub.s32 %v1699, %v1701
        %v1703 = vrot.slane %v1695, %v1702
        %v1705 = vunpack.c.l.s4 1934713408
        %v1706 = vunpack.c.0.s8 %v1705
        %v1707 = vlaneseq
        %v1708 = vshrl.u32 %v1707, 7
        %v1709 = vsub.s32 %v1706, %v1708
        %v1710 = vrot.slane %v1696, %v1709
        %v1711 = vcombine.low %v1655, %v1671
        %v1712 = vcombine.high %v1655, %v1671
        %v1714 = vunpack.c.l.s4 1934713408
        %v1715 = vunpack.c.0.s8 %v1714
        %v1716 = vlaneseq
        %v1717 = vshrl.u32 %v1716, 7
        %v1718 = vsub.s32 %v1715, %v1717
        %v1719 = vrot.slane %v1711, %v1718
        %v1721 = vunpack.c.l.s4 1934713408
        %v1722 = vunpack.c.0.s8 %v1721
        %v1723 = vlaneseq
        %v1724 = vshrl.u32 %v1723, 7
        %v1725 = vsub.s32 %v1722, %v1724
        %v1726 = vrot.slane %v1712, %v1725
        %v1727 = vcombine.low %v1662, %v1678
        %v1728 = vcombine.high %v1662, %v1678
        %v1730 = vunpack.c.l.s4 1934713408
        %v1731 = vunpack.c.0.s8 %v1730
        %v1732 = vlaneseq
        %v1733 = vshrl.u32 %v1732, 7
        %v1734 = vsub.s32 %v1731, %v1733
        %v1735 = vrot.slane %v1727, %v1734
        %v1737 = vunpack.c.l.s4 1934713408
        %v1738 = vunpack.c.0.s8 %v1737
        %v1739 = vlaneseq
        %v1740 = vshrl.u32 %v1739, 7
        %v1741 = vsub.s32 %v1738, %v1740
        %v1742 = vrot.slane %v1728, %v1741
        %v1743 = vcombine.low %v1687, %v1719
        %v1744 = vcombine.high %v1687, %v1719
        %v1745 = vcombine.low %v1694, %v1726
        %v1746 = vcombine.high %v1694, %v1726
        %v1747 = vcombine.low %v1703, %v1735
        %v1748 = vcombine.high %v1703, %v1735
        %v1749 = vcombine.low %v1710, %v1742
        %v1750 = vcombine.high %v1710, %v1742
        %v1751 = vcombine.low %v1304, %v1392
        %v1752 = vcombine.high %v1304, %v1392
        %v1754 = vunpack.c.l.s4 1983009808
        %v1755 = vunpack.c.0.s8 %v1754
        %v1756 = vlaneseq
        %v1757 = vshrl.u32 %v1756, 7
        %v1758 = vsub.s32 %v1755, %v1757
        %v1759 = vrot.slane %v1751, %v1758
        %v1761 = vunpack.c.l.s4 1983009808
        %v1762 = vunpack.c.0.s8 %v1761
        %v1763 = vlaneseq
        %v1764 = vshrl.u32 %v1763, 7
        %v1765 = vsub.s32 %v1762, %v1764
        %v1766 = vrot.slane %v1752, %v1765
        %v1767 = vcombine.low %v1348, %v1436
        %v1768 = vcombine.high %v1348, %v1436
        %v1770 = vunpack.c.l.s4 1983009808
        %v1771 = vunpack.c.0.s8 %v1770
        %v1772 = vlaneseq
        %v1773 = vshrl.u32 %v1772, 7
        %v1774 = vsub.s32 %v1771, %v1773
        %v1775 = vrot.slane %v1767, %v1774
        %v1777 = vunpack.c.l.s4 1983009808
        %v1778 = vunpack.c.0.s8 %v1777
        %v1779 = vlaneseq
        %v1780 = vshrl.u32 %v1779, 7
        %v1781 = vsub.s32 %v1778, %v1780
        %v1782 = vrot.slane %v1768, %v1781
        %v1783 = vcombine.low %v1480, %v1568
        %v1784 = vcombine.high %v1480, %v1568
        %v1786 = vunpack.c.l.s4 1983009808
        %v1787 = vunpack.c.0.s8 %v1786
        %v1788 = vlaneseq
        %v1789 = vshrl.u32 %v1788, 7
        %v1790 = vsub.s32 %v1787, %v1789
        %v1791 = vrot.slane %v1783, %v1790
        %v1793 = vunpack.c.l.s4 1983009808
        %v1794 = vunpack.c.0.s8 %v1793
        %v1795 = vlaneseq
        %v1796 = vshrl.u32 %v1795, 7
        %v1797 = vsub.s32 %v1794, %v1796
        %v1798 = vrot.slane %v1784, %v1797
        %v1799 = vcombine.low %v1524, %v1612
        %v1800 = vcombine.high %v1524, %v1612
        %v1802 = vunpack.c.l.s4 1983009808
        %v1803 = vunpack.c.0.s8 %v1802
        %v1804 = vlaneseq
        %v1805 = vshrl.u32 %v1804, 7
        %v1806 = vsub.s32 %v1803, %v1805
        %v1807 = vrot.slane %v1799, %v1806
        %v1809 = vunpack.c.l.s4 1983009808
        %v1810 = vunpack.c.0.s8 %v1809
        %v1811 = vlaneseq
        %v1812 = vshrl.u32 %v1811, 7
        %v1813 = vsub.s32 %v1810, %v1812
        %v1814 = vrot.slane %v1800, %v1813
        %v1815 = vcombine.low %v1759, %v1775
        %v1816 = vcombine.high %v1759, %v1775
        %v1818 = vunpack.c.l.s4 1934713408
        %v1819 = vunpack.c.0.s8 %v1818
        %v1820 = vlaneseq
        %v1821 = vshrl.u32 %v1820, 7
        %v1822 = vsub.s32 %v1819, %v1821
        %v1823 = vrot.slane %v1815, %v1822
        %v1825 = vunpack.c.l.s4 1934713408
        %v1826 = vunpack.c.0.s8 %v1825
        %v1827 = vlaneseq
        %v1828 = vshrl.u32 %v1827, 7
        %v1829 = vsub.s32 %v1826, %v1828
        %v1830 = vrot.slane %v1816, %v1829
        %v1831 = vcombine.low %v1766, %v1782
        %v1832 = vcombine.high %v1766, %v1782
        %v1834 = vunpack.c.l.s4 1934713408
        %v1835 = vunpack.c.0.s8 %v1834
        %v1836 = vlaneseq
        %v1837 = vshrl.u32 %v1836, 7
        %v1838 = vsub.s32 %v1835, %v1837
        %v1839 = vrot.slane %v1831, %v1838
        %v1841 = vunpack.c.l.s4 1934713408
        %v1842 = vunpack.c.0.s8 %v1841
        %v1843 = vlaneseq
        %v1844 = vshrl.u32 %v1843, 7
        %v1845 = vsub.s32 %v1842, %v1844
        %v1846 = vrot.slane %v1832, %v1845
        %v1847 = vcombine.low %v1791, %v1807
        %v1848 = vcombine.high %v1791, %v1807
        %v1850 = vunpack.c.l.s4 1934713408
        %v1851 = vunpack.c.0.s8 %v1850
        %v1852 = vlaneseq
        %v1853 = vshrl.u32 %v1852, 7
        %v1854 = vsub.s32 %v1851, %v1853
        %v1855 = vrot.slane %v1847, %v1854
        %v1857 = vunpack.c.l.s4 1934713408
        %v1858 = vunpack.c.0.s8 %v1857
        %v1859 = vlaneseq
        %v1860 = vshrl.u32 %v1859, 7
        %v1861 = vsub.s32 %v1858, %v1860
        %v1862 = vrot.slane %v1848, %v1861
        %v1863 = vcombine.low %v1798, %v1814
        %v1864 = vcombine.high %v1798, %v1814
        %v1866 = vunpack.c.l.s4 1934713408
        %v1867 = vunpack.c.0.s8 %v1866
        %v1868 = vlaneseq
        %v1869 = vshrl.u32 %v1868, 7
        %v1870 = vsub.s32 %v1867, %v1869
        %v1871 = vrot.slane %v1863, %v1870
        %v1873 = vunpack.c.l.s4 1934713408
        %v1874 = vunpack.c.0.s8 %v1873
        %v1875 = vlaneseq
        %v1876 = vshrl.u32 %v1875, 7
        %v1877 = vsub.s32 %v1874, %v1876
        %v1878 = vrot.slane %v1864, %v1877
        %v1879 = vcombine.low %v1823, %v1855
        %v1880 = vcombine.high %v1823, %v1855
        %v1881 = vcombine.low %v1830, %v1862
        %v1882 = vcombine.high %v1830, %v1862
        %v1883 = vcombine.low %v1839, %v1871
        %v1884 = vcombine.high %v1839, %v1871
        %v1885 = vcombine.low %v1846, %v1878
        %v1886 = vcombine.high %v1846, %v1878
        %v1887 = vpack.c.bf16 %v1743, %v1743
        %v1888 = vpack.c.bf16 %v1744, %v1744
        %v1889 = vpack.c.bf16 %v1745, %v1745
        %v1890 = vpack.c.bf16 %v1746, %v1746
        %v1891 = vpack.c.bf16 %v1747, %v1747
        %v1892 = vpack.c.bf16 %v1748, %v1748
        %v1893 = vpack.c.bf16 %v1749, %v1749
        %v1894 = vpack.c.bf16 %v1750, %v1750
        %v1895 = vpack.c.bf16 %v1879, %v1879
        %v1896 = vpack.c.bf16 %v1880, %v1880
        %v1897 = vpack.c.bf16 %v1881, %v1881
        %v1898 = vpack.c.bf16 %v1882, %v1882
        %v1899 = vpack.c.bf16 %v1883, %v1883
        %v1900 = vpack.c.bf16 %v1884, %v1884
        %v1901 = vpack.c.bf16 %v1885, %v1885
        %v1902 = vpack.c.bf16 %v1886, %v1886
        %v1903 = vld [vmem:[#allocation11] sm:$0xf]
        %v1904 = vld [vmem:[#allocation11 + $0x4] sm:$0xf]
        %v1907 = vunpack.c.l.b16 %v1903
        %v1908 = vunpack.c.l.b16 %v1904
        %v1909 = vpack.c.b16 %v1908, %v1907
        %v1911 = vsel %vm1258, %v1909, 0
        %v1914 = vsel %vm1262, %v1887, 0
        %1916 = vmatprep.subr.bf16.mxu0 0
        %1917 = vmatpush1.bf16.msra.mxu0 %v1914
        %1918 = vmatprep.subr.bf16.mxu0 0
        %1919 = vmatpush1.bf16.msra.mxu0 0
        %1920 = vmatprep.subr.bf16.mxu0 0
        %1921 = vmatpush1.bf16.msra.mxu0 0
        %1922 = vmatprep.subr.bf16.mxu0 0
        %1923 = vmatpush1.bf16.msra.mxu0 0
        %1924 = vmatprep.subr.bf16.mxu0 0
        %1925 = vmatpush1.bf16.msra.mxu0 0
        %1926 = vmatprep.subr.bf16.mxu0 0
        %1927 = vmatpush1.bf16.msra.mxu0 0
        %1928 = vmatprep.subr.bf16.mxu0 0
        %1929 = vmatpush1.bf16.msra.mxu0 0
        %1930 = vmatprep.subr.bf16.mxu0 0
        %1931 = vmatpush1.bf16.msra.mxu0 0
        %1932 = vmatprep.subr.bf16.mxu0 0
        %1933 = vmatpush1.bf16.msra.mxu0 0
        %1934 = vmatprep.subr.bf16.mxu0 0
        %1935 = vmatpush1.bf16.msra.mxu0 0
        %1936 = vmatprep.subr.bf16.mxu0 0
        %1937 = vmatpush1.bf16.msra.mxu0 0
        %1938 = vmatprep.subr.bf16.mxu0 0
        %1939 = vmatpush1.bf16.msra.mxu0 0
        %1940 = vmatprep.subr.bf16.mxu0 0
        %1941 = vmatpush1.bf16.msra.mxu0 0
        %1942 = vmatprep.subr.bf16.mxu0 0
        %1943 = vmatpush1.bf16.msra.mxu0 0
        %1944 = vmatprep.subr.bf16.mxu0 0
        %1945 = vmatpush1.bf16.msra.mxu0 0
        %1946 = vmatprep.subr.bf16.mxu0 0
        %1947 = vmatpush1.bf16.msra.mxu0 0
        %1948 = vmatprep.mubr.bf16.mxu0 0
        %1949 = vmatmul.mubr.bf16.gmra.mrb[0].mxu0 %v1911
        %v1950 = vpop.f32.mrb[0].mxu0
        %v1951 = vadd.f32 0.0, %v1950
        %v1952 = vpop.f32.mrb[0].mxu0
        %v1953 = vpop.f32.mrb[0].mxu0
        %v1954 = vadd.f32 0.0, %v1953
        %v1955 = vpop.f32.mrb[0].mxu0
        %1956 = vdwg.mxu0
        %v1958 = vsel %vm1262, %v1888, 0
        %1960 = vmatprep.subr.bf16.mxu0 0
        %1961 = vmatpush1.bf16.msra.mxu0 %v1958
        %1962 = vmatprep.subr.bf16.mxu0 0
        %1963 = vmatpush1.bf16.msra.mxu0 0
        %1964 = vmatprep.subr.bf16.mxu0 0
        %1965 = vmatpush1.bf16.msra.mxu0 0
        %1966 = vmatprep.subr.bf16.mxu0 0
        %1967 = vmatpush1.bf16.msra.mxu0 0
        %1968 = vmatprep.subr.bf16.mxu0 0
        %1969 = vmatpush1.bf16.msra.mxu0 0
        %1970 = vmatprep.subr.bf16.mxu0 0
        %1971 = vmatpush1.bf16.msra.mxu0 0
        %1972 = vmatprep.subr.bf16.mxu0 0
        %1973 = vmatpush1.bf16.msra.mxu0 0
        %1974 = vmatprep.subr.bf16.mxu0 0
        %1975 = vmatpush1.bf16.msra.mxu0 0
        %1976 = vmatprep.subr.bf16.mxu0 0
        %1977 = vmatpush1.bf16.msra.mxu0 0
        %1978 = vmatprep.subr.bf16.mxu0 0
        %1979 = vmatpush1.bf16.msra.mxu0 0
        %1980 = vmatprep.subr.bf16.mxu0 0
        %1981 = vmatpush1.bf16.msra.mxu0 0
        %1982 = vmatprep.subr.bf16.mxu0 0
        %1983 = vmatpush1.bf16.msra.mxu0 0
        %1984 = vmatprep.subr.bf16.mxu0 0
        %1985 = vmatpush1.bf16.msra.mxu0 0
        %1986 = vmatprep.subr.bf16.mxu0 0
        %1987 = vmatpush1.bf16.msra.mxu0 0
        %1988 = vmatprep.subr.bf16.mxu0 0
        %1989 = vmatpush1.bf16.msra.mxu0 0
        %1990 = vmatprep.subr.bf16.mxu0 0
        %1991 = vmatpush1.bf16.msra.mxu0 0
        %1992 = vmatprep.mubr.bf16.mxu0 0
        %1993 = vmatmul.mubr.bf16.gmra.mrb[0].mxu0 %v1911
        %v1994 = vpop.f32.mrb[0].mxu0
        %v1995 = vadd.f32 0.0, %v1994
        %v1996 = vpop.f32.mrb[0].mxu0
        %v1997 = vpop.f32.mrb[0].mxu0
        %v1998 = vadd.f32 0.0, %v1997
        %v1999 = vpop.f32.mrb[0].mxu0
        %2000 = vdwg.mxu0
        %v2002 = vsel %vm1262, %v1889, 0
        %2004 = vmatprep.subr.bf16.mxu0 0
        %2005 = vmatpush1.bf16.msra.mxu0 %v2002
        %2006 = vmatprep.subr.bf16.mxu0 0
        %2007 = vmatpush1.bf16.msra.mxu0 0
        %2008 = vmatprep.subr.bf16.mxu0 0
        %2009 = vmatpush1.bf16.msra.mxu0 0
        %2010 = vmatprep.subr.bf16.mxu0 0
        %2011 = vmatpush1.bf16.msra.mxu0 0
        %2012 = vmatprep.subr.bf16.mxu0 0
        %2013 = vmatpush1.bf16.msra.mxu0 0
        %2014 = vmatprep.subr.bf16.mxu0 0
        %2015 = vmatpush1.bf16.msra.mxu0 0
        %2016 = vmatprep.subr.bf16.mxu0 0
        %2017 = vmatpush1.bf16.msra.mxu0 0
        %2018 = vmatprep.subr.bf16.mxu0 0
        %2019 = vmatpush1.bf16.msra.mxu0 0
        %2020 = vmatprep.subr.bf16.mxu0 0
        %2021 = vmatpush1.bf16.msra.mxu0 0
        %2022 = vmatprep.subr.bf16.mxu0 0
        %2023 = vmatpush1.bf16.msra.mxu0 0
        %2024 = vmatprep.subr.bf16.mxu0 0
        %2025 = vmatpush1.bf16.msra.mxu0 0
        %2026 = vmatprep.subr.bf16.mxu0 0
        %2027 = vmatpush1.bf16.msra.mxu0 0
        %2028 = vmatprep.subr.bf16.mxu0 0
        %2029 = vmatpush1.bf16.msra.mxu0 0
        %2030 = vmatprep.subr.bf16.mxu0 0
        %2031 = vmatpush1.bf16.msra.mxu0 0
        %2032 = vmatprep.subr.bf16.mxu0 0
        %2033 = vmatpush1.bf16.msra.mxu0 0
        %2034 = vmatprep.subr.bf16.mxu0 0
        %2035 = vmatpush1.bf16.msra.mxu0 0
        %2036 = vmatprep.mubr.bf16.mxu0 0
        %2037 = vmatmul.mubr.bf16.gmra.mrb[0].mxu0 %v1911
        %v2038 = vpop.f32.mrb[0].mxu0
        %v2039 = vadd.f32 0.0, %v2038
        %v2040 = vpop.f32.mrb[0].mxu0
        %v2041 = vpop.f32.mrb[0].mxu0
        %v2042 = vadd.f32 0.0, %v2041
        %v2043 = vpop.f32.mrb[0].mxu0
        %2044 = vdwg.mxu0
        %v2046 = vsel %vm1262, %v1890, 0
        %2048 = vmatprep.subr.bf16.mxu0 0
        %2049 = vmatpush1.bf16.msra.mxu0 %v2046
        %2050 = vmatprep.subr.bf16.mxu0 0
        %2051 = vmatpush1.bf16.msra.mxu0 0
        %2052 = vmatprep.subr.bf16.mxu0 0
        %2053 = vmatpush1.bf16.msra.mxu0 0
        %2054 = vmatprep.subr.bf16.mxu0 0
        %2055 = vmatpush1.bf16.msra.mxu0 0
        %2056 = vmatprep.subr.bf16.mxu0 0
        %2057 = vmatpush1.bf16.msra.mxu0 0
        %2058 = vmatprep.subr.bf16.mxu0 0
        %2059 = vmatpush1.bf16.msra.mxu0 0
        %2060 = vmatprep.subr.bf16.mxu0 0
        %2061 = vmatpush1.bf16.msra.mxu0 0
        %2062 = vmatprep.subr.bf16.mxu0 0
        %2063 = vmatpush1.bf16.msra.mxu0 0
        %2064 = vmatprep.subr.bf16.mxu0 0
        %2065 = vmatpush1.bf16.msra.mxu0 0
        %2066 = vmatprep.subr.bf16.mxu0 0
        %2067 = vmatpush1.bf16.msra.mxu0 0
        %2068 = vmatprep.subr.bf16.mxu0 0
        %2069 = vmatpush1.bf16.msra.mxu0 0
        %2070 = vmatprep.subr.bf16.mxu0 0
        %2071 = vmatpush1.bf16.msra.mxu0 0
        %2072 = vmatprep.subr.bf16.mxu0 0
        %2073 = vmatpush1.bf16.msra.mxu0 0
        %2074 = vmatprep.subr.bf16.mxu0 0
        %2075 = vmatpush1.bf16.msra.mxu0 0
        %2076 = vmatprep.subr.bf16.mxu0 0
        %2077 = vmatpush1.bf16.msra.mxu0 0
        %2078 = vmatprep.subr.bf16.mxu0 0
        %2079 = vmatpush1.bf16.msra.mxu0 0
        %2080 = vmatprep.mubr.bf16.mxu0 0
        %2081 = vmatmul.mubr.bf16.gmra.mrb[0].mxu0 %v1911
        %v2082 = vpop.f32.mrb[0].mxu0
        %v2083 = vadd.f32 0.0, %v2082
        %v2084 = vpop.f32.mrb[0].mxu0
        %v2085 = vpop.f32.mrb[0].mxu0
        %v2086 = vadd.f32 0.0, %v2085
        %v2087 = vpop.f32.mrb[0].mxu0
        %2088 = vdwg.mxu0
        %v2090 = vsel %vm1262, %v1891, 0
        %2092 = vmatprep.subr.bf16.mxu0 0
        %2093 = vmatpush1.bf16.msra.mxu0 %v2090
        %2094 = vmatprep.subr.bf16.mxu0 0
        %2095 = vmatpush1.bf16.msra.mxu0 0
        %2096 = vmatprep.subr.bf16.mxu0 0
        %2097 = vmatpush1.bf16.msra.mxu0 0
        %2098 = vmatprep.subr.bf16.mxu0 0
        %2099 = vmatpush1.bf16.msra.mxu0 0
        %2100 = vmatprep.subr.bf16.mxu0 0
        %2101 = vmatpush1.bf16.msra.mxu0 0
        %2102 = vmatprep.subr.bf16.mxu0 0
        %2103 = vmatpush1.bf16.msra.mxu0 0
        %2104 = vmatprep.subr.bf16.mxu0 0
        %2105 = vmatpush1.bf16.msra.mxu0 0
        %2106 = vmatprep.subr.bf16.mxu0 0
        %2107 = vmatpush1.bf16.msra.mxu0 0
        %2108 = vmatprep.subr.bf16.mxu0 0
        %2109 = vmatpush1.bf16.msra.mxu0 0
        %2110 = vmatprep.subr.bf16.mxu0 0
        %2111 = vmatpush1.bf16.msra.mxu0 0
        %2112 = vmatprep.subr.bf16.mxu0 0
        %2113 = vmatpush1.bf16.msra.mxu0 0
        %2114 = vmatprep.subr.bf16.mxu0 0
        %2115 = vmatpush1.bf16.msra.mxu0 0
        %2116 = vmatprep.subr.bf16.mxu0 0
        %2117 = vmatpush1.bf16.msra.mxu0 0
        %2118 = vmatprep.subr.bf16.mxu0 0
        %2119 = vmatpush1.bf16.msra.mxu0 0
        %2120 = vmatprep.subr.bf16.mxu0 0
        %2121 = vmatpush1.bf16.msra.mxu0 0
        %2122 = vmatprep.subr.bf16.mxu0 0
        %2123 = vmatpush1.bf16.msra.mxu0 0
        %2124 = vmatprep.mubr.bf16.mxu0 0
        %2125 = vmatmul.mubr.bf16.gmra.mrb[0].mxu0 %v1911
        %v2126 = vpop.f32.mrb[0].mxu0
        %v2127 = vadd.f32 0.0, %v2126
        %v2128 = vpop.f32.mrb[0].mxu0
        %v2129 = vpop.f32.mrb[0].mxu0
        %v2130 = vadd.f32 0.0, %v2129
        %v2131 = vpop.f32.mrb[0].mxu0
        %2132 = vdwg.mxu0
        %v2134 = vsel %vm1262, %v1892, 0
        %2136 = vmatprep.subr.bf16.mxu0 0
        %2137 = vmatpush1.bf16.msra.mxu0 %v2134
        %2138 = vmatprep.subr.bf16.mxu0 0
        %2139 = vmatpush1.bf16.msra.mxu0 0
        %2140 = vmatprep.subr.bf16.mxu0 0
        %2141 = vmatpush1.bf16.msra.mxu0 0
        %2142 = vmatprep.subr.bf16.mxu0 0
        %2143 = vmatpush1.bf16.msra.mxu0 0
        %2144 = vmatprep.subr.bf16.mxu0 0
        %2145 = vmatpush1.bf16.msra.mxu0 0
        %2146 = vmatprep.subr.bf16.mxu0 0
        %2147 = vmatpush1.bf16.msra.mxu0 0
        %2148 = vmatprep.subr.bf16.mxu0 0
        %2149 = vmatpush1.bf16.msra.mxu0 0
        %2150 = vmatprep.subr.bf16.mxu0 0
        %2151 = vmatpush1.bf16.msra.mxu0 0
        %2152 = vmatprep.subr.bf16.mxu0 0
        %2153 = vmatpush1.bf16.msra.mxu0 0
        %2154 = vmatprep.subr.bf16.mxu0 0
        %2155 = vmatpush1.bf16.msra.mxu0 0
        %2156 = vmatprep.subr.bf16.mxu0 0
        %2157 = vmatpush1.bf16.msra.mxu0 0
        %2158 = vmatprep.subr.bf16.mxu0 0
        %2159 = vmatpush1.bf16.msra.mxu0 0
        %2160 = vmatprep.subr.bf16.mxu0 0
        %2161 = vmatpush1.bf16.msra.mxu0 0
        %2162 = vmatprep.subr.bf16.mxu0 0
        %2163 = vmatpush1.bf16.msra.mxu0 0
        %2164 = vmatprep.subr.bf16.mxu0 0
        %2165 = vmatpush1.bf16.msra.mxu0 0
        %2166 = vmatprep.subr.bf16.mxu0 0
        %2167 = vmatpush1.bf16.msra.mxu0 0
        %2168 = vmatprep.mubr.bf16.mxu0 0
        %2169 = vmatmul.mubr.bf16.gmra.mrb[0].mxu0 %v1911
        %v2170 = vpop.f32.mrb[0].mxu0
        %v2171 = vadd.f32 0.0, %v2170
        %v2172 = vpop.f32.mrb[0].mxu0
        %v2173 = vpop.f32.mrb[0].mxu0
        %v2174 = vadd.f32 0.0, %v2173
        %v2175 = vpop.f32.mrb[0].mxu0
        %2176 = vdwg.mxu0
        %v2178 = vsel %vm1262, %v1893, 0
        %2180 = vmatprep.subr.bf16.mxu0 0
        %2181 = vmatpush1.bf16.msra.mxu0 %v2178
        %2182 = vmatprep.subr.bf16.mxu0 0
        %2183 = vmatpush1.bf16.msra.mxu0 0
        %2184 = vmatprep.subr.bf16.mxu0 0
        %2185 = vmatpush1.bf16.msra.mxu0 0
        %2186 = vmatprep.subr.bf16.mxu0 0
        %2187 = vmatpush1.bf16.msra.mxu0 0
        %2188 = vmatprep.subr.bf16.mxu0 0
        %2189 = vmatpush1.bf16.msra.mxu0 0
        %2190 = vmatprep.subr.bf16.mxu0 0
        %2191 = vmatpush1.bf16.msra.mxu0 0
        %2192 = vmatprep.subr.bf16.mxu0 0
        %2193 = vmatpush1.bf16.msra.mxu0 0
        %2194 = vmatprep.subr.bf16.mxu0 0
        %2195 = vmatpush1.bf16.msra.mxu0 0
        %2196 = vmatprep.subr.bf16.mxu0 0
        %2197 = vmatpush1.bf16.msra.mxu0 0
        %2198 = vmatprep.subr.bf16.mxu0 0
        %2199 = vmatpush1.bf16.msra.mxu0 0
        %2200 = vmatprep.subr.bf16.mxu0 0
        %2201 = vmatpush1.bf16.msra.mxu0 0
        %2202 = vmatprep.subr.bf16.mxu0 0
        %2203 = vmatpush1.bf16.msra.mxu0 0
        %2204 = vmatprep.subr.bf16.mxu0 0
        %2205 = vmatpush1.bf16.msra.mxu0 0
        %2206 = vmatprep.subr.bf16.mxu0 0
        %2207 = vmatpush1.bf16.msra.mxu0 0
        %2208 = vmatprep.subr.bf16.mxu0 0
        %2209 = vmatpush1.bf16.msra.mxu0 0
        %2210 = vmatprep.subr.bf16.mxu0 0
        %2211 = vmatpush1.bf16.msra.mxu0 0
        %2212 = vmatprep.mubr.bf16.mxu0 0
        %2213 = vmatmul.mubr.bf16.gmra.mrb[0].mxu0 %v1911
        %v2214 = vpop.f32.mrb[0].mxu0
        %v2215 = vadd.f32 0.0, %v2214
        %v2216 = vpop.f32.mrb[0].mxu0
        %v2217 = vpop.f32.mrb[0].mxu0
        %v2218 = vadd.f32 0.0, %v2217
        %v2219 = vpop.f32.mrb[0].mxu0
        %2220 = vdwg.mxu0
        %v2222 = vsel %vm1262, %v1894, 0
        %2224 = vmatprep.subr.bf16.mxu0 0
        %2225 = vmatpush1.bf16.msra.mxu0 %v2222
        %2226 = vmatprep.subr.bf16.mxu0 0
        %2227 = vmatpush1.bf16.msra.mxu0 0
        %2228 = vmatprep.subr.bf16.mxu0 0
        %2229 = vmatpush1.bf16.msra.mxu0 0
        %2230 = vmatprep.subr.bf16.mxu0 0
        %2231 = vmatpush1.bf16.msra.mxu0 0
        %2232 = vmatprep.subr.bf16.mxu0 0
        %2233 = vmatpush1.bf16.msra.mxu0 0
        %2234 = vmatprep.subr.bf16.mxu0 0
        %2235 = vmatpush1.bf16.msra.mxu0 0
        %2236 = vmatprep.subr.bf16.mxu0 0
        %2237 = vmatpush1.bf16.msra.mxu0 0
        %2238 = vmatprep.subr.bf16.mxu0 0
        %2239 = vmatpush1.bf16.msra.mxu0 0
        %2240 = vmatprep.subr.bf16.mxu0 0
        %2241 = vmatpush1.bf16.msra.mxu0 0
        %2242 = vmatprep.subr.bf16.mxu0 0
        %2243 = vmatpush1.bf16.msra.mxu0 0
        %2244 = vmatprep.subr.bf16.mxu0 0
        %2245 = vmatpush1.bf16.msra.mxu0 0
        %2246 = vmatprep.subr.bf16.mxu0 0
        %2247 = vmatpush1.bf16.msra.mxu0 0
        %2248 = vmatprep.subr.bf16.mxu0 0
        %2249 = vmatpush1.bf16.msra.mxu0 0
        %2250 = vmatprep.subr.bf16.mxu0 0
        %2251 = vmatpush1.bf16.msra.mxu0 0
        %2252 = vmatprep.subr.bf16.mxu0 0
        %2253 = vmatpush1.bf16.msra.mxu0 0
        %2254 = vmatprep.subr.bf16.mxu0 0
        %2255 = vmatpush1.bf16.msra.mxu0 0
        %2256 = vmatprep.mubr.bf16.mxu0 0
        %2257 = vmatmul.mubr.bf16.gmra.mrb[0].mxu0 %v1911
        %v2258 = vpop.f32.mrb[0].mxu0
        %v2259 = vadd.f32 0.0, %v2258
        %v2260 = vpop.f32.mrb[0].mxu0
        %v2261 = vpop.f32.mrb[0].mxu0
        %v2262 = vadd.f32 0.0, %v2261
        %v2263 = vpop.f32.mrb[0].mxu0
        %2264 = vdwg.mxu0
        %v2266 = vsel %vm1262, %v1895, 0
        %2268 = vmatprep.subr.bf16.mxu0 0
        %2269 = vmatpush1.bf16.msra.mxu0 %v2266
        %2270 = vmatprep.subr.bf16.mxu0 0
        %2271 = vmatpush1.bf16.msra.mxu0 0
        %2272 = vmatprep.subr.bf16.mxu0 0
        %2273 = vmatpush1.bf16.msra.mxu0 0
        %2274 = vmatprep.subr.bf16.mxu0 0
        %2275 = vmatpush1.bf16.msra.mxu0 0
        %2276 = vmatprep.subr.bf16.mxu0 0
        %2277 = vmatpush1.bf16.msra.mxu0 0
        %2278 = vmatprep.subr.bf16.mxu0 0
        %2279 = vmatpush1.bf16.msra.mxu0 0
        %2280 = vmatprep.subr.bf16.mxu0 0
        %2281 = vmatpush1.bf16.msra.mxu0 0
        %2282 = vmatprep.subr.bf16.mxu0 0
        %2283 = vmatpush1.bf16.msra.mxu0 0
        %2284 = vmatprep.subr.bf16.mxu0 0
        %2285 = vmatpush1.bf16.msra.mxu0 0
        %2286 = vmatprep.subr.bf16.mxu0 0
        %2287 = vmatpush1.bf16.msra.mxu0 0
        %2288 = vmatprep.subr.bf16.mxu0 0
        %2289 = vmatpush1.bf16.msra.mxu0 0
        %2290 = vmatprep.subr.bf16.mxu0 0
        %2291 = vmatpush1.bf16.msra.mxu0 0
        %2292 = vmatprep.subr.bf16.mxu0 0
        %2293 = vmatpush1.bf16.msra.mxu0 0
        %2294 = vmatprep.subr.bf16.mxu0 0
        %2295 = vmatpush1.bf16.msra.mxu0 0
        %2296 = vmatprep.subr.bf16.mxu0 0
        %2297 = vmatpush1.bf16.msra.mxu0 0
        %2298 = vmatprep.subr.bf16.mxu0 0
        %2299 = vmatpush1.bf16.msra.mxu0 0
        %2300 = vmatprep.mubr.bf16.mxu0 0
        %2301 = vmatmul.mubr.bf16.gmra.mrb[0].mxu0 %v1911
        %v2302 = vpop.f32.mrb[0].mxu0
        %v2303 = vadd.f32 0.0, %v2302
        %v2304 = vpop.f32.mrb[0].mxu0
        %v2305 = vpop.f32.mrb[0].mxu0
        %v2306 = vadd.f32 0.0, %v2305
        %v2307 = vpop.f32.mrb[0].mxu0
        %2308 = vdwg.mxu0
        %v2310 = vsel %vm1262, %v1896, 0
        %2312 = vmatprep.subr.bf16.mxu0 0
        %2313 = vmatpush1.bf16.msra.mxu0 %v2310
        %2314 = vmatprep.subr.bf16.mxu0 0
        %2315 = vmatpush1.bf16.msra.mxu0 0
        %2316 = vmatprep.subr.bf16.mxu0 0
        %2317 = vmatpush1.bf16.msra.mxu0 0
        %2318 = vmatprep.subr.bf16.mxu0 0
        %2319 = vmatpush1.bf16.msra.mxu0 0
        %2320 = vmatprep.subr.bf16.mxu0 0
        %2321 = vmatpush1.bf16.msra.mxu0 0
        %2322 = vmatprep.subr.bf16.mxu0 0
        %2323 = vmatpush1.bf16.msra.mxu0 0
        %2324 = vmatprep.subr.bf16.mxu0 0
        %2325 = vmatpush1.bf16.msra.mxu0 0
        %2326 = vmatprep.subr.bf16.mxu0 0
        %2327 = vmatpush1.bf16.msra.mxu0 0
        %2328 = vmatprep.subr.bf16.mxu0 0
        %2329 = vmatpush1.bf16.msra.mxu0 0
        %2330 = vmatprep.subr.bf16.mxu0 0
        %2331 = vmatpush1.bf16.msra.mxu0 0
        %2332 = vmatprep.subr.bf16.mxu0 0
        %2333 = vmatpush1.bf16.msra.mxu0 0
        %2334 = vmatprep.subr.bf16.mxu0 0
        %2335 = vmatpush1.bf16.msra.mxu0 0
        %2336 = vmatprep.subr.bf16.mxu0 0
        %2337 = vmatpush1.bf16.msra.mxu0 0
        %2338 = vmatprep.subr.bf16.mxu0 0
        %2339 = vmatpush1.bf16.msra.mxu0 0
        %2340 = vmatprep.subr.bf16.mxu0 0
        %2341 = vmatpush1.bf16.msra.mxu0 0
        %2342 = vmatprep.subr.bf16.mxu0 0
        %2343 = vmatpush1.bf16.msra.mxu0 0
        %2344 = vmatprep.mubr.bf16.mxu0 0
        %2345 = vmatmul.mubr.bf16.gmra.mrb[0].mxu0 %v1911
        %v2346 = vpop.f32.mrb[0].mxu0
        %v2347 = vadd.f32 0.0, %v2346
        %v2348 = vpop.f32.mrb[0].mxu0
        %v2349 = vpop.f32.mrb[0].mxu0
        %v2350 = vadd.f32 0.0, %v2349
        %v2351 = vpop.f32.mrb[0].mxu0
        %2352 = vdwg.mxu0
        %v2354 = vsel %vm1262, %v1897, 0
        %2356 = vmatprep.subr.bf16.mxu0 0
        %2357 = vmatpush1.bf16.msra.mxu0 %v2354
        %2358 = vmatprep.subr.bf16.mxu0 0
        %2359 = vmatpush1.bf16.msra.mxu0 0
        %2360 = vmatprep.subr.bf16.mxu0 0
        %2361 = vmatpush1.bf16.msra.mxu0 0
        %2362 = vmatprep.subr.bf16.mxu0 0
        %2363 = vmatpush1.bf16.msra.mxu0 0
        %2364 = vmatprep.subr.bf16.mxu0 0
        %2365 = vmatpush1.bf16.msra.mxu0 0
        %2366 = vmatprep.subr.bf16.mxu0 0
        %2367 = vmatpush1.bf16.msra.mxu0 0
        %2368 = vmatprep.subr.bf16.mxu0 0
        %2369 = vmatpush1.bf16.msra.mxu0 0
        %2370 = vmatprep.subr.bf16.mxu0 0
        %2371 = vmatpush1.bf16.msra.mxu0 0
        %2372 = vmatprep.subr.bf16.mxu0 0
        %2373 = vmatpush1.bf16.msra.mxu0 0
        %2374 = vmatprep.subr.bf16.mxu0 0
        %2375 = vmatpush1.bf16.msra.mxu0 0
        %2376 = vmatprep.subr.bf16.mxu0 0
        %2377 = vmatpush1.bf16.msra.mxu0 0
        %2378 = vmatprep.subr.bf16.mxu0 0
        %2379 = vmatpush1.bf16.msra.mxu0 0
        %2380 = vmatprep.subr.bf16.mxu0 0
        %2381 = vmatpush1.bf16.msra.mxu0 0
        %2382 = vmatprep.subr.bf16.mxu0 0
        %2383 = vmatpush1.bf16.msra.mxu0 0
        %2384 = vmatprep.subr.bf16.mxu0 0
        %2385 = vmatpush1.bf16.msra.mxu0 0
        %2386 = vmatprep.subr.bf16.mxu0 0
        %2387 = vmatpush1.bf16.msra.mxu0 0
        %2388 = vmatprep.mubr.bf16.mxu0 0
        %2389 = vmatmul.mubr.bf16.gmra.mrb[0].mxu0 %v1911
        %v2390 = vpop.f32.mrb[0].mxu0
        %v2391 = vadd.f32 0.0, %v2390
        %v2392 = vpop.f32.mrb[0].mxu0
        %v2393 = vpop.f32.mrb[0].mxu0
        %v2394 = vadd.f32 0.0, %v2393
        %v2395 = vpop.f32.mrb[0].mxu0
        %2396 = vdwg.mxu0
        %v2398 = vsel %vm1262, %v1898, 0
        %2400 = vmatprep.subr.bf16.mxu0 0
        %2401 = vmatpush1.bf16.msra.mxu0 %v2398
        %2402 = vmatprep.subr.bf16.mxu0 0
        %2403 = vmatpush1.bf16.msra.mxu0 0
        %2404 = vmatprep.subr.bf16.mxu0 0
        %2405 = vmatpush1.bf16.msra.mxu0 0
        %2406 = vmatprep.subr.bf16.mxu0 0
        %2407 = vmatpush1.bf16.msra.mxu0 0
        %2408 = vmatprep.subr.bf16.mxu0 0
        %2409 = vmatpush1.bf16.msra.mxu0 0
        %2410 = vmatprep.subr.bf16.mxu0 0
        %2411 = vmatpush1.bf16.msra.mxu0 0
        %2412 = vmatprep.subr.bf16.mxu0 0
        %2413 = vmatpush1.bf16.msra.mxu0 0
        %2414 = vmatprep.subr.bf16.mxu0 0
        %2415 = vmatpush1.bf16.msra.mxu0 0
        %2416 = vmatprep.subr.bf16.mxu0 0
        %2417 = vmatpush1.bf16.msra.mxu0 0
        %2418 = vmatprep.subr.bf16.mxu0 0
        %2419 = vmatpush1.bf16.msra.mxu0 0
        %2420 = vmatprep.subr.bf16.mxu0 0
        %2421 = vmatpush1.bf16.msra.mxu0 0
        %2422 = vmatprep.subr.bf16.mxu0 0
        %2423 = vmatpush1.bf16.msra.mxu0 0
        %2424 = vmatprep.subr.bf16.mxu0 0
        %2425 = vmatpush1.bf16.msra.mxu0 0
        %2426 = vmatprep.subr.bf16.mxu0 0
        %2427 = vmatpush1.bf16.msra.mxu0 0
        %2428 = vmatprep.subr.bf16.mxu0 0
        %2429 = vmatpush1.bf16.msra.mxu0 0
        %2430 = vmatprep.subr.bf16.mxu0 0
        %2431 = vmatpush1.bf16.msra.mxu0 0
        %2432 = vmatprep.mubr.bf16.mxu0 0
        %2433 = vmatmul.mubr.bf16.gmra.mrb[0].mxu0 %v1911
        %v2434 = vpop.f32.mrb[0].mxu0
        %v2435 = vadd.f32 0.0, %v2434
        %v2436 = vpop.f32.mrb[0].mxu0
        %v2437 = vpop.f32.mrb[0].mxu0
        %v2438 = vadd.f32 0.0, %v2437
        %v2439 = vpop.f32.mrb[0].mxu0
        %2440 = vdwg.mxu0
        %v2442 = vsel %vm1262, %v1899, 0
        %2444 = vmatprep.subr.bf16.mxu0 0
        %2445 = vmatpush1.bf16.msra.mxu0 %v2442
        %2446 = vmatprep.subr.bf16.mxu0 0
        %2447 = vmatpush1.bf16.msra.mxu0 0
        %2448 = vmatprep.subr.bf16.mxu0 0
        %2449 = vmatpush1.bf16.msra.mxu0 0
        %2450 = vmatprep.subr.bf16.mxu0 0
        %2451 = vmatpush1.bf16.msra.mxu0 0
        %2452 = vmatprep.subr.bf16.mxu0 0
        %2453 = vmatpush1.bf16.msra.mxu0 0
        %2454 = vmatprep.subr.bf16.mxu0 0
        %2455 = vmatpush1.bf16.msra.mxu0 0
        %2456 = vmatprep.subr.bf16.mxu0 0
        %2457 = vmatpush1.bf16.msra.mxu0 0
        %2458 = vmatprep.subr.bf16.mxu0 0
        %2459 = vmatpush1.bf16.msra.mxu0 0
        %2460 = vmatprep.subr.bf16.mxu0 0
        %2461 = vmatpush1.bf16.msra.mxu0 0
        %2462 = vmatprep.subr.bf16.mxu0 0
        %2463 = vmatpush1.bf16.msra.mxu0 0
        %2464 = vmatprep.subr.bf16.mxu0 0
        %2465 = vmatpush1.bf16.msra.mxu0 0
        %2466 = vmatprep.subr.bf16.mxu0 0
        %2467 = vmatpush1.bf16.msra.mxu0 0
        %2468 = vmatprep.subr.bf16.mxu0 0
        %2469 = vmatpush1.bf16.msra.mxu0 0
        %2470 = vmatprep.subr.bf16.mxu0 0
        %2471 = vmatpush1.bf16.msra.mxu0 0
        %2472 = vmatprep.subr.bf16.mxu0 0
        %2473 = vmatpush1.bf16.msra.mxu0 0
        %2474 = vmatprep.subr.bf16.mxu0 0
        %2475 = vmatpush1.bf16.msra.mxu0 0
        %2476 = vmatprep.mubr.bf16.mxu0 0
        %2477 = vmatmul.mubr.bf16.gmra.mrb[0].mxu0 %v1911
        %v2478 = vpop.f32.mrb[0].mxu0
        %v2479 = vadd.f32 0.0, %v2478
        %v2480 = vpop.f32.mrb[0].mxu0
        %v2481 = vpop.f32.mrb[0].mxu0
        %v2482 = vadd.f32 0.0, %v2481
        %v2483 = vpop.f32.mrb[0].mxu0
        %2484 = vdwg.mxu0
        %v2486 = vsel %vm1262, %v1900, 0
        %2488 = vmatprep.subr.bf16.mxu0 0
        %2489 = vmatpush1.bf16.msra.mxu0 %v2486
        %2490 = vmatprep.subr.bf16.mxu0 0
        %2491 = vmatpush1.bf16.msra.mxu0 0
        %2492 = vmatprep.subr.bf16.mxu0 0
        %2493 = vmatpush1.bf16.msra.mxu0 0
        %2494 = vmatprep.subr.bf16.mxu0 0
        %2495 = vmatpush1.bf16.msra.mxu0 0
        %2496 = vmatprep.subr.bf16.mxu0 0
        %2497 = vmatpush1.bf16.msra.mxu0 0
        %2498 = vmatprep.subr.bf16.mxu0 0
        %2499 = vmatpush1.bf16.msra.mxu0 0
        %2500 = vmatprep.subr.bf16.mxu0 0
        %2501 = vmatpush1.bf16.msra.mxu0 0
        %2502 = vmatprep.subr.bf16.mxu0 0
        %2503 = vmatpush1.bf16.msra.mxu0 0
        %2504 = vmatprep.subr.bf16.mxu0 0
        %2505 = vmatpush1.bf16.msra.mxu0 0
        %2506 = vmatprep.subr.bf16.mxu0 0
        %2507 = vmatpush1.bf16.msra.mxu0 0
        %2508 = vmatprep.subr.bf16.mxu0 0
        %2509 = vmatpush1.bf16.msra.mxu0 0
        %2510 = vmatprep.subr.bf16.mxu0 0
        %2511 = vmatpush1.bf16.msra.mxu0 0
        %2512 = vmatprep.subr.bf16.mxu0 0
        %2513 = vmatpush1.bf16.msra.mxu0 0
        %2514 = vmatprep.subr.bf16.mxu0 0
        %2515 = vmatpush1.bf16.msra.mxu0 0
        %2516 = vmatprep.subr.bf16.mxu0 0
        %2517 = vmatpush1.bf16.msra.mxu0 0
        %2518 = vmatprep.subr.bf16.mxu0 0
        %2519 = vmatpush1.bf16.msra.mxu0 0
        %2520 = vmatprep.mubr.bf16.mxu0 0
        %2521 = vmatmul.mubr.bf16.gmra.mrb[0].mxu0 %v1911
        %v2522 = vpop.f32.mrb[0].mxu0
        %v2523 = vadd.f32 0.0, %v2522
        %v2524 = vpop.f32.mrb[0].mxu0
        %v2525 = vpop.f32.mrb[0].mxu0
        %v2526 = vadd.f32 0.0, %v2525
        %v2527 = vpop.f32.mrb[0].mxu0
        %2528 = vdwg.mxu0
        %v2530 = vsel %vm1262, %v1901, 0
        %2532 = vmatprep.subr.bf16.mxu0 0
        %2533 = vmatpush1.bf16.msra.mxu0 %v2530
        %2534 = vmatprep.subr.bf16.mxu0 0
        %2535 = vmatpush1.bf16.msra.mxu0 0
        %2536 = vmatprep.subr.bf16.mxu0 0
        %2537 = vmatpush1.bf16.msra.mxu0 0
        %2538 = vmatprep.subr.bf16.mxu0 0
        %2539 = vmatpush1.bf16.msra.mxu0 0
        %2540 = vmatprep.subr.bf16.mxu0 0
        %2541 = vmatpush1.bf16.msra.mxu0 0
        %2542 = vmatprep.subr.bf16.mxu0 0
        %2543 = vmatpush1.bf16.msra.mxu0 0
        %2544 = vmatprep.subr.bf16.mxu0 0
        %2545 = vmatpush1.bf16.msra.mxu0 0
        %2546 = vmatprep.subr.bf16.mxu0 0
        %2547 = vmatpush1.bf16.msra.mxu0 0
        %2548 = vmatprep.subr.bf16.mxu0 0
        %2549 = vmatpush1.bf16.msra.mxu0 0
        %2550 = vmatprep.subr.bf16.mxu0 0
        %2551 = vmatpush1.bf16.msra.mxu0 0
        %2552 = vmatprep.subr.bf16.mxu0 0
        %2553 = vmatpush1.bf16.msra.mxu0 0
        %2554 = vmatprep.subr.bf16.mxu0 0
        %2555 = vmatpush1.bf16.msra.mxu0 0
        %2556 = vmatprep.subr.bf16.mxu0 0
        %2557 = vmatpush1.bf16.msra.mxu0 0
        %2558 = vmatprep.subr.bf16.mxu0 0
        %2559 = vmatpush1.bf16.msra.mxu0 0
        %2560 = vmatprep.subr.bf16.mxu0 0
        %2561 = vmatpush1.bf16.msra.mxu0 0
        %2562 = vmatprep.subr.bf16.mxu0 0
        %2563 = vmatpush1.bf16.msra.mxu0 0
        %2564 = vmatprep.mubr.bf16.mxu0 0
        %2565 = vmatmul.mubr.bf16.gmra.mrb[0].mxu0 %v1911
        %v2566 = vpop.f32.mrb[0].mxu0
        %v2567 = vadd.f32 0.0, %v2566
        %v2568 = vpop.f32.mrb[0].mxu0
        %v2569 = vpop.f32.mrb[0].mxu0
        %v2570 = vadd.f32 0.0, %v2569
        %v2571 = vpop.f32.mrb[0].mxu0
        %2572 = vdwg.mxu0
        %v2574 = vsel %vm1262, %v1902, 0
        %2576 = vmatprep.subr.bf16.mxu0 0
        %2577 = vmatpush1.bf16.msra.mxu0 %v2574
        %2578 = vmatprep.subr.bf16.mxu0 0
        %2579 = vmatpush1.bf16.msra.mxu0 0
        %2580 = vmatprep.subr.bf16.mxu0 0
        %2581 = vmatpush1.bf16.msra.mxu0 0
        %2582 = vmatprep.subr.bf16.mxu0 0
        %2583 = vmatpush1.bf16.msra.mxu0 0
        %2584 = vmatprep.subr.bf16.mxu0 0
        %2585 = vmatpush1.bf16.msra.mxu0 0
        %2586 = vmatprep.subr.bf16.mxu0 0
        %2587 = vmatpush1.bf16.msra.mxu0 0
        %2588 = vmatprep.subr.bf16.mxu0 0
        %2589 = vmatpush1.bf16.msra.mxu0 0
        %2590 = vmatprep.subr.bf16.mxu0 0
        %2591 = vmatpush1.bf16.msra.mxu0 0
        %2592 = vmatprep.subr.bf16.mxu0 0
        %2593 = vmatpush1.bf16.msra.mxu0 0
        %2594 = vmatprep.subr.bf16.mxu0 0
        %2595 = vmatpush1.bf16.msra.mxu0 0
        %2596 = vmatprep.subr.bf16.mxu0 0
        %2597 = vmatpush1.bf16.msra.mxu0 0
        %2598 = vmatprep.subr.bf16.mxu0 0
        %2599 = vmatpush1.bf16.msra.mxu0 0
        %2600 = vmatprep.subr.bf16.mxu0 0
        %2601 = vmatpush1.bf16.msra.mxu0 0
        %2602 = vmatprep.subr.bf16.mxu0 0
        %2603 = vmatpush1.bf16.msra.mxu0 0
        %2604 = vmatprep.subr.bf16.mxu0 0
        %2605 = vmatpush1.bf16.msra.mxu0 0
        %2606 = vmatprep.subr.bf16.mxu0 0
        %2607 = vmatpush1.bf16.msra.mxu0 0
        %2608 = vmatprep.mubr.bf16.mxu0 0
        %2609 = vmatmul.mubr.bf16.gmra.mrb[0].mxu0 %v1911
        %v2610 = vpop.f32.mrb[0].mxu0
        %v2611 = vadd.f32 0.0, %v2610
        %v2612 = vpop.f32.mrb[0].mxu0
        %v2613 = vpop.f32.mrb[0].mxu0
        %v2614 = vadd.f32 0.0, %v2613
        %v2615 = vpop.f32.mrb[0].mxu0
        %2616 = vdwg.mxu0
        %v2617 = vcombine.low %v1951, %v2039
        %v2618 = vcombine.high %v1951, %v2039
        %v2620 = vunpack.c.l.s4 1983009808
        %v2621 = vunpack.c.0.s8 %v2620
        %v2622 = vlaneseq
        %v2623 = vshrl.u32 %v2622, 7
        %v2624 = vsub.s32 %v2621, %v2623
        %v2625 = vrot.slane %v2617, %v2624
        %v2627 = vunpack.c.l.s4 1983009808
        %v2628 = vunpack.c.0.s8 %v2627
        %v2629 = vlaneseq
        %v2630 = vshrl.u32 %v2629, 7
        %v2631 = vsub.s32 %v2628, %v2630
        %v2632 = vrot.slane %v2618, %v2631
        %v2633 = vcombine.low %v1995, %v2083
        %v2634 = vcombine.high %v1995, %v2083
        %v2636 = vunpack.c.l.s4 1983009808
        %v2637 = vunpack.c.0.s8 %v2636
        %v2638 = vlaneseq
        %v2639 = vshrl.u32 %v2638, 7
        %v2640 = vsub.s32 %v2637, %v2639
        %v2641 = vrot.slane %v2633, %v2640
        %v2643 = vunpack.c.l.s4 1983009808
        %v2644 = vunpack.c.0.s8 %v2643
        %v2645 = vlaneseq
        %v2646 = vshrl.u32 %v2645, 7
        %v2647 = vsub.s32 %v2644, %v2646
        %v2648 = vrot.slane %v2634, %v2647
        %v2649 = vcombine.low %v2127, %v2215
        %v2650 = vcombine.high %v2127, %v2215
        %v2652 = vunpack.c.l.s4 1983009808
        %v2653 = vunpack.c.0.s8 %v2652
        %v2654 = vlaneseq
        %v2655 = vshrl.u32 %v2654, 7
        %v2656 = vsub.s32 %v2653, %v2655
        %v2657 = vrot.slane %v2649, %v2656
        %v2659 = vunpack.c.l.s4 1983009808
        %v2660 = vunpack.c.0.s8 %v2659
        %v2661 = vlaneseq
        %v2662 = vshrl.u32 %v2661, 7
        %v2663 = vsub.s32 %v2660, %v2662
        %v2664 = vrot.slane %v2650, %v2663
        %v2665 = vcombine.low %v2171, %v2259
        %v2666 = vcombine.high %v2171, %v2259
        %v2668 = vunpack.c.l.s4 1983009808
        %v2669 = vunpack.c.0.s8 %v2668
        %v2670 = vlaneseq
        %v2671 = vshrl.u32 %v2670, 7
        %v2672 = vsub.s32 %v2669, %v2671
        %v2673 = vrot.slane %v2665, %v2672
        %v2675 = vunpack.c.l.s4 1983009808
        %v2676 = vunpack.c.0.s8 %v2675
        %v2677 = vlaneseq
        %v2678 = vshrl.u32 %v2677, 7
        %v2679 = vsub.s32 %v2676, %v2678
        %v2680 = vrot.slane %v2666, %v2679
        %v2681 = vcombine.low %v2625, %v2641
        %v2682 = vcombine.high %v2625, %v2641
        %v2684 = vunpack.c.l.s4 1934713408
        %v2685 = vunpack.c.0.s8 %v2684
        %v2686 = vlaneseq
        %v2687 = vshrl.u32 %v2686, 7
        %v2688 = vsub.s32 %v2685, %v2687
        %v2689 = vrot.slane %v2681, %v2688
        %v2691 = vunpack.c.l.s4 1934713408
        %v2692 = vunpack.c.0.s8 %v2691
        %v2693 = vlaneseq
        %v2694 = vshrl.u32 %v2693, 7
        %v2695 = vsub.s32 %v2692, %v2694
        %v2696 = vrot.slane %v2682, %v2695
        %v2697 = vcombine.low %v2632, %v2648
        %v2698 = vcombine.high %v2632, %v2648
        %v2700 = vunpack.c.l.s4 1934713408
        %v2701 = vunpack.c.0.s8 %v2700
        %v2702 = vlaneseq
        %v2703 = vshrl.u32 %v2702, 7
        %v2704 = vsub.s32 %v2701, %v2703
        %v2705 = vrot.slane %v2697, %v2704
        %v2707 = vunpack.c.l.s4 1934713408
        %v2708 = vunpack.c.0.s8 %v2707
        %v2709 = vlaneseq
        %v2710 = vshrl.u32 %v2709, 7
        %v2711 = vsub.s32 %v2708, %v2710
        %v2712 = vrot.slane %v2698, %v2711
        %v2713 = vcombine.low %v2657, %v2673
        %v2714 = vcombine.high %v2657, %v2673
        %v2716 = vunpack.c.l.s4 1934713408
        %v2717 = vunpack.c.0.s8 %v2716
        %v2718 = vlaneseq
        %v2719 = vshrl.u32 %v2718, 7
        %v2720 = vsub.s32 %v2717, %v2719
        %v2721 = vrot.slane %v2713, %v2720
        %v2723 = vunpack.c.l.s4 1934713408
        %v2724 = vunpack.c.0.s8 %v2723
        %v2725 = vlaneseq
        %v2726 = vshrl.u32 %v2725, 7
        %v2727 = vsub.s32 %v2724, %v2726
        %v2728 = vrot.slane %v2714, %v2727
        %v2729 = vcombine.low %v2664, %v2680
        %v2730 = vcombine.high %v2664, %v2680
        %v2732 = vunpack.c.l.s4 1934713408
        %v2733 = vunpack.c.0.s8 %v2732
        %v2734 = vlaneseq
        %v2735 = vshrl.u32 %v2734, 7
        %v2736 = vsub.s32 %v2733, %v2735
        %v2737 = vrot.slane %v2729, %v2736
        %v2739 = vunpack.c.l.s4 1934713408
        %v2740 = vunpack.c.0.s8 %v2739
        %v2741 = vlaneseq
        %v2742 = vshrl.u32 %v2741, 7
        %v2743 = vsub.s32 %v2740, %v2742
        %v2744 = vrot.slane %v2730, %v2743
        %v2745 = vcombine.low %v2689, %v2721
        %v2746 = vcombine.high %v2689, %v2721
        %v2747 = vcombine.low %v2696, %v2728
        %v2748 = vcombine.high %v2696, %v2728
        %v2749 = vcombine.low %v2705, %v2737
        %v2750 = vcombine.high %v2705, %v2737
        %v2751 = vcombine.low %v2712, %v2744
        %v2752 = vcombine.high %v2712, %v2744
        %v2753 = vcombine.low %v2303, %v2391
        %v2754 = vcombine.high %v2303, %v2391
        %v2756 = vunpack.c.l.s4 1983009808
        %v2757 = vunpack.c.0.s8 %v2756
        %v2758 = vlaneseq
        %v2759 = vshrl.u32 %v2758, 7
        %v2760 = vsub.s32 %v2757, %v2759
        %v2761 = vrot.slane %v2753, %v2760
        %v2763 = vunpack.c.l.s4 1983009808
        %v2764 = vunpack.c.0.s8 %v2763
        %v2765 = vlaneseq
        %v2766 = vshrl.u32 %v2765, 7
        %v2767 = vsub.s32 %v2764, %v2766
        %v2768 = vrot.slane %v2754, %v2767
        %v2769 = vcombine.low %v2347, %v2435
        %v2770 = vcombine.high %v2347, %v2435
        %v2772 = vunpack.c.l.s4 1983009808
        %v2773 = vunpack.c.0.s8 %v2772
        %v2774 = vlaneseq
        %v2775 = vshrl.u32 %v2774, 7
        %v2776 = vsub.s32 %v2773, %v2775
        %v2777 = vrot.slane %v2769, %v2776
        %v2779 = vunpack.c.l.s4 1983009808
        %v2780 = vunpack.c.0.s8 %v2779
        %v2781 = vlaneseq
        %v2782 = vshrl.u32 %v2781, 7
        %v2783 = vsub.s32 %v2780, %v2782
        %v2784 = vrot.slane %v2770, %v2783
        %v2785 = vcombine.low %v2479, %v2567
        %v2786 = vcombine.high %v2479, %v2567
        %v2788 = vunpack.c.l.s4 1983009808
        %v2789 = vunpack.c.0.s8 %v2788
        %v2790 = vlaneseq
        %v2791 = vshrl.u32 %v2790, 7
        %v2792 = vsub.s32 %v2789, %v2791
        %v2793 = vrot.slane %v2785, %v2792
        %v2795 = vunpack.c.l.s4 1983009808
        %v2796 = vunpack.c.0.s8 %v2795
        %v2797 = vlaneseq
        %v2798 = vshrl.u32 %v2797, 7
        %v2799 = vsub.s32 %v2796, %v2798
        %v2800 = vrot.slane %v2786, %v2799
        %v2801 = vcombine.low %v2523, %v2611
        %v2802 = vcombine.high %v2523, %v2611
        %v2804 = vunpack.c.l.s4 1983009808
        %v2805 = vunpack.c.0.s8 %v2804
        %v2806 = vlaneseq
        %v2807 = vshrl.u32 %v2806, 7
        %v2808 = vsub.s32 %v2805, %v2807
        %v2809 = vrot.slane %v2801, %v2808
        %v2811 = vunpack.c.l.s4 1983009808
        %v2812 = vunpack.c.0.s8 %v2811
        %v2813 = vlaneseq
        %v2814 = vshrl.u32 %v2813, 7
        %v2815 = vsub.s32 %v2812, %v2814
        %v2816 = vrot.slane %v2802, %v2815
        %v2817 = vcombine.low %v2761, %v2777
        %v2818 = vcombine.high %v2761, %v2777
        %v2820 = vunpack.c.l.s4 1934713408
        %v2821 = vunpack.c.0.s8 %v2820
        %v2822 = vlaneseq
        %v2823 = vshrl.u32 %v2822, 7
        %v2824 = vsub.s32 %v2821, %v2823
        %v2825 = vrot.slane %v2817, %v2824
        %v2827 = vunpack.c.l.s4 1934713408
        %v2828 = vunpack.c.0.s8 %v2827
        %v2829 = vlaneseq
        %v2830 = vshrl.u32 %v2829, 7
        %v2831 = vsub.s32 %v2828, %v2830
        %v2832 = vrot.slane %v2818, %v2831
        %v2833 = vcombine.low %v2768, %v2784
        %v2834 = vcombine.high %v2768, %v2784
        %v2836 = vunpack.c.l.s4 1934713408
        %v2837 = vunpack.c.0.s8 %v2836
        %v2838 = vlaneseq
        %v2839 = vshrl.u32 %v2838, 7
        %v2840 = vsub.s32 %v2837, %v2839
        %v2841 = vrot.slane %v2833, %v2840
        %v2843 = vunpack.c.l.s4 1934713408
        %v2844 = vunpack.c.0.s8 %v2843
        %v2845 = vlaneseq
        %v2846 = vshrl.u32 %v2845, 7
        %v2847 = vsub.s32 %v2844, %v2846
        %v2848 = vrot.slane %v2834, %v2847
        %v2849 = vcombine.low %v2793, %v2809
        %v2850 = vcombine.high %v2793, %v2809
        %v2852 = vunpack.c.l.s4 1934713408
        %v2853 = vunpack.c.0.s8 %v2852
        %v2854 = vlaneseq
        %v2855 = vshrl.u32 %v2854, 7
        %v2856 = vsub.s32 %v2853, %v2855
        %v2857 = vrot.slane %v2849, %v2856
        %v2859 = vunpack.c.l.s4 1934713408
        %v2860 = vunpack.c.0.s8 %v2859
        %v2861 = vlaneseq
        %v2862 = vshrl.u32 %v2861, 7
        %v2863 = vsub.s32 %v2860, %v2862
        %v2864 = vrot.slane %v2850, %v2863
        %v2865 = vcombine.low %v2800, %v2816
        %v2866 = vcombine.high %v2800, %v2816
        %v2868 = vunpack.c.l.s4 1934713408
        %v2869 = vunpack.c.0.s8 %v2868
        %v2870 = vlaneseq
        %v2871 = vshrl.u32 %v2870, 7
        %v2872 = vsub.s32 %v2869, %v2871
        %v2873 = vrot.slane %v2865, %v2872
        %v2875 = vunpack.c.l.s4 1934713408
        %v2876 = vunpack.c.0.s8 %v2875
        %v2877 = vlaneseq
        %v2878 = vshrl.u32 %v2877, 7
        %v2879 = vsub.s32 %v2876, %v2878
        %v2880 = vrot.slane %v2866, %v2879
        %v2881 = vcombine.low %v2825, %v2857
        %v2882 = vcombine.high %v2825, %v2857
        %v2883 = vcombine.low %v2832, %v2864
        %v2884 = vcombine.high %v2832, %v2864
        %v2885 = vcombine.low %v2841, %v2873
        %v2886 = vcombine.high %v2841, %v2873
        %v2887 = vcombine.low %v2848, %v2880
        %v2888 = vcombine.high %v2848, %v2880
        %v2889 = vcombine.low %v1954, %v2042
        %v2890 = vcombine.high %v1954, %v2042
        %v2892 = vunpack.c.l.s4 1983009808
        %v2893 = vunpack.c.0.s8 %v2892
        %v2894 = vlaneseq
        %v2895 = vshrl.u32 %v2894, 7
        %v2896 = vsub.s32 %v2893, %v2895
        %v2897 = vrot.slane %v2889, %v2896
        %v2899 = vunpack.c.l.s4 1983009808
        %v2900 = vunpack.c.0.s8 %v2899
        %v2901 = vlaneseq
        %v2902 = vshrl.u32 %v2901, 7
        %v2903 = vsub.s32 %v2900, %v2902
        %v2904 = vrot.slane %v2890, %v2903
        %v2905 = vcombine.low %v1998, %v2086
        %v2906 = vcombine.high %v1998, %v2086
        %v2908 = vunpack.c.l.s4 1983009808
        %v2909 = vunpack.c.0.s8 %v2908
        %v2910 = vlaneseq
        %v2911 = vshrl.u32 %v2910, 7
        %v2912 = vsub.s32 %v2909, %v2911
        %v2913 = vrot.slane %v2905, %v2912
        %v2915 = vunpack.c.l.s4 1983009808
        %v2916 = vunpack.c.0.s8 %v2915
        %v2917 = vlaneseq
        %v2918 = vshrl.u32 %v2917, 7
        %v2919 = vsub.s32 %v2916, %v2918
        %v2920 = vrot.slane %v2906, %v2919
        %v2921 = vcombine.low %v2130, %v2218
        %v2922 = vcombine.high %v2130, %v2218
        %v2924 = vunpack.c.l.s4 1983009808
        %v2925 = vunpack.c.0.s8 %v2924
        %v2926 = vlaneseq
        %v2927 = vshrl.u32 %v2926, 7
        %v2928 = vsub.s32 %v2925, %v2927
        %v2929 = vrot.slane %v2921, %v2928
        %v2931 = vunpack.c.l.s4 1983009808
        %v2932 = vunpack.c.0.s8 %v2931
        %v2933 = vlaneseq
        %v2934 = vshrl.u32 %v2933, 7
        %v2935 = vsub.s32 %v2932, %v2934
        %v2936 = vrot.slane %v2922, %v2935
        %v2937 = vcombine.low %v2174, %v2262
        %v2938 = vcombine.high %v2174, %v2262
        %v2940 = vunpack.c.l.s4 1983009808
        %v2941 = vunpack.c.0.s8 %v2940
        %v2942 = vlaneseq
        %v2943 = vshrl.u32 %v2942, 7
        %v2944 = vsub.s32 %v2941, %v2943
        %v2945 = vrot.slane %v2937, %v2944
        %v2947 = vunpack.c.l.s4 1983009808
        %v2948 = vunpack.c.0.s8 %v2947
        %v2949 = vlaneseq
        %v2950 = vshrl.u32 %v2949, 7
        %v2951 = vsub.s32 %v2948, %v2950
        %v2952 = vrot.slane %v2938, %v2951
        %v2953 = vcombine.low %v2897, %v2913
        %v2954 = vcombine.high %v2897, %v2913
        %v2956 = vunpack.c.l.s4 1934713408
        %v2957 = vunpack.c.0.s8 %v2956
        %v2958 = vlaneseq
        %v2959 = vshrl.u32 %v2958, 7
        %v2960 = vsub.s32 %v2957, %v2959
        %v2961 = vrot.slane %v2953, %v2960
        %v2963 = vunpack.c.l.s4 1934713408
        %v2964 = vunpack.c.0.s8 %v2963
        %v2965 = vlaneseq
        %v2966 = vshrl.u32 %v2965, 7
        %v2967 = vsub.s32 %v2964, %v2966
        %v2968 = vrot.slane %v2954, %v2967
        %v2969 = vcombine.low %v2904, %v2920
        %v2970 = vcombine.high %v2904, %v2920
        %v2972 = vunpack.c.l.s4 1934713408
        %v2973 = vunpack.c.0.s8 %v2972
        %v2974 = vlaneseq
        %v2975 = vshrl.u32 %v2974, 7
        %v2976 = vsub.s32 %v2973, %v2975
        %v2977 = vrot.slane %v2969, %v2976
        %v2979 = vunpack.c.l.s4 1934713408
        %v2980 = vunpack.c.0.s8 %v2979
        %v2981 = vlaneseq
        %v2982 = vshrl.u32 %v2981, 7
        %v2983 = vsub.s32 %v2980, %v2982
        %v2984 = vrot.slane %v2970, %v2983
        %v2985 = vcombine.low %v2929, %v2945
        %v2986 = vcombine.high %v2929, %v2945
        %v2988 = vunpack.c.l.s4 1934713408
        %v2989 = vunpack.c.0.s8 %v2988
        %v2990 = vlaneseq
        %v2991 = vshrl.u32 %v2990, 7
        %v2992 = vsub.s32 %v2989, %v2991
        %v2993 = vrot.slane %v2985, %v2992
        %v2995 = vunpack.c.l.s4 1934713408
        %v2996 = vunpack.c.0.s8 %v2995
        %v2997 = vlaneseq
        %v2998 = vshrl.u32 %v2997, 7
        %v2999 = vsub.s32 %v2996, %v2998
        %v3000 = vrot.slane %v2986, %v2999
        %v3001 = vcombine.low %v2936, %v2952
        %v3002 = vcombine.high %v2936, %v2952
        %v3004 = vunpack.c.l.s4 1934713408
        %v3005 = vunpack.c.0.s8 %v3004
        %v3006 = vlaneseq
        %v3007 = vshrl.u32 %v3006, 7
        %v3008 = vsub.s32 %v3005, %v3007
        %v3009 = vrot.slane %v3001, %v3008
        %v3011 = vunpack.c.l.s4 1934713408
        %v3012 = vunpack.c.0.s8 %v3011
        %v3013 = vlaneseq
        %v3014 = vshrl.u32 %v3013, 7
        %v3015 = vsub.s32 %v3012, %v3014
        %v3016 = vrot.slane %v3002, %v3015
        %v3017 = vcombine.low %v2961, %v2993
        %v3018 = vcombine.high %v2961, %v2993
        %v3019 = vcombine.low %v2968, %v3000
        %v3020 = vcombine.high %v2968, %v3000
        %v3021 = vcombine.low %v2977, %v3009
        %v3022 = vcombine.high %v2977, %v3009
        %v3023 = vcombine.low %v2984, %v3016
        %v3024 = vcombine.high %v2984, %v3016
        %v3025 = vcombine.low %v2306, %v2394
        %v3026 = vcombine.high %v2306, %v2394
        %v3028 = vunpack.c.l.s4 1983009808
        %v3029 = vunpack.c.0.s8 %v3028
        %v3030 = vlaneseq
        %v3031 = vshrl.u32 %v3030, 7
        %v3032 = vsub.s32 %v3029, %v3031
        %v3033 = vrot.slane %v3025, %v3032
        %v3035 = vunpack.c.l.s4 1983009808
        %v3036 = vunpack.c.0.s8 %v3035
        %v3037 = vlaneseq
        %v3038 = vshrl.u32 %v3037, 7
        %v3039 = vsub.s32 %v3036, %v3038
        %v3040 = vrot.slane %v3026, %v3039
        %v3041 = vcombine.low %v2350, %v2438
        %v3042 = vcombine.high %v2350, %v2438
        %v3044 = vunpack.c.l.s4 1983009808
        %v3045 = vunpack.c.0.s8 %v3044
        %v3046 = vlaneseq
        %v3047 = vshrl.u32 %v3046, 7
        %v3048 = vsub.s32 %v3045, %v3047
        %v3049 = vrot.slane %v3041, %v3048
        %v3051 = vunpack.c.l.s4 1983009808
        %v3052 = vunpack.c.0.s8 %v3051
        %v3053 = vlaneseq
        %v3054 = vshrl.u32 %v3053, 7
        %v3055 = vsub.s32 %v3052, %v3054
        %v3056 = vrot.slane %v3042, %v3055
        %v3057 = vcombine.low %v2482, %v2570
        %v3058 = vcombine.high %v2482, %v2570
        %v3060 = vunpack.c.l.s4 1983009808
        %v3061 = vunpack.c.0.s8 %v3060
        %v3062 = vlaneseq
        %v3063 = vshrl.u32 %v3062, 7
        %v3064 = vsub.s32 %v3061, %v3063
        %v3065 = vrot.slane %v3057, %v3064
        %v3067 = vunpack.c.l.s4 1983009808
        %v3068 = vunpack.c.0.s8 %v3067
        %v3069 = vlaneseq
        %v3070 = vshrl.u32 %v3069, 7
        %v3071 = vsub.s32 %v3068, %v3070
        %v3072 = vrot.slane %v3058, %v3071
        %v3073 = vcombine.low %v2526, %v2614
        %v3074 = vcombine.high %v2526, %v2614
        %v3076 = vunpack.c.l.s4 1983009808
        %v3077 = vunpack.c.0.s8 %v3076
        %v3078 = vlaneseq
        %v3079 = vshrl.u32 %v3078, 7
        %v3080 = vsub.s32 %v3077, %v3079
        %v3081 = vrot.slane %v3073, %v3080
        %v3083 = vunpack.c.l.s4 1983009808
        %v3084 = vunpack.c.0.s8 %v3083
        %v3085 = vlaneseq
        %v3086 = vshrl.u32 %v3085, 7
        %v3087 = vsub.s32 %v3084, %v3086
        %v3088 = vrot.slane %v3074, %v3087
        %v3089 = vcombine.low %v3033, %v3049
        %v3090 = vcombine.high %v3033, %v3049
        %v3092 = vunpack.c.l.s4 1934713408
        %v3093 = vunpack.c.0.s8 %v3092
        %v3094 = vlaneseq
        %v3095 = vshrl.u32 %v3094, 7
        %v3096 = vsub.s32 %v3093, %v3095
        %v3097 = vrot.slane %v3089, %v3096
        %v3099 = vunpack.c.l.s4 1934713408
        %v3100 = vunpack.c.0.s8 %v3099
        %v3101 = vlaneseq
        %v3102 = vshrl.u32 %v3101, 7
        %v3103 = vsub.s32 %v3100, %v3102
        %v3104 = vrot.slane %v3090, %v3103
        %v3105 = vcombine.low %v3040, %v3056
        %v3106 = vcombine.high %v3040, %v3056
        %v3108 = vunpack.c.l.s4 1934713408
        %v3109 = vunpack.c.0.s8 %v3108
        %v3110 = vlaneseq
        %v3111 = vshrl.u32 %v3110, 7
        %v3112 = vsub.s32 %v3109, %v3111
        %v3113 = vrot.slane %v3105, %v3112
        %v3115 = vunpack.c.l.s4 1934713408
        %v3116 = vunpack.c.0.s8 %v3115
        %v3117 = vlaneseq
        %v3118 = vshrl.u32 %v3117, 7
        %v3119 = vsub.s32 %v3116, %v3118
        %v3120 = vrot.slane %v3106, %v3119
        %v3121 = vcombine.low %v3065, %v3081
        %v3122 = vcombine.high %v3065, %v3081
        %v3124 = vunpack.c.l.s4 1934713408
        %v3125 = vunpack.c.0.s8 %v3124
        %v3126 = vlaneseq
        %v3127 = vshrl.u32 %v3126, 7
        %v3128 = vsub.s32 %v3125, %v3127
        %v3129 = vrot.slane %v3121, %v3128
        %v3131 = vunpack.c.l.s4 1934713408
        %v3132 = vunpack.c.0.s8 %v3131
        %v3133 = vlaneseq
        %v3134 = vshrl.u32 %v3133, 7
        %v3135 = vsub.s32 %v3132, %v3134
        %v3136 = vrot.slane %v3122, %v3135
        %v3137 = vcombine.low %v3072, %v3088
        %v3138 = vcombine.high %v3072, %v3088
        %v3140 = vunpack.c.l.s4 1934713408
        %v3141 = vunpack.c.0.s8 %v3140
        %v3142 = vlaneseq
        %v3143 = vshrl.u32 %v3142, 7
        %v3144 = vsub.s32 %v3141, %v3143
        %v3145 = vrot.slane %v3137, %v3144
        %v3147 = vunpack.c.l.s4 1934713408
        %v3148 = vunpack.c.0.s8 %v3147
        %v3149 = vlaneseq
        %v3150 = vshrl.u32 %v3149, 7
        %v3151 = vsub.s32 %v3148, %v3150
        %v3152 = vrot.slane %v3138, %v3151
        %v3153 = vcombine.low %v3097, %v3129
        %v3154 = vcombine.high %v3097, %v3129
        %v3155 = vcombine.low %v3104, %v3136
        %v3156 = vcombine.high %v3104, %v3136
        %v3157 = vcombine.low %v3113, %v3145
        %v3158 = vcombine.high %v3113, %v3145
        %v3159 = vcombine.low %v3120, %v3152
        %v3160 = vcombine.high %v3120, %v3152
        %3161 = vst.msk [vmem:[%s338] sm:$0xff] %vm1258, %v2745
        %3162 = vst.msk [vmem:[%s338 + $0x8] sm:$0xff] %vm1258, %v2881
        %3163 = vst.msk [vmem:[%s338 + $0x10] sm:$0xff] %vm1258, %v2746
        %3164 = vst.msk [vmem:[%s338 + $0x18] sm:$0xff] %vm1258, %v2882
        %3165 = vst.msk [vmem:[%s338 + $0x20] sm:$0xff] %vm1258, %v2747
        %3166 = vst.msk [vmem:[%s338 + $0x28] sm:$0xff] %vm1258, %v2883
        %3167 = vst.msk [vmem:[%s338 + $0x30] sm:$0xff] %vm1258, %v2748
        %3168 = vst.msk [vmem:[%s338 + $0x38] sm:$0xff] %vm1258, %v2884
        %3169 = vst.msk [vmem:[%s338 + $0x40] sm:$0xff] %vm1258, %v2749
        %3170 = vst.msk [vmem:[%s338 + $0x48] sm:$0xff] %vm1258, %v2885
        %3171 = vst.msk [vmem:[%s338 + $0x50] sm:$0xff] %vm1258, %v2750
        %3172 = vst.msk [vmem:[%s338 + $0x58] sm:$0xff] %vm1258, %v2886
        %3173 = vst.msk [vmem:[%s338 + $0x60] sm:$0xff] %vm1258, %v2751
        %3174 = vst.msk [vmem:[%s338 + $0x68] sm:$0xff] %vm1258, %v2887
        %3175 = vst.msk [vmem:[%s338 + $0x70] sm:$0xff] %vm1258, %v2752
        %3176 = vst.msk [vmem:[%s338 + $0x78] sm:$0xff] %vm1258, %v2888
        %3177 = vst.msk [vmem:[%s338 + $0x80] sm:$0xff] %vm1258, %v3017
        %3178 = vst.msk [vmem:[%s338 + $0x88] sm:$0xff] %vm1258, %v3153
        %3179 = vst.msk [vmem:[%s338 + $0x90] sm:$0xff] %vm1258, %v3018
        %3180 = vst.msk [vmem:[%s338 + $0x98] sm:$0xff] %vm1258, %v3154
        %3181 = vst.msk [vmem:[%s338 + $0xa0] sm:$0xff] %vm1258, %v3019
        %3182 = vst.msk [vmem:[%s338 + $0xa8] sm:$0xff] %vm1258, %v3155
        %3183 = vst.msk [vmem:[%s338 + $0xb0] sm:$0xff] %vm1258, %v3020
        %3184 = vst.msk [vmem:[%s338 + $0xb8] sm:$0xff] %vm1258, %v3156
        %3185 = vst.msk [vmem:[%s338 + $0xc0] sm:$0xff] %vm1258, %v3021
        %3186 = vst.msk [vmem:[%s338 + $0xc8] sm:$0xff] %vm1258, %v3157
        %3187 = vst.msk [vmem:[%s338 + $0xd0] sm:$0xff] %vm1258, %v3022
        %3188 = vst.msk [vmem:[%s338 + $0xd8] sm:$0xff] %vm1258, %v3158
        %3189 = vst.msk [vmem:[%s338 + $0xe0] sm:$0xff] %vm1258, %v3023
        %3190 = vst.msk [vmem:[%s338 + $0xe8] sm:$0xff] %vm1258, %v3159
        %3191 = vst.msk [vmem:[%s338 + $0xf0] sm:$0xff] %vm1258, %v3024
        %3192 = vst.msk [vmem:[%s338 + $0xf8] sm:$0xff] %vm1258, %v3160
        %s3193 = sand.u32 %s165, 1
        %s3194 = scalar_lea.sflag [#allocation4], %s3193
        %s3195 = sand.u32 %s165, 1
        %s3196 = smul.addr %s3195, 256
        %s3197 = scalar_lea.vmem [#allocation13], %s3196
        // Predicated region
        $region69: #{vit_seg_forward.8} parent=43 // pred_check
          %p3198 = pneg %p175
        $region70: #{vit_seg_forward.8} parent=43 // pred_check_branch
          %3200 = sbr.rel (%p3198) target = $region72
        $region71: #{vit_seg_forward.8} parent=43 // pred_region
          %s3202 = ssub.s32 4096, 4096
          %3203 = vsyncadd %s3194, %s3202
          %s3204 = smul.addr %s26, 32
          %s3205 = smul.addr %s3204, 128
          %s3206 = scalar_lea.hbm %s6, %s3205
          %s3207 = sshll.u32 %s3197, 4
          %s3208 = int_to_ptr.vmem [resolvable:$true] %s3207
          %3213 = dma.vmem_to_hbm [thread:$0]  %s3208, 4096, %s3206, %s3194, 128, 128, 8
        $region72: #{vit_seg_forward.8} parent=43 // pred_fallthru
          _
      $region44: #{vit_seg_forward.8} parent=5 // pred_fallthru
        _
      %p3214 = scmp.le.s32.totalorder 2, %s21
      // Predicated region
      $region73: #{vit_seg_forward.8} parent=5 // pred_check
        %p3215 = pneg %p3214
      $region74: #{vit_seg_forward.8} parent=5 // pred_check_branch
        %3217 = sbr.rel (%p3215) target = $region76
      $region75: #{vit_seg_forward.8} parent=5 // pred_region
        %s3218 = ssub.s32 %s21, 2
        // Predicated region
        $region77: #{vit_seg_forward.8} parent=75 // pred_check
          %p3219 = pneg %p181
        $region78: #{vit_seg_forward.8} parent=75 // pred_check_branch
          %3221 = sbr.rel (%p3219) target = $region80
        $region79: #{vit_seg_forward.8} parent=75 // pred_region
          %s3222 = sand.u32 %s166, 1
          %s3223 = scalar_lea.sflag [#allocation4], %s3222
          %s3224 = sand.u32 %s166, 1
          %s3225 = smul.addr %s3224, 256
          %s3226 = scalar_lea.vmem [#allocation13], %s3225
          %3227 = dma.done %s3223, 4096
        $region80: #{vit_seg_forward.8} parent=75 // pred_fallthru
          _
      $region76: #{vit_seg_forward.8} parent=5 // pred_fallthru
        _
    $region6: #{vit_seg_forward.8} parent=1 // loop_footer
      %s25 = sadd.s32 1, %s21
    $region7: #{vit_seg_forward.8} parent=1 // loop_footer_branch
      %20 = sbr.rel target = $region3
    $region8: #{vit_seg_forward.8} parent=1 // loop_exit
      _
    %3228 = vsyncpa [#allocation3], 1
    %s3229 = scalar_lea.sflag [#allocation3], 1
    %3230 = vsyncpa %s3229, 1
    %3231 = vsyncpa [#allocation6], 1
    %3232 = vsyncpa [#allocation9], 1
    %3233 = vsyncpa [#allocation12], 1
    %3234 = vsyncpa [#allocation4], 1
    %s3235 = scalar_lea.sflag [#allocation4], 1
    %3236 = vsyncpa %s3235, 1

</llo_original>
